<compile_context>
chip_gen: v7x
topology: tpu7x:2x2x1
jax: 0.10.0
libtpu: 0.0.40
codegen_flags: <defaults>
</compile_context>

<pallas_src>
import jax
import jax.numpy as jnp
from jax.experimental import pallas as pl
from jax.experimental.pallas import tpu as pltpu


# ---------------------------------------------------------------------------
# Kernel
# ---------------------------------------------------------------------------
def gru_seq_kernel(x_ref, wcat_ref, uzr_ref, uh_ref, bias_ref, out_ref):
    """One node-tile grid point; runs the entire sequence in-kernel.

    x_ref   : (1, T*TILE_N, I)  this tile's inputs, time-major within the tile
    wcat_ref: (I, 3*Hp)         [W_z | W_r | W_h]   (resident)
    uzr_ref : (Hp, 2*Hp)        [U_z | U_r]         (resident)
    uh_ref  : (Hp, Hp)          U_h                 (resident)
    bias_ref: (1, 3*Hp)         [b_z | b_r | b_h]   (folded W+U biases)
    out_ref : (TILE_N, Hp)      final hidden state for this node tile
    """
    _, rows, _ = x_ref.shape
    tile_n, Hp = out_ref.shape
    T = rows // tile_n

    # One wide MXU matmul for ALL timesteps' input projections (independent of
    # the recurrence), instead of T narrow matmuls inside the serial loop.
    xw_all = (jnp.dot(x_ref[0], wcat_ref[...], preferred_element_type=jnp.float32)
              + bias_ref[...])                                   # (T*tile_n, 3Hp)

    # seq_len is a compile-time constant -> fully unrolled serial recurrence;
    # h is carried as a value (vregs), no VMEM round-trip between timesteps.
    h = jnp.zeros((tile_n, Hp), jnp.float32)
    for t in range(T):
        xw = xw_all[t * tile_n:(t + 1) * tile_n, :]              # static slice
        hu = jnp.dot(h, uzr_ref[...], preferred_element_type=jnp.float32)
        z_t = jax.nn.sigmoid(xw[:, :Hp] + hu[:, :Hp])
        r_t = jax.nn.sigmoid(xw[:, Hp:2 * Hp] + hu[:, Hp:2 * Hp])
        h_tilde = jnp.tanh(
            xw[:, 2 * Hp:]
            + jnp.dot(r_t * h, uh_ref[...], preferred_element_type=jnp.float32))
        h = (1.0 - z_t) * h + z_t * h_tilde

    out_ref[...] = h.astype(out_ref.dtype)


# ---------------------------------------------------------------------------
# Host-side parameter fusion / padding
# ---------------------------------------------------------------------------
def fuse_gru_params(params, hidden_pad):
    """Concatenate per-gate weights, fold paired biases, zero-pad hidden dim."""
    (wz, bwz, uz, buz, wr, bwr, ur, bur, wh, bwh, uh, buh) = params
    _, H = wz.shape
    pad_c = lambda a: jnp.pad(a, ((0, 0), (0, hidden_pad - H)))
    pad_rc = lambda a: jnp.pad(a, ((0, hidden_pad - H), (0, hidden_pad - H)))

    w_cat = jnp.concatenate([pad_c(wz), pad_c(wr), pad_c(wh)], axis=1)      # [I, 3Hp]
    u_zr = jnp.concatenate([pad_rc(uz), pad_rc(ur)], axis=1)                # [Hp, 2Hp]
    u_h = pad_rc(uh)                                                        # [Hp, Hp]
    bias = jnp.concatenate(
        [pad_c(bwz + buz), pad_c(bwr + bur), pad_c(bwh + buh)], axis=1)     # [1, 3Hp]
    return w_cat, u_zr, u_h, bias


# ---------------------------------------------------------------------------
# Wrapper
# ---------------------------------------------------------------------------
def gru_gat_recurrence(x_seq, params, hidden_size, *, tile_n=128):
    """Runs the GRU recurrence of GRU_GAT.forward over the whole sequence.

    x_seq: [num_nodes, seq_len, input_size]  (same layout as the PyTorch module)
    Returns h: [num_nodes, hidden_size]
    """
    N, T, I = x_seq.shape
    assert N % tile_n == 0, "num_nodes must be a multiple of tile_n"
    Hp = ((hidden_size + 127) // 128) * 128
    w_cat, u_zr, u_h, bias = fuse_gru_params(params, Hp)

    # Pre-lay-out x as (n_tiles, T*tile_n, I): within a tile, rows are grouped
    # time-major so the kernel's per-timestep slices are contiguous & static.
    n_tiles = N // tile_n
    x_grp = (x_seq.reshape(n_tiles, tile_n, T, I)
                  .transpose(0, 2, 1, 3)
                  .reshape(n_tiles, T * tile_n, I))

    out = pl.pallas_call(
        gru_seq_kernel,
        out_shape=jax.ShapeDtypeStruct((N, Hp), jnp.float32),
        grid_spec=pltpu.PrefetchScalarGridSpec(
            num_scalar_prefetch=0,
            grid=(n_tiles,),
            in_specs=[
                pl.BlockSpec((1, T * tile_n, I), lambda n: (n, 0, 0)),  # x (streamed)
                pl.BlockSpec((I, 3 * Hp), lambda n: (0, 0)),            # fused W  (resident)
                pl.BlockSpec((Hp, 2 * Hp), lambda n: (0, 0)),           # [U_z|U_r] (resident)
                pl.BlockSpec((Hp, Hp), lambda n: (0, 0)),               # U_h      (resident)
                pl.BlockSpec((1, 3 * Hp), lambda n: (0, 0)),            # folded biases
            ],
            out_specs=pl.BlockSpec((tile_n, Hp), lambda n: (n, 0)),
        ),
        compiler_params=pltpu.CompilerParams(
            dimension_semantics=("parallel",)),
    )(x_grp, w_cat, u_zr, u_h, bias)

    return out[:, :hidden_size]


# ---------------------------------------------------------------------------
# Pure-JAX reference (matches the PyTorch GRUCellOriginal loop semantics)
# ---------------------------------------------------------------------------
def gru_sequence_reference(x_seq, params):
    (wz, bwz, uz, buz, wr, bwr, ur, bur, wh, bwh, uh, buh) = params
    N, T, _ = x_seq.shape
    H = wz.shape[1]
    h = jnp.zeros((N, H), jnp.float32)
    for t in range(T):
        x_t = x_seq[:, t, :]
        z_t = jax.nn.sigmoid(x_t @ wz + bwz + h @ uz + buz)
        r_t = jax.nn.sigmoid(x_t @ wr + bwr + h @ ur + bur)
        h_tilde = jnp.tanh(x_t @ wh + bwh + (r_t * h) @ uh + buh)
        h = (1.0 - z_t) * h + z_t * h_tilde
    return h


# ---------------------------------------------------------------------------
# Deterministic init (nn.Linear default: uniform +-1/sqrt(fan_in)).
# Weights stored [in_features, out_features] (transposed vs PyTorch).
# ---------------------------------------------------------------------------
def init_gru_params(key, input_size, hidden_size, dtype=jnp.float32):
    keys = jax.random.split(key, 12)

    def lin(kw, kb, fan_in, fan_out):
        bound = 1.0 / jnp.sqrt(fan_in)
        w = jax.random.uniform(kw, (fan_in, fan_out), dtype, -bound, bound)
        b = jax.random.uniform(kb, (1, fan_out), dtype, -bound, bound)
        return w, b

    wz, bwz = lin(keys[0], keys[1], input_size, hidden_size)
    uz, buz = lin(keys[2], keys[3], hidden_size, hidden_size)
    wr, bwr = lin(keys[4], keys[5], input_size, hidden_size)
    ur, bur = lin(keys[6], keys[7], hidden_size, hidden_size)
    wh, bwh = lin(keys[8], keys[9], input_size, hidden_size)
    uh, buh = lin(keys[10], keys[11], hidden_size, hidden_size)
    return (wz, bwz, uz, buz, wr, bwr, ur, bur, wh, bwh, uh, buh)


if __name__ == "__main__":
    num_nodes = 256      # GAT graph nodes (batch rows), multiple of 128
    seq_len = 8
    input_size = 16
    gru_hidden = 32
    TILE_N = 128

    key = jax.random.PRNGKey(0)
    kx, kp = jax.random.split(key)
    x_seq = jax.random.normal(kx, (num_nodes, seq_len, input_size), jnp.float32)
    params = init_gru_params(kp, input_size, gru_hidden)

    h_kernel = gru_gat_recurrence(x_seq, params, gru_hidden, tile_n=TILE_N)
    h_kernel = jax.block_until_ready(h_kernel)

    h_ref = gru_sequence_reference(x_seq, params)
    assert h_kernel.shape == (num_nodes, gru_hidden)
    assert jnp.allclose(h_kernel, h_ref, atol=1e-5, rtol=1e-5), "mismatch vs reference"

    print("KERNEL_OK")
</pallas_src>

<mosaic_0001>
module attributes {stable_mosaic.version = 11 : i64} {
  func.func @gru_seq_kernel(%arg0: i32, %arg1: memref<1x1024x16xf32, #tpu.memory_space<vmem>>, %arg2: memref<16x384xf32, #tpu.memory_space<vmem>>, %arg3: memref<128x256xf32, #tpu.memory_space<vmem>>, %arg4: memref<128x128xf32, #tpu.memory_space<vmem>>, %arg5: memref<1x384xf32, #tpu.memory_space<vmem>>, %arg6: memref<128x128xf32, #tpu.memory_space<vmem>>) attributes {dimension_semantics = [#tpu.dimension_semantics<parallel>], iteration_bounds = array<i64: 2>, scalar_prefetch = 0 : i64, scratch_operands = 0 : i64, tpu.core_type = #tpu.core_type<tc>, window_params = [{transform_indices = @transform_0, window_bounds = array<i64: 1, 1024, 16>}, {pipeline_mode = #tpu.pipeline_mode<synchronous>, transform_indices = @transform_1, window_bounds = array<i64: 16, 384>}, {pipeline_mode = #tpu.pipeline_mode<synchronous>, transform_indices = @transform_2, window_bounds = array<i64: 128, 256>}, {pipeline_mode = #tpu.pipeline_mode<synchronous>, transform_indices = @transform_3, window_bounds = array<i64: 128, 128>}, {pipeline_mode = #tpu.pipeline_mode<synchronous>, transform_indices = @transform_4, window_bounds = array<i64: 1, 384>}, {transform_indices = @transform_5, window_bounds = array<i64: 128, 128>}]} {
    %c0 = arith.constant 0 : index
    %c0_0 = arith.constant 0 : index
    %c0_1 = arith.constant 0 : index
    %0 = vector.load %arg1[%c0, %c0_0, %c0_1] : memref<1x1024x16xf32, #tpu.memory_space<vmem>>, vector<1x1024x16xf32>
    %1 = vector.shape_cast %0 : vector<1x1024x16xf32> to vector<1024x16xf32>
    %c0_2 = arith.constant 0 : index
    %c0_3 = arith.constant 0 : index
    %2 = vector.load %arg2[%c0_2, %c0_3] : memref<16x384xf32, #tpu.memory_space<vmem>>, vector<16x384xf32>
    %cst = arith.constant dense<0.000000e+00> : vector<1024x384xf32>
    %3 = tpu.matmul %1, %2, %cst {dimension_numbers = #tpu.dot_dimension_numbers<[1], [0], [0], [1], [0, 0, 1, 1], [], []>} : vector<1024x16xf32>, vector<16x384xf32>, vector<1024x384xf32> -> vector<1024x384xf32>
    %c0_4 = arith.constant 0 : index
    %c0_5 = arith.constant 0 : index
    %4 = vector.load %arg5[%c0_4, %c0_5] : memref<1x384xf32, #tpu.memory_space<vmem>>, vector<1x384xf32>
    %5 = vector.broadcast %4 : vector<1x384xf32> to vector<1024x384xf32>
    %6 = arith.addf %3, %5 : vector<1024x384xf32>
    %cst_6 = arith.constant 0.000000e+00 : f32
    %7 = vector.broadcast %cst_6 : f32 to vector<128x128xf32>
    %8 = vector.extract_strided_slice %6 {offsets = [0, 0], sizes = [128, 384], strides = [1, 1]} : vector<1024x384xf32> to vector<128x384xf32>
    %c0_7 = arith.constant 0 : index
    %c0_8 = arith.constant 0 : index
    %9 = vector.load %arg3[%c0_7, %c0_8] : memref<128x256xf32, #tpu.memory_space<vmem>>, vector<128x256xf32>
    %cst_9 = arith.constant dense<0.000000e+00> : vector<128x256xf32>
    %10 = tpu.matmul %7, %9, %cst_9 {dimension_numbers = #tpu.dot_dimension_numbers<[1], [0], [0], [1], [0, 0, 1, 1], [], []>} : vector<128x128xf32>, vector<128x256xf32>, vector<128x256xf32> -> vector<128x256xf32>
    %11 = vector.extract_strided_slice %8 {offsets = [0, 0], sizes = [128, 128], strides = [1, 1]} : vector<128x384xf32> to vector<128x128xf32>
    %12 = vector.extract_strided_slice %10 {offsets = [0, 0], sizes = [128, 128], strides = [1, 1]} : vector<128x256xf32> to vector<128x128xf32>
    %13 = arith.addf %11, %12 : vector<128x128xf32>
    %14 = arith.negf %13 : vector<128x128xf32>
    %15 = math.exp %14 : vector<128x128xf32>
    %cst_10 = arith.constant 1.000000e+00 : f32
    %16 = vector.broadcast %cst_10 : f32 to vector<128x128xf32>
    %17 = arith.addf %16, %15 : vector<128x128xf32>
    %18 = arith.divf %16, %17 : vector<128x128xf32>
    %19 = vector.extract_strided_slice %8 {offsets = [0, 128], sizes = [128, 128], strides = [1, 1]} : vector<128x384xf32> to vector<128x128xf32>
    %20 = vector.extract_strided_slice %10 {offsets = [0, 128], sizes = [128, 128], strides = [1, 1]} : vector<128x256xf32> to vector<128x128xf32>
    %21 = arith.addf %19, %20 : vector<128x128xf32>
    %22 = arith.negf %21 : vector<128x128xf32>
    %23 = math.exp %22 : vector<128x128xf32>
    %cst_11 = arith.constant 1.000000e+00 : f32
    %24 = vector.broadcast %cst_11 : f32 to vector<128x128xf32>
    %25 = arith.addf %24, %23 : vector<128x128xf32>
    %26 = arith.divf %24, %25 : vector<128x128xf32>
    %27 = vector.extract_strided_slice %8 {offsets = [0, 256], sizes = [128, 128], strides = [1, 1]} : vector<128x384xf32> to vector<128x128xf32>
    %28 = arith.mulf %26, %7 : vector<128x128xf32>
    %c0_12 = arith.constant 0 : index
    %c0_13 = arith.constant 0 : index
    %29 = vector.load %arg4[%c0_12, %c0_13] : memref<128x128xf32, #tpu.memory_space<vmem>>, vector<128x128xf32>
    %cst_14 = arith.constant dense<0.000000e+00> : vector<128x128xf32>
    %30 = tpu.matmul %28, %29, %cst_14 {dimension_numbers = #tpu.dot_dimension_numbers<[1], [0], [0], [1], [0, 0, 1, 1], [], []>} : vector<128x128xf32>, vector<128x128xf32>, vector<128x128xf32> -> vector<128x128xf32>
    %31 = arith.addf %27, %30 : vector<128x128xf32>
    %32 = math.tanh %31 : vector<128x128xf32>
    %cst_15 = arith.constant 1.000000e+00 : f32
    %33 = vector.broadcast %cst_15 : f32 to vector<128x128xf32>
    %34 = arith.subf %33, %18 : vector<128x128xf32>
    %35 = arith.mulf %34, %7 : vector<128x128xf32>
    %36 = arith.mulf %18, %32 : vector<128x128xf32>
    %37 = arith.addf %35, %36 : vector<128x128xf32>
    %38 = vector.extract_strided_slice %6 {offsets = [128, 0], sizes = [128, 384], strides = [1, 1]} : vector<1024x384xf32> to vector<128x384xf32>
    %c0_16 = arith.constant 0 : index
    %c0_17 = arith.constant 0 : index
    %39 = vector.load %arg3[%c0_16, %c0_17] : memref<128x256xf32, #tpu.memory_space<vmem>>, vector<128x256xf32>
    %cst_18 = arith.constant dense<0.000000e+00> : vector<128x256xf32>
    %40 = tpu.matmul %37, %39, %cst_18 {dimension_numbers = #tpu.dot_dimension_numbers<[1], [0], [0], [1], [0, 0, 1, 1], [], []>} : vector<128x128xf32>, vector<128x256xf32>, vector<128x256xf32> -> vector<128x256xf32>
    %41 = vector.extract_strided_slice %38 {offsets = [0, 0], sizes = [128, 128], strides = [1, 1]} : vector<128x384xf32> to vector<128x128xf32>
    %42 = vector.extract_strided_slice %40 {offsets = [0, 0], sizes = [128, 128], strides = [1, 1]} : vector<128x256xf32> to vector<128x128xf32>
    %43 = arith.addf %41, %42 : vector<128x128xf32>
    %44 = arith.negf %43 : vector<128x128xf32>
    %45 = math.exp %44 : vector<128x128xf32>
    %cst_19 = arith.constant 1.000000e+00 : f32
    %46 = vector.broadcast %cst_19 : f32 to vector<128x128xf32>
    %47 = arith.addf %46, %45 : vector<128x128xf32>
    %48 = arith.divf %46, %47 : vector<128x128xf32>
    %49 = vector.extract_strided_slice %38 {offsets = [0, 128], sizes = [128, 128], strides = [1, 1]} : vector<128x384xf32> to vector<128x128xf32>
    %50 = vector.extract_strided_slice %40 {offsets = [0, 128], sizes = [128, 128], strides = [1, 1]} : vector<128x256xf32> to vector<128x128xf32>
    %51 = arith.addf %49, %50 : vector<128x128xf32>
    %52 = arith.negf %51 : vector<128x128xf32>
    %53 = math.exp %52 : vector<128x128xf32>
    %cst_20 = arith.constant 1.000000e+00 : f32
    %54 = vector.broadcast %cst_20 : f32 to vector<128x128xf32>
    %55 = arith.addf %54, %53 : vector<128x128xf32>
    %56 = arith.divf %54, %55 : vector<128x128xf32>
    %57 = vector.extract_strided_slice %38 {offsets = [0, 256], sizes = [128, 128], strides = [1, 1]} : vector<128x384xf32> to vector<128x128xf32>
    %58 = arith.mulf %56, %37 : vector<128x128xf32>
    %c0_21 = arith.constant 0 : index
    %c0_22 = arith.constant 0 : index
    %59 = vector.load %arg4[%c0_21, %c0_22] : memref<128x128xf32, #tpu.memory_space<vmem>>, vector<128x128xf32>
    %cst_23 = arith.constant dense<0.000000e+00> : vector<128x128xf32>
    %60 = tpu.matmul %58, %59, %cst_23 {dimension_numbers = #tpu.dot_dimension_numbers<[1], [0], [0], [1], [0, 0, 1, 1], [], []>} : vector<128x128xf32>, vector<128x128xf32>, vector<128x128xf32> -> vector<128x128xf32>
    %61 = arith.addf %57, %60 : vector<128x128xf32>
    %62 = math.tanh %61 : vector<128x128xf32>
    %cst_24 = arith.constant 1.000000e+00 : f32
    %63 = vector.broadcast %cst_24 : f32 to vector<128x128xf32>
    %64 = arith.subf %63, %48 : vector<128x128xf32>
    %65 = arith.mulf %64, %37 : vector<128x128xf32>
    %66 = arith.mulf %48, %62 : vector<128x128xf32>
    %67 = arith.addf %65, %66 : vector<128x128xf32>
    %68 = vector.extract_strided_slice %6 {offsets = [256, 0], sizes = [128, 384], strides = [1, 1]} : vector<1024x384xf32> to vector<128x384xf32>
    %c0_25 = arith.constant 0 : index
    %c0_26 = arith.constant 0 : index
    %69 = vector.load %arg3[%c0_25, %c0_26] : memref<128x256xf32, #tpu.memory_space<vmem>>, vector<128x256xf32>
    %cst_27 = arith.constant dense<0.000000e+00> : vector<128x256xf32>
    %70 = tpu.matmul %67, %69, %cst_27 {dimension_numbers = #tpu.dot_dimension_numbers<[1], [0], [0], [1], [0, 0, 1, 1], [], []>} : vector<128x128xf32>, vector<128x256xf32>, vector<128x256xf32> -> vector<128x256xf32>
    %71 = vector.extract_strided_slice %68 {offsets = [0, 0], sizes = [128, 128], strides = [1, 1]} : vector<128x384xf32> to vector<128x128xf32>
    %72 = vector.extract_strided_slice %70 {offsets = [0, 0], sizes = [128, 128], strides = [1, 1]} : vector<128x256xf32> to vector<128x128xf32>
    %73 = arith.addf %71, %72 : vector<128x128xf32>
    %74 = arith.negf %73 : vector<128x128xf32>
    %75 = math.exp %74 : vector<128x128xf32>
    %cst_28 = arith.constant 1.000000e+00 : f32
    %76 = vector.broadcast %cst_28 : f32 to vector<128x128xf32>
    %77 = arith.addf %76, %75 : vector<128x128xf32>
    %78 = arith.divf %76, %77 : vector<128x128xf32>
    %79 = vector.extract_strided_slice %68 {offsets = [0, 128], sizes = [128, 128], strides = [1, 1]} : vector<128x384xf32> to vector<128x128xf32>
    %80 = vector.extract_strided_slice %70 {offsets = [0, 128], sizes = [128, 128], strides = [1, 1]} : vector<128x256xf32> to vector<128x128xf32>
    %81 = arith.addf %79, %80 : vector<128x128xf32>
    %82 = arith.negf %81 : vector<128x128xf32>
    %83 = math.exp %82 : vector<128x128xf32>
    %cst_29 = arith.constant 1.000000e+00 : f32
    %84 = vector.broadcast %cst_29 : f32 to vector<128x128xf32>
    %85 = arith.addf %84, %83 : vector<128x128xf32>
    %86 = arith.divf %84, %85 : vector<128x128xf32>
    %87 = vector.extract_strided_slice %68 {offsets = [0, 256], sizes = [128, 128], strides = [1, 1]} : vector<128x384xf32> to vector<128x128xf32>
    %88 = arith.mulf %86, %67 : vector<128x128xf32>
    %c0_30 = arith.constant 0 : index
    %c0_31 = arith.constant 0 : index
    %89 = vector.load %arg4[%c0_30, %c0_31] : memref<128x128xf32, #tpu.memory_space<vmem>>, vector<128x128xf32>
    %cst_32 = arith.constant dense<0.000000e+00> : vector<128x128xf32>
    %90 = tpu.matmul %88, %89, %cst_32 {dimension_numbers = #tpu.dot_dimension_numbers<[1], [0], [0], [1], [0, 0, 1, 1], [], []>} : vector<128x128xf32>, vector<128x128xf32>, vector<128x128xf32> -> vector<128x128xf32>
    %91 = arith.addf %87, %90 : vector<128x128xf32>
    %92 = math.tanh %91 : vector<128x128xf32>
    %cst_33 = arith.constant 1.000000e+00 : f32
    %93 = vector.broadcast %cst_33 : f32 to vector<128x128xf32>
    %94 = arith.subf %93, %78 : vector<128x128xf32>
    %95 = arith.mulf %94, %67 : vector<128x128xf32>
    %96 = arith.mulf %78, %92 : vector<128x128xf32>
    %97 = arith.addf %95, %96 : vector<128x128xf32>
    %98 = vector.extract_strided_slice %6 {offsets = [384, 0], sizes = [128, 384], strides = [1, 1]} : vector<1024x384xf32> to vector<128x384xf32>
    %c0_34 = arith.constant 0 : index
    %c0_35 = arith.constant 0 : index
    %99 = vector.load %arg3[%c0_34, %c0_35] : memref<128x256xf32, #tpu.memory_space<vmem>>, vector<128x256xf32>
    %cst_36 = arith.constant dense<0.000000e+00> : vector<128x256xf32>
    %100 = tpu.matmul %97, %99, %cst_36 {dimension_numbers = #tpu.dot_dimension_numbers<[1], [0], [0], [1], [0, 0, 1, 1], [], []>} : vector<128x128xf32>, vector<128x256xf32>, vector<128x256xf32> -> vector<128x256xf32>
    %101 = vector.extract_strided_slice %98 {offsets = [0, 0], sizes = [128, 128], strides = [1, 1]} : vector<128x384xf32> to vector<128x128xf32>
    %102 = vector.extract_strided_slice %100 {offsets = [0, 0], sizes = [128, 128], strides = [1, 1]} : vector<128x256xf32> to vector<128x128xf32>
    %103 = arith.addf %101, %102 : vector<128x128xf32>
    %104 = arith.negf %103 : vector<128x128xf32>
    %105 = math.exp %104 : vector<128x128xf32>
    %cst_37 = arith.constant 1.000000e+00 : f32
    %106 = vector.broadcast %cst_37 : f32 to vector<128x128xf32>
    %107 = arith.addf %106, %105 : vector<128x128xf32>
    %108 = arith.divf %106, %107 : vector<128x128xf32>
    %109 = vector.extract_strided_slice %98 {offsets = [0, 128], sizes = [128, 128], strides = [1, 1]} : vector<128x384xf32> to vector<128x128xf32>
    %110 = vector.extract_strided_slice %100 {offsets = [0, 128], sizes = [128, 128], strides = [1, 1]} : vector<128x256xf32> to vector<128x128xf32>
    %111 = arith.addf %109, %110 : vector<128x128xf32>
    %112 = arith.negf %111 : vector<128x128xf32>
    %113 = math.exp %112 : vector<128x128xf32>
    %cst_38 = arith.constant 1.000000e+00 : f32
    %114 = vector.broadcast %cst_38 : f32 to vector<128x128xf32>
    %115 = arith.addf %114, %113 : vector<128x128xf32>
    %116 = arith.divf %114, %115 : vector<128x128xf32>
    %117 = vector.extract_strided_slice %98 {offsets = [0, 256], sizes = [128, 128], strides = [1, 1]} : vector<128x384xf32> to vector<128x128xf32>
    %118 = arith.mulf %116, %97 : vector<128x128xf32>
    %c0_39 = arith.constant 0 : index
    %c0_40 = arith.constant 0 : index
    %119 = vector.load %arg4[%c0_39, %c0_40] : memref<128x128xf32, #tpu.memory_space<vmem>>, vector<128x128xf32>
    %cst_41 = arith.constant dense<0.000000e+00> : vector<128x128xf32>
    %120 = tpu.matmul %118, %119, %cst_41 {dimension_numbers = #tpu.dot_dimension_numbers<[1], [0], [0], [1], [0, 0, 1, 1], [], []>} : vector<128x128xf32>, vector<128x128xf32>, vector<128x128xf32> -> vector<128x128xf32>
    %121 = arith.addf %117, %120 : vector<128x128xf32>
    %122 = math.tanh %121 : vector<128x128xf32>
    %cst_42 = arith.constant 1.000000e+00 : f32
    %123 = vector.broadcast %cst_42 : f32 to vector<128x128xf32>
    %124 = arith.subf %123, %108 : vector<128x128xf32>
    %125 = arith.mulf %124, %97 : vector<128x128xf32>
    %126 = arith.mulf %108, %122 : vector<128x128xf32>
    %127 = arith.addf %125, %126 : vector<128x128xf32>
    %128 = vector.extract_strided_slice %6 {offsets = [512, 0], sizes = [128, 384], strides = [1, 1]} : vector<1024x384xf32> to vector<128x384xf32>
    %c0_43 = arith.constant 0 : index
    %c0_44 = arith.constant 0 : index
    %129 = vector.load %arg3[%c0_43, %c0_44] : memref<128x256xf32, #tpu.memory_space<vmem>>, vector<128x256xf32>
    %cst_45 = arith.constant dense<0.000000e+00> : vector<128x256xf32>
    %130 = tpu.matmul %127, %129, %cst_45 {dimension_numbers = #tpu.dot_dimension_numbers<[1], [0], [0], [1], [0, 0, 1, 1], [], []>} : vector<128x128xf32>, vector<128x256xf32>, vector<128x256xf32> -> vector<128x256xf32>
    %131 = vector.extract_strided_slice %128 {offsets = [0, 0], sizes = [128, 128], strides = [1, 1]} : vector<128x384xf32> to vector<128x128xf32>
    %132 = vector.extract_strided_slice %130 {offsets = [0, 0], sizes = [128, 128], strides = [1, 1]} : vector<128x256xf32> to vector<128x128xf32>
    %133 = arith.addf %131, %132 : vector<128x128xf32>
    %134 = arith.negf %133 : vector<128x128xf32>
    %135 = math.exp %134 : vector<128x128xf32>
    %cst_46 = arith.constant 1.000000e+00 : f32
    %136 = vector.broadcast %cst_46 : f32 to vector<128x128xf32>
    %137 = arith.addf %136, %135 : vector<128x128xf32>
    %138 = arith.divf %136, %137 : vector<128x128xf32>
    %139 = vector.extract_strided_slice %128 {offsets = [0, 128], sizes = [128, 128], strides = [1, 1]} : vector<128x384xf32> to vector<128x128xf32>
    %140 = vector.extract_strided_slice %130 {offsets = [0, 128], sizes = [128, 128], strides = [1, 1]} : vector<128x256xf32> to vector<128x128xf32>
    %141 = arith.addf %139, %140 : vector<128x128xf32>
    %142 = arith.negf %141 : vector<128x128xf32>
    %143 = math.exp %142 : vector<128x128xf32>
    %cst_47 = arith.constant 1.000000e+00 : f32
    %144 = vector.broadcast %cst_47 : f32 to vector<128x128xf32>
    %145 = arith.addf %144, %143 : vector<128x128xf32>
    %146 = arith.divf %144, %145 : vector<128x128xf32>
    %147 = vector.extract_strided_slice %128 {offsets = [0, 256], sizes = [128, 128], strides = [1, 1]} : vector<128x384xf32> to vector<128x128xf32>
    %148 = arith.mulf %146, %127 : vector<128x128xf32>
    %c0_48 = arith.constant 0 : index
    %c0_49 = arith.constant 0 : index
    %149 = vector.load %arg4[%c0_48, %c0_49] : memref<128x128xf32, #tpu.memory_space<vmem>>, vector<128x128xf32>
    %cst_50 = arith.constant dense<0.000000e+00> : vector<128x128xf32>
    %150 = tpu.matmul %148, %149, %cst_50 {dimension_numbers = #tpu.dot_dimension_numbers<[1], [0], [0], [1], [0, 0, 1, 1], [], []>} : vector<128x128xf32>, vector<128x128xf32>, vector<128x128xf32> -> vector<128x128xf32>
    %151 = arith.addf %147, %150 : vector<128x128xf32>
    %152 = math.tanh %151 : vector<128x128xf32>
    %cst_51 = arith.constant 1.000000e+00 : f32
    %153 = vector.broadcast %cst_51 : f32 to vector<128x128xf32>
    %154 = arith.subf %153, %138 : vector<128x128xf32>
    %155 = arith.mulf %154, %127 : vector<128x128xf32>
    %156 = arith.mulf %138, %152 : vector<128x128xf32>
    %157 = arith.addf %155, %156 : vector<128x128xf32>
    %158 = vector.extract_strided_slice %6 {offsets = [640, 0], sizes = [128, 384], strides = [1, 1]} : vector<1024x384xf32> to vector<128x384xf32>
    %c0_52 = arith.constant 0 : index
    %c0_53 = arith.constant 0 : index
    %159 = vector.load %arg3[%c0_52, %c0_53] : memref<128x256xf32, #tpu.memory_space<vmem>>, vector<128x256xf32>
    %cst_54 = arith.constant dense<0.000000e+00> : vector<128x256xf32>
    %160 = tpu.matmul %157, %159, %cst_54 {dimension_numbers = #tpu.dot_dimension_numbers<[1], [0], [0], [1], [0, 0, 1, 1], [], []>} : vector<128x128xf32>, vector<128x256xf32>, vector<128x256xf32> -> vector<128x256xf32>
    %161 = vector.extract_strided_slice %158 {offsets = [0, 0], sizes = [128, 128], strides = [1, 1]} : vector<128x384xf32> to vector<128x128xf32>
    %162 = vector.extract_strided_slice %160 {offsets = [0, 0], sizes = [128, 128], strides = [1, 1]} : vector<128x256xf32> to vector<128x128xf32>
    %163 = arith.addf %161, %162 : vector<128x128xf32>
    %164 = arith.negf %163 : vector<128x128xf32>
    %165 = math.exp %164 : vector<128x128xf32>
    %cst_55 = arith.constant 1.000000e+00 : f32
    %166 = vector.broadcast %cst_55 : f32 to vector<128x128xf32>
    %167 = arith.addf %166, %165 : vector<128x128xf32>
    %168 = arith.divf %166, %167 : vector<128x128xf32>
    %169 = vector.extract_strided_slice %158 {offsets = [0, 128], sizes = [128, 128], strides = [1, 1]} : vector<128x384xf32> to vector<128x128xf32>
    %170 = vector.extract_strided_slice %160 {offsets = [0, 128], sizes = [128, 128], strides = [1, 1]} : vector<128x256xf32> to vector<128x128xf32>
    %171 = arith.addf %169, %170 : vector<128x128xf32>
    %172 = arith.negf %171 : vector<128x128xf32>
    %173 = math.exp %172 : vector<128x128xf32>
    %cst_56 = arith.constant 1.000000e+00 : f32
    %174 = vector.broadcast %cst_56 : f32 to vector<128x128xf32>
    %175 = arith.addf %174, %173 : vector<128x128xf32>
    %176 = arith.divf %174, %175 : vector<128x128xf32>
    %177 = vector.extract_strided_slice %158 {offsets = [0, 256], sizes = [128, 128], strides = [1, 1]} : vector<128x384xf32> to vector<128x128xf32>
    %178 = arith.mulf %176, %157 : vector<128x128xf32>
    %c0_57 = arith.constant 0 : index
    %c0_58 = arith.constant 0 : index
    %179 = vector.load %arg4[%c0_57, %c0_58] : memref<128x128xf32, #tpu.memory_space<vmem>>, vector<128x128xf32>
    %cst_59 = arith.constant dense<0.000000e+00> : vector<128x128xf32>
    %180 = tpu.matmul %178, %179, %cst_59 {dimension_numbers = #tpu.dot_dimension_numbers<[1], [0], [0], [1], [0, 0, 1, 1], [], []>} : vector<128x128xf32>, vector<128x128xf32>, vector<128x128xf32> -> vector<128x128xf32>
    %181 = arith.addf %177, %180 : vector<128x128xf32>
    %182 = math.tanh %181 : vector<128x128xf32>
    %cst_60 = arith.constant 1.000000e+00 : f32
    %183 = vector.broadcast %cst_60 : f32 to vector<128x128xf32>
    %184 = arith.subf %183, %168 : vector<128x128xf32>
    %185 = arith.mulf %184, %157 : vector<128x128xf32>
    %186 = arith.mulf %168, %182 : vector<128x128xf32>
    %187 = arith.addf %185, %186 : vector<128x128xf32>
    %188 = vector.extract_strided_slice %6 {offsets = [768, 0], sizes = [128, 384], strides = [1, 1]} : vector<1024x384xf32> to vector<128x384xf32>
    %c0_61 = arith.constant 0 : index
    %c0_62 = arith.constant 0 : index
    %189 = vector.load %arg3[%c0_61, %c0_62] : memref<128x256xf32, #tpu.memory_space<vmem>>, vector<128x256xf32>
    %cst_63 = arith.constant dense<0.000000e+00> : vector<128x256xf32>
    %190 = tpu.matmul %187, %189, %cst_63 {dimension_numbers = #tpu.dot_dimension_numbers<[1], [0], [0], [1], [0, 0, 1, 1], [], []>} : vector<128x128xf32>, vector<128x256xf32>, vector<128x256xf32> -> vector<128x256xf32>
    %191 = vector.extract_strided_slice %188 {offsets = [0, 0], sizes = [128, 128], strides = [1, 1]} : vector<128x384xf32> to vector<128x128xf32>
    %192 = vector.extract_strided_slice %190 {offsets = [0, 0], sizes = [128, 128], strides = [1, 1]} : vector<128x256xf32> to vector<128x128xf32>
    %193 = arith.addf %191, %192 : vector<128x128xf32>
    %194 = arith.negf %193 : vector<128x128xf32>
    %195 = math.exp %194 : vector<128x128xf32>
    %cst_64 = arith.constant 1.000000e+00 : f32
    %196 = vector.broadcast %cst_64 : f32 to vector<128x128xf32>
    %197 = arith.addf %196, %195 : vector<128x128xf32>
    %198 = arith.divf %196, %197 : vector<128x128xf32>
    %199 = vector.extract_strided_slice %188 {offsets = [0, 128], sizes = [128, 128], strides = [1, 1]} : vector<128x384xf32> to vector<128x128xf32>
    %200 = vector.extract_strided_slice %190 {offsets = [0, 128], sizes = [128, 128], strides = [1, 1]} : vector<128x256xf32> to vector<128x128xf32>
    %201 = arith.addf %199, %200 : vector<128x128xf32>
    %202 = arith.negf %201 : vector<128x128xf32>
    %203 = math.exp %202 : vector<128x128xf32>
    %cst_65 = arith.constant 1.000000e+00 : f32
    %204 = vector.broadcast %cst_65 : f32 to vector<128x128xf32>
    %205 = arith.addf %204, %203 : vector<128x128xf32>
    %206 = arith.divf %204, %205 : vector<128x128xf32>
    %207 = vector.extract_strided_slice %188 {offsets = [0, 256], sizes = [128, 128], strides = [1, 1]} : vector<128x384xf32> to vector<128x128xf32>
    %208 = arith.mulf %206, %187 : vector<128x128xf32>
    %c0_66 = arith.constant 0 : index
    %c0_67 = arith.constant 0 : index
    %209 = vector.load %arg4[%c0_66, %c0_67] : memref<128x128xf32, #tpu.memory_space<vmem>>, vector<128x128xf32>
    %cst_68 = arith.constant dense<0.000000e+00> : vector<128x128xf32>
    %210 = tpu.matmul %208, %209, %cst_68 {dimension_numbers = #tpu.dot_dimension_numbers<[1], [0], [0], [1], [0, 0, 1, 1], [], []>} : vector<128x128xf32>, vector<128x128xf32>, vector<128x128xf32> -> vector<128x128xf32>
    %211 = arith.addf %207, %210 : vector<128x128xf32>
    %212 = math.tanh %211 : vector<128x128xf32>
    %cst_69 = arith.constant 1.000000e+00 : f32
    %213 = vector.broadcast %cst_69 : f32 to vector<128x128xf32>
    %214 = arith.subf %213, %198 : vector<128x128xf32>
    %215 = arith.mulf %214, %187 : vector<128x128xf32>
    %216 = arith.mulf %198, %212 : vector<128x128xf32>
    %217 = arith.addf %215, %216 : vector<128x128xf32>
    %218 = vector.extract_strided_slice %6 {offsets = [896, 0], sizes = [128, 384], strides = [1, 1]} : vector<1024x384xf32> to vector<128x384xf32>
    %c0_70 = arith.constant 0 : index
    %c0_71 = arith.constant 0 : index
    %219 = vector.load %arg3[%c0_70, %c0_71] : memref<128x256xf32, #tpu.memory_space<vmem>>, vector<128x256xf32>
    %cst_72 = arith.constant dense<0.000000e+00> : vector<128x256xf32>
    %220 = tpu.matmul %217, %219, %cst_72 {dimension_numbers = #tpu.dot_dimension_numbers<[1], [0], [0], [1], [0, 0, 1, 1], [], []>} : vector<128x128xf32>, vector<128x256xf32>, vector<128x256xf32> -> vector<128x256xf32>
    %221 = vector.extract_strided_slice %218 {offsets = [0, 0], sizes = [128, 128], strides = [1, 1]} : vector<128x384xf32> to vector<128x128xf32>
    %222 = vector.extract_strided_slice %220 {offsets = [0, 0], sizes = [128, 128], strides = [1, 1]} : vector<128x256xf32> to vector<128x128xf32>
    %223 = arith.addf %221, %222 : vector<128x128xf32>
    %224 = arith.negf %223 : vector<128x128xf32>
    %225 = math.exp %224 : vector<128x128xf32>
    %cst_73 = arith.constant 1.000000e+00 : f32
    %226 = vector.broadcast %cst_73 : f32 to vector<128x128xf32>
    %227 = arith.addf %226, %225 : vector<128x128xf32>
    %228 = arith.divf %226, %227 : vector<128x128xf32>
    %229 = vector.extract_strided_slice %218 {offsets = [0, 128], sizes = [128, 128], strides = [1, 1]} : vector<128x384xf32> to vector<128x128xf32>
    %230 = vector.extract_strided_slice %220 {offsets = [0, 128], sizes = [128, 128], strides = [1, 1]} : vector<128x256xf32> to vector<128x128xf32>
    %231 = arith.addf %229, %230 : vector<128x128xf32>
    %232 = arith.negf %231 : vector<128x128xf32>
    %233 = math.exp %232 : vector<128x128xf32>
    %cst_74 = arith.constant 1.000000e+00 : f32
    %234 = vector.broadcast %cst_74 : f32 to vector<128x128xf32>
    %235 = arith.addf %234, %233 : vector<128x128xf32>
    %236 = arith.divf %234, %235 : vector<128x128xf32>
    %237 = vector.extract_strided_slice %218 {offsets = [0, 256], sizes = [128, 128], strides = [1, 1]} : vector<128x384xf32> to vector<128x128xf32>
    %238 = arith.mulf %236, %217 : vector<128x128xf32>
    %c0_75 = arith.constant 0 : index
    %c0_76 = arith.constant 0 : index
    %239 = vector.load %arg4[%c0_75, %c0_76] : memref<128x128xf32, #tpu.memory_space<vmem>>, vector<128x128xf32>
    %cst_77 = arith.constant dense<0.000000e+00> : vector<128x128xf32>
    %240 = tpu.matmul %238, %239, %cst_77 {dimension_numbers = #tpu.dot_dimension_numbers<[1], [0], [0], [1], [0, 0, 1, 1], [], []>} : vector<128x128xf32>, vector<128x128xf32>, vector<128x128xf32> -> vector<128x128xf32>
    %241 = arith.addf %237, %240 : vector<128x128xf32>
    %242 = math.tanh %241 : vector<128x128xf32>
    %cst_78 = arith.constant 1.000000e+00 : f32
    %243 = vector.broadcast %cst_78 : f32 to vector<128x128xf32>
    %244 = arith.subf %243, %228 : vector<128x128xf32>
    %245 = arith.mulf %244, %217 : vector<128x128xf32>
    %246 = arith.mulf %228, %242 : vector<128x128xf32>
    %247 = arith.addf %245, %246 : vector<128x128xf32>
    %c0_79 = arith.constant 0 : index
    %c0_80 = arith.constant 0 : index
    %248 = vector.load %arg6[%c0_79, %c0_80] : memref<128x128xf32, #tpu.memory_space<vmem>>, vector<128x128xf32>
    tpu.vector_store %arg6[%c0_79, %c0_80], %247 {strides = array<i32>} : memref<128x128xf32, #tpu.memory_space<vmem>>, vector<128x128xf32>,
    return
  }
  func.func @transform_0(%arg0: i32) -> (i32, i32, i32) {
    %c0_i32 = arith.constant 0 : i32
    %c0_i32_0 = arith.constant 0 : i32
    %c0_i32_1 = arith.constant 0 : i32
    return %arg0, %c0_i32, %c0_i32_0 : i32, i32, i32
  }
  func.func @transform_1(%arg0: i32) -> (i32, i32) {
    %c0_i32 = arith.constant 0 : i32
    %c0_i32_0 = arith.constant 0 : i32
    %c0_i32_1 = arith.constant 0 : i32
    return %c0_i32, %c0_i32_0 : i32, i32
  }
  func.func @transform_2(%arg0: i32) -> (i32, i32) {
    %c0_i32 = arith.constant 0 : i32
    %c0_i32_0 = arith.constant 0 : i32
    %c0_i32_1 = arith.constant 0 : i32
    return %c0_i32, %c0_i32_0 : i32, i32
  }
  func.func @transform_3(%arg0: i32) -> (i32, i32) {
    %c0_i32 = arith.constant 0 : i32
    %c0_i32_0 = arith.constant 0 : i32
    %c0_i32_1 = arith.constant 0 : i32
    return %c0_i32, %c0_i32_0 : i32, i32
  }
  func.func @transform_4(%arg0: i32) -> (i32, i32) {
    %c0_i32 = arith.constant 0 : i32
    %c0_i32_0 = arith.constant 0 : i32
    %c0_i32_1 = arith.constant 0 : i32
    return %c0_i32, %c0_i32_0 : i32, i32
  }
  func.func @transform_5(%arg0: i32) -> (i32, i32) {
    %c0_i32 = arith.constant 0 : i32
    %c0_i32_0 = arith.constant 0 : i32
    return %arg0, %c0_i32 : i32, i32
  }
}

</mosaic_0001>

<llo_original>
// kernel: tpu_custom_call.1
$region0: #{tpu_custom_call.1}
  #allocation0 [shape = 'u32[]', space=smem, size = 0x4, offset = 0x4, fixed_abs, tag = 'smem constant byte address 0x4 - core index']
  #allocation1 [shape = 'u32[144,128]{1,0:T(1,128)}', space=vmem, size = 0x12000, scoped, tag = 'internal scratch']
  %s0 = inlined_call_operand.vmem [shape: f32[2,1024,16], index: 0, kind: input, shape index: {}]
  %s1 = inlined_call_operand.vmem [shape: f32[16,384], index: 1, kind: input, shape index: {}]
  %s2 = inlined_call_operand.vmem [shape: f32[128,256], index: 2, kind: input, shape index: {}]
  %s3 = inlined_call_operand.vmem [shape: f32[128,128], index: 3, kind: input, shape index: {}]
  %s4 = inlined_call_operand.vmem [shape: f32[1,384], index: 4, kind: input, shape index: {}]
  %s5 = inlined_call_operand.hbm [shape: f32[256,128], index: 5, kind: output, shape index: {}]
  %s6 = sld [smem:[#allocation0]]
  $region53: #{tpu_custom_call.1} parent=0
    _
  %s8 = ssub.s32 1, %s6
  %s9 = scalar_select 0, %s8, %s6
  $region1: #{tpu_custom_call.1} parent=0
    #allocation2 [shape = 'u8[131072]{0}', space=vmem, size = 0x20000, scoped, tag = 'output window, operand 0']
    #allocation3 [shape = 's32[2]{0}', space=sflag, size = 0x8, scoped, tag = 'scoped memory for tpu_custom_call.1']
    %10 = vsyncpa [#allocation3], 0
    %s11 = scalar_lea.sflag [#allocation3], 1
    %12 = vsyncpa %s11, 0
    loop: start=0, step=1, limit=4
    $region2: #{tpu_custom_call.1} parent=1 // loop_pre_header
      _
    $region3: #{tpu_custom_call.1} parent=1 // loop_header
      %s14 = sphi 0, %s18
      %p15 = scmp.ge.s32.totalorder %s14, 4
      %s24 = sphi 0, %s26
      %s27 = sphi 0, %s24
      %s28 = sphi 0, %s27
      %s44 = sphi 0, %s28
      %s48 = sphi 0, %s48
      %s50 = sphi 0, %s48
      %s51 = sphi 0, %s50
      %s65 = sphi 0, %s51
      %s69 = sphi 0, %s69
      %s71 = sphi 0, %s69
      %s72 = sphi 0, %s71
      %s86 = sphi 0, %s72
      %s90 = sphi 0, %s90
      %s92 = sphi 0, %s90
      %s93 = sphi 0, %s92
      %s107 = sphi 0, %s93
      %s111 = sphi 0, %s111
      %s113 = sphi 0, %s111
      %s114 = sphi 0, %s113
      %s128 = sphi 0, %s114
      %s134 = sphi 0, %s136
      %s137 = sphi 0, %s134
      %s138 = sphi 0, %s137
      %s154 = sphi 0, %s138
    $region4: #{tpu_custom_call.1} parent=1 // loop_header_branch
      %17 = sbr.rel (%p15) target = $region8
    $region5: #{tpu_custom_call.1} parent=1 // loop_body
      %s19 = ssub.s32 %s14, 1
      %s20 = ssub.s32 %s14, 2
      %s21 = sadd.s32 %s14, 1
      %s22 = ssub.s32 %s14, %s21
      %p23 = scmp.eq.s32.totalorder %s22, 0
      %s25 = sadd.s32 %s24, 1
      %s26 = scalar_select %p23, %s24, %s25
      %p29 = pneg %p23
      %p30 = scmp.eq.s32.totalorder %s14, 1
      %p31 = por %p29, %p30
      %p32 = scmp.ne.s32.totalorder %s24, %s27
      %p33 = scmp.eq.s32.totalorder %s14, 0
      %p34 = por %p32, %p33
      %p35 = scmp.ne.s32.totalorder %s24, %s27
      %p36 = scmp.eq.s32.totalorder %s19, 1
      %p37 = por %p35, %p36
      %p38 = scmp.ne.s32.totalorder %s27, %s28
      %p39 = scmp.eq.s32.totalorder %s19, 0
      %p40 = por %p38, %p39
      %p41 = scmp.ne.s32.totalorder %s27, %s28
      %p42 = scmp.eq.s32.totalorder %s20, 1
      %p43 = por %p41, %p42
      %p45 = scmp.ne.s32.totalorder %s28, %s44
      %p46 = scmp.eq.s32.totalorder %s20, 0
      %p47 = por %p45, %p46
      %s49 = sadd.s32 %s48, 1
      %p52 = scmp.eq.s32.totalorder %s14, 1
      %p53 = scmp.ne.s32.totalorder %s48, %s50
      %p54 = scmp.eq.s32.totalorder %s14, 0
      %p55 = por %p53, %p54
      %p56 = scmp.ne.s32.totalorder %s48, %s50
      %p57 = scmp.eq.s32.totalorder %s19, 1
      %p58 = por %p56, %p57
      %p59 = scmp.ne.s32.totalorder %s50, %s51
      %p60 = scmp.eq.s32.totalorder %s19, 0
      %p61 = por %p59, %p60
      %p62 = scmp.ne.s32.totalorder %s50, %s51
      %p63 = scmp.eq.s32.totalorder %s20, 1
      %p64 = por %p62, %p63
      %p66 = scmp.ne.s32.totalorder %s51, %s65
      %p67 = scmp.eq.s32.totalorder %s20, 0
      %p68 = por %p66, %p67
      %s70 = sadd.s32 %s69, 1
      %p73 = scmp.eq.s32.totalorder %s14, 1
      %p74 = scmp.ne.s32.totalorder %s69, %s71
      %p75 = scmp.eq.s32.totalorder %s14, 0
      %p76 = por %p74, %p75
      %p77 = scmp.ne.s32.totalorder %s69, %s71
      %p78 = scmp.eq.s32.totalorder %s19, 1
      %p79 = por %p77, %p78
      %p80 = scmp.ne.s32.totalorder %s71, %s72
      %p81 = scmp.eq.s32.totalorder %s19, 0
      %p82 = por %p80, %p81
      %p83 = scmp.ne.s32.totalorder %s71, %s72
      %p84 = scmp.eq.s32.totalorder %s20, 1
      %p85 = por %p83, %p84
      %p87 = scmp.ne.s32.totalorder %s72, %s86
      %p88 = scmp.eq.s32.totalorder %s20, 0
      %p89 = por %p87, %p88
      %s91 = sadd.s32 %s90, 1
      %p94 = scmp.eq.s32.totalorder %s14, 1
      %p95 = scmp.ne.s32.totalorder %s90, %s92
      %p96 = scmp.eq.s32.totalorder %s14, 0
      %p97 = por %p95, %p96
      %p98 = scmp.ne.s32.totalorder %s90, %s92
      %p99 = scmp.eq.s32.totalorder %s19, 1
      %p100 = por %p98, %p99
      %p101 = scmp.ne.s32.totalorder %s92, %s93
      %p102 = scmp.eq.s32.totalorder %s19, 0
      %p103 = por %p101, %p102
      %p104 = scmp.ne.s32.totalorder %s92, %s93
      %p105 = scmp.eq.s32.totalorder %s20, 1
      %p106 = por %p104, %p105
      %p108 = scmp.ne.s32.totalorder %s93, %s107
      %p109 = scmp.eq.s32.totalorder %s20, 0
      %p110 = por %p108, %p109
      %s112 = sadd.s32 %s111, 1
      %p115 = scmp.eq.s32.totalorder %s14, 1
      %p116 = scmp.ne.s32.totalorder %s111, %s113
      %p117 = scmp.eq.s32.totalorder %s14, 0
      %p118 = por %p116, %p117
      %p119 = scmp.ne.s32.totalorder %s111, %s113
      %p120 = scmp.eq.s32.totalorder %s19, 1
      %p121 = por %p119, %p120
      %p122 = scmp.ne.s32.totalorder %s113, %s114
      %p123 = scmp.eq.s32.totalorder %s19, 0
      %p124 = por %p122, %p123
      %p125 = scmp.ne.s32.totalorder %s113, %s114
      %p126 = scmp.eq.s32.totalorder %s20, 1
      %p127 = por %p125, %p126
      %p129 = scmp.ne.s32.totalorder %s114, %s128
      %p130 = scmp.eq.s32.totalorder %s20, 0
      %p131 = por %p129, %p130
      %s132 = ssub.s32 %s14, %s21
      %p133 = scmp.eq.s32.totalorder %s132, 0
      %s135 = sadd.s32 %s134, 1
      %s136 = scalar_select %p133, %s134, %s135
      %p139 = pneg %p133
      %p140 = scmp.eq.s32.totalorder %s14, 1
      %p141 = por %p139, %p140
      %p142 = scmp.ne.s32.totalorder %s134, %s137
      %p143 = scmp.eq.s32.totalorder %s14, 0
      %p144 = por %p142, %p143
      %p145 = scmp.ne.s32.totalorder %s134, %s137
      %p146 = scmp.eq.s32.totalorder %s19, 1
      %p147 = por %p145, %p146
      %p148 = scmp.ne.s32.totalorder %s137, %s138
      %p149 = scmp.eq.s32.totalorder %s19, 0
      %p150 = por %p148, %p149
      %p151 = scmp.ne.s32.totalorder %s137, %s138
      %p152 = scmp.eq.s32.totalorder %s20, 1
      %p153 = por %p151, %p152
      %p155 = scmp.ne.s32.totalorder %s138, %s154
      %p156 = scmp.eq.s32.totalorder %s20, 0
      %p157 = por %p155, %p156
      %p158 = scmp.le.s32.totalorder 1, %s14
      %p159 = scmp.lt.s32.totalorder %s14, 3
      %p160 = pnand %p158, %p159
      %p161 = pneg %p160
      // Predicated region
      $region9: #{tpu_custom_call.1} parent=5 // pred_check
        _
      $region10: #{tpu_custom_call.1} parent=5 // pred_check_branch
        %163 = sbr.rel (%p160) target = $region12
      $region11: #{tpu_custom_call.1} parent=5 // pred_region
        %s164 = ssub.s32 %s14, 1
        // Predicated region
        $region13: #{tpu_custom_call.1} parent=11 // pred_check
          %p165 = pneg %p61
        $region14: #{tpu_custom_call.1} parent=11 // pred_check_branch
          %167 = sbr.rel (%p165) target = $region16
        $region15: #{tpu_custom_call.1} parent=11 // pred_region
          _
        $region16: #{tpu_custom_call.1} parent=11 // pred_fallthru
          _
        // Predicated region
        $region17: #{tpu_custom_call.1} parent=11 // pred_check
          %p168 = pneg %p82
        $region18: #{tpu_custom_call.1} parent=11 // pred_check_branch
          %170 = sbr.rel (%p168) target = $region20
        $region19: #{tpu_custom_call.1} parent=11 // pred_region
          _
        $region20: #{tpu_custom_call.1} parent=11 // pred_fallthru
          _
        // Predicated region
        $region21: #{tpu_custom_call.1} parent=11 // pred_check
          %p171 = pneg %p103
        $region22: #{tpu_custom_call.1} parent=11 // pred_check_branch
          %173 = sbr.rel (%p171) target = $region24
        $region23: #{tpu_custom_call.1} parent=11 // pred_region
          _
        $region24: #{tpu_custom_call.1} parent=11 // pred_fallthru
          _
        // Predicated region
        $region25: #{tpu_custom_call.1} parent=11 // pred_check
          %p174 = pneg %p124
        $region26: #{tpu_custom_call.1} parent=11 // pred_check_branch
          %176 = sbr.rel (%p174) target = $region28
        $region27: #{tpu_custom_call.1} parent=11 // pred_region
          _
        $region28: #{tpu_custom_call.1} parent=11 // pred_fallthru
          _
      $region12: #{tpu_custom_call.1} parent=5 // pred_fallthru
        _
      %p177 = scmp.lt.s32.totalorder %s14, 2
      // Predicated region
      $region29: #{tpu_custom_call.1} parent=5 // pred_check
        %p178 = pneg %p177
      $region30: #{tpu_custom_call.1} parent=5 // pred_check_branch
        %180 = sbr.rel (%p178) target = $region32
      $region31: #{tpu_custom_call.1} parent=5 // pred_region
        // Predicated region
        $region33: #{tpu_custom_call.1} parent=31 // pred_check
          %p181 = pneg %p34
        $region34: #{tpu_custom_call.1} parent=31 // pred_check_branch
          %183 = sbr.rel (%p181) target = $region36
        $region35: #{tpu_custom_call.1} parent=31 // pred_region
          %p184 = scmp.lt.s32.totalorder %s14, 1
          %s185 = scalar_select %p184, %s14, 1
          %s186 = smul.addr %s185, 128
          %s187 = smul.addr %s186, 8
          %s188 = scalar_lea.vmem %s0, %s187
        $region36: #{tpu_custom_call.1} parent=31 // pred_fallthru
          _
      $region32: #{tpu_custom_call.1} parent=5 // pred_fallthru
        _
      %p189 = scmp.le.s32.totalorder 1, %s14
      %p190 = scmp.lt.s32.totalorder %s14, 3
      %p191 = pnand %p189, %p190
      %p192 = pneg %p191
      // Predicated region
      $region37: #{tpu_custom_call.1} parent=5 // pred_check
        _
      $region38: #{tpu_custom_call.1} parent=5 // pred_check_branch
        %194 = sbr.rel (%p191) target = $region40
      $region39: #{tpu_custom_call.1} parent=5 // pred_region
        %s195 = ssub.s32 %s14, 1
        %p196 = scmp.lt.s32.totalorder %s19, 1
        %s197 = scalar_select %p196, %s19, 1
        %s198 = smul.addr %s197, 128
        %s199 = smul.addr %s198, 8
        %s200 = scalar_lea.vmem %s0, %s199
        %p201 = pneg %p40
        %p202 = pneg %p37
        %p203 = pneg %p61
        %p204 = pneg %p58
        %p205 = pneg %p82
        %p206 = pneg %p79
        %p207 = pneg %p103
        %p208 = pneg %p100
        %p209 = pneg %p124
        %p210 = pneg %p121
        %p211 = pneg %p150
        %p212 = pneg %p147
        %s213 = sand.u32 %s137, 1
        %s214 = scalar_lea.sflag [#allocation3], %s213
        %s215 = sand.u32 %s137, 1
        %s216 = smul.addr %s215, 128
        %s217 = scalar_lea.vmem [#allocation2], %s216
        %p218 = scmp.lt.s32.totalorder %s19, 1
        %s219 = scalar_select %p218, %s19, 1
        %s220 = smul.addr %s219, 128
        %s221 = smul.addr %s220, 8
        %s222 = scalar_lea.vmem %s0, %s221
        %s223 = smul.u32 16, %s19
        %v224 = vld [vmem:[%s222] sm:$0xff]
        %v225 = vld [vmem:[%s222 + $0x8] sm:$0xff]
        %v226 = vld [vmem:[%s222 + $0x10] sm:$0xff]
        %v227 = vld [vmem:[%s222 + $0x18] sm:$0xff]
        %v228 = vld [vmem:[%s222 + $0x20] sm:$0xff]
        %v229 = vld [vmem:[%s222 + $0x28] sm:$0xff]
        %v230 = vld [vmem:[%s222 + $0x30] sm:$0xff]
        %v231 = vld [vmem:[%s222 + $0x38] sm:$0xff]
        %v232 = vld [vmem:[%s222 + $0x40] sm:$0xff]
        %v233 = vld [vmem:[%s222 + $0x48] sm:$0xff]
        %v234 = vld [vmem:[%s222 + $0x50] sm:$0xff]
        %v235 = vld [vmem:[%s222 + $0x58] sm:$0xff]
        %v236 = vld [vmem:[%s222 + $0x60] sm:$0xff]
        %v237 = vld [vmem:[%s222 + $0x68] sm:$0xff]
        %v238 = vld [vmem:[%s222 + $0x70] sm:$0xff]
        %v239 = vld [vmem:[%s222 + $0x78] sm:$0xff]
        %v240 = vld [vmem:[%s222 + $0x80] sm:$0xff]
        %v241 = vld [vmem:[%s222 + $0x88] sm:$0xff]
        %v242 = vld [vmem:[%s222 + $0x90] sm:$0xff]
        %v243 = vld [vmem:[%s222 + $0x98] sm:$0xff]
        %v244 = vld [vmem:[%s222 + $0xa0] sm:$0xff]
        %v245 = vld [vmem:[%s222 + $0xa8] sm:$0xff]
        %v246 = vld [vmem:[%s222 + $0xb0] sm:$0xff]
        %v247 = vld [vmem:[%s222 + $0xb8] sm:$0xff]
        %v248 = vld [vmem:[%s222 + $0xc0] sm:$0xff]
        %v249 = vld [vmem:[%s222 + $0xc8] sm:$0xff]
        %v250 = vld [vmem:[%s222 + $0xd0] sm:$0xff]
        %v251 = vld [vmem:[%s222 + $0xd8] sm:$0xff]
        %v252 = vld [vmem:[%s222 + $0xe0] sm:$0xff]
        %v253 = vld [vmem:[%s222 + $0xe8] sm:$0xff]
        %v254 = vld [vmem:[%s222 + $0xf0] sm:$0xff]
        %v255 = vld [vmem:[%s222 + $0xf8] sm:$0xff]
        %v256 = vld [vmem:[%s222 + $0x100] sm:$0xff]
        %v257 = vld [vmem:[%s222 + $0x108] sm:$0xff]
        %v258 = vld [vmem:[%s222 + $0x110] sm:$0xff]
        %v259 = vld [vmem:[%s222 + $0x118] sm:$0xff]
        %v260 = vld [vmem:[%s222 + $0x120] sm:$0xff]
        %v261 = vld [vmem:[%s222 + $0x128] sm:$0xff]
        %v262 = vld [vmem:[%s222 + $0x130] sm:$0xff]
        %v263 = vld [vmem:[%s222 + $0x138] sm:$0xff]
        %v264 = vld [vmem:[%s222 + $0x140] sm:$0xff]
        %v265 = vld [vmem:[%s222 + $0x148] sm:$0xff]
        %v266 = vld [vmem:[%s222 + $0x150] sm:$0xff]
        %v267 = vld [vmem:[%s222 + $0x158] sm:$0xff]
        %v268 = vld [vmem:[%s222 + $0x160] sm:$0xff]
        %v269 = vld [vmem:[%s222 + $0x168] sm:$0xff]
        %v270 = vld [vmem:[%s222 + $0x170] sm:$0xff]
        %v271 = vld [vmem:[%s222 + $0x178] sm:$0xff]
        %v272 = vld [vmem:[%s222 + $0x180] sm:$0xff]
        %v273 = vld [vmem:[%s222 + $0x188] sm:$0xff]
        %v274 = vld [vmem:[%s222 + $0x190] sm:$0xff]
        %v275 = vld [vmem:[%s222 + $0x198] sm:$0xff]
        %v276 = vld [vmem:[%s222 + $0x1a0] sm:$0xff]
        %v277 = vld [vmem:[%s222 + $0x1a8] sm:$0xff]
        %v278 = vld [vmem:[%s222 + $0x1b0] sm:$0xff]
        %v279 = vld [vmem:[%s222 + $0x1b8] sm:$0xff]
        %v280 = vld [vmem:[%s222 + $0x1c0] sm:$0xff]
        %v281 = vld [vmem:[%s222 + $0x1c8] sm:$0xff]
        %v282 = vld [vmem:[%s222 + $0x1d0] sm:$0xff]
        %v283 = vld [vmem:[%s222 + $0x1d8] sm:$0xff]
        %v284 = vld [vmem:[%s222 + $0x1e0] sm:$0xff]
        %v285 = vld [vmem:[%s222 + $0x1e8] sm:$0xff]
        %v286 = vld [vmem:[%s222 + $0x1f0] sm:$0xff]
        %v287 = vld [vmem:[%s222 + $0x1f8] sm:$0xff]
        %v288 = vld [vmem:[%s222 + $0x200] sm:$0xff]
        %v289 = vld [vmem:[%s222 + $0x208] sm:$0xff]
        %v290 = vld [vmem:[%s222 + $0x210] sm:$0xff]
        %v291 = vld [vmem:[%s222 + $0x218] sm:$0xff]
        %v292 = vld [vmem:[%s222 + $0x220] sm:$0xff]
        %v293 = vld [vmem:[%s222 + $0x228] sm:$0xff]
        %v294 = vld [vmem:[%s222 + $0x230] sm:$0xff]
        %v295 = vld [vmem:[%s222 + $0x238] sm:$0xff]
        %v296 = vld [vmem:[%s222 + $0x240] sm:$0xff]
        %v297 = vld [vmem:[%s222 + $0x248] sm:$0xff]
        %v298 = vld [vmem:[%s222 + $0x250] sm:$0xff]
        %v299 = vld [vmem:[%s222 + $0x258] sm:$0xff]
        %v300 = vld [vmem:[%s222 + $0x260] sm:$0xff]
        %v301 = vld [vmem:[%s222 + $0x268] sm:$0xff]
        %v302 = vld [vmem:[%s222 + $0x270] sm:$0xff]
        %v303 = vld [vmem:[%s222 + $0x278] sm:$0xff]
        %v304 = vld [vmem:[%s222 + $0x280] sm:$0xff]
        %v305 = vld [vmem:[%s222 + $0x288] sm:$0xff]
        %v306 = vld [vmem:[%s222 + $0x290] sm:$0xff]
        %v307 = vld [vmem:[%s222 + $0x298] sm:$0xff]
        %v308 = vld [vmem:[%s222 + $0x2a0] sm:$0xff]
        %v309 = vld [vmem:[%s222 + $0x2a8] sm:$0xff]
        %v310 = vld [vmem:[%s222 + $0x2b0] sm:$0xff]
        %v311 = vld [vmem:[%s222 + $0x2b8] sm:$0xff]
        %v312 = vld [vmem:[%s222 + $0x2c0] sm:$0xff]
        %v313 = vld [vmem:[%s222 + $0x2c8] sm:$0xff]
        %v314 = vld [vmem:[%s222 + $0x2d0] sm:$0xff]
        %v315 = vld [vmem:[%s222 + $0x2d8] sm:$0xff]
        %v316 = vld [vmem:[%s222 + $0x2e0] sm:$0xff]
        %v317 = vld [vmem:[%s222 + $0x2e8] sm:$0xff]
        %v318 = vld [vmem:[%s222 + $0x2f0] sm:$0xff]
        %v319 = vld [vmem:[%s222 + $0x2f8] sm:$0xff]
        %v320 = vld [vmem:[%s222 + $0x300] sm:$0xff]
        %v321 = vld [vmem:[%s222 + $0x308] sm:$0xff]
        %v322 = vld [vmem:[%s222 + $0x310] sm:$0xff]
        %v323 = vld [vmem:[%s222 + $0x318] sm:$0xff]
        %v324 = vld [vmem:[%s222 + $0x320] sm:$0xff]
        %v325 = vld [vmem:[%s222 + $0x328] sm:$0xff]
        %v326 = vld [vmem:[%s222 + $0x330] sm:$0xff]
        %v327 = vld [vmem:[%s222 + $0x338] sm:$0xff]
        %v328 = vld [vmem:[%s222 + $0x340] sm:$0xff]
        %v329 = vld [vmem:[%s222 + $0x348] sm:$0xff]
        %v330 = vld [vmem:[%s222 + $0x350] sm:$0xff]
        %v331 = vld [vmem:[%s222 + $0x358] sm:$0xff]
        %v332 = vld [vmem:[%s222 + $0x360] sm:$0xff]
        %v333 = vld [vmem:[%s222 + $0x368] sm:$0xff]
        %v334 = vld [vmem:[%s222 + $0x370] sm:$0xff]
        %v335 = vld [vmem:[%s222 + $0x378] sm:$0xff]
        %v336 = vld [vmem:[%s222 + $0x380] sm:$0xff]
        %v337 = vld [vmem:[%s222 + $0x388] sm:$0xff]
        %v338 = vld [vmem:[%s222 + $0x390] sm:$0xff]
        %v339 = vld [vmem:[%s222 + $0x398] sm:$0xff]
        %v340 = vld [vmem:[%s222 + $0x3a0] sm:$0xff]
        %v341 = vld [vmem:[%s222 + $0x3a8] sm:$0xff]
        %v342 = vld [vmem:[%s222 + $0x3b0] sm:$0xff]
        %v343 = vld [vmem:[%s222 + $0x3b8] sm:$0xff]
        %v344 = vld [vmem:[%s222 + $0x3c0] sm:$0xff]
        %v345 = vld [vmem:[%s222 + $0x3c8] sm:$0xff]
        %v346 = vld [vmem:[%s222 + $0x3d0] sm:$0xff]
        %v347 = vld [vmem:[%s222 + $0x3d8] sm:$0xff]
        %v348 = vld [vmem:[%s222 + $0x3e0] sm:$0xff]
        %v349 = vld [vmem:[%s222 + $0x3e8] sm:$0xff]
        %v350 = vld [vmem:[%s222 + $0x3f0] sm:$0xff]
        %v351 = vld [vmem:[%s222 + $0x3f8] sm:$0xff]
        %v352 = vld [vmem:[%s1] sm:$0xff]
        %v353 = vld [vmem:[%s1 + $0x8] sm:$0xff]
        %v354 = vld [vmem:[%s1 + $0x10] sm:$0xff]
        %v355 = vld [vmem:[%s1 + $0x18] sm:$0xff]
        %v356 = vld [vmem:[%s1 + $0x20] sm:$0xff]
        %v357 = vld [vmem:[%s1 + $0x28] sm:$0xff]
        %v358 = vld [vmem:[%s4] sm:$0x7]
        %v360 = vlaneseq
        %v361 = vshrl.u32 %v360, 7
        %v362 = vsub.s32 0, %v361
        %v363 = vrot.slane %v358, %v362
        %v364 = vlaneseq
        %v365 = vshrl.u32 %v364, 7
        %v366 = vsub.s32 1, %v365
        %v367 = vrot.slane %v358, %v366
        %v368 = vlaneseq
        %v369 = vshrl.u32 %v368, 7
        %v370 = vsub.s32 2, %v369
        %v371 = vrot.slane %v358, %v370
        %vm375 = vcmask 130048
        %v377 = vsel %vm375, %v224, 0
        %v380 = vsel %vm375, %v225, 0
        %v383 = vsel %vm375, %v226, 0
        %v386 = vsel %vm375, %v227, 0
        %v389 = vsel %vm375, %v228, 0
        %v392 = vsel %vm375, %v229, 0
        %v395 = vsel %vm375, %v230, 0
        %v398 = vsel %vm375, %v231, 0
        %v401 = vsel %vm375, %v232, 0
        %v404 = vsel %vm375, %v233, 0
        %v407 = vsel %vm375, %v234, 0
        %v410 = vsel %vm375, %v235, 0
        %v413 = vsel %vm375, %v236, 0
        %v416 = vsel %vm375, %v237, 0
        %v419 = vsel %vm375, %v238, 0
        %v422 = vsel %vm375, %v239, 0
        %v425 = vsel %vm375, %v240, 0
        %v428 = vsel %vm375, %v241, 0
        %v431 = vsel %vm375, %v242, 0
        %v434 = vsel %vm375, %v243, 0
        %v437 = vsel %vm375, %v244, 0
        %v440 = vsel %vm375, %v245, 0
        %v443 = vsel %vm375, %v246, 0
        %v446 = vsel %vm375, %v247, 0
        %v449 = vsel %vm375, %v248, 0
        %v452 = vsel %vm375, %v249, 0
        %v455 = vsel %vm375, %v250, 0
        %v458 = vsel %vm375, %v251, 0
        %v461 = vsel %vm375, %v252, 0
        %v464 = vsel %vm375, %v253, 0
        %v467 = vsel %vm375, %v254, 0
        %v470 = vsel %vm375, %v255, 0
        %v473 = vsel %vm375, %v256, 0
        %v476 = vsel %vm375, %v257, 0
        %v479 = vsel %vm375, %v258, 0
        %v482 = vsel %vm375, %v259, 0
        %v485 = vsel %vm375, %v260, 0
        %v488 = vsel %vm375, %v261, 0
        %v491 = vsel %vm375, %v262, 0
        %v494 = vsel %vm375, %v263, 0
        %v497 = vsel %vm375, %v264, 0
        %v500 = vsel %vm375, %v265, 0
        %v503 = vsel %vm375, %v266, 0
        %v506 = vsel %vm375, %v267, 0
        %v509 = vsel %vm375, %v268, 0
        %v512 = vsel %vm375, %v269, 0
        %v515 = vsel %vm375, %v270, 0
        %v518 = vsel %vm375, %v271, 0
        %v521 = vsel %vm375, %v272, 0
        %v524 = vsel %vm375, %v273, 0
        %v527 = vsel %vm375, %v274, 0
        %v530 = vsel %vm375, %v275, 0
        %v533 = vsel %vm375, %v276, 0
        %v536 = vsel %vm375, %v277, 0
        %v539 = vsel %vm375, %v278, 0
        %v542 = vsel %vm375, %v279, 0
        %v545 = vsel %vm375, %v280, 0
        %v548 = vsel %vm375, %v281, 0
        %v551 = vsel %vm375, %v282, 0
        %v554 = vsel %vm375, %v283, 0
        %v557 = vsel %vm375, %v284, 0
        %v560 = vsel %vm375, %v285, 0
        %v563 = vsel %vm375, %v286, 0
        %v566 = vsel %vm375, %v287, 0
        %v569 = vsel %vm375, %v288, 0
        %v572 = vsel %vm375, %v289, 0
        %v575 = vsel %vm375, %v290, 0
        %v578 = vsel %vm375, %v291, 0
        %v581 = vsel %vm375, %v292, 0
        %v584 = vsel %vm375, %v293, 0
        %v587 = vsel %vm375, %v294, 0
        %v590 = vsel %vm375, %v295, 0
        %v593 = vsel %vm375, %v296, 0
        %v596 = vsel %vm375, %v297, 0
        %v599 = vsel %vm375, %v298, 0
        %v602 = vsel %vm375, %v299, 0
        %v605 = vsel %vm375, %v300, 0
        %v608 = vsel %vm375, %v301, 0
        %v611 = vsel %vm375, %v302, 0
        %v614 = vsel %vm375, %v303, 0
        %v617 = vsel %vm375, %v304, 0
        %v620 = vsel %vm375, %v305, 0
        %v623 = vsel %vm375, %v306, 0
        %v626 = vsel %vm375, %v307, 0
        %v629 = vsel %vm375, %v308, 0
        %v632 = vsel %vm375, %v309, 0
        %v635 = vsel %vm375, %v310, 0
        %v638 = vsel %vm375, %v311, 0
        %v641 = vsel %vm375, %v312, 0
        %v644 = vsel %vm375, %v313, 0
        %v647 = vsel %vm375, %v314, 0
        %v650 = vsel %vm375, %v315, 0
        %v653 = vsel %vm375, %v316, 0
        %v656 = vsel %vm375, %v317, 0
        %v659 = vsel %vm375, %v318, 0
        %v662 = vsel %vm375, %v319, 0
        %v665 = vsel %vm375, %v320, 0
        %v668 = vsel %vm375, %v321, 0
        %v671 = vsel %vm375, %v322, 0
        %v674 = vsel %vm375, %v323, 0
        %v677 = vsel %vm375, %v324, 0
        %v680 = vsel %vm375, %v325, 0
        %v683 = vsel %vm375, %v326, 0
        %v686 = vsel %vm375, %v327, 0
        %v689 = vsel %vm375, %v328, 0
        %v692 = vsel %vm375, %v329, 0
        %v695 = vsel %vm375, %v330, 0
        %v698 = vsel %vm375, %v331, 0
        %v701 = vsel %vm375, %v332, 0
        %v704 = vsel %vm375, %v333, 0
        %v707 = vsel %vm375, %v334, 0
        %v710 = vsel %vm375, %v335, 0
        %v713 = vsel %vm375, %v336, 0
        %v716 = vsel %vm375, %v337, 0
        %v719 = vsel %vm375, %v338, 0
        %v722 = vsel %vm375, %v339, 0
        %v725 = vsel %vm375, %v340, 0
        %v728 = vsel %vm375, %v341, 0
        %v731 = vsel %vm375, %v342, 0
        %v734 = vsel %vm375, %v343, 0
        %v737 = vsel %vm375, %v344, 0
        %v740 = vsel %vm375, %v345, 0
        %v743 = vsel %vm375, %v346, 0
        %v746 = vsel %vm375, %v347, 0
        %v749 = vsel %vm375, %v348, 0
        %v752 = vsel %vm375, %v349, 0
        %v755 = vsel %vm375, %v350, 0
        %v758 = vsel %vm375, %v351, 0
        %760 = vmatprep.subr.mxu0 %v353
        %761 = vmatpush1.msra.mxu0 %v352
        %762 = vmatprep.subr.mxu0 %v356
        %763 = vmatpush1.msra.mxu0 %v355
        %764 = vmatprep.subr.mxu0 0.0
        %765 = vmatpush1.msra.mxu0 0.0
        %766 = vmatprep.subr.mxu0 0.0
        %767 = vmatpush1.msra.mxu0 0.0
        %768 = vmatprep.subr.mxu0 0.0
        %769 = vmatpush1.msra.mxu0 0.0
        %770 = vmatprep.subr.mxu0 0.0
        %771 = vmatpush1.msra.mxu0 0.0
        %772 = vmatprep.subr.mxu0 0.0
        %773 = vmatpush1.msra.mxu0 0.0
        %774 = vmatprep.subr.mxu0 0.0
        %775 = vmatpush1.msra.mxu0 0.0
        %776 = vmatprep.subr.mxu0 0.0
        %777 = vmatpush1.msra.mxu0 0.0
        %778 = vmatprep.subr.mxu0 0.0
        %779 = vmatpush1.msra.mxu0 0.0
        %780 = vmatprep.subr.mxu0 0.0
        %781 = vmatpush1.msra.mxu0 0.0
        %782 = vmatprep.subr.mxu0 0.0
        %783 = vmatpush1.msra.mxu0 0.0
        %784 = vmatprep.subr.mxu0 0.0
        %785 = vmatpush1.msra.mxu0 0.0
        %786 = vmatprep.subr.mxu0 0.0
        %787 = vmatpush1.msra.mxu0 0.0
        %788 = vmatprep.subr.mxu0 0.0
        %789 = vmatpush1.msra.mxu0 0.0
        %790 = vmatprep.subr.mxu0 0.0
        %791 = vmatpush1.msra.mxu0 0.0
        %792 = vmatprep.subr.mxu0 0.0
        %793 = vmatpush1.msra.mxu0 0.0
        %794 = vmatprep.subr.mxu0 0.0
        %795 = vmatpush1.msra.mxu0 0.0
        %796 = vmatprep.subr.mxu0 0.0
        %797 = vmatpush1.msra.mxu0 0.0
        %798 = vmatprep.subr.mxu0 0.0
        %799 = vmatpush1.msra.mxu0 0.0
        %800 = vmatprep.subr.mxu0 0.0
        %801 = vmatpush1.msra.mxu0 0.0
        %802 = vmatprep.subr.mxu0 0.0
        %803 = vmatpush1.msra.mxu0 0.0
        %804 = vmatprep.subr.mxu0 0.0
        %805 = vmatpush1.msra.mxu0 0.0
        %806 = vmatprep.subr.mxu0 0.0
        %807 = vmatpush1.msra.mxu0 0.0
        %808 = vmatprep.subr.mxu0 0.0
        %809 = vmatpush1.msra.mxu0 0.0
        %810 = vmatprep.subr.mxu0 0.0
        %811 = vmatpush1.msra.mxu0 0.0
        %812 = vmatprep.subr.mxu0 0.0
        %813 = vmatpush1.msra.mxu0 0.0
        %814 = vmatprep.subr.mxu0 0.0
        %815 = vmatpush1.msra.mxu0 0.0
        %816 = vmatprep.subr.mxu0 0.0
        %817 = vmatpush1.msra.mxu0 0.0
        %818 = vmatprep.subr.mxu0 0.0
        %819 = vmatpush1.msra.mxu0 0.0
        %820 = vmatprep.subr.mxu0 0.0
        %821 = vmatpush1.msra.mxu0 0.0
        %822 = vmatprep.subr.mxu0 0.0
        %823 = vmatpush1.msra.mxu0 0.0
        %824 = vmatprep.mubr.f32.mxu0 0.0
        %825 = vmatmul.mubr.f32.gmra.mrb[0].mxu0 %v377
        %v826 = vpop.f32.mrb[0].mxu0
        %v827 = vadd.f32 %v363, %v826
        %v828 = vpop.f32.mrb[0].mxu0
        %v829 = vadd.f32 %v367, %v828
        %830 = vmatprep.mubr.f32.mxu0 0.0
        %831 = vmatmul.mubr.f32.gmra.mrb[0].mxu0 %v380
        %v832 = vpop.f32.mrb[0].mxu0
        %v833 = vadd.f32 %v363, %v832
        %v834 = vpop.f32.mrb[0].mxu0
        %v835 = vadd.f32 %v367, %v834
        %836 = vmatprep.mubr.f32.mxu0 0.0
        %837 = vmatmul.mubr.f32.gmra.mrb[0].mxu0 %v383
        %v838 = vpop.f32.mrb[0].mxu0
        %v839 = vadd.f32 %v363, %v838
        %v840 = vpop.f32.mrb[0].mxu0
        %v841 = vadd.f32 %v367, %v840
        %842 = vmatprep.mubr.f32.mxu0 0.0
        %843 = vmatmul.mubr.f32.gmra.mrb[0].mxu0 %v386
        %v844 = vpop.f32.mrb[0].mxu0
        %v845 = vadd.f32 %v363, %v844
        %v846 = vpop.f32.mrb[0].mxu0
        %v847 = vadd.f32 %v367, %v846
        %848 = vmatprep.mubr.f32.mxu0 0.0
        %849 = vmatmul.mubr.f32.gmra.mrb[0].mxu0 %v389
        %v850 = vpop.f32.mrb[0].mxu0
        %v851 = vadd.f32 %v363, %v850
        %v852 = vpop.f32.mrb[0].mxu0
        %v853 = vadd.f32 %v367, %v852
        %854 = vmatprep.mubr.f32.mxu0 0.0
        %855 = vmatmul.mubr.f32.gmra.mrb[0].mxu0 %v392
        %v856 = vpop.f32.mrb[0].mxu0
        %v857 = vadd.f32 %v363, %v856
        %v858 = vpop.f32.mrb[0].mxu0
        %v859 = vadd.f32 %v367, %v858
        %860 = vmatprep.mubr.f32.mxu0 0.0
        %861 = vmatmul.mubr.f32.gmra.mrb[0].mxu0 %v395
        %v862 = vpop.f32.mrb[0].mxu0
        %v863 = vadd.f32 %v363, %v862
        %v864 = vpop.f32.mrb[0].mxu0
        %v865 = vadd.f32 %v367, %v864
        %866 = vmatprep.mubr.f32.mxu0 0.0
        %867 = vmatmul.mubr.f32.gmra.mrb[0].mxu0 %v398
        %v868 = vpop.f32.mrb[0].mxu0
        %v869 = vadd.f32 %v363, %v868
        %v870 = vpop.f32.mrb[0].mxu0
        %v871 = vadd.f32 %v367, %v870
        %872 = vmatprep.mubr.f32.mxu0 0.0
        %873 = vmatmul.mubr.f32.gmra.mrb[0].mxu0 %v401
        %v874 = vpop.f32.mrb[0].mxu0
        %v875 = vadd.f32 %v363, %v874
        %v876 = vpop.f32.mrb[0].mxu0
        %v877 = vadd.f32 %v367, %v876
        %878 = vmatprep.mubr.f32.mxu0 0.0
        %879 = vmatmul.mubr.f32.gmra.mrb[0].mxu0 %v404
        %v880 = vpop.f32.mrb[0].mxu0
        %v881 = vadd.f32 %v363, %v880
        %v882 = vpop.f32.mrb[0].mxu0
        %v883 = vadd.f32 %v367, %v882
        %884 = vmatprep.mubr.f32.mxu0 0.0
        %885 = vmatmul.mubr.f32.gmra.mrb[0].mxu0 %v407
        %v886 = vpop.f32.mrb[0].mxu0
        %v887 = vadd.f32 %v363, %v886
        %v888 = vpop.f32.mrb[0].mxu0
        %v889 = vadd.f32 %v367, %v888
        %890 = vmatprep.mubr.f32.mxu0 0.0
        %891 = vmatmul.mubr.f32.gmra.mrb[0].mxu0 %v410
        %v892 = vpop.f32.mrb[0].mxu0
        %v893 = vadd.f32 %v363, %v892
        %v894 = vpop.f32.mrb[0].mxu0
        %v895 = vadd.f32 %v367, %v894
        %896 = vmatprep.mubr.f32.mxu0 0.0
        %897 = vmatmul.mubr.f32.gmra.mrb[0].mxu0 %v413
        %v898 = vpop.f32.mrb[0].mxu0
        %v899 = vadd.f32 %v363, %v898
        %v900 = vpop.f32.mrb[0].mxu0
        %v901 = vadd.f32 %v367, %v900
        %902 = vmatprep.mubr.f32.mxu0 0.0
        %903 = vmatmul.mubr.f32.gmra.mrb[0].mxu0 %v416
        %v904 = vpop.f32.mrb[0].mxu0
        %v905 = vadd.f32 %v363, %v904
        %v906 = vpop.f32.mrb[0].mxu0
        %v907 = vadd.f32 %v367, %v906
        %908 = vmatprep.mubr.f32.mxu0 0.0
        %909 = vmatmul.mubr.f32.gmra.mrb[0].mxu0 %v419
        %v910 = vpop.f32.mrb[0].mxu0
        %v911 = vadd.f32 %v363, %v910
        %v912 = vpop.f32.mrb[0].mxu0
        %v913 = vadd.f32 %v367, %v912
        %914 = vmatprep.mubr.f32.mxu0 0.0
        %915 = vmatmul.mubr.f32.gmra.mrb[0].mxu0 %v422
        %v916 = vpop.f32.mrb[0].mxu0
        %v917 = vadd.f32 %v363, %v916
        %v918 = vpop.f32.mrb[0].mxu0
        %v919 = vadd.f32 %v367, %v918
        %920 = vmatprep.mubr.f32.mxu0 0.0
        %921 = vmatmul.mubr.f32.gmra.mrb[0].mxu0 %v425
        %v922 = vpop.f32.mrb[0].mxu0
        %v923 = vadd.f32 %v363, %v922
        %v924 = vpop.f32.mrb[0].mxu0
        %v925 = vadd.f32 %v367, %v924
        %926 = vmatprep.mubr.f32.mxu0 0.0
        %927 = vmatmul.mubr.f32.gmra.mrb[0].mxu0 %v428
        %v928 = vpop.f32.mrb[0].mxu0
        %v929 = vadd.f32 %v363, %v928
        %v930 = vpop.f32.mrb[0].mxu0
        %v931 = vadd.f32 %v367, %v930
        %932 = vmatprep.mubr.f32.mxu0 0.0
        %933 = vmatmul.mubr.f32.gmra.mrb[0].mxu0 %v431
        %v934 = vpop.f32.mrb[0].mxu0
        %v935 = vadd.f32 %v363, %v934
        %v936 = vpop.f32.mrb[0].mxu0
        %v937 = vadd.f32 %v367, %v936
        %938 = vmatprep.mubr.f32.mxu0 0.0
        %939 = vmatmul.mubr.f32.gmra.mrb[0].mxu0 %v434
        %v940 = vpop.f32.mrb[0].mxu0
        %v941 = vadd.f32 %v363, %v940
        %v942 = vpop.f32.mrb[0].mxu0
        %v943 = vadd.f32 %v367, %v942
        %944 = vmatprep.mubr.f32.mxu0 0.0
        %945 = vmatmul.mubr.f32.gmra.mrb[0].mxu0 %v437
        %v946 = vpop.f32.mrb[0].mxu0
        %v947 = vadd.f32 %v363, %v946
        %v948 = vpop.f32.mrb[0].mxu0
        %v949 = vadd.f32 %v367, %v948
        %950 = vmatprep.mubr.f32.mxu0 0.0
        %951 = vmatmul.mubr.f32.gmra.mrb[0].mxu0 %v440
        %v952 = vpop.f32.mrb[0].mxu0
        %v953 = vadd.f32 %v363, %v952
        %v954 = vpop.f32.mrb[0].mxu0
        %v955 = vadd.f32 %v367, %v954
        %956 = vmatprep.mubr.f32.mxu0 0.0
        %957 = vmatmul.mubr.f32.gmra.mrb[0].mxu0 %v443
        %v958 = vpop.f32.mrb[0].mxu0
        %v959 = vadd.f32 %v363, %v958
        %v960 = vpop.f32.mrb[0].mxu0
        %v961 = vadd.f32 %v367, %v960
        %962 = vmatprep.mubr.f32.mxu0 0.0
        %963 = vmatmul.mubr.f32.gmra.mrb[0].mxu0 %v446
        %v964 = vpop.f32.mrb[0].mxu0
        %v965 = vadd.f32 %v363, %v964
        %v966 = vpop.f32.mrb[0].mxu0
        %v967 = vadd.f32 %v367, %v966
        %968 = vmatprep.mubr.f32.mxu0 0.0
        %969 = vmatmul.mubr.f32.gmra.mrb[0].mxu0 %v449
        %v970 = vpop.f32.mrb[0].mxu0
        %v971 = vadd.f32 %v363, %v970
        %v972 = vpop.f32.mrb[0].mxu0
        %v973 = vadd.f32 %v367, %v972
        %974 = vmatprep.mubr.f32.mxu0 0.0
        %975 = vmatmul.mubr.f32.gmra.mrb[0].mxu0 %v452
        %v976 = vpop.f32.mrb[0].mxu0
        %v977 = vadd.f32 %v363, %v976
        %v978 = vpop.f32.mrb[0].mxu0
        %v979 = vadd.f32 %v367, %v978
        %980 = vmatprep.mubr.f32.mxu0 0.0
        %981 = vmatmul.mubr.f32.gmra.mrb[0].mxu0 %v455
        %v982 = vpop.f32.mrb[0].mxu0
        %v983 = vadd.f32 %v363, %v982
        %v984 = vpop.f32.mrb[0].mxu0
        %v985 = vadd.f32 %v367, %v984
        %986 = vmatprep.mubr.f32.mxu0 0.0
        %987 = vmatmul.mubr.f32.gmra.mrb[0].mxu0 %v458
        %v988 = vpop.f32.mrb[0].mxu0
        %v989 = vadd.f32 %v363, %v988
        %v990 = vpop.f32.mrb[0].mxu0
        %v991 = vadd.f32 %v367, %v990
        %992 = vmatprep.mubr.f32.mxu0 0.0
        %993 = vmatmul.mubr.f32.gmra.mrb[0].mxu0 %v461
        %v994 = vpop.f32.mrb[0].mxu0
        %v995 = vadd.f32 %v363, %v994
        %v996 = vpop.f32.mrb[0].mxu0
        %v997 = vadd.f32 %v367, %v996
        %998 = vmatprep.mubr.f32.mxu0 0.0
        %999 = vmatmul.mubr.f32.gmra.mrb[0].mxu0 %v464
        %v1000 = vpop.f32.mrb[0].mxu0
        %v1001 = vadd.f32 %v363, %v1000
        %v1002 = vpop.f32.mrb[0].mxu0
        %v1003 = vadd.f32 %v367, %v1002
        %1004 = vmatprep.mubr.f32.mxu0 0.0
        %1005 = vmatmul.mubr.f32.gmra.mrb[0].mxu0 %v467
        %v1006 = vpop.f32.mrb[0].mxu0
        %v1007 = vadd.f32 %v363, %v1006
        %v1008 = vpop.f32.mrb[0].mxu0
        %v1009 = vadd.f32 %v367, %v1008
        %1010 = vmatprep.mubr.f32.mxu0 0.0
        %1011 = vmatmul.mubr.f32.gmra.mrb[0].mxu0 %v470
        %v1012 = vpop.f32.mrb[0].mxu0
        %v1013 = vadd.f32 %v363, %v1012
        %v1014 = vpop.f32.mrb[0].mxu0
        %v1015 = vadd.f32 %v367, %v1014
        %1016 = vmatprep.mubr.f32.mxu0 0.0
        %1017 = vmatmul.mubr.f32.gmra.mrb[0].mxu0 %v473
        %v1018 = vpop.f32.mrb[0].mxu0
        %v1019 = vadd.f32 %v363, %v1018
        %v1020 = vpop.f32.mrb[0].mxu0
        %v1021 = vadd.f32 %v367, %v1020
        %1022 = vmatprep.mubr.f32.mxu0 0.0
        %1023 = vmatmul.mubr.f32.gmra.mrb[0].mxu0 %v476
        %v1024 = vpop.f32.mrb[0].mxu0
        %v1025 = vadd.f32 %v363, %v1024
        %v1026 = vpop.f32.mrb[0].mxu0
        %v1027 = vadd.f32 %v367, %v1026
        %1028 = vmatprep.mubr.f32.mxu0 0.0
        %1029 = vmatmul.mubr.f32.gmra.mrb[0].mxu0 %v479
        %v1030 = vpop.f32.mrb[0].mxu0
        %v1031 = vadd.f32 %v363, %v1030
        %v1032 = vpop.f32.mrb[0].mxu0
        %v1033 = vadd.f32 %v367, %v1032
        %1034 = vmatprep.mubr.f32.mxu0 0.0
        %1035 = vmatmul.mubr.f32.gmra.mrb[0].mxu0 %v482
        %v1036 = vpop.f32.mrb[0].mxu0
        %v1037 = vadd.f32 %v363, %v1036
        %v1038 = vpop.f32.mrb[0].mxu0
        %v1039 = vadd.f32 %v367, %v1038
        %1040 = vmatprep.mubr.f32.mxu0 0.0
        %1041 = vmatmul.mubr.f32.gmra.mrb[0].mxu0 %v485
        %v1042 = vpop.f32.mrb[0].mxu0
        %v1043 = vadd.f32 %v363, %v1042
        %v1044 = vpop.f32.mrb[0].mxu0
        %v1045 = vadd.f32 %v367, %v1044
        %1046 = vmatprep.mubr.f32.mxu0 0.0
        %1047 = vmatmul.mubr.f32.gmra.mrb[0].mxu0 %v488
        %v1048 = vpop.f32.mrb[0].mxu0
        %v1049 = vadd.f32 %v363, %v1048
        %v1050 = vpop.f32.mrb[0].mxu0
        %v1051 = vadd.f32 %v367, %v1050
        %1052 = vmatprep.mubr.f32.mxu0 0.0
        %1053 = vmatmul.mubr.f32.gmra.mrb[0].mxu0 %v491
        %v1054 = vpop.f32.mrb[0].mxu0
        %v1055 = vadd.f32 %v363, %v1054
        %v1056 = vpop.f32.mrb[0].mxu0
        %v1057 = vadd.f32 %v367, %v1056
        %1058 = vmatprep.mubr.f32.mxu0 0.0
        %1059 = vmatmul.mubr.f32.gmra.mrb[0].mxu0 %v494
        %v1060 = vpop.f32.mrb[0].mxu0
        %v1061 = vadd.f32 %v363, %v1060
        %v1062 = vpop.f32.mrb[0].mxu0
        %v1063 = vadd.f32 %v367, %v1062
        %1064 = vmatprep.mubr.f32.mxu0 0.0
        %1065 = vmatmul.mubr.f32.gmra.mrb[0].mxu0 %v497
        %v1066 = vpop.f32.mrb[0].mxu0
        %v1067 = vadd.f32 %v363, %v1066
        %v1068 = vpop.f32.mrb[0].mxu0
        %v1069 = vadd.f32 %v367, %v1068
        %1070 = vmatprep.mubr.f32.mxu0 0.0
        %1071 = vmatmul.mubr.f32.gmra.mrb[0].mxu0 %v500
        %v1072 = vpop.f32.mrb[0].mxu0
        %v1073 = vadd.f32 %v363, %v1072
        %v1074 = vpop.f32.mrb[0].mxu0
        %v1075 = vadd.f32 %v367, %v1074
        %1076 = vmatprep.mubr.f32.mxu0 0.0
        %1077 = vmatmul.mubr.f32.gmra.mrb[0].mxu0 %v503
        %v1078 = vpop.f32.mrb[0].mxu0
        %v1079 = vadd.f32 %v363, %v1078
        %v1080 = vpop.f32.mrb[0].mxu0
        %v1081 = vadd.f32 %v367, %v1080
        %1082 = vmatprep.mubr.f32.mxu0 0.0
        %1083 = vmatmul.mubr.f32.gmra.mrb[0].mxu0 %v506
        %v1084 = vpop.f32.mrb[0].mxu0
        %v1085 = vadd.f32 %v363, %v1084
        %v1086 = vpop.f32.mrb[0].mxu0
        %v1087 = vadd.f32 %v367, %v1086
        %1088 = vmatprep.mubr.f32.mxu0 0.0
        %1089 = vmatmul.mubr.f32.gmra.mrb[0].mxu0 %v509
        %v1090 = vpop.f32.mrb[0].mxu0
        %v1091 = vadd.f32 %v363, %v1090
        %v1092 = vpop.f32.mrb[0].mxu0
        %v1093 = vadd.f32 %v367, %v1092
        %1094 = vmatprep.mubr.f32.mxu0 0.0
        %1095 = vmatmul.mubr.f32.gmra.mrb[0].mxu0 %v512
        %v1096 = vpop.f32.mrb[0].mxu0
        %v1097 = vadd.f32 %v363, %v1096
        %v1098 = vpop.f32.mrb[0].mxu0
        %v1099 = vadd.f32 %v367, %v1098
        %1100 = vmatprep.mubr.f32.mxu0 0.0
        %1101 = vmatmul.mubr.f32.gmra.mrb[0].mxu0 %v515
        %v1102 = vpop.f32.mrb[0].mxu0
        %v1103 = vadd.f32 %v363, %v1102
        %v1104 = vpop.f32.mrb[0].mxu0
        %v1105 = vadd.f32 %v367, %v1104
        %1106 = vmatprep.mubr.f32.mxu0 0.0
        %1107 = vmatmul.mubr.f32.gmra.mrb[0].mxu0 %v518
        %v1108 = vpop.f32.mrb[0].mxu0
        %v1109 = vadd.f32 %v363, %v1108
        %v1110 = vpop.f32.mrb[0].mxu0
        %v1111 = vadd.f32 %v367, %v1110
        %1112 = vmatprep.mubr.f32.mxu0 0.0
        %1113 = vmatmul.mubr.f32.gmra.mrb[0].mxu0 %v521
        %v1114 = vpop.f32.mrb[0].mxu0
        %v1115 = vadd.f32 %v363, %v1114
        %v1116 = vpop.f32.mrb[0].mxu0
        %v1117 = vadd.f32 %v367, %v1116
        %1118 = vmatprep.mubr.f32.mxu0 0.0
        %1119 = vmatmul.mubr.f32.gmra.mrb[0].mxu0 %v524
        %v1120 = vpop.f32.mrb[0].mxu0
        %v1121 = vadd.f32 %v363, %v1120
        %v1122 = vpop.f32.mrb[0].mxu0
        %v1123 = vadd.f32 %v367, %v1122
        %1124 = vmatprep.mubr.f32.mxu0 0.0
        %1125 = vmatmul.mubr.f32.gmra.mrb[0].mxu0 %v527
        %v1126 = vpop.f32.mrb[0].mxu0
        %v1127 = vadd.f32 %v363, %v1126
        %v1128 = vpop.f32.mrb[0].mxu0
        %v1129 = vadd.f32 %v367, %v1128
        %1130 = vmatprep.mubr.f32.mxu0 0.0
        %1131 = vmatmul.mubr.f32.gmra.mrb[0].mxu0 %v530
        %v1132 = vpop.f32.mrb[0].mxu0
        %v1133 = vadd.f32 %v363, %v1132
        %v1134 = vpop.f32.mrb[0].mxu0
        %v1135 = vadd.f32 %v367, %v1134
        %1136 = vmatprep.mubr.f32.mxu0 0.0
        %1137 = vmatmul.mubr.f32.gmra.mrb[0].mxu0 %v533
        %v1138 = vpop.f32.mrb[0].mxu0
        %v1139 = vadd.f32 %v363, %v1138
        %v1140 = vpop.f32.mrb[0].mxu0
        %v1141 = vadd.f32 %v367, %v1140
        %1142 = vmatprep.mubr.f32.mxu0 0.0
        %1143 = vmatmul.mubr.f32.gmra.mrb[0].mxu0 %v536
        %v1144 = vpop.f32.mrb[0].mxu0
        %v1145 = vadd.f32 %v363, %v1144
        %v1146 = vpop.f32.mrb[0].mxu0
        %v1147 = vadd.f32 %v367, %v1146
        %1148 = vmatprep.mubr.f32.mxu0 0.0
        %1149 = vmatmul.mubr.f32.gmra.mrb[0].mxu0 %v539
        %v1150 = vpop.f32.mrb[0].mxu0
        %v1151 = vadd.f32 %v363, %v1150
        %v1152 = vpop.f32.mrb[0].mxu0
        %v1153 = vadd.f32 %v367, %v1152
        %1154 = vmatprep.mubr.f32.mxu0 0.0
        %1155 = vmatmul.mubr.f32.gmra.mrb[0].mxu0 %v542
        %v1156 = vpop.f32.mrb[0].mxu0
        %v1157 = vadd.f32 %v363, %v1156
        %v1158 = vpop.f32.mrb[0].mxu0
        %v1159 = vadd.f32 %v367, %v1158
        %1160 = vmatprep.mubr.f32.mxu0 0.0
        %1161 = vmatmul.mubr.f32.gmra.mrb[0].mxu0 %v545
        %v1162 = vpop.f32.mrb[0].mxu0
        %v1163 = vadd.f32 %v363, %v1162
        %v1164 = vpop.f32.mrb[0].mxu0
        %v1165 = vadd.f32 %v367, %v1164
        %1166 = vmatprep.mubr.f32.mxu0 0.0
        %1167 = vmatmul.mubr.f32.gmra.mrb[0].mxu0 %v548
        %v1168 = vpop.f32.mrb[0].mxu0
        %v1169 = vadd.f32 %v363, %v1168
        %v1170 = vpop.f32.mrb[0].mxu0
        %v1171 = vadd.f32 %v367, %v1170
        %1172 = vmatprep.mubr.f32.mxu0 0.0
        %1173 = vmatmul.mubr.f32.gmra.mrb[0].mxu0 %v551
        %v1174 = vpop.f32.mrb[0].mxu0
        %v1175 = vadd.f32 %v363, %v1174
        %v1176 = vpop.f32.mrb[0].mxu0
        %v1177 = vadd.f32 %v367, %v1176
        %1178 = vmatprep.mubr.f32.mxu0 0.0
        %1179 = vmatmul.mubr.f32.gmra.mrb[0].mxu0 %v554
        %v1180 = vpop.f32.mrb[0].mxu0
        %v1181 = vadd.f32 %v363, %v1180
        %v1182 = vpop.f32.mrb[0].mxu0
        %v1183 = vadd.f32 %v367, %v1182
        %1184 = vmatprep.mubr.f32.mxu0 0.0
        %1185 = vmatmul.mubr.f32.gmra.mrb[0].mxu0 %v557
        %v1186 = vpop.f32.mrb[0].mxu0
        %v1187 = vadd.f32 %v363, %v1186
        %v1188 = vpop.f32.mrb[0].mxu0
        %v1189 = vadd.f32 %v367, %v1188
        %1190 = vmatprep.mubr.f32.mxu0 0.0
        %1191 = vmatmul.mubr.f32.gmra.mrb[0].mxu0 %v560
        %v1192 = vpop.f32.mrb[0].mxu0
        %v1193 = vadd.f32 %v363, %v1192
        %v1194 = vpop.f32.mrb[0].mxu0
        %v1195 = vadd.f32 %v367, %v1194
        %1196 = vmatprep.mubr.f32.mxu0 0.0
        %1197 = vmatmul.mubr.f32.gmra.mrb[0].mxu0 %v563
        %v1198 = vpop.f32.mrb[0].mxu0
        %v1199 = vadd.f32 %v363, %v1198
        %v1200 = vpop.f32.mrb[0].mxu0
        %v1201 = vadd.f32 %v367, %v1200
        %1202 = vmatprep.mubr.f32.mxu0 0.0
        %1203 = vmatmul.mubr.f32.gmra.mrb[0].mxu0 %v566
        %v1204 = vpop.f32.mrb[0].mxu0
        %v1205 = vadd.f32 %v363, %v1204
        %v1206 = vpop.f32.mrb[0].mxu0
        %v1207 = vadd.f32 %v367, %v1206
        %1208 = vmatprep.mubr.f32.mxu0 0.0
        %1209 = vmatmul.mubr.f32.gmra.mrb[0].mxu0 %v569
        %v1210 = vpop.f32.mrb[0].mxu0
        %v1211 = vadd.f32 %v363, %v1210
        %v1212 = vpop.f32.mrb[0].mxu0
        %v1213 = vadd.f32 %v367, %v1212
        %1214 = vmatprep.mubr.f32.mxu0 0.0
        %1215 = vmatmul.mubr.f32.gmra.mrb[0].mxu0 %v572
        %v1216 = vpop.f32.mrb[0].mxu0
        %v1217 = vadd.f32 %v363, %v1216
        %v1218 = vpop.f32.mrb[0].mxu0
        %v1219 = vadd.f32 %v367, %v1218
        %1220 = vmatprep.mubr.f32.mxu0 0.0
        %1221 = vmatmul.mubr.f32.gmra.mrb[0].mxu0 %v575
        %v1222 = vpop.f32.mrb[0].mxu0
        %v1223 = vadd.f32 %v363, %v1222
        %v1224 = vpop.f32.mrb[0].mxu0
        %v1225 = vadd.f32 %v367, %v1224
        %1226 = vmatprep.mubr.f32.mxu0 0.0
        %1227 = vmatmul.mubr.f32.gmra.mrb[0].mxu0 %v578
        %v1228 = vpop.f32.mrb[0].mxu0
        %v1229 = vadd.f32 %v363, %v1228
        %v1230 = vpop.f32.mrb[0].mxu0
        %v1231 = vadd.f32 %v367, %v1230
        %1232 = vmatprep.mubr.f32.mxu0 0.0
        %1233 = vmatmul.mubr.f32.gmra.mrb[0].mxu0 %v581
        %v1234 = vpop.f32.mrb[0].mxu0
        %v1235 = vadd.f32 %v363, %v1234
        %v1236 = vpop.f32.mrb[0].mxu0
        %v1237 = vadd.f32 %v367, %v1236
        %1238 = vmatprep.mubr.f32.mxu0 0.0
        %1239 = vmatmul.mubr.f32.gmra.mrb[0].mxu0 %v584
        %v1240 = vpop.f32.mrb[0].mxu0
        %v1241 = vadd.f32 %v363, %v1240
        %v1242 = vpop.f32.mrb[0].mxu0
        %v1243 = vadd.f32 %v367, %v1242
        %1244 = vmatprep.mubr.f32.mxu0 0.0
        %1245 = vmatmul.mubr.f32.gmra.mrb[0].mxu0 %v587
        %v1246 = vpop.f32.mrb[0].mxu0
        %v1247 = vadd.f32 %v363, %v1246
        %v1248 = vpop.f32.mrb[0].mxu0
        %v1249 = vadd.f32 %v367, %v1248
        %1250 = vmatprep.mubr.f32.mxu0 0.0
        %1251 = vmatmul.mubr.f32.gmra.mrb[0].mxu0 %v590
        %v1252 = vpop.f32.mrb[0].mxu0
        %v1253 = vadd.f32 %v363, %v1252
        %v1254 = vpop.f32.mrb[0].mxu0
        %v1255 = vadd.f32 %v367, %v1254
        %1256 = vmatprep.mubr.f32.mxu0 0.0
        %1257 = vmatmul.mubr.f32.gmra.mrb[0].mxu0 %v593
        %v1258 = vpop.f32.mrb[0].mxu0
        %v1259 = vadd.f32 %v363, %v1258
        %v1260 = vpop.f32.mrb[0].mxu0
        %v1261 = vadd.f32 %v367, %v1260
        %1262 = vmatprep.mubr.f32.mxu0 0.0
        %1263 = vmatmul.mubr.f32.gmra.mrb[0].mxu0 %v596
        %v1264 = vpop.f32.mrb[0].mxu0
        %v1265 = vadd.f32 %v363, %v1264
        %v1266 = vpop.f32.mrb[0].mxu0
        %v1267 = vadd.f32 %v367, %v1266
        %1268 = vmatprep.mubr.f32.mxu0 0.0
        %1269 = vmatmul.mubr.f32.gmra.mrb[0].mxu0 %v599
        %v1270 = vpop.f32.mrb[0].mxu0
        %v1271 = vadd.f32 %v363, %v1270
        %v1272 = vpop.f32.mrb[0].mxu0
        %v1273 = vadd.f32 %v367, %v1272
        %1274 = vmatprep.mubr.f32.mxu0 0.0
        %1275 = vmatmul.mubr.f32.gmra.mrb[0].mxu0 %v602
        %v1276 = vpop.f32.mrb[0].mxu0
        %v1277 = vadd.f32 %v363, %v1276
        %v1278 = vpop.f32.mrb[0].mxu0
        %v1279 = vadd.f32 %v367, %v1278
        %1280 = vmatprep.mubr.f32.mxu0 0.0
        %1281 = vmatmul.mubr.f32.gmra.mrb[0].mxu0 %v605
        %v1282 = vpop.f32.mrb[0].mxu0
        %v1283 = vadd.f32 %v363, %v1282
        %v1284 = vpop.f32.mrb[0].mxu0
        %v1285 = vadd.f32 %v367, %v1284
        %1286 = vmatprep.mubr.f32.mxu0 0.0
        %1287 = vmatmul.mubr.f32.gmra.mrb[0].mxu0 %v608
        %v1288 = vpop.f32.mrb[0].mxu0
        %v1289 = vadd.f32 %v363, %v1288
        %v1290 = vpop.f32.mrb[0].mxu0
        %v1291 = vadd.f32 %v367, %v1290
        %1292 = vmatprep.mubr.f32.mxu0 0.0
        %1293 = vmatmul.mubr.f32.gmra.mrb[0].mxu0 %v611
        %v1294 = vpop.f32.mrb[0].mxu0
        %v1295 = vadd.f32 %v363, %v1294
        %v1296 = vpop.f32.mrb[0].mxu0
        %v1297 = vadd.f32 %v367, %v1296
        %1298 = vmatprep.mubr.f32.mxu0 0.0
        %1299 = vmatmul.mubr.f32.gmra.mrb[0].mxu0 %v614
        %v1300 = vpop.f32.mrb[0].mxu0
        %v1301 = vadd.f32 %v363, %v1300
        %v1302 = vpop.f32.mrb[0].mxu0
        %v1303 = vadd.f32 %v367, %v1302
        %1304 = vmatprep.mubr.f32.mxu0 0.0
        %1305 = vmatmul.mubr.f32.gmra.mrb[0].mxu0 %v617
        %v1306 = vpop.f32.mrb[0].mxu0
        %v1307 = vadd.f32 %v363, %v1306
        %v1308 = vpop.f32.mrb[0].mxu0
        %v1309 = vadd.f32 %v367, %v1308
        %1310 = vmatprep.mubr.f32.mxu0 0.0
        %1311 = vmatmul.mubr.f32.gmra.mrb[0].mxu0 %v620
        %v1312 = vpop.f32.mrb[0].mxu0
        %v1313 = vadd.f32 %v363, %v1312
        %v1314 = vpop.f32.mrb[0].mxu0
        %v1315 = vadd.f32 %v367, %v1314
        %1316 = vmatprep.mubr.f32.mxu0 0.0
        %1317 = vmatmul.mubr.f32.gmra.mrb[0].mxu0 %v623
        %v1318 = vpop.f32.mrb[0].mxu0
        %v1319 = vadd.f32 %v363, %v1318
        %v1320 = vpop.f32.mrb[0].mxu0
        %v1321 = vadd.f32 %v367, %v1320
        %1322 = vmatprep.mubr.f32.mxu0 0.0
        %1323 = vmatmul.mubr.f32.gmra.mrb[0].mxu0 %v626
        %v1324 = vpop.f32.mrb[0].mxu0
        %v1325 = vadd.f32 %v363, %v1324
        %v1326 = vpop.f32.mrb[0].mxu0
        %v1327 = vadd.f32 %v367, %v1326
        %1328 = vmatprep.mubr.f32.mxu0 0.0
        %1329 = vmatmul.mubr.f32.gmra.mrb[0].mxu0 %v629
        %v1330 = vpop.f32.mrb[0].mxu0
        %v1331 = vadd.f32 %v363, %v1330
        %v1332 = vpop.f32.mrb[0].mxu0
        %v1333 = vadd.f32 %v367, %v1332
        %1334 = vmatprep.mubr.f32.mxu0 0.0
        %1335 = vmatmul.mubr.f32.gmra.mrb[0].mxu0 %v632
        %v1336 = vpop.f32.mrb[0].mxu0
        %v1337 = vadd.f32 %v363, %v1336
        %v1338 = vpop.f32.mrb[0].mxu0
        %v1339 = vadd.f32 %v367, %v1338
        %1340 = vmatprep.mubr.f32.mxu0 0.0
        %1341 = vmatmul.mubr.f32.gmra.mrb[0].mxu0 %v635
        %v1342 = vpop.f32.mrb[0].mxu0
        %v1343 = vadd.f32 %v363, %v1342
        %v1344 = vpop.f32.mrb[0].mxu0
        %v1345 = vadd.f32 %v367, %v1344
        %1346 = vmatprep.mubr.f32.mxu0 0.0
        %1347 = vmatmul.mubr.f32.gmra.mrb[0].mxu0 %v638
        %v1348 = vpop.f32.mrb[0].mxu0
        %v1349 = vadd.f32 %v363, %v1348
        %v1350 = vpop.f32.mrb[0].mxu0
        %v1351 = vadd.f32 %v367, %v1350
        %1352 = vmatprep.mubr.f32.mxu0 0.0
        %1353 = vmatmul.mubr.f32.gmra.mrb[0].mxu0 %v641
        %v1354 = vpop.f32.mrb[0].mxu0
        %v1355 = vadd.f32 %v363, %v1354
        %v1356 = vpop.f32.mrb[0].mxu0
        %v1357 = vadd.f32 %v367, %v1356
        %1358 = vmatprep.mubr.f32.mxu0 0.0
        %1359 = vmatmul.mubr.f32.gmra.mrb[0].mxu0 %v644
        %v1360 = vpop.f32.mrb[0].mxu0
        %v1361 = vadd.f32 %v363, %v1360
        %v1362 = vpop.f32.mrb[0].mxu0
        %v1363 = vadd.f32 %v367, %v1362
        %1364 = vmatprep.mubr.f32.mxu0 0.0
        %1365 = vmatmul.mubr.f32.gmra.mrb[0].mxu0 %v647
        %v1366 = vpop.f32.mrb[0].mxu0
        %v1367 = vadd.f32 %v363, %v1366
        %v1368 = vpop.f32.mrb[0].mxu0
        %v1369 = vadd.f32 %v367, %v1368
        %1370 = vmatprep.mubr.f32.mxu0 0.0
        %1371 = vmatmul.mubr.f32.gmra.mrb[0].mxu0 %v650
        %v1372 = vpop.f32.mrb[0].mxu0
        %v1373 = vadd.f32 %v363, %v1372
        %v1374 = vpop.f32.mrb[0].mxu0
        %v1375 = vadd.f32 %v367, %v1374
        %1376 = vmatprep.mubr.f32.mxu0 0.0
        %1377 = vmatmul.mubr.f32.gmra.mrb[0].mxu0 %v653
        %v1378 = vpop.f32.mrb[0].mxu0
        %v1379 = vadd.f32 %v363, %v1378
        %v1380 = vpop.f32.mrb[0].mxu0
        %v1381 = vadd.f32 %v367, %v1380
        %1382 = vmatprep.mubr.f32.mxu0 0.0
        %1383 = vmatmul.mubr.f32.gmra.mrb[0].mxu0 %v656
        %v1384 = vpop.f32.mrb[0].mxu0
        %v1385 = vadd.f32 %v363, %v1384
        %v1386 = vpop.f32.mrb[0].mxu0
        %v1387 = vadd.f32 %v367, %v1386
        %1388 = vmatprep.mubr.f32.mxu0 0.0
        %1389 = vmatmul.mubr.f32.gmra.mrb[0].mxu0 %v659
        %v1390 = vpop.f32.mrb[0].mxu0
        %v1391 = vadd.f32 %v363, %v1390
        %v1392 = vpop.f32.mrb[0].mxu0
        %v1393 = vadd.f32 %v367, %v1392
        %1394 = vmatprep.mubr.f32.mxu0 0.0
        %1395 = vmatmul.mubr.f32.gmra.mrb[0].mxu0 %v662
        %v1396 = vpop.f32.mrb[0].mxu0
        %v1397 = vadd.f32 %v363, %v1396
        %v1398 = vpop.f32.mrb[0].mxu0
        %v1399 = vadd.f32 %v367, %v1398
        %1400 = vmatprep.mubr.f32.mxu0 0.0
        %1401 = vmatmul.mubr.f32.gmra.mrb[0].mxu0 %v665
        %v1402 = vpop.f32.mrb[0].mxu0
        %v1403 = vadd.f32 %v363, %v1402
        %v1404 = vpop.f32.mrb[0].mxu0
        %v1405 = vadd.f32 %v367, %v1404
        %1406 = vmatprep.mubr.f32.mxu0 0.0
        %1407 = vmatmul.mubr.f32.gmra.mrb[0].mxu0 %v668
        %v1408 = vpop.f32.mrb[0].mxu0
        %v1409 = vadd.f32 %v363, %v1408
        %v1410 = vpop.f32.mrb[0].mxu0
        %v1411 = vadd.f32 %v367, %v1410
        %1412 = vmatprep.mubr.f32.mxu0 0.0
        %1413 = vmatmul.mubr.f32.gmra.mrb[0].mxu0 %v671
        %v1414 = vpop.f32.mrb[0].mxu0
        %v1415 = vadd.f32 %v363, %v1414
        %v1416 = vpop.f32.mrb[0].mxu0
        %v1417 = vadd.f32 %v367, %v1416
        %1418 = vmatprep.mubr.f32.mxu0 0.0
        %1419 = vmatmul.mubr.f32.gmra.mrb[0].mxu0 %v674
        %v1420 = vpop.f32.mrb[0].mxu0
        %v1421 = vadd.f32 %v363, %v1420
        %v1422 = vpop.f32.mrb[0].mxu0
        %v1423 = vadd.f32 %v367, %v1422
        %1424 = vmatprep.mubr.f32.mxu0 0.0
        %1425 = vmatmul.mubr.f32.gmra.mrb[0].mxu0 %v677
        %v1426 = vpop.f32.mrb[0].mxu0
        %v1427 = vadd.f32 %v363, %v1426
        %v1428 = vpop.f32.mrb[0].mxu0
        %v1429 = vadd.f32 %v367, %v1428
        %1430 = vmatprep.mubr.f32.mxu0 0.0
        %1431 = vmatmul.mubr.f32.gmra.mrb[0].mxu0 %v680
        %v1432 = vpop.f32.mrb[0].mxu0
        %v1433 = vadd.f32 %v363, %v1432
        %v1434 = vpop.f32.mrb[0].mxu0
        %v1435 = vadd.f32 %v367, %v1434
        %1436 = vmatprep.mubr.f32.mxu0 0.0
        %1437 = vmatmul.mubr.f32.gmra.mrb[0].mxu0 %v683
        %v1438 = vpop.f32.mrb[0].mxu0
        %v1439 = vadd.f32 %v363, %v1438
        %v1440 = vpop.f32.mrb[0].mxu0
        %v1441 = vadd.f32 %v367, %v1440
        %1442 = vmatprep.mubr.f32.mxu0 0.0
        %1443 = vmatmul.mubr.f32.gmra.mrb[0].mxu0 %v686
        %v1444 = vpop.f32.mrb[0].mxu0
        %v1445 = vadd.f32 %v363, %v1444
        %v1446 = vpop.f32.mrb[0].mxu0
        %v1447 = vadd.f32 %v367, %v1446
        %1448 = vmatprep.mubr.f32.mxu0 0.0
        %1449 = vmatmul.mubr.f32.gmra.mrb[0].mxu0 %v689
        %v1450 = vpop.f32.mrb[0].mxu0
        %v1451 = vadd.f32 %v363, %v1450
        %v1452 = vpop.f32.mrb[0].mxu0
        %v1453 = vadd.f32 %v367, %v1452
        %1454 = vmatprep.mubr.f32.mxu0 0.0
        %1455 = vmatmul.mubr.f32.gmra.mrb[0].mxu0 %v692
        %v1456 = vpop.f32.mrb[0].mxu0
        %v1457 = vadd.f32 %v363, %v1456
        %v1458 = vpop.f32.mrb[0].mxu0
        %v1459 = vadd.f32 %v367, %v1458
        %1460 = vmatprep.mubr.f32.mxu0 0.0
        %1461 = vmatmul.mubr.f32.gmra.mrb[0].mxu0 %v695
        %v1462 = vpop.f32.mrb[0].mxu0
        %v1463 = vadd.f32 %v363, %v1462
        %v1464 = vpop.f32.mrb[0].mxu0
        %v1465 = vadd.f32 %v367, %v1464
        %1466 = vmatprep.mubr.f32.mxu0 0.0
        %1467 = vmatmul.mubr.f32.gmra.mrb[0].mxu0 %v698
        %v1468 = vpop.f32.mrb[0].mxu0
        %v1469 = vadd.f32 %v363, %v1468
        %v1470 = vpop.f32.mrb[0].mxu0
        %v1471 = vadd.f32 %v367, %v1470
        %1472 = vmatprep.mubr.f32.mxu0 0.0
        %1473 = vmatmul.mubr.f32.gmra.mrb[0].mxu0 %v701
        %v1474 = vpop.f32.mrb[0].mxu0
        %v1475 = vadd.f32 %v363, %v1474
        %v1476 = vpop.f32.mrb[0].mxu0
        %v1477 = vadd.f32 %v367, %v1476
        %1478 = vmatprep.mubr.f32.mxu0 0.0
        %1479 = vmatmul.mubr.f32.gmra.mrb[0].mxu0 %v704
        %v1480 = vpop.f32.mrb[0].mxu0
        %v1481 = vadd.f32 %v363, %v1480
        %v1482 = vpop.f32.mrb[0].mxu0
        %v1483 = vadd.f32 %v367, %v1482
        %1484 = vmatprep.mubr.f32.mxu0 0.0
        %1485 = vmatmul.mubr.f32.gmra.mrb[0].mxu0 %v707
        %v1486 = vpop.f32.mrb[0].mxu0
        %v1487 = vadd.f32 %v363, %v1486
        %v1488 = vpop.f32.mrb[0].mxu0
        %v1489 = vadd.f32 %v367, %v1488
        %1490 = vmatprep.mubr.f32.mxu0 0.0
        %1491 = vmatmul.mubr.f32.gmra.mrb[0].mxu0 %v710
        %v1492 = vpop.f32.mrb[0].mxu0
        %v1493 = vadd.f32 %v363, %v1492
        %v1494 = vpop.f32.mrb[0].mxu0
        %v1495 = vadd.f32 %v367, %v1494
        %1496 = vmatprep.mubr.f32.mxu0 0.0
        %1497 = vmatmul.mubr.f32.gmra.mrb[0].mxu0 %v713
        %v1498 = vpop.f32.mrb[0].mxu0
        %v1499 = vadd.f32 %v363, %v1498
        %v1500 = vpop.f32.mrb[0].mxu0
        %v1501 = vadd.f32 %v367, %v1500
        %1502 = vmatprep.mubr.f32.mxu0 0.0
        %1503 = vmatmul.mubr.f32.gmra.mrb[0].mxu0 %v716
        %v1504 = vpop.f32.mrb[0].mxu0
        %v1505 = vadd.f32 %v363, %v1504
        %v1506 = vpop.f32.mrb[0].mxu0
        %v1507 = vadd.f32 %v367, %v1506
        %1508 = vmatprep.mubr.f32.mxu0 0.0
        %1509 = vmatmul.mubr.f32.gmra.mrb[0].mxu0 %v719
        %v1510 = vpop.f32.mrb[0].mxu0
        %v1511 = vadd.f32 %v363, %v1510
        %v1512 = vpop.f32.mrb[0].mxu0
        %v1513 = vadd.f32 %v367, %v1512
        %1514 = vmatprep.mubr.f32.mxu0 0.0
        %1515 = vmatmul.mubr.f32.gmra.mrb[0].mxu0 %v722
        %v1516 = vpop.f32.mrb[0].mxu0
        %v1517 = vadd.f32 %v363, %v1516
        %v1518 = vpop.f32.mrb[0].mxu0
        %v1519 = vadd.f32 %v367, %v1518
        %1520 = vmatprep.mubr.f32.mxu0 0.0
        %1521 = vmatmul.mubr.f32.gmra.mrb[0].mxu0 %v725
        %v1522 = vpop.f32.mrb[0].mxu0
        %v1523 = vadd.f32 %v363, %v1522
        %v1524 = vpop.f32.mrb[0].mxu0
        %v1525 = vadd.f32 %v367, %v1524
        %1526 = vmatprep.mubr.f32.mxu0 0.0
        %1527 = vmatmul.mubr.f32.gmra.mrb[0].mxu0 %v728
        %v1528 = vpop.f32.mrb[0].mxu0
        %v1529 = vadd.f32 %v363, %v1528
        %v1530 = vpop.f32.mrb[0].mxu0
        %v1531 = vadd.f32 %v367, %v1530
        %1532 = vmatprep.mubr.f32.mxu0 0.0
        %1533 = vmatmul.mubr.f32.gmra.mrb[0].mxu0 %v731
        %v1534 = vpop.f32.mrb[0].mxu0
        %v1535 = vadd.f32 %v363, %v1534
        %v1536 = vpop.f32.mrb[0].mxu0
        %v1537 = vadd.f32 %v367, %v1536
        %1538 = vmatprep.mubr.f32.mxu0 0.0
        %1539 = vmatmul.mubr.f32.gmra.mrb[0].mxu0 %v734
        %v1540 = vpop.f32.mrb[0].mxu0
        %v1541 = vadd.f32 %v363, %v1540
        %v1542 = vpop.f32.mrb[0].mxu0
        %v1543 = vadd.f32 %v367, %v1542
        %1544 = vmatprep.mubr.f32.mxu0 0.0
        %1545 = vmatmul.mubr.f32.gmra.mrb[0].mxu0 %v737
        %v1546 = vpop.f32.mrb[0].mxu0
        %v1547 = vadd.f32 %v363, %v1546
        %v1548 = vpop.f32.mrb[0].mxu0
        %v1549 = vadd.f32 %v367, %v1548
        %1550 = vmatprep.mubr.f32.mxu0 0.0
        %1551 = vmatmul.mubr.f32.gmra.mrb[0].mxu0 %v740
        %v1552 = vpop.f32.mrb[0].mxu0
        %v1553 = vadd.f32 %v363, %v1552
        %v1554 = vpop.f32.mrb[0].mxu0
        %v1555 = vadd.f32 %v367, %v1554
        %1556 = vmatprep.mubr.f32.mxu0 0.0
        %1557 = vmatmul.mubr.f32.gmra.mrb[0].mxu0 %v743
        %v1558 = vpop.f32.mrb[0].mxu0
        %v1559 = vadd.f32 %v363, %v1558
        %v1560 = vpop.f32.mrb[0].mxu0
        %v1561 = vadd.f32 %v367, %v1560
        %1562 = vmatprep.mubr.f32.mxu0 0.0
        %1563 = vmatmul.mubr.f32.gmra.mrb[0].mxu0 %v746
        %v1564 = vpop.f32.mrb[0].mxu0
        %v1565 = vadd.f32 %v363, %v1564
        %v1566 = vpop.f32.mrb[0].mxu0
        %v1567 = vadd.f32 %v367, %v1566
        %1568 = vmatprep.mubr.f32.mxu0 0.0
        %1569 = vmatmul.mubr.f32.gmra.mrb[0].mxu0 %v749
        %v1570 = vpop.f32.mrb[0].mxu0
        %v1571 = vadd.f32 %v363, %v1570
        %v1572 = vpop.f32.mrb[0].mxu0
        %v1573 = vadd.f32 %v367, %v1572
        %1574 = vmatprep.mubr.f32.mxu0 0.0
        %1575 = vmatmul.mubr.f32.gmra.mrb[0].mxu0 %v752
        %v1576 = vpop.f32.mrb[0].mxu0
        %v1577 = vadd.f32 %v363, %v1576
        %v1578 = vpop.f32.mrb[0].mxu0
        %v1579 = vadd.f32 %v367, %v1578
        %1580 = vmatprep.mubr.f32.mxu0 0.0
        %1581 = vmatmul.mubr.f32.gmra.mrb[0].mxu0 %v755
        %v1582 = vpop.f32.mrb[0].mxu0
        %v1583 = vadd.f32 %v363, %v1582
        %v1584 = vpop.f32.mrb[0].mxu0
        %v1585 = vadd.f32 %v367, %v1584
        %1586 = vmatprep.mubr.f32.mxu0 0.0
        %1587 = vmatmul.mubr.f32.gmra.mrb[0].mxu0 %v758
        %v1588 = vpop.f32.mrb[0].mxu0
        %v1589 = vadd.f32 %v363, %v1588
        %v1590 = vpop.f32.mrb[0].mxu0
        %v1591 = vadd.f32 %v367, %v1590
        %1592 = vdwg.mxu0
        %1593 = vmatprep.subr.mxu0 0.0
        %1594 = vmatpush1.msra.mxu0 %v354
        %1595 = vmatprep.subr.mxu0 0.0
        %1596 = vmatpush1.msra.mxu0 %v357
        %1597 = vmatprep.subr.mxu0 0.0
        %1598 = vmatpush1.msra.mxu0 0.0
        %1599 = vmatprep.subr.mxu0 0.0
        %1600 = vmatpush1.msra.mxu0 0.0
        %1601 = vmatprep.subr.mxu0 0.0
        %1602 = vmatpush1.msra.mxu0 0.0
        %1603 = vmatprep.subr.mxu0 0.0
        %1604 = vmatpush1.msra.mxu0 0.0
        %1605 = vmatprep.subr.mxu0 0.0
        %1606 = vmatpush1.msra.mxu0 0.0
        %1607 = vmatprep.subr.mxu0 0.0
        %1608 = vmatpush1.msra.mxu0 0.0
        %1609 = vmatprep.subr.mxu0 0.0
        %1610 = vmatpush1.msra.mxu0 0.0
        %1611 = vmatprep.subr.mxu0 0.0
        %1612 = vmatpush1.msra.mxu0 0.0
        %1613 = vmatprep.subr.mxu0 0.0
        %1614 = vmatpush1.msra.mxu0 0.0
        %1615 = vmatprep.subr.mxu0 0.0
        %1616 = vmatpush1.msra.mxu0 0.0
        %1617 = vmatprep.subr.mxu0 0.0
        %1618 = vmatpush1.msra.mxu0 0.0
        %1619 = vmatprep.subr.mxu0 0.0
        %1620 = vmatpush1.msra.mxu0 0.0
        %1621 = vmatprep.subr.mxu0 0.0
        %1622 = vmatpush1.msra.mxu0 0.0
        %1623 = vmatprep.subr.mxu0 0.0
        %1624 = vmatpush1.msra.mxu0 0.0
        %1625 = vmatprep.subr.mxu0 0.0
        %1626 = vmatpush1.msra.mxu0 0.0
        %1627 = vmatprep.subr.mxu0 0.0
        %1628 = vmatpush1.msra.mxu0 0.0
        %1629 = vmatprep.subr.mxu0 0.0
        %1630 = vmatpush1.msra.mxu0 0.0
        %1631 = vmatprep.subr.mxu0 0.0
        %1632 = vmatpush1.msra.mxu0 0.0
        %1633 = vmatprep.subr.mxu0 0.0
        %1634 = vmatpush1.msra.mxu0 0.0
        %1635 = vmatprep.subr.mxu0 0.0
        %1636 = vmatpush1.msra.mxu0 0.0
        %1637 = vmatprep.subr.mxu0 0.0
        %1638 = vmatpush1.msra.mxu0 0.0
        %1639 = vmatprep.subr.mxu0 0.0
        %1640 = vmatpush1.msra.mxu0 0.0
        %1641 = vmatprep.subr.mxu0 0.0
        %1642 = vmatpush1.msra.mxu0 0.0
        %1643 = vmatprep.subr.mxu0 0.0
        %1644 = vmatpush1.msra.mxu0 0.0
        %1645 = vmatprep.subr.mxu0 0.0
        %1646 = vmatpush1.msra.mxu0 0.0
        %1647 = vmatprep.subr.mxu0 0.0
        %1648 = vmatpush1.msra.mxu0 0.0
        %1649 = vmatprep.subr.mxu0 0.0
        %1650 = vmatpush1.msra.mxu0 0.0
        %1651 = vmatprep.subr.mxu0 0.0
        %1652 = vmatpush1.msra.mxu0 0.0
        %1653 = vmatprep.subr.mxu0 0.0
        %1654 = vmatpush1.msra.mxu0 0.0
        %1655 = vmatprep.subr.mxu0 0.0
        %1656 = vmatpush1.msra.mxu0 0.0
        %1657 = vmatprep.mubr.f32.mxu0 0.0
        %1658 = vmatmul.mubr.f32.gmra.mrb[0].mxu0 %v377
        %v1659 = vpop.f32.mrb[0].mxu0
        %v1660 = vadd.f32 %v371, %v1659
        %v1661 = vpop.f32.mrb[0].mxu0
        %1662 = vmatprep.mubr.f32.mxu0 0.0
        %1663 = vmatmul.mubr.f32.gmra.mrb[0].mxu0 %v380
        %v1664 = vpop.f32.mrb[0].mxu0
        %v1665 = vadd.f32 %v371, %v1664
        %v1666 = vpop.f32.mrb[0].mxu0
        %1667 = vmatprep.mubr.f32.mxu0 0.0
        %1668 = vmatmul.mubr.f32.gmra.mrb[0].mxu0 %v383
        %v1669 = vpop.f32.mrb[0].mxu0
        %v1670 = vadd.f32 %v371, %v1669
        %v1671 = vpop.f32.mrb[0].mxu0
        %1672 = vmatprep.mubr.f32.mxu0 0.0
        %1673 = vmatmul.mubr.f32.gmra.mrb[0].mxu0 %v386
        %v1674 = vpop.f32.mrb[0].mxu0
        %v1675 = vadd.f32 %v371, %v1674
        %v1676 = vpop.f32.mrb[0].mxu0
        %1677 = vmatprep.mubr.f32.mxu0 0.0
        %1678 = vmatmul.mubr.f32.gmra.mrb[0].mxu0 %v389
        %v1679 = vpop.f32.mrb[0].mxu0
        %v1680 = vadd.f32 %v371, %v1679
        %v1681 = vpop.f32.mrb[0].mxu0
        %1682 = vmatprep.mubr.f32.mxu0 0.0
        %1683 = vmatmul.mubr.f32.gmra.mrb[0].mxu0 %v392
        %v1684 = vpop.f32.mrb[0].mxu0
        %v1685 = vadd.f32 %v371, %v1684
        %v1686 = vpop.f32.mrb[0].mxu0
        %1687 = vmatprep.mubr.f32.mxu0 0.0
        %1688 = vmatmul.mubr.f32.gmra.mrb[0].mxu0 %v395
        %v1689 = vpop.f32.mrb[0].mxu0
        %v1690 = vadd.f32 %v371, %v1689
        %v1691 = vpop.f32.mrb[0].mxu0
        %1692 = vmatprep.mubr.f32.mxu0 0.0
        %1693 = vmatmul.mubr.f32.gmra.mrb[0].mxu0 %v398
        %v1694 = vpop.f32.mrb[0].mxu0
        %v1695 = vadd.f32 %v371, %v1694
        %v1696 = vpop.f32.mrb[0].mxu0
        %1697 = vmatprep.mubr.f32.mxu0 0.0
        %1698 = vmatmul.mubr.f32.gmra.mrb[0].mxu0 %v401
        %v1699 = vpop.f32.mrb[0].mxu0
        %v1700 = vadd.f32 %v371, %v1699
        %v1701 = vpop.f32.mrb[0].mxu0
        %1702 = vmatprep.mubr.f32.mxu0 0.0
        %1703 = vmatmul.mubr.f32.gmra.mrb[0].mxu0 %v404
        %v1704 = vpop.f32.mrb[0].mxu0
        %v1705 = vadd.f32 %v371, %v1704
        %v1706 = vpop.f32.mrb[0].mxu0
        %1707 = vmatprep.mubr.f32.mxu0 0.0
        %1708 = vmatmul.mubr.f32.gmra.mrb[0].mxu0 %v407
        %v1709 = vpop.f32.mrb[0].mxu0
        %v1710 = vadd.f32 %v371, %v1709
        %v1711 = vpop.f32.mrb[0].mxu0
        %1712 = vmatprep.mubr.f32.mxu0 0.0
        %1713 = vmatmul.mubr.f32.gmra.mrb[0].mxu0 %v410
        %v1714 = vpop.f32.mrb[0].mxu0
        %v1715 = vadd.f32 %v371, %v1714
        %v1716 = vpop.f32.mrb[0].mxu0
        %1717 = vmatprep.mubr.f32.mxu0 0.0
        %1718 = vmatmul.mubr.f32.gmra.mrb[0].mxu0 %v413
        %v1719 = vpop.f32.mrb[0].mxu0
        %v1720 = vadd.f32 %v371, %v1719
        %v1721 = vpop.f32.mrb[0].mxu0
        %1722 = vmatprep.mubr.f32.mxu0 0.0
        %1723 = vmatmul.mubr.f32.gmra.mrb[0].mxu0 %v416
        %v1724 = vpop.f32.mrb[0].mxu0
        %v1725 = vadd.f32 %v371, %v1724
        %v1726 = vpop.f32.mrb[0].mxu0
        %1727 = vmatprep.mubr.f32.mxu0 0.0
        %1728 = vmatmul.mubr.f32.gmra.mrb[0].mxu0 %v419
        %v1729 = vpop.f32.mrb[0].mxu0
        %v1730 = vadd.f32 %v371, %v1729
        %v1731 = vpop.f32.mrb[0].mxu0
        %1732 = vmatprep.mubr.f32.mxu0 0.0
        %1733 = vmatmul.mubr.f32.gmra.mrb[0].mxu0 %v422
        %v1734 = vpop.f32.mrb[0].mxu0
        %v1735 = vadd.f32 %v371, %v1734
        %v1736 = vpop.f32.mrb[0].mxu0
        %1737 = vmatprep.mubr.f32.mxu0 0.0
        %1738 = vmatmul.mubr.f32.gmra.mrb[0].mxu0 %v425
        %v1739 = vpop.f32.mrb[0].mxu0
        %v1740 = vadd.f32 %v371, %v1739
        %v1741 = vpop.f32.mrb[0].mxu0
        %1742 = vmatprep.mubr.f32.mxu0 0.0
        %1743 = vmatmul.mubr.f32.gmra.mrb[0].mxu0 %v428
        %v1744 = vpop.f32.mrb[0].mxu0
        %v1745 = vadd.f32 %v371, %v1744
        %v1746 = vpop.f32.mrb[0].mxu0
        %1747 = vmatprep.mubr.f32.mxu0 0.0
        %1748 = vmatmul.mubr.f32.gmra.mrb[0].mxu0 %v431
        %v1749 = vpop.f32.mrb[0].mxu0
        %v1750 = vadd.f32 %v371, %v1749
        %v1751 = vpop.f32.mrb[0].mxu0
        %1752 = vmatprep.mubr.f32.mxu0 0.0
        %1753 = vmatmul.mubr.f32.gmra.mrb[0].mxu0 %v434
        %v1754 = vpop.f32.mrb[0].mxu0
        %v1755 = vadd.f32 %v371, %v1754
        %v1756 = vpop.f32.mrb[0].mxu0
        %1757 = vmatprep.mubr.f32.mxu0 0.0
        %1758 = vmatmul.mubr.f32.gmra.mrb[0].mxu0 %v437
        %v1759 = vpop.f32.mrb[0].mxu0
        %v1760 = vadd.f32 %v371, %v1759
        %v1761 = vpop.f32.mrb[0].mxu0
        %1762 = vmatprep.mubr.f32.mxu0 0.0
        %1763 = vmatmul.mubr.f32.gmra.mrb[0].mxu0 %v440
        %v1764 = vpop.f32.mrb[0].mxu0
        %v1765 = vadd.f32 %v371, %v1764
        %v1766 = vpop.f32.mrb[0].mxu0
        %1767 = vmatprep.mubr.f32.mxu0 0.0
        %1768 = vmatmul.mubr.f32.gmra.mrb[0].mxu0 %v443
        %v1769 = vpop.f32.mrb[0].mxu0
        %v1770 = vadd.f32 %v371, %v1769
        %v1771 = vpop.f32.mrb[0].mxu0
        %1772 = vmatprep.mubr.f32.mxu0 0.0
        %1773 = vmatmul.mubr.f32.gmra.mrb[0].mxu0 %v446
        %v1774 = vpop.f32.mrb[0].mxu0
        %v1775 = vadd.f32 %v371, %v1774
        %v1776 = vpop.f32.mrb[0].mxu0
        %1777 = vmatprep.mubr.f32.mxu0 0.0
        %1778 = vmatmul.mubr.f32.gmra.mrb[0].mxu0 %v449
        %v1779 = vpop.f32.mrb[0].mxu0
        %v1780 = vadd.f32 %v371, %v1779
        %v1781 = vpop.f32.mrb[0].mxu0
        %1782 = vmatprep.mubr.f32.mxu0 0.0
        %1783 = vmatmul.mubr.f32.gmra.mrb[0].mxu0 %v452
        %v1784 = vpop.f32.mrb[0].mxu0
        %v1785 = vadd.f32 %v371, %v1784
        %v1786 = vpop.f32.mrb[0].mxu0
        %1787 = vmatprep.mubr.f32.mxu0 0.0
        %1788 = vmatmul.mubr.f32.gmra.mrb[0].mxu0 %v455
        %v1789 = vpop.f32.mrb[0].mxu0
        %v1790 = vadd.f32 %v371, %v1789
        %v1791 = vpop.f32.mrb[0].mxu0
        %1792 = vmatprep.mubr.f32.mxu0 0.0
        %1793 = vmatmul.mubr.f32.gmra.mrb[0].mxu0 %v458
        %v1794 = vpop.f32.mrb[0].mxu0
        %v1795 = vadd.f32 %v371, %v1794
        %v1796 = vpop.f32.mrb[0].mxu0
        %1797 = vmatprep.mubr.f32.mxu0 0.0
        %1798 = vmatmul.mubr.f32.gmra.mrb[0].mxu0 %v461
        %v1799 = vpop.f32.mrb[0].mxu0
        %v1800 = vadd.f32 %v371, %v1799
        %v1801 = vpop.f32.mrb[0].mxu0
        %1802 = vmatprep.mubr.f32.mxu0 0.0
        %1803 = vmatmul.mubr.f32.gmra.mrb[0].mxu0 %v464
        %v1804 = vpop.f32.mrb[0].mxu0
        %v1805 = vadd.f32 %v371, %v1804
        %v1806 = vpop.f32.mrb[0].mxu0
        %1807 = vmatprep.mubr.f32.mxu0 0.0
        %1808 = vmatmul.mubr.f32.gmra.mrb[0].mxu0 %v467
        %v1809 = vpop.f32.mrb[0].mxu0
        %v1810 = vadd.f32 %v371, %v1809
        %v1811 = vpop.f32.mrb[0].mxu0
        %1812 = vmatprep.mubr.f32.mxu0 0.0
        %1813 = vmatmul.mubr.f32.gmra.mrb[0].mxu0 %v470
        %v1814 = vpop.f32.mrb[0].mxu0
        %v1815 = vadd.f32 %v371, %v1814
        %v1816 = vpop.f32.mrb[0].mxu0
        %1817 = vmatprep.mubr.f32.mxu0 0.0
        %1818 = vmatmul.mubr.f32.gmra.mrb[0].mxu0 %v473
        %v1819 = vpop.f32.mrb[0].mxu0
        %v1820 = vadd.f32 %v371, %v1819
        %v1821 = vpop.f32.mrb[0].mxu0
        %1822 = vmatprep.mubr.f32.mxu0 0.0
        %1823 = vmatmul.mubr.f32.gmra.mrb[0].mxu0 %v476
        %v1824 = vpop.f32.mrb[0].mxu0
        %v1825 = vadd.f32 %v371, %v1824
        %v1826 = vpop.f32.mrb[0].mxu0
        %1827 = vmatprep.mubr.f32.mxu0 0.0
        %1828 = vmatmul.mubr.f32.gmra.mrb[0].mxu0 %v479
        %v1829 = vpop.f32.mrb[0].mxu0
        %v1830 = vadd.f32 %v371, %v1829
        %v1831 = vpop.f32.mrb[0].mxu0
        %1832 = vmatprep.mubr.f32.mxu0 0.0
        %1833 = vmatmul.mubr.f32.gmra.mrb[0].mxu0 %v482
        %v1834 = vpop.f32.mrb[0].mxu0
        %v1835 = vadd.f32 %v371, %v1834
        %v1836 = vpop.f32.mrb[0].mxu0
        %1837 = vmatprep.mubr.f32.mxu0 0.0
        %1838 = vmatmul.mubr.f32.gmra.mrb[0].mxu0 %v485
        %v1839 = vpop.f32.mrb[0].mxu0
        %v1840 = vadd.f32 %v371, %v1839
        %v1841 = vpop.f32.mrb[0].mxu0
        %1842 = vmatprep.mubr.f32.mxu0 0.0
        %1843 = vmatmul.mubr.f32.gmra.mrb[0].mxu0 %v488
        %v1844 = vpop.f32.mrb[0].mxu0
        %v1845 = vadd.f32 %v371, %v1844
        %v1846 = vpop.f32.mrb[0].mxu0
        %1847 = vmatprep.mubr.f32.mxu0 0.0
        %1848 = vmatmul.mubr.f32.gmra.mrb[0].mxu0 %v491
        %v1849 = vpop.f32.mrb[0].mxu0
        %v1850 = vadd.f32 %v371, %v1849
        %v1851 = vpop.f32.mrb[0].mxu0
        %1852 = vmatprep.mubr.f32.mxu0 0.0
        %1853 = vmatmul.mubr.f32.gmra.mrb[0].mxu0 %v494
        %v1854 = vpop.f32.mrb[0].mxu0
        %v1855 = vadd.f32 %v371, %v1854
        %v1856 = vpop.f32.mrb[0].mxu0
        %1857 = vmatprep.mubr.f32.mxu0 0.0
        %1858 = vmatmul.mubr.f32.gmra.mrb[0].mxu0 %v497
        %v1859 = vpop.f32.mrb[0].mxu0
        %v1860 = vadd.f32 %v371, %v1859
        %v1861 = vpop.f32.mrb[0].mxu0
        %1862 = vmatprep.mubr.f32.mxu0 0.0
        %1863 = vmatmul.mubr.f32.gmra.mrb[0].mxu0 %v500
        %v1864 = vpop.f32.mrb[0].mxu0
        %v1865 = vadd.f32 %v371, %v1864
        %v1866 = vpop.f32.mrb[0].mxu0
        %1867 = vmatprep.mubr.f32.mxu0 0.0
        %1868 = vmatmul.mubr.f32.gmra.mrb[0].mxu0 %v503
        %v1869 = vpop.f32.mrb[0].mxu0
        %v1870 = vadd.f32 %v371, %v1869
        %v1871 = vpop.f32.mrb[0].mxu0
        %1872 = vmatprep.mubr.f32.mxu0 0.0
        %1873 = vmatmul.mubr.f32.gmra.mrb[0].mxu0 %v506
        %v1874 = vpop.f32.mrb[0].mxu0
        %v1875 = vadd.f32 %v371, %v1874
        %v1876 = vpop.f32.mrb[0].mxu0
        %1877 = vmatprep.mubr.f32.mxu0 0.0
        %1878 = vmatmul.mubr.f32.gmra.mrb[0].mxu0 %v509
        %v1879 = vpop.f32.mrb[0].mxu0
        %v1880 = vadd.f32 %v371, %v1879
        %v1881 = vpop.f32.mrb[0].mxu0
        %1882 = vmatprep.mubr.f32.mxu0 0.0
        %1883 = vmatmul.mubr.f32.gmra.mrb[0].mxu0 %v512
        %v1884 = vpop.f32.mrb[0].mxu0
        %v1885 = vadd.f32 %v371, %v1884
        %v1886 = vpop.f32.mrb[0].mxu0
        %1887 = vmatprep.mubr.f32.mxu0 0.0
        %1888 = vmatmul.mubr.f32.gmra.mrb[0].mxu0 %v515
        %v1889 = vpop.f32.mrb[0].mxu0
        %v1890 = vadd.f32 %v371, %v1889
        %v1891 = vpop.f32.mrb[0].mxu0
        %1892 = vmatprep.mubr.f32.mxu0 0.0
        %1893 = vmatmul.mubr.f32.gmra.mrb[0].mxu0 %v518
        %v1894 = vpop.f32.mrb[0].mxu0
        %v1895 = vadd.f32 %v371, %v1894
        %v1896 = vpop.f32.mrb[0].mxu0
        %1897 = vmatprep.mubr.f32.mxu0 0.0
        %1898 = vmatmul.mubr.f32.gmra.mrb[0].mxu0 %v521
        %v1899 = vpop.f32.mrb[0].mxu0
        %v1900 = vadd.f32 %v371, %v1899
        %v1901 = vpop.f32.mrb[0].mxu0
        %1902 = vmatprep.mubr.f32.mxu0 0.0
        %1903 = vmatmul.mubr.f32.gmra.mrb[0].mxu0 %v524
        %v1904 = vpop.f32.mrb[0].mxu0
        %v1905 = vadd.f32 %v371, %v1904
        %v1906 = vpop.f32.mrb[0].mxu0
        %1907 = vmatprep.mubr.f32.mxu0 0.0
        %1908 = vmatmul.mubr.f32.gmra.mrb[0].mxu0 %v527
        %v1909 = vpop.f32.mrb[0].mxu0
        %v1910 = vadd.f32 %v371, %v1909
        %v1911 = vpop.f32.mrb[0].mxu0
        %1912 = vmatprep.mubr.f32.mxu0 0.0
        %1913 = vmatmul.mubr.f32.gmra.mrb[0].mxu0 %v530
        %v1914 = vpop.f32.mrb[0].mxu0
        %v1915 = vadd.f32 %v371, %v1914
        %v1916 = vpop.f32.mrb[0].mxu0
        %1917 = vmatprep.mubr.f32.mxu0 0.0
        %1918 = vmatmul.mubr.f32.gmra.mrb[0].mxu0 %v533
        %v1919 = vpop.f32.mrb[0].mxu0
        %v1920 = vadd.f32 %v371, %v1919
        %v1921 = vpop.f32.mrb[0].mxu0
        %1922 = vmatprep.mubr.f32.mxu0 0.0
        %1923 = vmatmul.mubr.f32.gmra.mrb[0].mxu0 %v536
        %v1924 = vpop.f32.mrb[0].mxu0
        %v1925 = vadd.f32 %v371, %v1924
        %v1926 = vpop.f32.mrb[0].mxu0
        %1927 = vmatprep.mubr.f32.mxu0 0.0
        %1928 = vmatmul.mubr.f32.gmra.mrb[0].mxu0 %v539
        %v1929 = vpop.f32.mrb[0].mxu0
        %v1930 = vadd.f32 %v371, %v1929
        %v1931 = vpop.f32.mrb[0].mxu0
        %1932 = vmatprep.mubr.f32.mxu0 0.0
        %1933 = vmatmul.mubr.f32.gmra.mrb[0].mxu0 %v542
        %v1934 = vpop.f32.mrb[0].mxu0
        %v1935 = vadd.f32 %v371, %v1934
        %v1936 = vpop.f32.mrb[0].mxu0
        %1937 = vmatprep.mubr.f32.mxu0 0.0
        %1938 = vmatmul.mubr.f32.gmra.mrb[0].mxu0 %v545
        %v1939 = vpop.f32.mrb[0].mxu0
        %v1940 = vadd.f32 %v371, %v1939
        %v1941 = vpop.f32.mrb[0].mxu0
        %1942 = vmatprep.mubr.f32.mxu0 0.0
        %1943 = vmatmul.mubr.f32.gmra.mrb[0].mxu0 %v548
        %v1944 = vpop.f32.mrb[0].mxu0
        %v1945 = vadd.f32 %v371, %v1944
        %v1946 = vpop.f32.mrb[0].mxu0
        %1947 = vmatprep.mubr.f32.mxu0 0.0
        %1948 = vmatmul.mubr.f32.gmra.mrb[0].mxu0 %v551
        %v1949 = vpop.f32.mrb[0].mxu0
        %v1950 = vadd.f32 %v371, %v1949
        %v1951 = vpop.f32.mrb[0].mxu0
        %1952 = vmatprep.mubr.f32.mxu0 0.0
        %1953 = vmatmul.mubr.f32.gmra.mrb[0].mxu0 %v554
        %v1954 = vpop.f32.mrb[0].mxu0
        %v1955 = vadd.f32 %v371, %v1954
        %v1956 = vpop.f32.mrb[0].mxu0
        %1957 = vmatprep.mubr.f32.mxu0 0.0
        %1958 = vmatmul.mubr.f32.gmra.mrb[0].mxu0 %v557
        %v1959 = vpop.f32.mrb[0].mxu0
        %v1960 = vadd.f32 %v371, %v1959
        %v1961 = vpop.f32.mrb[0].mxu0
        %1962 = vmatprep.mubr.f32.mxu0 0.0
        %1963 = vmatmul.mubr.f32.gmra.mrb[0].mxu0 %v560
        %v1964 = vpop.f32.mrb[0].mxu0
        %v1965 = vadd.f32 %v371, %v1964
        %v1966 = vpop.f32.mrb[0].mxu0
        %1967 = vmatprep.mubr.f32.mxu0 0.0
        %1968 = vmatmul.mubr.f32.gmra.mrb[0].mxu0 %v563
        %v1969 = vpop.f32.mrb[0].mxu0
        %v1970 = vadd.f32 %v371, %v1969
        %v1971 = vpop.f32.mrb[0].mxu0
        %1972 = vmatprep.mubr.f32.mxu0 0.0
        %1973 = vmatmul.mubr.f32.gmra.mrb[0].mxu0 %v566
        %v1974 = vpop.f32.mrb[0].mxu0
        %v1975 = vadd.f32 %v371, %v1974
        %v1976 = vpop.f32.mrb[0].mxu0
        %1977 = vmatprep.mubr.f32.mxu0 0.0
        %1978 = vmatmul.mubr.f32.gmra.mrb[0].mxu0 %v569
        %v1979 = vpop.f32.mrb[0].mxu0
        %v1980 = vadd.f32 %v371, %v1979
        %v1981 = vpop.f32.mrb[0].mxu0
        %1982 = vmatprep.mubr.f32.mxu0 0.0
        %1983 = vmatmul.mubr.f32.gmra.mrb[0].mxu0 %v572
        %v1984 = vpop.f32.mrb[0].mxu0
        %v1985 = vadd.f32 %v371, %v1984
        %v1986 = vpop.f32.mrb[0].mxu0
        %1987 = vmatprep.mubr.f32.mxu0 0.0
        %1988 = vmatmul.mubr.f32.gmra.mrb[0].mxu0 %v575
        %v1989 = vpop.f32.mrb[0].mxu0
        %v1990 = vadd.f32 %v371, %v1989
        %v1991 = vpop.f32.mrb[0].mxu0
        %1992 = vmatprep.mubr.f32.mxu0 0.0
        %1993 = vmatmul.mubr.f32.gmra.mrb[0].mxu0 %v578
        %v1994 = vpop.f32.mrb[0].mxu0
        %v1995 = vadd.f32 %v371, %v1994
        %v1996 = vpop.f32.mrb[0].mxu0
        %1997 = vmatprep.mubr.f32.mxu0 0.0
        %1998 = vmatmul.mubr.f32.gmra.mrb[0].mxu0 %v581
        %v1999 = vpop.f32.mrb[0].mxu0
        %v2000 = vadd.f32 %v371, %v1999
        %v2001 = vpop.f32.mrb[0].mxu0
        %2002 = vmatprep.mubr.f32.mxu0 0.0
        %2003 = vmatmul.mubr.f32.gmra.mrb[0].mxu0 %v584
        %v2004 = vpop.f32.mrb[0].mxu0
        %v2005 = vadd.f32 %v371, %v2004
        %v2006 = vpop.f32.mrb[0].mxu0
        %2007 = vmatprep.mubr.f32.mxu0 0.0
        %2008 = vmatmul.mubr.f32.gmra.mrb[0].mxu0 %v587
        %v2009 = vpop.f32.mrb[0].mxu0
        %v2010 = vadd.f32 %v371, %v2009
        %v2011 = vpop.f32.mrb[0].mxu0
        %2012 = vmatprep.mubr.f32.mxu0 0.0
        %2013 = vmatmul.mubr.f32.gmra.mrb[0].mxu0 %v590
        %v2014 = vpop.f32.mrb[0].mxu0
        %v2015 = vadd.f32 %v371, %v2014
        %v2016 = vpop.f32.mrb[0].mxu0
        %2017 = vmatprep.mubr.f32.mxu0 0.0
        %2018 = vmatmul.mubr.f32.gmra.mrb[0].mxu0 %v593
        %v2019 = vpop.f32.mrb[0].mxu0
        %v2020 = vadd.f32 %v371, %v2019
        %v2021 = vpop.f32.mrb[0].mxu0
        %2022 = vmatprep.mubr.f32.mxu0 0.0
        %2023 = vmatmul.mubr.f32.gmra.mrb[0].mxu0 %v596
        %v2024 = vpop.f32.mrb[0].mxu0
        %v2025 = vadd.f32 %v371, %v2024
        %v2026 = vpop.f32.mrb[0].mxu0
        %2027 = vmatprep.mubr.f32.mxu0 0.0
        %2028 = vmatmul.mubr.f32.gmra.mrb[0].mxu0 %v599
        %v2029 = vpop.f32.mrb[0].mxu0
        %v2030 = vadd.f32 %v371, %v2029
        %v2031 = vpop.f32.mrb[0].mxu0
        %2032 = vmatprep.mubr.f32.mxu0 0.0
        %2033 = vmatmul.mubr.f32.gmra.mrb[0].mxu0 %v602
        %v2034 = vpop.f32.mrb[0].mxu0
        %v2035 = vadd.f32 %v371, %v2034
        %v2036 = vpop.f32.mrb[0].mxu0
        %2037 = vmatprep.mubr.f32.mxu0 0.0
        %2038 = vmatmul.mubr.f32.gmra.mrb[0].mxu0 %v605
        %v2039 = vpop.f32.mrb[0].mxu0
        %v2040 = vadd.f32 %v371, %v2039
        %v2041 = vpop.f32.mrb[0].mxu0
        %2042 = vmatprep.mubr.f32.mxu0 0.0
        %2043 = vmatmul.mubr.f32.gmra.mrb[0].mxu0 %v608
        %v2044 = vpop.f32.mrb[0].mxu0
        %v2045 = vadd.f32 %v371, %v2044
        %v2046 = vpop.f32.mrb[0].mxu0
        %2047 = vmatprep.mubr.f32.mxu0 0.0
        %2048 = vmatmul.mubr.f32.gmra.mrb[0].mxu0 %v611
        %v2049 = vpop.f32.mrb[0].mxu0
        %v2050 = vadd.f32 %v371, %v2049
        %v2051 = vpop.f32.mrb[0].mxu0
        %2052 = vmatprep.mubr.f32.mxu0 0.0
        %2053 = vmatmul.mubr.f32.gmra.mrb[0].mxu0 %v614
        %v2054 = vpop.f32.mrb[0].mxu0
        %v2055 = vadd.f32 %v371, %v2054
        %v2056 = vpop.f32.mrb[0].mxu0
        %2057 = vmatprep.mubr.f32.mxu0 0.0
        %2058 = vmatmul.mubr.f32.gmra.mrb[0].mxu0 %v617
        %v2059 = vpop.f32.mrb[0].mxu0
        %v2060 = vadd.f32 %v371, %v2059
        %v2061 = vpop.f32.mrb[0].mxu0
        %2062 = vmatprep.mubr.f32.mxu0 0.0
        %2063 = vmatmul.mubr.f32.gmra.mrb[0].mxu0 %v620
        %v2064 = vpop.f32.mrb[0].mxu0
        %v2065 = vadd.f32 %v371, %v2064
        %v2066 = vpop.f32.mrb[0].mxu0
        %2067 = vmatprep.mubr.f32.mxu0 0.0
        %2068 = vmatmul.mubr.f32.gmra.mrb[0].mxu0 %v623
        %v2069 = vpop.f32.mrb[0].mxu0
        %v2070 = vadd.f32 %v371, %v2069
        %v2071 = vpop.f32.mrb[0].mxu0
        %2072 = vmatprep.mubr.f32.mxu0 0.0
        %2073 = vmatmul.mubr.f32.gmra.mrb[0].mxu0 %v626
        %v2074 = vpop.f32.mrb[0].mxu0
        %v2075 = vadd.f32 %v371, %v2074
        %v2076 = vpop.f32.mrb[0].mxu0
        %2077 = vmatprep.mubr.f32.mxu0 0.0
        %2078 = vmatmul.mubr.f32.gmra.mrb[0].mxu0 %v629
        %v2079 = vpop.f32.mrb[0].mxu0
        %v2080 = vadd.f32 %v371, %v2079
        %v2081 = vpop.f32.mrb[0].mxu0
        %2082 = vmatprep.mubr.f32.mxu0 0.0
        %2083 = vmatmul.mubr.f32.gmra.mrb[0].mxu0 %v632
        %v2084 = vpop.f32.mrb[0].mxu0
        %v2085 = vadd.f32 %v371, %v2084
        %v2086 = vpop.f32.mrb[0].mxu0
        %2087 = vmatprep.mubr.f32.mxu0 0.0
        %2088 = vmatmul.mubr.f32.gmra.mrb[0].mxu0 %v635
        %v2089 = vpop.f32.mrb[0].mxu0
        %v2090 = vadd.f32 %v371, %v2089
        %v2091 = vpop.f32.mrb[0].mxu0
        %2092 = vmatprep.mubr.f32.mxu0 0.0
        %2093 = vmatmul.mubr.f32.gmra.mrb[0].mxu0 %v638
        %v2094 = vpop.f32.mrb[0].mxu0
        %v2095 = vadd.f32 %v371, %v2094
        %v2096 = vpop.f32.mrb[0].mxu0
        %2097 = vmatprep.mubr.f32.mxu0 0.0
        %2098 = vmatmul.mubr.f32.gmra.mrb[0].mxu0 %v641
        %v2099 = vpop.f32.mrb[0].mxu0
        %v2100 = vadd.f32 %v371, %v2099
        %v2101 = vpop.f32.mrb[0].mxu0
        %2102 = vmatprep.mubr.f32.mxu0 0.0
        %2103 = vmatmul.mubr.f32.gmra.mrb[0].mxu0 %v644
        %v2104 = vpop.f32.mrb[0].mxu0
        %v2105 = vadd.f32 %v371, %v2104
        %v2106 = vpop.f32.mrb[0].mxu0
        %2107 = vmatprep.mubr.f32.mxu0 0.0
        %2108 = vmatmul.mubr.f32.gmra.mrb[0].mxu0 %v647
        %v2109 = vpop.f32.mrb[0].mxu0
        %v2110 = vadd.f32 %v371, %v2109
        %v2111 = vpop.f32.mrb[0].mxu0
        %2112 = vmatprep.mubr.f32.mxu0 0.0
        %2113 = vmatmul.mubr.f32.gmra.mrb[0].mxu0 %v650
        %v2114 = vpop.f32.mrb[0].mxu0
        %v2115 = vadd.f32 %v371, %v2114
        %v2116 = vpop.f32.mrb[0].mxu0
        %2117 = vmatprep.mubr.f32.mxu0 0.0
        %2118 = vmatmul.mubr.f32.gmra.mrb[0].mxu0 %v653
        %v2119 = vpop.f32.mrb[0].mxu0
        %v2120 = vadd.f32 %v371, %v2119
        %v2121 = vpop.f32.mrb[0].mxu0
        %2122 = vmatprep.mubr.f32.mxu0 0.0
        %2123 = vmatmul.mubr.f32.gmra.mrb[0].mxu0 %v656
        %v2124 = vpop.f32.mrb[0].mxu0
        %v2125 = vadd.f32 %v371, %v2124
        %v2126 = vpop.f32.mrb[0].mxu0
        %2127 = vmatprep.mubr.f32.mxu0 0.0
        %2128 = vmatmul.mubr.f32.gmra.mrb[0].mxu0 %v659
        %v2129 = vpop.f32.mrb[0].mxu0
        %v2130 = vadd.f32 %v371, %v2129
        %v2131 = vpop.f32.mrb[0].mxu0
        %2132 = vmatprep.mubr.f32.mxu0 0.0
        %2133 = vmatmul.mubr.f32.gmra.mrb[0].mxu0 %v662
        %v2134 = vpop.f32.mrb[0].mxu0
        %v2135 = vadd.f32 %v371, %v2134
        %v2136 = vpop.f32.mrb[0].mxu0
        %2137 = vmatprep.mubr.f32.mxu0 0.0
        %2138 = vmatmul.mubr.f32.gmra.mrb[0].mxu0 %v665
        %v2139 = vpop.f32.mrb[0].mxu0
        %v2140 = vadd.f32 %v371, %v2139
        %v2141 = vpop.f32.mrb[0].mxu0
        %2142 = vmatprep.mubr.f32.mxu0 0.0
        %2143 = vmatmul.mubr.f32.gmra.mrb[0].mxu0 %v668
        %v2144 = vpop.f32.mrb[0].mxu0
        %v2145 = vadd.f32 %v371, %v2144
        %v2146 = vpop.f32.mrb[0].mxu0
        %2147 = vmatprep.mubr.f32.mxu0 0.0
        %2148 = vmatmul.mubr.f32.gmra.mrb[0].mxu0 %v671
        %v2149 = vpop.f32.mrb[0].mxu0
        %v2150 = vadd.f32 %v371, %v2149
        %v2151 = vpop.f32.mrb[0].mxu0
        %2152 = vmatprep.mubr.f32.mxu0 0.0
        %2153 = vmatmul.mubr.f32.gmra.mrb[0].mxu0 %v674
        %v2154 = vpop.f32.mrb[0].mxu0
        %v2155 = vadd.f32 %v371, %v2154
        %v2156 = vpop.f32.mrb[0].mxu0
        %2157 = vmatprep.mubr.f32.mxu0 0.0
        %2158 = vmatmul.mubr.f32.gmra.mrb[0].mxu0 %v677
        %v2159 = vpop.f32.mrb[0].mxu0
        %v2160 = vadd.f32 %v371, %v2159
        %v2161 = vpop.f32.mrb[0].mxu0
        %2162 = vmatprep.mubr.f32.mxu0 0.0
        %2163 = vmatmul.mubr.f32.gmra.mrb[0].mxu0 %v680
        %v2164 = vpop.f32.mrb[0].mxu0
        %v2165 = vadd.f32 %v371, %v2164
        %v2166 = vpop.f32.mrb[0].mxu0
        %2167 = vmatprep.mubr.f32.mxu0 0.0
        %2168 = vmatmul.mubr.f32.gmra.mrb[0].mxu0 %v683
        %v2169 = vpop.f32.mrb[0].mxu0
        %v2170 = vadd.f32 %v371, %v2169
        %v2171 = vpop.f32.mrb[0].mxu0
        %2172 = vmatprep.mubr.f32.mxu0 0.0
        %2173 = vmatmul.mubr.f32.gmra.mrb[0].mxu0 %v686
        %v2174 = vpop.f32.mrb[0].mxu0
        %v2175 = vadd.f32 %v371, %v2174
        %v2176 = vpop.f32.mrb[0].mxu0
        %2177 = vmatprep.mubr.f32.mxu0 0.0
        %2178 = vmatmul.mubr.f32.gmra.mrb[0].mxu0 %v689
        %v2179 = vpop.f32.mrb[0].mxu0
        %v2180 = vadd.f32 %v371, %v2179
        %v2181 = vpop.f32.mrb[0].mxu0
        %2182 = vmatprep.mubr.f32.mxu0 0.0
        %2183 = vmatmul.mubr.f32.gmra.mrb[0].mxu0 %v692
        %v2184 = vpop.f32.mrb[0].mxu0
        %v2185 = vadd.f32 %v371, %v2184
        %v2186 = vpop.f32.mrb[0].mxu0
        %2187 = vmatprep.mubr.f32.mxu0 0.0
        %2188 = vmatmul.mubr.f32.gmra.mrb[0].mxu0 %v695
        %v2189 = vpop.f32.mrb[0].mxu0
        %v2190 = vadd.f32 %v371, %v2189
        %v2191 = vpop.f32.mrb[0].mxu0
        %2192 = vmatprep.mubr.f32.mxu0 0.0
        %2193 = vmatmul.mubr.f32.gmra.mrb[0].mxu0 %v698
        %v2194 = vpop.f32.mrb[0].mxu0
        %v2195 = vadd.f32 %v371, %v2194
        %v2196 = vpop.f32.mrb[0].mxu0
        %2197 = vmatprep.mubr.f32.mxu0 0.0
        %2198 = vmatmul.mubr.f32.gmra.mrb[0].mxu0 %v701
        %v2199 = vpop.f32.mrb[0].mxu0
        %v2200 = vadd.f32 %v371, %v2199
        %v2201 = vpop.f32.mrb[0].mxu0
        %2202 = vmatprep.mubr.f32.mxu0 0.0
        %2203 = vmatmul.mubr.f32.gmra.mrb[0].mxu0 %v704
        %v2204 = vpop.f32.mrb[0].mxu0
        %v2205 = vadd.f32 %v371, %v2204
        %v2206 = vpop.f32.mrb[0].mxu0
        %2207 = vmatprep.mubr.f32.mxu0 0.0
        %2208 = vmatmul.mubr.f32.gmra.mrb[0].mxu0 %v707
        %v2209 = vpop.f32.mrb[0].mxu0
        %v2210 = vadd.f32 %v371, %v2209
        %v2211 = vpop.f32.mrb[0].mxu0
        %2212 = vmatprep.mubr.f32.mxu0 0.0
        %2213 = vmatmul.mubr.f32.gmra.mrb[0].mxu0 %v710
        %v2214 = vpop.f32.mrb[0].mxu0
        %v2215 = vadd.f32 %v371, %v2214
        %v2216 = vpop.f32.mrb[0].mxu0
        %2217 = vmatprep.mubr.f32.mxu0 0.0
        %2218 = vmatmul.mubr.f32.gmra.mrb[0].mxu0 %v713
        %v2219 = vpop.f32.mrb[0].mxu0
        %v2220 = vadd.f32 %v371, %v2219
        %v2221 = vpop.f32.mrb[0].mxu0
        %2222 = vmatprep.mubr.f32.mxu0 0.0
        %2223 = vmatmul.mubr.f32.gmra.mrb[0].mxu0 %v716
        %v2224 = vpop.f32.mrb[0].mxu0
        %v2225 = vadd.f32 %v371, %v2224
        %v2226 = vpop.f32.mrb[0].mxu0
        %2227 = vmatprep.mubr.f32.mxu0 0.0
        %2228 = vmatmul.mubr.f32.gmra.mrb[0].mxu0 %v719
        %v2229 = vpop.f32.mrb[0].mxu0
        %v2230 = vadd.f32 %v371, %v2229
        %v2231 = vpop.f32.mrb[0].mxu0
        %2232 = vmatprep.mubr.f32.mxu0 0.0
        %2233 = vmatmul.mubr.f32.gmra.mrb[0].mxu0 %v722
        %v2234 = vpop.f32.mrb[0].mxu0
        %v2235 = vadd.f32 %v371, %v2234
        %v2236 = vpop.f32.mrb[0].mxu0
        %2237 = vmatprep.mubr.f32.mxu0 0.0
        %2238 = vmatmul.mubr.f32.gmra.mrb[0].mxu0 %v725
        %v2239 = vpop.f32.mrb[0].mxu0
        %v2240 = vadd.f32 %v371, %v2239
        %v2241 = vpop.f32.mrb[0].mxu0
        %2242 = vmatprep.mubr.f32.mxu0 0.0
        %2243 = vmatmul.mubr.f32.gmra.mrb[0].mxu0 %v728
        %v2244 = vpop.f32.mrb[0].mxu0
        %v2245 = vadd.f32 %v371, %v2244
        %v2246 = vpop.f32.mrb[0].mxu0
        %2247 = vmatprep.mubr.f32.mxu0 0.0
        %2248 = vmatmul.mubr.f32.gmra.mrb[0].mxu0 %v731
        %v2249 = vpop.f32.mrb[0].mxu0
        %v2250 = vadd.f32 %v371, %v2249
        %v2251 = vpop.f32.mrb[0].mxu0
        %2252 = vmatprep.mubr.f32.mxu0 0.0
        %2253 = vmatmul.mubr.f32.gmra.mrb[0].mxu0 %v734
        %v2254 = vpop.f32.mrb[0].mxu0
        %v2255 = vadd.f32 %v371, %v2254
        %v2256 = vpop.f32.mrb[0].mxu0
        %2257 = vmatprep.mubr.f32.mxu0 0.0
        %2258 = vmatmul.mubr.f32.gmra.mrb[0].mxu0 %v737
        %v2259 = vpop.f32.mrb[0].mxu0
        %v2260 = vadd.f32 %v371, %v2259
        %v2261 = vpop.f32.mrb[0].mxu0
        %2262 = vmatprep.mubr.f32.mxu0 0.0
        %2263 = vmatmul.mubr.f32.gmra.mrb[0].mxu0 %v740
        %v2264 = vpop.f32.mrb[0].mxu0
        %v2265 = vadd.f32 %v371, %v2264
        %v2266 = vpop.f32.mrb[0].mxu0
        %2267 = vmatprep.mubr.f32.mxu0 0.0
        %2268 = vmatmul.mubr.f32.gmra.mrb[0].mxu0 %v743
        %v2269 = vpop.f32.mrb[0].mxu0
        %v2270 = vadd.f32 %v371, %v2269
        %v2271 = vpop.f32.mrb[0].mxu0
        %2272 = vmatprep.mubr.f32.mxu0 0.0
        %2273 = vmatmul.mubr.f32.gmra.mrb[0].mxu0 %v746
        %v2274 = vpop.f32.mrb[0].mxu0
        %v2275 = vadd.f32 %v371, %v2274
        %v2276 = vpop.f32.mrb[0].mxu0
        %2277 = vmatprep.mubr.f32.mxu0 0.0
        %2278 = vmatmul.mubr.f32.gmra.mrb[0].mxu0 %v749
        %v2279 = vpop.f32.mrb[0].mxu0
        %v2280 = vadd.f32 %v371, %v2279
        %v2281 = vpop.f32.mrb[0].mxu0
        %2282 = vmatprep.mubr.f32.mxu0 0.0
        %2283 = vmatmul.mubr.f32.gmra.mrb[0].mxu0 %v752
        %v2284 = vpop.f32.mrb[0].mxu0
        %v2285 = vadd.f32 %v371, %v2284
        %v2286 = vpop.f32.mrb[0].mxu0
        %2287 = vmatprep.mubr.f32.mxu0 0.0
        %2288 = vmatmul.mubr.f32.gmra.mrb[0].mxu0 %v755
        %v2289 = vpop.f32.mrb[0].mxu0
        %v2290 = vadd.f32 %v371, %v2289
        %v2291 = vpop.f32.mrb[0].mxu0
        %2292 = vmatprep.mubr.f32.mxu0 0.0
        %2293 = vmatmul.mubr.f32.gmra.mrb[0].mxu0 %v758
        %v2294 = vpop.f32.mrb[0].mxu0
        %v2295 = vadd.f32 %v371, %v2294
        %v2296 = vpop.f32.mrb[0].mxu0
        %2297 = vdwg.mxu0
        %v2298 = vld [vmem:[%s2] sm:$0xff]
        %v2299 = vld [vmem:[%s2 + $0x8] sm:$0xff]
        %v2300 = vld [vmem:[%s2 + $0x10] sm:$0xff]
        %v2301 = vld [vmem:[%s2 + $0x18] sm:$0xff]
        %v2302 = vld [vmem:[%s2 + $0x20] sm:$0xff]
        %v2303 = vld [vmem:[%s2 + $0x28] sm:$0xff]
        %v2304 = vld [vmem:[%s2 + $0x30] sm:$0xff]
        %v2305 = vld [vmem:[%s2 + $0x38] sm:$0xff]
        %v2306 = vld [vmem:[%s2 + $0x40] sm:$0xff]
        %v2307 = vld [vmem:[%s2 + $0x48] sm:$0xff]
        %v2308 = vld [vmem:[%s2 + $0x50] sm:$0xff]
        %v2309 = vld [vmem:[%s2 + $0x58] sm:$0xff]
        %v2310 = vld [vmem:[%s2 + $0x60] sm:$0xff]
        %v2311 = vld [vmem:[%s2 + $0x68] sm:$0xff]
        %v2312 = vld [vmem:[%s2 + $0x70] sm:$0xff]
        %v2313 = vld [vmem:[%s2 + $0x78] sm:$0xff]
        %v2314 = vld [vmem:[%s2 + $0x80] sm:$0xff]
        %v2315 = vld [vmem:[%s2 + $0x88] sm:$0xff]
        %v2316 = vld [vmem:[%s2 + $0x90] sm:$0xff]
        %v2317 = vld [vmem:[%s2 + $0x98] sm:$0xff]
        %v2318 = vld [vmem:[%s2 + $0xa0] sm:$0xff]
        %v2319 = vld [vmem:[%s2 + $0xa8] sm:$0xff]
        %v2320 = vld [vmem:[%s2 + $0xb0] sm:$0xff]
        %v2321 = vld [vmem:[%s2 + $0xb8] sm:$0xff]
        %v2322 = vld [vmem:[%s2 + $0xc0] sm:$0xff]
        %v2323 = vld [vmem:[%s2 + $0xc8] sm:$0xff]
        %v2324 = vld [vmem:[%s2 + $0xd0] sm:$0xff]
        %v2325 = vld [vmem:[%s2 + $0xd8] sm:$0xff]
        %v2326 = vld [vmem:[%s2 + $0xe0] sm:$0xff]
        %v2327 = vld [vmem:[%s2 + $0xe8] sm:$0xff]
        %v2328 = vld [vmem:[%s2 + $0xf0] sm:$0xff]
        %v2329 = vld [vmem:[%s2 + $0xf8] sm:$0xff]
        %2330 = vmatprep.subr.mxu0 %v2299
        %2331 = vmatpush1.msra.mxu0 %v2298
        %2332 = vmatprep.subr.mxu0 %v2301
        %2333 = vmatpush1.msra.mxu0 %v2300
        %2334 = vmatprep.subr.mxu0 %v2303
        %2335 = vmatpush1.msra.mxu0 %v2302
        %2336 = vmatprep.subr.mxu0 %v2305
        %2337 = vmatpush1.msra.mxu0 %v2304
        %2338 = vmatprep.subr.mxu0 %v2307
        %2339 = vmatpush1.msra.mxu0 %v2306
        %2340 = vmatprep.subr.mxu0 %v2309
        %2341 = vmatpush1.msra.mxu0 %v2308
        %2342 = vmatprep.subr.mxu0 %v2311
        %2343 = vmatpush1.msra.mxu0 %v2310
        %2344 = vmatprep.subr.mxu0 %v2313
        %2345 = vmatpush1.msra.mxu0 %v2312
        %2346 = vmatprep.subr.mxu0 %v2315
        %2347 = vmatpush1.msra.mxu0 %v2314
        %2348 = vmatprep.subr.mxu0 %v2317
        %2349 = vmatpush1.msra.mxu0 %v2316
        %2350 = vmatprep.subr.mxu0 %v2319
        %2351 = vmatpush1.msra.mxu0 %v2318
        %2352 = vmatprep.subr.mxu0 %v2321
        %2353 = vmatpush1.msra.mxu0 %v2320
        %2354 = vmatprep.subr.mxu0 %v2323
        %2355 = vmatpush1.msra.mxu0 %v2322
        %2356 = vmatprep.subr.mxu0 %v2325
        %2357 = vmatpush1.msra.mxu0 %v2324
        %2358 = vmatprep.subr.mxu0 %v2327
        %2359 = vmatpush1.msra.mxu0 %v2326
        %2360 = vmatprep.subr.mxu0 %v2329
        %2361 = vmatpush1.msra.mxu0 %v2328
        %2362 = vmatprep.subr.mxu0 0.0
        %2363 = vmatpush1.msra.mxu0 0.0
        %2364 = vmatprep.subr.mxu0 0.0
        %2365 = vmatpush1.msra.mxu0 0.0
        %2366 = vmatprep.subr.mxu0 0.0
        %2367 = vmatpush1.msra.mxu0 0.0
        %2368 = vmatprep.subr.mxu0 0.0
        %2369 = vmatpush1.msra.mxu0 0.0
        %2370 = vmatprep.subr.mxu0 0.0
        %2371 = vmatpush1.msra.mxu0 0.0
        %2372 = vmatprep.subr.mxu0 0.0
        %2373 = vmatpush1.msra.mxu0 0.0
        %2374 = vmatprep.subr.mxu0 0.0
        %2375 = vmatpush1.msra.mxu0 0.0
        %2376 = vmatprep.subr.mxu0 0.0
        %2377 = vmatpush1.msra.mxu0 0.0
        %2378 = vmatprep.subr.mxu0 0.0
        %2379 = vmatpush1.msra.mxu0 0.0
        %2380 = vmatprep.subr.mxu0 0.0
        %2381 = vmatpush1.msra.mxu0 0.0
        %2382 = vmatprep.subr.mxu0 0.0
        %2383 = vmatpush1.msra.mxu0 0.0
        %2384 = vmatprep.subr.mxu0 0.0
        %2385 = vmatpush1.msra.mxu0 0.0
        %2386 = vmatprep.subr.mxu0 0.0
        %2387 = vmatpush1.msra.mxu0 0.0
        %2388 = vmatprep.subr.mxu0 0.0
        %2389 = vmatpush1.msra.mxu0 0.0
        %2390 = vmatprep.subr.mxu0 0.0
        %2391 = vmatpush1.msra.mxu0 0.0
        %2392 = vmatprep.subr.mxu0 0.0
        %2393 = vmatpush1.msra.mxu0 0.0
        %2394 = vmatprep.mubr.f32.mxu0 0.0
        %2395 = vmatmul.mubr.f32.gmra.mrb[0].mxu0 0.0
        %v2396 = vpop.f32.mrb[0].mxu0
        %v2397 = vadd.f32 0.0, %v2396
        %v2398 = vpop.f32.mrb[0].mxu0
        %v2399 = vadd.f32 0.0, %v2398
        %2400 = vmatprep.mubr.f32.mxu0 0.0
        %2401 = vmatmul.mubr.f32.gmra.mrb[0].mxu0 0.0
        %v2402 = vpop.f32.mrb[0].mxu0
        %v2403 = vadd.f32 0.0, %v2402
        %v2404 = vpop.f32.mrb[0].mxu0
        %v2405 = vadd.f32 0.0, %v2404
        %2406 = vmatprep.mubr.f32.mxu0 0.0
        %2407 = vmatmul.mubr.f32.gmra.mrb[0].mxu0 0.0
        %v2408 = vpop.f32.mrb[0].mxu0
        %v2409 = vadd.f32 0.0, %v2408
        %v2410 = vpop.f32.mrb[0].mxu0
        %v2411 = vadd.f32 0.0, %v2410
        %2412 = vmatprep.mubr.f32.mxu0 0.0
        %2413 = vmatmul.mubr.f32.gmra.mrb[0].mxu0 0.0
        %v2414 = vpop.f32.mrb[0].mxu0
        %v2415 = vadd.f32 0.0, %v2414
        %v2416 = vpop.f32.mrb[0].mxu0
        %v2417 = vadd.f32 0.0, %v2416
        %2418 = vmatprep.mubr.f32.mxu0 0.0
        %2419 = vmatmul.mubr.f32.gmra.mrb[0].mxu0 0.0
        %v2420 = vpop.f32.mrb[0].mxu0
        %v2421 = vadd.f32 0.0, %v2420
        %v2422 = vpop.f32.mrb[0].mxu0
        %v2423 = vadd.f32 0.0, %v2422
        %2424 = vmatprep.mubr.f32.mxu0 0.0
        %2425 = vmatmul.mubr.f32.gmra.mrb[0].mxu0 0.0
        %v2426 = vpop.f32.mrb[0].mxu0
        %v2427 = vadd.f32 0.0, %v2426
        %v2428 = vpop.f32.mrb[0].mxu0
        %v2429 = vadd.f32 0.0, %v2428
        %2430 = vmatprep.mubr.f32.mxu0 0.0
        %2431 = vmatmul.mubr.f32.gmra.mrb[0].mxu0 0.0
        %v2432 = vpop.f32.mrb[0].mxu0
        %v2433 = vadd.f32 0.0, %v2432
        %v2434 = vpop.f32.mrb[0].mxu0
        %v2435 = vadd.f32 0.0, %v2434
        %2436 = vmatprep.mubr.f32.mxu0 0.0
        %2437 = vmatmul.mubr.f32.gmra.mrb[0].mxu0 0.0
        %v2438 = vpop.f32.mrb[0].mxu0
        %v2439 = vadd.f32 0.0, %v2438
        %v2440 = vpop.f32.mrb[0].mxu0
        %v2441 = vadd.f32 0.0, %v2440
        %2442 = vmatprep.mubr.f32.mxu0 0.0
        %2443 = vmatmul.mubr.f32.gmra.mrb[0].mxu0 0.0
        %v2444 = vpop.f32.mrb[0].mxu0
        %v2445 = vadd.f32 0.0, %v2444
        %v2446 = vpop.f32.mrb[0].mxu0
        %v2447 = vadd.f32 0.0, %v2446
        %2448 = vmatprep.mubr.f32.mxu0 0.0
        %2449 = vmatmul.mubr.f32.gmra.mrb[0].mxu0 0.0
        %v2450 = vpop.f32.mrb[0].mxu0
        %v2451 = vadd.f32 0.0, %v2450
        %v2452 = vpop.f32.mrb[0].mxu0
        %v2453 = vadd.f32 0.0, %v2452
        %2454 = vmatprep.mubr.f32.mxu0 0.0
        %2455 = vmatmul.mubr.f32.gmra.mrb[0].mxu0 0.0
        %v2456 = vpop.f32.mrb[0].mxu0
        %v2457 = vadd.f32 0.0, %v2456
        %v2458 = vpop.f32.mrb[0].mxu0
        %v2459 = vadd.f32 0.0, %v2458
        %2460 = vmatprep.mubr.f32.mxu0 0.0
        %2461 = vmatmul.mubr.f32.gmra.mrb[0].mxu0 0.0
        %v2462 = vpop.f32.mrb[0].mxu0
        %v2463 = vadd.f32 0.0, %v2462
        %v2464 = vpop.f32.mrb[0].mxu0
        %v2465 = vadd.f32 0.0, %v2464
        %2466 = vmatprep.mubr.f32.mxu0 0.0
        %2467 = vmatmul.mubr.f32.gmra.mrb[0].mxu0 0.0
        %v2468 = vpop.f32.mrb[0].mxu0
        %v2469 = vadd.f32 0.0, %v2468
        %v2470 = vpop.f32.mrb[0].mxu0
        %v2471 = vadd.f32 0.0, %v2470
        %2472 = vmatprep.mubr.f32.mxu0 0.0
        %2473 = vmatmul.mubr.f32.gmra.mrb[0].mxu0 0.0
        %v2474 = vpop.f32.mrb[0].mxu0
        %v2475 = vadd.f32 0.0, %v2474
        %v2476 = vpop.f32.mrb[0].mxu0
        %v2477 = vadd.f32 0.0, %v2476
        %2478 = vmatprep.mubr.f32.mxu0 0.0
        %2479 = vmatmul.mubr.f32.gmra.mrb[0].mxu0 0.0
        %v2480 = vpop.f32.mrb[0].mxu0
        %v2481 = vadd.f32 0.0, %v2480
        %v2482 = vpop.f32.mrb[0].mxu0
        %v2483 = vadd.f32 0.0, %v2482
        %2484 = vmatprep.mubr.f32.mxu0 0.0
        %2485 = vmatmul.mubr.f32.gmra.mrb[0].mxu0 0.0
        %v2486 = vpop.f32.mrb[0].mxu0
        %v2487 = vadd.f32 0.0, %v2486
        %v2488 = vpop.f32.mrb[0].mxu0
        %v2489 = vadd.f32 0.0, %v2488
        %2490 = vdwg.mxu0
        %v2491 = vadd.f32 %v827, %v2397
        %v2492 = vadd.f32 %v833, %v2403
        %v2493 = vadd.f32 %v839, %v2409
        %v2494 = vadd.f32 %v845, %v2415
        %v2495 = vadd.f32 %v851, %v2421
        %v2496 = vadd.f32 %v857, %v2427
        %v2497 = vadd.f32 %v863, %v2433
        %v2498 = vadd.f32 %v869, %v2439
        %v2499 = vadd.f32 %v875, %v2445
        %v2500 = vadd.f32 %v881, %v2451
        %v2501 = vadd.f32 %v887, %v2457
        %v2502 = vadd.f32 %v893, %v2463
        %v2503 = vadd.f32 %v899, %v2469
        %v2504 = vadd.f32 %v905, %v2475
        %v2505 = vadd.f32 %v911, %v2481
        %v2506 = vadd.f32 %v917, %v2487
        %v2507 = vxor.u32 %v2491, 2147483648
        %v2508 = vxor.u32 %v2492, 2147483648
        %v2509 = vxor.u32 %v2493, 2147483648
        %v2510 = vxor.u32 %v2494, 2147483648
        %v2511 = vxor.u32 %v2495, 2147483648
        %v2512 = vxor.u32 %v2496, 2147483648
        %v2513 = vxor.u32 %v2497, 2147483648
        %v2514 = vxor.u32 %v2498, 2147483648
        %v2515 = vxor.u32 %v2499, 2147483648
        %v2516 = vxor.u32 %v2500, 2147483648
        %v2517 = vxor.u32 %v2501, 2147483648
        %v2518 = vxor.u32 %v2502, 2147483648
        %v2519 = vxor.u32 %v2503, 2147483648
        %v2520 = vxor.u32 %v2504, 2147483648
        %v2521 = vxor.u32 %v2505, 2147483648
        %v2522 = vxor.u32 %v2506, 2147483648
        %v2523 = vmul.f32 %v2507, 1.442695
        %v2524 = vpow.pop %v2523
        %v2525 = vmul.f32 %v2508, 1.442695
        %v2526 = vpow.pop %v2525
        %v2527 = vmul.f32 %v2509, 1.442695
        %v2528 = vpow.pop %v2527
        %v2529 = vmul.f32 %v2510, 1.442695
        %v2530 = vpow.pop %v2529
        %v2531 = vmul.f32 %v2511, 1.442695
        %v2532 = vpow.pop %v2531
        %v2533 = vmul.f32 %v2512, 1.442695
        %v2534 = vpow.pop %v2533
        %v2535 = vmul.f32 %v2513, 1.442695
        %v2536 = vpow.pop %v2535
        %v2537 = vmul.f32 %v2514, 1.442695
        %v2538 = vpow.pop %v2537
        %v2539 = vmul.f32 %v2515, 1.442695
        %v2540 = vpow.pop %v2539
        %v2541 = vmul.f32 %v2516, 1.442695
        %v2542 = vpow.pop %v2541
        %v2543 = vmul.f32 %v2517, 1.442695
        %v2544 = vpow.pop %v2543
        %v2545 = vmul.f32 %v2518, 1.442695
        %v2546 = vpow.pop %v2545
        %v2547 = vmul.f32 %v2519, 1.442695
        %v2548 = vpow.pop %v2547
        %v2549 = vmul.f32 %v2520, 1.442695
        %v2550 = vpow.pop %v2549
        %v2551 = vmul.f32 %v2521, 1.442695
        %v2552 = vpow.pop %v2551
        %v2553 = vmul.f32 %v2522, 1.442695
        %v2554 = vpow.pop %v2553
        %v2555 = vadd.f32 %v2524, 1.0
        %v2556 = vadd.f32 %v2526, 1.0
        %v2557 = vadd.f32 %v2528, 1.0
        %v2558 = vadd.f32 %v2530, 1.0
        %v2559 = vadd.f32 %v2532, 1.0
        %v2560 = vadd.f32 %v2534, 1.0
        %v2561 = vadd.f32 %v2536, 1.0
        %v2562 = vadd.f32 %v2538, 1.0
        %v2563 = vadd.f32 %v2540, 1.0
        %v2564 = vadd.f32 %v2542, 1.0
        %v2565 = vadd.f32 %v2544, 1.0
        %v2566 = vadd.f32 %v2546, 1.0
        %v2567 = vadd.f32 %v2548, 1.0
        %v2568 = vadd.f32 %v2550, 1.0
        %v2569 = vadd.f32 %v2552, 1.0
        %v2570 = vadd.f32 %v2554, 1.0
        %v2571 = vrcp.pop %v2555
        %v2572 = vmul.f32 1.0, %v2571
        %v2573 = vrcp.pop %v2556
        %v2574 = vmul.f32 1.0, %v2573
        %v2575 = vrcp.pop %v2557
        %v2576 = vmul.f32 1.0, %v2575
        %v2577 = vrcp.pop %v2558
        %v2578 = vmul.f32 1.0, %v2577
        %v2579 = vrcp.pop %v2559
        %v2580 = vmul.f32 1.0, %v2579
        %v2581 = vrcp.pop %v2560
        %v2582 = vmul.f32 1.0, %v2581
        %v2583 = vrcp.pop %v2561
        %v2584 = vmul.f32 1.0, %v2583
        %v2585 = vrcp.pop %v2562
        %v2586 = vmul.f32 1.0, %v2585
        %v2587 = vrcp.pop %v2563
        %v2588 = vmul.f32 1.0, %v2587
        %v2589 = vrcp.pop %v2564
        %v2590 = vmul.f32 1.0, %v2589
        %v2591 = vrcp.pop %v2565
        %v2592 = vmul.f32 1.0, %v2591
        %v2593 = vrcp.pop %v2566
        %v2594 = vmul.f32 1.0, %v2593
        %v2595 = vrcp.pop %v2567
        %v2596 = vmul.f32 1.0, %v2595
        %v2597 = vrcp.pop %v2568
        %v2598 = vmul.f32 1.0, %v2597
        %v2599 = vrcp.pop %v2569
        %v2600 = vmul.f32 1.0, %v2599
        %v2601 = vrcp.pop %v2570
        %v2602 = vmul.f32 1.0, %v2601
        %v2603 = vadd.f32 %v829, %v2399
        %v2604 = vadd.f32 %v835, %v2405
        %v2605 = vadd.f32 %v841, %v2411
        %v2606 = vadd.f32 %v847, %v2417
        %v2607 = vadd.f32 %v853, %v2423
        %v2608 = vadd.f32 %v859, %v2429
        %v2609 = vadd.f32 %v865, %v2435
        %v2610 = vadd.f32 %v871, %v2441
        %v2611 = vadd.f32 %v877, %v2447
        %v2612 = vadd.f32 %v883, %v2453
        %v2613 = vadd.f32 %v889, %v2459
        %v2614 = vadd.f32 %v895, %v2465
        %v2615 = vadd.f32 %v901, %v2471
        %v2616 = vadd.f32 %v907, %v2477
        %v2617 = vadd.f32 %v913, %v2483
        %v2618 = vadd.f32 %v919, %v2489
        %v2619 = vxor.u32 %v2603, 2147483648
        %v2620 = vxor.u32 %v2604, 2147483648
        %v2621 = vxor.u32 %v2605, 2147483648
        %v2622 = vxor.u32 %v2606, 2147483648
        %v2623 = vxor.u32 %v2607, 2147483648
        %v2624 = vxor.u32 %v2608, 2147483648
        %v2625 = vxor.u32 %v2609, 2147483648
        %v2626 = vxor.u32 %v2610, 2147483648
        %v2627 = vxor.u32 %v2611, 2147483648
        %v2628 = vxor.u32 %v2612, 2147483648
        %v2629 = vxor.u32 %v2613, 2147483648
        %v2630 = vxor.u32 %v2614, 2147483648
        %v2631 = vxor.u32 %v2615, 2147483648
        %v2632 = vxor.u32 %v2616, 2147483648
        %v2633 = vxor.u32 %v2617, 2147483648
        %v2634 = vxor.u32 %v2618, 2147483648
        %v2635 = vmul.f32 %v2619, 1.442695
        %v2636 = vpow.pop %v2635
        %v2637 = vmul.f32 %v2620, 1.442695
        %v2638 = vpow.pop %v2637
        %v2639 = vmul.f32 %v2621, 1.442695
        %v2640 = vpow.pop %v2639
        %v2641 = vmul.f32 %v2622, 1.442695
        %v2642 = vpow.pop %v2641
        %v2643 = vmul.f32 %v2623, 1.442695
        %v2644 = vpow.pop %v2643
        %v2645 = vmul.f32 %v2624, 1.442695
        %v2646 = vpow.pop %v2645
        %v2647 = vmul.f32 %v2625, 1.442695
        %v2648 = vpow.pop %v2647
        %v2649 = vmul.f32 %v2626, 1.442695
        %v2650 = vpow.pop %v2649
        %v2651 = vmul.f32 %v2627, 1.442695
        %v2652 = vpow.pop %v2651
        %v2653 = vmul.f32 %v2628, 1.442695
        %v2654 = vpow.pop %v2653
        %v2655 = vmul.f32 %v2629, 1.442695
        %v2656 = vpow.pop %v2655
        %v2657 = vmul.f32 %v2630, 1.442695
        %v2658 = vpow.pop %v2657
        %v2659 = vmul.f32 %v2631, 1.442695
        %v2660 = vpow.pop %v2659
        %v2661 = vmul.f32 %v2632, 1.442695
        %v2662 = vpow.pop %v2661
        %v2663 = vmul.f32 %v2633, 1.442695
        %v2664 = vpow.pop %v2663
        %v2665 = vmul.f32 %v2634, 1.442695
        %v2666 = vpow.pop %v2665
        %v2667 = vadd.f32 %v2636, 1.0
        %v2668 = vadd.f32 %v2638, 1.0
        %v2669 = vadd.f32 %v2640, 1.0
        %v2670 = vadd.f32 %v2642, 1.0
        %v2671 = vadd.f32 %v2644, 1.0
        %v2672 = vadd.f32 %v2646, 1.0
        %v2673 = vadd.f32 %v2648, 1.0
        %v2674 = vadd.f32 %v2650, 1.0
        %v2675 = vadd.f32 %v2652, 1.0
        %v2676 = vadd.f32 %v2654, 1.0
        %v2677 = vadd.f32 %v2656, 1.0
        %v2678 = vadd.f32 %v2658, 1.0
        %v2679 = vadd.f32 %v2660, 1.0
        %v2680 = vadd.f32 %v2662, 1.0
        %v2681 = vadd.f32 %v2664, 1.0
        %v2682 = vadd.f32 %v2666, 1.0
        %v2683 = vrcp.pop %v2667
        %v2684 = vmul.f32 1.0, %v2683
        %v2685 = vrcp.pop %v2668
        %v2686 = vmul.f32 1.0, %v2685
        %v2687 = vrcp.pop %v2669
        %v2688 = vmul.f32 1.0, %v2687
        %v2689 = vrcp.pop %v2670
        %v2690 = vmul.f32 1.0, %v2689
        %v2691 = vrcp.pop %v2671
        %v2692 = vmul.f32 1.0, %v2691
        %v2693 = vrcp.pop %v2672
        %v2694 = vmul.f32 1.0, %v2693
        %v2695 = vrcp.pop %v2673
        %v2696 = vmul.f32 1.0, %v2695
        %v2697 = vrcp.pop %v2674
        %v2698 = vmul.f32 1.0, %v2697
        %v2699 = vrcp.pop %v2675
        %v2700 = vmul.f32 1.0, %v2699
        %v2701 = vrcp.pop %v2676
        %v2702 = vmul.f32 1.0, %v2701
        %v2703 = vrcp.pop %v2677
        %v2704 = vmul.f32 1.0, %v2703
        %v2705 = vrcp.pop %v2678
        %v2706 = vmul.f32 1.0, %v2705
        %v2707 = vrcp.pop %v2679
        %v2708 = vmul.f32 1.0, %v2707
        %v2709 = vrcp.pop %v2680
        %v2710 = vmul.f32 1.0, %v2709
        %v2711 = vrcp.pop %v2681
        %v2712 = vmul.f32 1.0, %v2711
        %v2713 = vrcp.pop %v2682
        %v2714 = vmul.f32 1.0, %v2713
        %v2715 = vmul.f32 %v2684, 0.0
        %v2716 = vmul.f32 %v2686, 0.0
        %v2717 = vmul.f32 %v2688, 0.0
        %v2718 = vmul.f32 %v2690, 0.0
        %v2719 = vmul.f32 %v2692, 0.0
        %v2720 = vmul.f32 %v2694, 0.0
        %v2721 = vmul.f32 %v2696, 0.0
        %v2722 = vmul.f32 %v2698, 0.0
        %v2723 = vmul.f32 %v2700, 0.0
        %v2724 = vmul.f32 %v2702, 0.0
        %v2725 = vmul.f32 %v2704, 0.0
        %v2726 = vmul.f32 %v2706, 0.0
        %v2727 = vmul.f32 %v2708, 0.0
        %v2728 = vmul.f32 %v2710, 0.0
        %v2729 = vmul.f32 %v2712, 0.0
        %v2730 = vmul.f32 %v2714, 0.0
        %v2731 = vld [vmem:[%s3] sm:$0xff]
        %v2732 = vld [vmem:[%s3 + $0x8] sm:$0xff]
        %v2733 = vld [vmem:[%s3 + $0x10] sm:$0xff]
        %v2734 = vld [vmem:[%s3 + $0x18] sm:$0xff]
        %v2735 = vld [vmem:[%s3 + $0x20] sm:$0xff]
        %v2736 = vld [vmem:[%s3 + $0x28] sm:$0xff]
        %v2737 = vld [vmem:[%s3 + $0x30] sm:$0xff]
        %v2738 = vld [vmem:[%s3 + $0x38] sm:$0xff]
        %v2739 = vld [vmem:[%s3 + $0x40] sm:$0xff]
        %v2740 = vld [vmem:[%s3 + $0x48] sm:$0xff]
        %v2741 = vld [vmem:[%s3 + $0x50] sm:$0xff]
        %v2742 = vld [vmem:[%s3 + $0x58] sm:$0xff]
        %v2743 = vld [vmem:[%s3 + $0x60] sm:$0xff]
        %v2744 = vld [vmem:[%s3 + $0x68] sm:$0xff]
        %v2745 = vld [vmem:[%s3 + $0x70] sm:$0xff]
        %v2746 = vld [vmem:[%s3 + $0x78] sm:$0xff]
        %2747 = vmatprep.subr.mxu0 0.0
        %2748 = vmatpush1.msra.mxu0 %v2731
        %2749 = vmatprep.subr.mxu0 0.0
        %2750 = vmatpush1.msra.mxu0 %v2732
        %2751 = vmatprep.subr.mxu0 0.0
        %2752 = vmatpush1.msra.mxu0 %v2733
        %2753 = vmatprep.subr.mxu0 0.0
        %2754 = vmatpush1.msra.mxu0 %v2734
        %2755 = vmatprep.subr.mxu0 0.0
        %2756 = vmatpush1.msra.mxu0 %v2735
        %2757 = vmatprep.subr.mxu0 0.0
        %2758 = vmatpush1.msra.mxu0 %v2736
        %2759 = vmatprep.subr.mxu0 0.0
        %2760 = vmatpush1.msra.mxu0 %v2737
        %2761 = vmatprep.subr.mxu0 0.0
        %2762 = vmatpush1.msra.mxu0 %v2738
        %2763 = vmatprep.subr.mxu0 0.0
        %2764 = vmatpush1.msra.mxu0 %v2739
        %2765 = vmatprep.subr.mxu0 0.0
        %2766 = vmatpush1.msra.mxu0 %v2740
        %2767 = vmatprep.subr.mxu0 0.0
        %2768 = vmatpush1.msra.mxu0 %v2741
        %2769 = vmatprep.subr.mxu0 0.0
        %2770 = vmatpush1.msra.mxu0 %v2742
        %2771 = vmatprep.subr.mxu0 0.0
        %2772 = vmatpush1.msra.mxu0 %v2743
        %2773 = vmatprep.subr.mxu0 0.0
        %2774 = vmatpush1.msra.mxu0 %v2744
        %2775 = vmatprep.subr.mxu0 0.0
        %2776 = vmatpush1.msra.mxu0 %v2745
        %2777 = vmatprep.subr.mxu0 0.0
        %2778 = vmatpush1.msra.mxu0 %v2746
        %2779 = vmatprep.subr.mxu0 0.0
        %2780 = vmatpush1.msra.mxu0 0.0
        %2781 = vmatprep.subr.mxu0 0.0
        %2782 = vmatpush1.msra.mxu0 0.0
        %2783 = vmatprep.subr.mxu0 0.0
        %2784 = vmatpush1.msra.mxu0 0.0
        %2785 = vmatprep.subr.mxu0 0.0
        %2786 = vmatpush1.msra.mxu0 0.0
        %2787 = vmatprep.subr.mxu0 0.0
        %2788 = vmatpush1.msra.mxu0 0.0
        %2789 = vmatprep.subr.mxu0 0.0
        %2790 = vmatpush1.msra.mxu0 0.0
        %2791 = vmatprep.subr.mxu0 0.0
        %2792 = vmatpush1.msra.mxu0 0.0
        %2793 = vmatprep.subr.mxu0 0.0
        %2794 = vmatpush1.msra.mxu0 0.0
        %2795 = vmatprep.subr.mxu0 0.0
        %2796 = vmatpush1.msra.mxu0 0.0
        %2797 = vmatprep.subr.mxu0 0.0
        %2798 = vmatpush1.msra.mxu0 0.0
        %2799 = vmatprep.subr.mxu0 0.0
        %2800 = vmatpush1.msra.mxu0 0.0
        %2801 = vmatprep.subr.mxu0 0.0
        %2802 = vmatpush1.msra.mxu0 0.0
        %2803 = vmatprep.subr.mxu0 0.0
        %2804 = vmatpush1.msra.mxu0 0.0
        %2805 = vmatprep.subr.mxu0 0.0
        %2806 = vmatpush1.msra.mxu0 0.0
        %2807 = vmatprep.subr.mxu0 0.0
        %2808 = vmatpush1.msra.mxu0 0.0
        %2809 = vmatprep.subr.mxu0 0.0
        %2810 = vmatpush1.msra.mxu0 0.0
        %2811 = vmatprep.mubr.f32.mxu0 0.0
        %2812 = vmatmul.mubr.f32.gmra.mrb[0].mxu0 %v2715
        %v2813 = vpop.f32.mrb[0].mxu0
        %v2814 = vadd.f32 0.0, %v2813
        %v2815 = vpop.f32.mrb[0].mxu0
        %2816 = vmatprep.mubr.f32.mxu0 0.0
        %2817 = vmatmul.mubr.f32.gmra.mrb[0].mxu0 %v2716
        %v2818 = vpop.f32.mrb[0].mxu0
        %v2819 = vadd.f32 0.0, %v2818
        %v2820 = vpop.f32.mrb[0].mxu0
        %2821 = vmatprep.mubr.f32.mxu0 0.0
        %2822 = vmatmul.mubr.f32.gmra.mrb[0].mxu0 %v2717
        %v2823 = vpop.f32.mrb[0].mxu0
        %v2824 = vadd.f32 0.0, %v2823
        %v2825 = vpop.f32.mrb[0].mxu0
        %2826 = vmatprep.mubr.f32.mxu0 0.0
        %2827 = vmatmul.mubr.f32.gmra.mrb[0].mxu0 %v2718
        %v2828 = vpop.f32.mrb[0].mxu0
        %v2829 = vadd.f32 0.0, %v2828
        %v2830 = vpop.f32.mrb[0].mxu0
        %2831 = vmatprep.mubr.f32.mxu0 0.0
        %2832 = vmatmul.mubr.f32.gmra.mrb[0].mxu0 %v2719
        %v2833 = vpop.f32.mrb[0].mxu0
        %v2834 = vadd.f32 0.0, %v2833
        %v2835 = vpop.f32.mrb[0].mxu0
        %2836 = vmatprep.mubr.f32.mxu0 0.0
        %2837 = vmatmul.mubr.f32.gmra.mrb[0].mxu0 %v2720
        %v2838 = vpop.f32.mrb[0].mxu0
        %v2839 = vadd.f32 0.0, %v2838
        %v2840 = vpop.f32.mrb[0].mxu0
        %2841 = vmatprep.mubr.f32.mxu0 0.0
        %2842 = vmatmul.mubr.f32.gmra.mrb[0].mxu0 %v2721
        %v2843 = vpop.f32.mrb[0].mxu0
        %v2844 = vadd.f32 0.0, %v2843
        %v2845 = vpop.f32.mrb[0].mxu0
        %2846 = vmatprep.mubr.f32.mxu0 0.0
        %2847 = vmatmul.mubr.f32.gmra.mrb[0].mxu0 %v2722
        %v2848 = vpop.f32.mrb[0].mxu0
        %v2849 = vadd.f32 0.0, %v2848
        %v2850 = vpop.f32.mrb[0].mxu0
        %2851 = vmatprep.mubr.f32.mxu0 0.0
        %2852 = vmatmul.mubr.f32.gmra.mrb[0].mxu0 %v2723
        %v2853 = vpop.f32.mrb[0].mxu0
        %v2854 = vadd.f32 0.0, %v2853
        %v2855 = vpop.f32.mrb[0].mxu0
        %2856 = vmatprep.mubr.f32.mxu0 0.0
        %2857 = vmatmul.mubr.f32.gmra.mrb[0].mxu0 %v2724
        %v2858 = vpop.f32.mrb[0].mxu0
        %v2859 = vadd.f32 0.0, %v2858
        %v2860 = vpop.f32.mrb[0].mxu0
        %2861 = vmatprep.mubr.f32.mxu0 0.0
        %2862 = vmatmul.mubr.f32.gmra.mrb[0].mxu0 %v2725
        %v2863 = vpop.f32.mrb[0].mxu0
        %v2864 = vadd.f32 0.0, %v2863
        %v2865 = vpop.f32.mrb[0].mxu0
        %2866 = vmatprep.mubr.f32.mxu0 0.0
        %2867 = vmatmul.mubr.f32.gmra.mrb[0].mxu0 %v2726
        %v2868 = vpop.f32.mrb[0].mxu0
        %v2869 = vadd.f32 0.0, %v2868
        %v2870 = vpop.f32.mrb[0].mxu0
        %2871 = vmatprep.mubr.f32.mxu0 0.0
        %2872 = vmatmul.mubr.f32.gmra.mrb[0].mxu0 %v2727
        %v2873 = vpop.f32.mrb[0].mxu0
        %v2874 = vadd.f32 0.0, %v2873
        %v2875 = vpop.f32.mrb[0].mxu0
        %2876 = vmatprep.mubr.f32.mxu0 0.0
        %2877 = vmatmul.mubr.f32.gmra.mrb[0].mxu0 %v2728
        %v2878 = vpop.f32.mrb[0].mxu0
        %v2879 = vadd.f32 0.0, %v2878
        %v2880 = vpop.f32.mrb[0].mxu0
        %2881 = vmatprep.mubr.f32.mxu0 0.0
        %2882 = vmatmul.mubr.f32.gmra.mrb[0].mxu0 %v2729
        %v2883 = vpop.f32.mrb[0].mxu0
        %v2884 = vadd.f32 0.0, %v2883
        %v2885 = vpop.f32.mrb[0].mxu0
        %2886 = vmatprep.mubr.f32.mxu0 0.0
        %2887 = vmatmul.mubr.f32.gmra.mrb[0].mxu0 %v2730
        %v2888 = vpop.f32.mrb[0].mxu0
        %v2889 = vadd.f32 0.0, %v2888
        %v2890 = vpop.f32.mrb[0].mxu0
        %2891 = vdwg.mxu0
        %v2892 = vadd.f32 %v1660, %v2814
        %v2893 = vadd.f32 %v1665, %v2819
        %v2894 = vadd.f32 %v1670, %v2824
        %v2895 = vadd.f32 %v1675, %v2829
        %v2896 = vadd.f32 %v1680, %v2834
        %v2897 = vadd.f32 %v1685, %v2839
        %v2898 = vadd.f32 %v1690, %v2844
        %v2899 = vadd.f32 %v1695, %v2849
        %v2900 = vadd.f32 %v1700, %v2854
        %v2901 = vadd.f32 %v1705, %v2859
        %v2902 = vadd.f32 %v1710, %v2864
        %v2903 = vadd.f32 %v1715, %v2869
        %v2904 = vadd.f32 %v1720, %v2874
        %v2905 = vadd.f32 %v1725, %v2879
        %v2906 = vadd.f32 %v1730, %v2884
        %v2907 = vadd.f32 %v1735, %v2889
        %v2908 = vtanh.pop %v2892
        %v2909 = vtanh.pop %v2893
        %v2910 = vtanh.pop %v2894
        %v2911 = vtanh.pop %v2895
        %v2912 = vtanh.pop %v2896
        %v2913 = vtanh.pop %v2897
        %v2914 = vtanh.pop %v2898
        %v2915 = vtanh.pop %v2899
        %v2916 = vtanh.pop %v2900
        %v2917 = vtanh.pop %v2901
        %v2918 = vtanh.pop %v2902
        %v2919 = vtanh.pop %v2903
        %v2920 = vtanh.pop %v2904
        %v2921 = vtanh.pop %v2905
        %v2922 = vtanh.pop %v2906
        %v2923 = vtanh.pop %v2907
        %v2924 = vsub.f32 1.0, %v2572
        %v2925 = vsub.f32 1.0, %v2574
        %v2926 = vsub.f32 1.0, %v2576
        %v2927 = vsub.f32 1.0, %v2578
        %v2928 = vsub.f32 1.0, %v2580
        %v2929 = vsub.f32 1.0, %v2582
        %v2930 = vsub.f32 1.0, %v2584
        %v2931 = vsub.f32 1.0, %v2586
        %v2932 = vsub.f32 1.0, %v2588
        %v2933 = vsub.f32 1.0, %v2590
        %v2934 = vsub.f32 1.0, %v2592
        %v2935 = vsub.f32 1.0, %v2594
        %v2936 = vsub.f32 1.0, %v2596
        %v2937 = vsub.f32 1.0, %v2598
        %v2938 = vsub.f32 1.0, %v2600
        %v2939 = vsub.f32 1.0, %v2602
        %v2940 = vmul.f32 %v2924, 0.0
        %v2941 = vmul.f32 %v2925, 0.0
        %v2942 = vmul.f32 %v2926, 0.0
        %v2943 = vmul.f32 %v2927, 0.0
        %v2944 = vmul.f32 %v2928, 0.0
        %v2945 = vmul.f32 %v2929, 0.0
        %v2946 = vmul.f32 %v2930, 0.0
        %v2947 = vmul.f32 %v2931, 0.0
        %v2948 = vmul.f32 %v2932, 0.0
        %v2949 = vmul.f32 %v2933, 0.0
        %v2950 = vmul.f32 %v2934, 0.0
        %v2951 = vmul.f32 %v2935, 0.0
        %v2952 = vmul.f32 %v2936, 0.0
        %v2953 = vmul.f32 %v2937, 0.0
        %v2954 = vmul.f32 %v2938, 0.0
        %v2955 = vmul.f32 %v2939, 0.0
        %v2956 = vmul.f32 %v2572, %v2908
        %v2957 = vmul.f32 %v2574, %v2909
        %v2958 = vmul.f32 %v2576, %v2910
        %v2959 = vmul.f32 %v2578, %v2911
        %v2960 = vmul.f32 %v2580, %v2912
        %v2961 = vmul.f32 %v2582, %v2913
        %v2962 = vmul.f32 %v2584, %v2914
        %v2963 = vmul.f32 %v2586, %v2915
        %v2964 = vmul.f32 %v2588, %v2916
        %v2965 = vmul.f32 %v2590, %v2917
        %v2966 = vmul.f32 %v2592, %v2918
        %v2967 = vmul.f32 %v2594, %v2919
        %v2968 = vmul.f32 %v2596, %v2920
        %v2969 = vmul.f32 %v2598, %v2921
        %v2970 = vmul.f32 %v2600, %v2922
        %v2971 = vmul.f32 %v2602, %v2923
        %v2972 = vadd.f32 %v2940, %v2956
        %v2973 = vadd.f32 %v2941, %v2957
        %v2974 = vadd.f32 %v2942, %v2958
        %v2975 = vadd.f32 %v2943, %v2959
        %v2976 = vadd.f32 %v2944, %v2960
        %v2977 = vadd.f32 %v2945, %v2961
        %v2978 = vadd.f32 %v2946, %v2962
        %v2979 = vadd.f32 %v2947, %v2963
        %v2980 = vadd.f32 %v2948, %v2964
        %v2981 = vadd.f32 %v2949, %v2965
        %v2982 = vadd.f32 %v2950, %v2966
        %v2983 = vadd.f32 %v2951, %v2967
        %v2984 = vadd.f32 %v2952, %v2968
        %v2985 = vadd.f32 %v2953, %v2969
        %v2986 = vadd.f32 %v2954, %v2970
        %v2987 = vadd.f32 %v2955, %v2971
        %2988 = vmatprep.subr.mxu0 %v2299
        %2989 = vmatpush1.msra.mxu0 %v2298
        %2990 = vmatprep.subr.mxu0 %v2301
        %2991 = vmatpush1.msra.mxu0 %v2300
        %2992 = vmatprep.subr.mxu0 %v2303
        %2993 = vmatpush1.msra.mxu0 %v2302
        %2994 = vmatprep.subr.mxu0 %v2305
        %2995 = vmatpush1.msra.mxu0 %v2304
        %2996 = vmatprep.subr.mxu0 %v2307
        %2997 = vmatpush1.msra.mxu0 %v2306
        %2998 = vmatprep.subr.mxu0 %v2309
        %2999 = vmatpush1.msra.mxu0 %v2308
        %3000 = vmatprep.subr.mxu0 %v2311
        %3001 = vmatpush1.msra.mxu0 %v2310
        %3002 = vmatprep.subr.mxu0 %v2313
        %3003 = vmatpush1.msra.mxu0 %v2312
        %3004 = vmatprep.subr.mxu0 %v2315
        %3005 = vmatpush1.msra.mxu0 %v2314
        %3006 = vmatprep.subr.mxu0 %v2317
        %3007 = vmatpush1.msra.mxu0 %v2316
        %3008 = vmatprep.subr.mxu0 %v2319
        %3009 = vmatpush1.msra.mxu0 %v2318
        %3010 = vmatprep.subr.mxu0 %v2321
        %3011 = vmatpush1.msra.mxu0 %v2320
        %3012 = vmatprep.subr.mxu0 %v2323
        %3013 = vmatpush1.msra.mxu0 %v2322
        %3014 = vmatprep.subr.mxu0 %v2325
        %3015 = vmatpush1.msra.mxu0 %v2324
        %3016 = vmatprep.subr.mxu0 %v2327
        %3017 = vmatpush1.msra.mxu0 %v2326
        %3018 = vmatprep.subr.mxu0 %v2329
        %3019 = vmatpush1.msra.mxu0 %v2328
        %3020 = vmatprep.subr.mxu0 0.0
        %3021 = vmatpush1.msra.mxu0 0.0
        %3022 = vmatprep.subr.mxu0 0.0
        %3023 = vmatpush1.msra.mxu0 0.0
        %3024 = vmatprep.subr.mxu0 0.0
        %3025 = vmatpush1.msra.mxu0 0.0
        %3026 = vmatprep.subr.mxu0 0.0
        %3027 = vmatpush1.msra.mxu0 0.0
        %3028 = vmatprep.subr.mxu0 0.0
        %3029 = vmatpush1.msra.mxu0 0.0
        %3030 = vmatprep.subr.mxu0 0.0
        %3031 = vmatpush1.msra.mxu0 0.0
        %3032 = vmatprep.subr.mxu0 0.0
        %3033 = vmatpush1.msra.mxu0 0.0
        %3034 = vmatprep.subr.mxu0 0.0
        %3035 = vmatpush1.msra.mxu0 0.0
        %3036 = vmatprep.subr.mxu0 0.0
        %3037 = vmatpush1.msra.mxu0 0.0
        %3038 = vmatprep.subr.mxu0 0.0
        %3039 = vmatpush1.msra.mxu0 0.0
        %3040 = vmatprep.subr.mxu0 0.0
        %3041 = vmatpush1.msra.mxu0 0.0
        %3042 = vmatprep.subr.mxu0 0.0
        %3043 = vmatpush1.msra.mxu0 0.0
        %3044 = vmatprep.subr.mxu0 0.0
        %3045 = vmatpush1.msra.mxu0 0.0
        %3046 = vmatprep.subr.mxu0 0.0
        %3047 = vmatpush1.msra.mxu0 0.0
        %3048 = vmatprep.subr.mxu0 0.0
        %3049 = vmatpush1.msra.mxu0 0.0
        %3050 = vmatprep.subr.mxu0 0.0
        %3051 = vmatpush1.msra.mxu0 0.0
        %3052 = vmatprep.mubr.f32.mxu0 0.0
        %3053 = vmatmul.mubr.f32.gmra.mrb[0].mxu0 %v2972
        %v3054 = vpop.f32.mrb[0].mxu0
        %v3055 = vadd.f32 0.0, %v3054
        %v3056 = vpop.f32.mrb[0].mxu0
        %v3057 = vadd.f32 0.0, %v3056
        %3058 = vmatprep.mubr.f32.mxu0 0.0
        %3059 = vmatmul.mubr.f32.gmra.mrb[0].mxu0 %v2973
        %v3060 = vpop.f32.mrb[0].mxu0
        %v3061 = vadd.f32 0.0, %v3060
        %v3062 = vpop.f32.mrb[0].mxu0
        %v3063 = vadd.f32 0.0, %v3062
        %3064 = vmatprep.mubr.f32.mxu0 0.0
        %3065 = vmatmul.mubr.f32.gmra.mrb[0].mxu0 %v2974
        %v3066 = vpop.f32.mrb[0].mxu0
        %v3067 = vadd.f32 0.0, %v3066
        %v3068 = vpop.f32.mrb[0].mxu0
        %v3069 = vadd.f32 0.0, %v3068
        %3070 = vmatprep.mubr.f32.mxu0 0.0
        %3071 = vmatmul.mubr.f32.gmra.mrb[0].mxu0 %v2975
        %v3072 = vpop.f32.mrb[0].mxu0
        %v3073 = vadd.f32 0.0, %v3072
        %v3074 = vpop.f32.mrb[0].mxu0
        %v3075 = vadd.f32 0.0, %v3074
        %3076 = vmatprep.mubr.f32.mxu0 0.0
        %3077 = vmatmul.mubr.f32.gmra.mrb[0].mxu0 %v2976
        %v3078 = vpop.f32.mrb[0].mxu0
        %v3079 = vadd.f32 0.0, %v3078
        %v3080 = vpop.f32.mrb[0].mxu0
        %v3081 = vadd.f32 0.0, %v3080
        %3082 = vmatprep.mubr.f32.mxu0 0.0
        %3083 = vmatmul.mubr.f32.gmra.mrb[0].mxu0 %v2977
        %v3084 = vpop.f32.mrb[0].mxu0
        %v3085 = vadd.f32 0.0, %v3084
        %v3086 = vpop.f32.mrb[0].mxu0
        %v3087 = vadd.f32 0.0, %v3086
        %3088 = vmatprep.mubr.f32.mxu0 0.0
        %3089 = vmatmul.mubr.f32.gmra.mrb[0].mxu0 %v2978
        %v3090 = vpop.f32.mrb[0].mxu0
        %v3091 = vadd.f32 0.0, %v3090
        %v3092 = vpop.f32.mrb[0].mxu0
        %v3093 = vadd.f32 0.0, %v3092
        %3094 = vmatprep.mubr.f32.mxu0 0.0
        %3095 = vmatmul.mubr.f32.gmra.mrb[0].mxu0 %v2979
        %v3096 = vpop.f32.mrb[0].mxu0
        %v3097 = vadd.f32 0.0, %v3096
        %v3098 = vpop.f32.mrb[0].mxu0
        %v3099 = vadd.f32 0.0, %v3098
        %3100 = vmatprep.mubr.f32.mxu0 0.0
        %3101 = vmatmul.mubr.f32.gmra.mrb[0].mxu0 %v2980
        %v3102 = vpop.f32.mrb[0].mxu0
        %v3103 = vadd.f32 0.0, %v3102
        %v3104 = vpop.f32.mrb[0].mxu0
        %v3105 = vadd.f32 0.0, %v3104
        %3106 = vmatprep.mubr.f32.mxu0 0.0
        %3107 = vmatmul.mubr.f32.gmra.mrb[0].mxu0 %v2981
        %v3108 = vpop.f32.mrb[0].mxu0
        %v3109 = vadd.f32 0.0, %v3108
        %v3110 = vpop.f32.mrb[0].mxu0
        %v3111 = vadd.f32 0.0, %v3110
        %3112 = vmatprep.mubr.f32.mxu0 0.0
        %3113 = vmatmul.mubr.f32.gmra.mrb[0].mxu0 %v2982
        %v3114 = vpop.f32.mrb[0].mxu0
        %v3115 = vadd.f32 0.0, %v3114
        %v3116 = vpop.f32.mrb[0].mxu0
        %v3117 = vadd.f32 0.0, %v3116
        %3118 = vmatprep.mubr.f32.mxu0 0.0
        %3119 = vmatmul.mubr.f32.gmra.mrb[0].mxu0 %v2983
        %v3120 = vpop.f32.mrb[0].mxu0
        %v3121 = vadd.f32 0.0, %v3120
        %v3122 = vpop.f32.mrb[0].mxu0
        %v3123 = vadd.f32 0.0, %v3122
        %3124 = vmatprep.mubr.f32.mxu0 0.0
        %3125 = vmatmul.mubr.f32.gmra.mrb[0].mxu0 %v2984
        %v3126 = vpop.f32.mrb[0].mxu0
        %v3127 = vadd.f32 0.0, %v3126
        %v3128 = vpop.f32.mrb[0].mxu0
        %v3129 = vadd.f32 0.0, %v3128
        %3130 = vmatprep.mubr.f32.mxu0 0.0
        %3131 = vmatmul.mubr.f32.gmra.mrb[0].mxu0 %v2985
        %v3132 = vpop.f32.mrb[0].mxu0
        %v3133 = vadd.f32 0.0, %v3132
        %v3134 = vpop.f32.mrb[0].mxu0
        %v3135 = vadd.f32 0.0, %v3134
        %3136 = vmatprep.mubr.f32.mxu0 0.0
        %3137 = vmatmul.mubr.f32.gmra.mrb[0].mxu0 %v2986
        %v3138 = vpop.f32.mrb[0].mxu0
        %v3139 = vadd.f32 0.0, %v3138
        %v3140 = vpop.f32.mrb[0].mxu0
        %v3141 = vadd.f32 0.0, %v3140
        %3142 = vmatprep.mubr.f32.mxu0 0.0
        %3143 = vmatmul.mubr.f32.gmra.mrb[0].mxu0 %v2987
        %v3144 = vpop.f32.mrb[0].mxu0
        %v3145 = vadd.f32 0.0, %v3144
        %v3146 = vpop.f32.mrb[0].mxu0
        %v3147 = vadd.f32 0.0, %v3146
        %3148 = vdwg.mxu0
        %v3149 = vadd.f32 %v923, %v3055
        %v3150 = vadd.f32 %v929, %v3061
        %v3151 = vadd.f32 %v935, %v3067
        %v3152 = vadd.f32 %v941, %v3073
        %v3153 = vadd.f32 %v947, %v3079
        %v3154 = vadd.f32 %v953, %v3085
        %v3155 = vadd.f32 %v959, %v3091
        %v3156 = vadd.f32 %v965, %v3097
        %v3157 = vadd.f32 %v971, %v3103
        %v3158 = vadd.f32 %v977, %v3109
        %v3159 = vadd.f32 %v983, %v3115
        %v3160 = vadd.f32 %v989, %v3121
        %v3161 = vadd.f32 %v995, %v3127
        %v3162 = vadd.f32 %v1001, %v3133
        %v3163 = vadd.f32 %v1007, %v3139
        %v3164 = vadd.f32 %v1013, %v3145
        %v3165 = vxor.u32 %v3149, 2147483648
        %v3166 = vxor.u32 %v3150, 2147483648
        %v3167 = vxor.u32 %v3151, 2147483648
        %v3168 = vxor.u32 %v3152, 2147483648
        %v3169 = vxor.u32 %v3153, 2147483648
        %v3170 = vxor.u32 %v3154, 2147483648
        %v3171 = vxor.u32 %v3155, 2147483648
        %v3172 = vxor.u32 %v3156, 2147483648
        %v3173 = vxor.u32 %v3157, 2147483648
        %v3174 = vxor.u32 %v3158, 2147483648
        %v3175 = vxor.u32 %v3159, 2147483648
        %v3176 = vxor.u32 %v3160, 2147483648
        %v3177 = vxor.u32 %v3161, 2147483648
        %v3178 = vxor.u32 %v3162, 2147483648
        %v3179 = vxor.u32 %v3163, 2147483648
        %v3180 = vxor.u32 %v3164, 2147483648
        %v3181 = vmul.f32 %v3165, 1.442695
        %v3182 = vpow.pop %v3181
        %v3183 = vmul.f32 %v3166, 1.442695
        %v3184 = vpow.pop %v3183
        %v3185 = vmul.f32 %v3167, 1.442695
        %v3186 = vpow.pop %v3185
        %v3187 = vmul.f32 %v3168, 1.442695
        %v3188 = vpow.pop %v3187
        %v3189 = vmul.f32 %v3169, 1.442695
        %v3190 = vpow.pop %v3189
        %v3191 = vmul.f32 %v3170, 1.442695
        %v3192 = vpow.pop %v3191
        %v3193 = vmul.f32 %v3171, 1.442695
        %v3194 = vpow.pop %v3193
        %v3195 = vmul.f32 %v3172, 1.442695
        %v3196 = vpow.pop %v3195
        %v3197 = vmul.f32 %v3173, 1.442695
        %v3198 = vpow.pop %v3197
        %v3199 = vmul.f32 %v3174, 1.442695
        %v3200 = vpow.pop %v3199
        %v3201 = vmul.f32 %v3175, 1.442695
        %v3202 = vpow.pop %v3201
        %v3203 = vmul.f32 %v3176, 1.442695
        %v3204 = vpow.pop %v3203
        %v3205 = vmul.f32 %v3177, 1.442695
        %v3206 = vpow.pop %v3205
        %v3207 = vmul.f32 %v3178, 1.442695
        %v3208 = vpow.pop %v3207
        %v3209 = vmul.f32 %v3179, 1.442695
        %v3210 = vpow.pop %v3209
        %v3211 = vmul.f32 %v3180, 1.442695
        %v3212 = vpow.pop %v3211
        %v3213 = vadd.f32 %v3182, 1.0
        %v3214 = vadd.f32 %v3184, 1.0
        %v3215 = vadd.f32 %v3186, 1.0
        %v3216 = vadd.f32 %v3188, 1.0
        %v3217 = vadd.f32 %v3190, 1.0
        %v3218 = vadd.f32 %v3192, 1.0
        %v3219 = vadd.f32 %v3194, 1.0
        %v3220 = vadd.f32 %v3196, 1.0
        %v3221 = vadd.f32 %v3198, 1.0
        %v3222 = vadd.f32 %v3200, 1.0
        %v3223 = vadd.f32 %v3202, 1.0
        %v3224 = vadd.f32 %v3204, 1.0
        %v3225 = vadd.f32 %v3206, 1.0
        %v3226 = vadd.f32 %v3208, 1.0
        %v3227 = vadd.f32 %v3210, 1.0
        %v3228 = vadd.f32 %v3212, 1.0
        %v3229 = vrcp.pop %v3213
        %v3230 = vmul.f32 1.0, %v3229
        %v3231 = vrcp.pop %v3214
        %v3232 = vmul.f32 1.0, %v3231
        %v3233 = vrcp.pop %v3215
        %v3234 = vmul.f32 1.0, %v3233
        %v3235 = vrcp.pop %v3216
        %v3236 = vmul.f32 1.0, %v3235
        %v3237 = vrcp.pop %v3217
        %v3238 = vmul.f32 1.0, %v3237
        %v3239 = vrcp.pop %v3218
        %v3240 = vmul.f32 1.0, %v3239
        %v3241 = vrcp.pop %v3219
        %v3242 = vmul.f32 1.0, %v3241
        %v3243 = vrcp.pop %v3220
        %v3244 = vmul.f32 1.0, %v3243
        %v3245 = vrcp.pop %v3221
        %v3246 = vmul.f32 1.0, %v3245
        %v3247 = vrcp.pop %v3222
        %v3248 = vmul.f32 1.0, %v3247
        %v3249 = vrcp.pop %v3223
        %v3250 = vmul.f32 1.0, %v3249
        %v3251 = vrcp.pop %v3224
        %v3252 = vmul.f32 1.0, %v3251
        %v3253 = vrcp.pop %v3225
        %v3254 = vmul.f32 1.0, %v3253
        %v3255 = vrcp.pop %v3226
        %v3256 = vmul.f32 1.0, %v3255
        %v3257 = vrcp.pop %v3227
        %v3258 = vmul.f32 1.0, %v3257
        %v3259 = vrcp.pop %v3228
        %v3260 = vmul.f32 1.0, %v3259
        %v3261 = vadd.f32 %v925, %v3057
        %v3262 = vadd.f32 %v931, %v3063
        %v3263 = vadd.f32 %v937, %v3069
        %v3264 = vadd.f32 %v943, %v3075
        %v3265 = vadd.f32 %v949, %v3081
        %v3266 = vadd.f32 %v955, %v3087
        %v3267 = vadd.f32 %v961, %v3093
        %v3268 = vadd.f32 %v967, %v3099
        %v3269 = vadd.f32 %v973, %v3105
        %v3270 = vadd.f32 %v979, %v3111
        %v3271 = vadd.f32 %v985, %v3117
        %v3272 = vadd.f32 %v991, %v3123
        %v3273 = vadd.f32 %v997, %v3129
        %v3274 = vadd.f32 %v1003, %v3135
        %v3275 = vadd.f32 %v1009, %v3141
        %v3276 = vadd.f32 %v1015, %v3147
        %v3277 = vxor.u32 %v3261, 2147483648
        %v3278 = vxor.u32 %v3262, 2147483648
        %v3279 = vxor.u32 %v3263, 2147483648
        %v3280 = vxor.u32 %v3264, 2147483648
        %v3281 = vxor.u32 %v3265, 2147483648
        %v3282 = vxor.u32 %v3266, 2147483648
        %v3283 = vxor.u32 %v3267, 2147483648
        %v3284 = vxor.u32 %v3268, 2147483648
        %v3285 = vxor.u32 %v3269, 2147483648
        %v3286 = vxor.u32 %v3270, 2147483648
        %v3287 = vxor.u32 %v3271, 2147483648
        %v3288 = vxor.u32 %v3272, 2147483648
        %v3289 = vxor.u32 %v3273, 2147483648
        %v3290 = vxor.u32 %v3274, 2147483648
        %v3291 = vxor.u32 %v3275, 2147483648
        %v3292 = vxor.u32 %v3276, 2147483648
        %v3293 = vmul.f32 %v3277, 1.442695
        %v3294 = vpow.pop %v3293
        %v3295 = vmul.f32 %v3278, 1.442695
        %v3296 = vpow.pop %v3295
        %v3297 = vmul.f32 %v3279, 1.442695
        %v3298 = vpow.pop %v3297
        %v3299 = vmul.f32 %v3280, 1.442695
        %v3300 = vpow.pop %v3299
        %v3301 = vmul.f32 %v3281, 1.442695
        %v3302 = vpow.pop %v3301
        %v3303 = vmul.f32 %v3282, 1.442695
        %v3304 = vpow.pop %v3303
        %v3305 = vmul.f32 %v3283, 1.442695
        %v3306 = vpow.pop %v3305
        %v3307 = vmul.f32 %v3284, 1.442695
        %v3308 = vpow.pop %v3307
        %v3309 = vmul.f32 %v3285, 1.442695
        %v3310 = vpow.pop %v3309
        %v3311 = vmul.f32 %v3286, 1.442695
        %v3312 = vpow.pop %v3311
        %v3313 = vmul.f32 %v3287, 1.442695
        %v3314 = vpow.pop %v3313
        %v3315 = vmul.f32 %v3288, 1.442695
        %v3316 = vpow.pop %v3315
        %v3317 = vmul.f32 %v3289, 1.442695
        %v3318 = vpow.pop %v3317
        %v3319 = vmul.f32 %v3290, 1.442695
        %v3320 = vpow.pop %v3319
        %v3321 = vmul.f32 %v3291, 1.442695
        %v3322 = vpow.pop %v3321
        %v3323 = vmul.f32 %v3292, 1.442695
        %v3324 = vpow.pop %v3323
        %v3325 = vadd.f32 %v3294, 1.0
        %v3326 = vadd.f32 %v3296, 1.0
        %v3327 = vadd.f32 %v3298, 1.0
        %v3328 = vadd.f32 %v3300, 1.0
        %v3329 = vadd.f32 %v3302, 1.0
        %v3330 = vadd.f32 %v3304, 1.0
        %v3331 = vadd.f32 %v3306, 1.0
        %v3332 = vadd.f32 %v3308, 1.0
        %v3333 = vadd.f32 %v3310, 1.0
        %v3334 = vadd.f32 %v3312, 1.0
        %v3335 = vadd.f32 %v3314, 1.0
        %v3336 = vadd.f32 %v3316, 1.0
        %v3337 = vadd.f32 %v3318, 1.0
        %v3338 = vadd.f32 %v3320, 1.0
        %v3339 = vadd.f32 %v3322, 1.0
        %v3340 = vadd.f32 %v3324, 1.0
        %v3341 = vrcp.pop %v3325
        %v3342 = vmul.f32 1.0, %v3341
        %v3343 = vrcp.pop %v3326
        %v3344 = vmul.f32 1.0, %v3343
        %v3345 = vrcp.pop %v3327
        %v3346 = vmul.f32 1.0, %v3345
        %v3347 = vrcp.pop %v3328
        %v3348 = vmul.f32 1.0, %v3347
        %v3349 = vrcp.pop %v3329
        %v3350 = vmul.f32 1.0, %v3349
        %v3351 = vrcp.pop %v3330
        %v3352 = vmul.f32 1.0, %v3351
        %v3353 = vrcp.pop %v3331
        %v3354 = vmul.f32 1.0, %v3353
        %v3355 = vrcp.pop %v3332
        %v3356 = vmul.f32 1.0, %v3355
        %v3357 = vrcp.pop %v3333
        %v3358 = vmul.f32 1.0, %v3357
        %v3359 = vrcp.pop %v3334
        %v3360 = vmul.f32 1.0, %v3359
        %v3361 = vrcp.pop %v3335
        %v3362 = vmul.f32 1.0, %v3361
        %v3363 = vrcp.pop %v3336
        %v3364 = vmul.f32 1.0, %v3363
        %v3365 = vrcp.pop %v3337
        %v3366 = vmul.f32 1.0, %v3365
        %v3367 = vrcp.pop %v3338
        %v3368 = vmul.f32 1.0, %v3367
        %v3369 = vrcp.pop %v3339
        %v3370 = vmul.f32 1.0, %v3369
        %v3371 = vrcp.pop %v3340
        %v3372 = vmul.f32 1.0, %v3371
        %v3373 = vmul.f32 %v3342, %v2972
        %v3374 = vmul.f32 %v3344, %v2973
        %v3375 = vmul.f32 %v3346, %v2974
        %v3376 = vmul.f32 %v3348, %v2975
        %v3377 = vmul.f32 %v3350, %v2976
        %v3378 = vmul.f32 %v3352, %v2977
        %v3379 = vmul.f32 %v3354, %v2978
        %v3380 = vmul.f32 %v3356, %v2979
        %v3381 = vmul.f32 %v3358, %v2980
        %v3382 = vmul.f32 %v3360, %v2981
        %v3383 = vmul.f32 %v3362, %v2982
        %v3384 = vmul.f32 %v3364, %v2983
        %v3385 = vmul.f32 %v3366, %v2984
        %v3386 = vmul.f32 %v3368, %v2985
        %v3387 = vmul.f32 %v3370, %v2986
        %v3388 = vmul.f32 %v3372, %v2987
        %3389 = vmatprep.subr.mxu0 0.0
        %3390 = vmatpush1.msra.mxu0 %v2731
        %3391 = vmatprep.subr.mxu0 0.0
        %3392 = vmatpush1.msra.mxu0 %v2732
        %3393 = vmatprep.subr.mxu0 0.0
        %3394 = vmatpush1.msra.mxu0 %v2733
        %3395 = vmatprep.subr.mxu0 0.0
        %3396 = vmatpush1.msra.mxu0 %v2734
        %3397 = vmatprep.subr.mxu0 0.0
        %3398 = vmatpush1.msra.mxu0 %v2735
        %3399 = vmatprep.subr.mxu0 0.0
        %3400 = vmatpush1.msra.mxu0 %v2736
        %3401 = vmatprep.subr.mxu0 0.0
        %3402 = vmatpush1.msra.mxu0 %v2737
        %3403 = vmatprep.subr.mxu0 0.0
        %3404 = vmatpush1.msra.mxu0 %v2738
        %3405 = vmatprep.subr.mxu0 0.0
        %3406 = vmatpush1.msra.mxu0 %v2739
        %3407 = vmatprep.subr.mxu0 0.0
        %3408 = vmatpush1.msra.mxu0 %v2740
        %3409 = vmatprep.subr.mxu0 0.0
        %3410 = vmatpush1.msra.mxu0 %v2741
        %3411 = vmatprep.subr.mxu0 0.0
        %3412 = vmatpush1.msra.mxu0 %v2742
        %3413 = vmatprep.subr.mxu0 0.0
        %3414 = vmatpush1.msra.mxu0 %v2743
        %3415 = vmatprep.subr.mxu0 0.0
        %3416 = vmatpush1.msra.mxu0 %v2744
        %3417 = vmatprep.subr.mxu0 0.0
        %3418 = vmatpush1.msra.mxu0 %v2745
        %3419 = vmatprep.subr.mxu0 0.0
        %3420 = vmatpush1.msra.mxu0 %v2746
        %3421 = vmatprep.subr.mxu0 0.0
        %3422 = vmatpush1.msra.mxu0 0.0
        %3423 = vmatprep.subr.mxu0 0.0
        %3424 = vmatpush1.msra.mxu0 0.0
        %3425 = vmatprep.subr.mxu0 0.0
        %3426 = vmatpush1.msra.mxu0 0.0
        %3427 = vmatprep.subr.mxu0 0.0
        %3428 = vmatpush1.msra.mxu0 0.0
        %3429 = vmatprep.subr.mxu0 0.0
        %3430 = vmatpush1.msra.mxu0 0.0
        %3431 = vmatprep.subr.mxu0 0.0
        %3432 = vmatpush1.msra.mxu0 0.0
        %3433 = vmatprep.subr.mxu0 0.0
        %3434 = vmatpush1.msra.mxu0 0.0
        %3435 = vmatprep.subr.mxu0 0.0
        %3436 = vmatpush1.msra.mxu0 0.0
        %3437 = vmatprep.subr.mxu0 0.0
        %3438 = vmatpush1.msra.mxu0 0.0
        %3439 = vmatprep.subr.mxu0 0.0
        %3440 = vmatpush1.msra.mxu0 0.0
        %3441 = vmatprep.subr.mxu0 0.0
        %3442 = vmatpush1.msra.mxu0 0.0
        %3443 = vmatprep.subr.mxu0 0.0
        %3444 = vmatpush1.msra.mxu0 0.0
        %3445 = vmatprep.subr.mxu0 0.0
        %3446 = vmatpush1.msra.mxu0 0.0
        %3447 = vmatprep.subr.mxu0 0.0
        %3448 = vmatpush1.msra.mxu0 0.0
        %3449 = vmatprep.subr.mxu0 0.0
        %3450 = vmatpush1.msra.mxu0 0.0
        %3451 = vmatprep.subr.mxu0 0.0
        %3452 = vmatpush1.msra.mxu0 0.0
        %3453 = vmatprep.mubr.f32.mxu0 0.0
        %3454 = vmatmul.mubr.f32.gmra.mrb[0].mxu0 %v3373
        %v3455 = vpop.f32.mrb[0].mxu0
        %v3456 = vadd.f32 0.0, %v3455
        %v3457 = vpop.f32.mrb[0].mxu0
        %3458 = vmatprep.mubr.f32.mxu0 0.0
        %3459 = vmatmul.mubr.f32.gmra.mrb[0].mxu0 %v3374
        %v3460 = vpop.f32.mrb[0].mxu0
        %v3461 = vadd.f32 0.0, %v3460
        %v3462 = vpop.f32.mrb[0].mxu0
        %3463 = vmatprep.mubr.f32.mxu0 0.0
        %3464 = vmatmul.mubr.f32.gmra.mrb[0].mxu0 %v3375
        %v3465 = vpop.f32.mrb[0].mxu0
        %v3466 = vadd.f32 0.0, %v3465
        %v3467 = vpop.f32.mrb[0].mxu0
        %3468 = vmatprep.mubr.f32.mxu0 0.0
        %3469 = vmatmul.mubr.f32.gmra.mrb[0].mxu0 %v3376
        %v3470 = vpop.f32.mrb[0].mxu0
        %v3471 = vadd.f32 0.0, %v3470
        %v3472 = vpop.f32.mrb[0].mxu0
        %3473 = vmatprep.mubr.f32.mxu0 0.0
        %3474 = vmatmul.mubr.f32.gmra.mrb[0].mxu0 %v3377
        %v3475 = vpop.f32.mrb[0].mxu0
        %v3476 = vadd.f32 0.0, %v3475
        %v3477 = vpop.f32.mrb[0].mxu0
        %3478 = vmatprep.mubr.f32.mxu0 0.0
        %3479 = vmatmul.mubr.f32.gmra.mrb[0].mxu0 %v3378
        %v3480 = vpop.f32.mrb[0].mxu0
        %v3481 = vadd.f32 0.0, %v3480
        %v3482 = vpop.f32.mrb[0].mxu0
        %3483 = vmatprep.mubr.f32.mxu0 0.0
        %3484 = vmatmul.mubr.f32.gmra.mrb[0].mxu0 %v3379
        %v3485 = vpop.f32.mrb[0].mxu0
        %v3486 = vadd.f32 0.0, %v3485
        %v3487 = vpop.f32.mrb[0].mxu0
        %3488 = vmatprep.mubr.f32.mxu0 0.0
        %3489 = vmatmul.mubr.f32.gmra.mrb[0].mxu0 %v3380
        %v3490 = vpop.f32.mrb[0].mxu0
        %v3491 = vadd.f32 0.0, %v3490
        %v3492 = vpop.f32.mrb[0].mxu0
        %3493 = vmatprep.mubr.f32.mxu0 0.0
        %3494 = vmatmul.mubr.f32.gmra.mrb[0].mxu0 %v3381
        %v3495 = vpop.f32.mrb[0].mxu0
        %v3496 = vadd.f32 0.0, %v3495
        %v3497 = vpop.f32.mrb[0].mxu0
        %3498 = vmatprep.mubr.f32.mxu0 0.0
        %3499 = vmatmul.mubr.f32.gmra.mrb[0].mxu0 %v3382
        %v3500 = vpop.f32.mrb[0].mxu0
        %v3501 = vadd.f32 0.0, %v3500
        %v3502 = vpop.f32.mrb[0].mxu0
        %3503 = vmatprep.mubr.f32.mxu0 0.0
        %3504 = vmatmul.mubr.f32.gmra.mrb[0].mxu0 %v3383
        %v3505 = vpop.f32.mrb[0].mxu0
        %v3506 = vadd.f32 0.0, %v3505
        %v3507 = vpop.f32.mrb[0].mxu0
        %3508 = vmatprep.mubr.f32.mxu0 0.0
        %3509 = vmatmul.mubr.f32.gmra.mrb[0].mxu0 %v3384
        %v3510 = vpop.f32.mrb[0].mxu0
        %v3511 = vadd.f32 0.0, %v3510
        %v3512 = vpop.f32.mrb[0].mxu0
        %3513 = vmatprep.mubr.f32.mxu0 0.0
        %3514 = vmatmul.mubr.f32.gmra.mrb[0].mxu0 %v3385
        %v3515 = vpop.f32.mrb[0].mxu0
        %v3516 = vadd.f32 0.0, %v3515
        %v3517 = vpop.f32.mrb[0].mxu0
        %3518 = vmatprep.mubr.f32.mxu0 0.0
        %3519 = vmatmul.mubr.f32.gmra.mrb[0].mxu0 %v3386
        %v3520 = vpop.f32.mrb[0].mxu0
        %v3521 = vadd.f32 0.0, %v3520
        %v3522 = vpop.f32.mrb[0].mxu0
        %3523 = vmatprep.mubr.f32.mxu0 0.0
        %3524 = vmatmul.mubr.f32.gmra.mrb[0].mxu0 %v3387
        %v3525 = vpop.f32.mrb[0].mxu0
        %v3526 = vadd.f32 0.0, %v3525
        %v3527 = vpop.f32.mrb[0].mxu0
        %3528 = vmatprep.mubr.f32.mxu0 0.0
        %3529 = vmatmul.mubr.f32.gmra.mrb[0].mxu0 %v3388
        %v3530 = vpop.f32.mrb[0].mxu0
        %v3531 = vadd.f32 0.0, %v3530
        %v3532 = vpop.f32.mrb[0].mxu0
        %3533 = vdwg.mxu0
        %v3534 = vadd.f32 %v1740, %v3456
        %v3535 = vadd.f32 %v1745, %v3461
        %v3536 = vadd.f32 %v1750, %v3466
        %v3537 = vadd.f32 %v1755, %v3471
        %v3538 = vadd.f32 %v1760, %v3476
        %v3539 = vadd.f32 %v1765, %v3481
        %v3540 = vadd.f32 %v1770, %v3486
        %v3541 = vadd.f32 %v1775, %v3491
        %v3542 = vadd.f32 %v1780, %v3496
        %v3543 = vadd.f32 %v1785, %v3501
        %v3544 = vadd.f32 %v1790, %v3506
        %v3545 = vadd.f32 %v1795, %v3511
        %v3546 = vadd.f32 %v1800, %v3516
        %v3547 = vadd.f32 %v1805, %v3521
        %v3548 = vadd.f32 %v1810, %v3526
        %v3549 = vadd.f32 %v1815, %v3531
        %v3550 = vtanh.pop %v3534
        %v3551 = vtanh.pop %v3535
        %v3552 = vtanh.pop %v3536
        %v3553 = vtanh.pop %v3537
        %v3554 = vtanh.pop %v3538
        %v3555 = vtanh.pop %v3539
        %v3556 = vtanh.pop %v3540
        %v3557 = vtanh.pop %v3541
        %v3558 = vtanh.pop %v3542
        %v3559 = vtanh.pop %v3543
        %v3560 = vtanh.pop %v3544
        %v3561 = vtanh.pop %v3545
        %v3562 = vtanh.pop %v3546
        %v3563 = vtanh.pop %v3547
        %v3564 = vtanh.pop %v3548
        %v3565 = vtanh.pop %v3549
        %v3566 = vsub.f32 1.0, %v3230
        %v3567 = vsub.f32 1.0, %v3232
        %v3568 = vsub.f32 1.0, %v3234
        %v3569 = vsub.f32 1.0, %v3236
        %v3570 = vsub.f32 1.0, %v3238
        %v3571 = vsub.f32 1.0, %v3240
        %v3572 = vsub.f32 1.0, %v3242
        %v3573 = vsub.f32 1.0, %v3244
        %v3574 = vsub.f32 1.0, %v3246
        %v3575 = vsub.f32 1.0, %v3248
        %v3576 = vsub.f32 1.0, %v3250
        %v3577 = vsub.f32 1.0, %v3252
        %v3578 = vsub.f32 1.0, %v3254
        %v3579 = vsub.f32 1.0, %v3256
        %v3580 = vsub.f32 1.0, %v3258
        %v3581 = vsub.f32 1.0, %v3260
        %v3582 = vmul.f32 %v3566, %v2972
        %v3583 = vmul.f32 %v3567, %v2973
        %v3584 = vmul.f32 %v3568, %v2974
        %v3585 = vmul.f32 %v3569, %v2975
        %v3586 = vmul.f32 %v3570, %v2976
        %v3587 = vmul.f32 %v3571, %v2977
        %v3588 = vmul.f32 %v3572, %v2978
        %v3589 = vmul.f32 %v3573, %v2979
        %v3590 = vmul.f32 %v3574, %v2980
        %v3591 = vmul.f32 %v3575, %v2981
        %v3592 = vmul.f32 %v3576, %v2982
        %v3593 = vmul.f32 %v3577, %v2983
        %v3594 = vmul.f32 %v3578, %v2984
        %v3595 = vmul.f32 %v3579, %v2985
        %v3596 = vmul.f32 %v3580, %v2986
        %v3597 = vmul.f32 %v3581, %v2987
        %v3598 = vmul.f32 %v3230, %v3550
        %v3599 = vmul.f32 %v3232, %v3551
        %v3600 = vmul.f32 %v3234, %v3552
        %v3601 = vmul.f32 %v3236, %v3553
        %v3602 = vmul.f32 %v3238, %v3554
        %v3603 = vmul.f32 %v3240, %v3555
        %v3604 = vmul.f32 %v3242, %v3556
        %v3605 = vmul.f32 %v3244, %v3557
        %v3606 = vmul.f32 %v3246, %v3558
        %v3607 = vmul.f32 %v3248, %v3559
        %v3608 = vmul.f32 %v3250, %v3560
        %v3609 = vmul.f32 %v3252, %v3561
        %v3610 = vmul.f32 %v3254, %v3562
        %v3611 = vmul.f32 %v3256, %v3563
        %v3612 = vmul.f32 %v3258, %v3564
        %v3613 = vmul.f32 %v3260, %v3565
        %v3614 = vadd.f32 %v3582, %v3598
        %v3615 = vadd.f32 %v3583, %v3599
        %v3616 = vadd.f32 %v3584, %v3600
        %v3617 = vadd.f32 %v3585, %v3601
        %v3618 = vadd.f32 %v3586, %v3602
        %v3619 = vadd.f32 %v3587, %v3603
        %v3620 = vadd.f32 %v3588, %v3604
        %v3621 = vadd.f32 %v3589, %v3605
        %v3622 = vadd.f32 %v3590, %v3606
        %v3623 = vadd.f32 %v3591, %v3607
        %v3624 = vadd.f32 %v3592, %v3608
        %v3625 = vadd.f32 %v3593, %v3609
        %v3626 = vadd.f32 %v3594, %v3610
        %v3627 = vadd.f32 %v3595, %v3611
        %v3628 = vadd.f32 %v3596, %v3612
        %v3629 = vadd.f32 %v3597, %v3613
        %3630 = vmatprep.subr.mxu0 %v2299
        %3631 = vmatpush1.msra.mxu0 %v2298
        %3632 = vmatprep.subr.mxu0 %v2301
        %3633 = vmatpush1.msra.mxu0 %v2300
        %3634 = vmatprep.subr.mxu0 %v2303
        %3635 = vmatpush1.msra.mxu0 %v2302
        %3636 = vmatprep.subr.mxu0 %v2305
        %3637 = vmatpush1.msra.mxu0 %v2304
        %3638 = vmatprep.subr.mxu0 %v2307
        %3639 = vmatpush1.msra.mxu0 %v2306
        %3640 = vmatprep.subr.mxu0 %v2309
        %3641 = vmatpush1.msra.mxu0 %v2308
        %3642 = vmatprep.subr.mxu0 %v2311
        %3643 = vmatpush1.msra.mxu0 %v2310
        %3644 = vmatprep.subr.mxu0 %v2313
        %3645 = vmatpush1.msra.mxu0 %v2312
        %3646 = vmatprep.subr.mxu0 %v2315
        %3647 = vmatpush1.msra.mxu0 %v2314
        %3648 = vmatprep.subr.mxu0 %v2317
        %3649 = vmatpush1.msra.mxu0 %v2316
        %3650 = vmatprep.subr.mxu0 %v2319
        %3651 = vmatpush1.msra.mxu0 %v2318
        %3652 = vmatprep.subr.mxu0 %v2321
        %3653 = vmatpush1.msra.mxu0 %v2320
        %3654 = vmatprep.subr.mxu0 %v2323
        %3655 = vmatpush1.msra.mxu0 %v2322
        %3656 = vmatprep.subr.mxu0 %v2325
        %3657 = vmatpush1.msra.mxu0 %v2324
        %3658 = vmatprep.subr.mxu0 %v2327
        %3659 = vmatpush1.msra.mxu0 %v2326
        %3660 = vmatprep.subr.mxu0 %v2329
        %3661 = vmatpush1.msra.mxu0 %v2328
        %3662 = vmatprep.subr.mxu0 0.0
        %3663 = vmatpush1.msra.mxu0 0.0
        %3664 = vmatprep.subr.mxu0 0.0
        %3665 = vmatpush1.msra.mxu0 0.0
        %3666 = vmatprep.subr.mxu0 0.0
        %3667 = vmatpush1.msra.mxu0 0.0
        %3668 = vmatprep.subr.mxu0 0.0
        %3669 = vmatpush1.msra.mxu0 0.0
        %3670 = vmatprep.subr.mxu0 0.0
        %3671 = vmatpush1.msra.mxu0 0.0
        %3672 = vmatprep.subr.mxu0 0.0
        %3673 = vmatpush1.msra.mxu0 0.0
        %3674 = vmatprep.subr.mxu0 0.0
        %3675 = vmatpush1.msra.mxu0 0.0
        %3676 = vmatprep.subr.mxu0 0.0
        %3677 = vmatpush1.msra.mxu0 0.0
        %3678 = vmatprep.subr.mxu0 0.0
        %3679 = vmatpush1.msra.mxu0 0.0
        %3680 = vmatprep.subr.mxu0 0.0
        %3681 = vmatpush1.msra.mxu0 0.0
        %3682 = vmatprep.subr.mxu0 0.0
        %3683 = vmatpush1.msra.mxu0 0.0
        %3684 = vmatprep.subr.mxu0 0.0
        %3685 = vmatpush1.msra.mxu0 0.0
        %3686 = vmatprep.subr.mxu0 0.0
        %3687 = vmatpush1.msra.mxu0 0.0
        %3688 = vmatprep.subr.mxu0 0.0
        %3689 = vmatpush1.msra.mxu0 0.0
        %3690 = vmatprep.subr.mxu0 0.0
        %3691 = vmatpush1.msra.mxu0 0.0
        %3692 = vmatprep.subr.mxu0 0.0
        %3693 = vmatpush1.msra.mxu0 0.0
        %3694 = vmatprep.mubr.f32.mxu0 0.0
        %3695 = vmatmul.mubr.f32.gmra.mrb[0].mxu0 %v3614
        %v3696 = vpop.f32.mrb[0].mxu0
        %v3697 = vadd.f32 0.0, %v3696
        %v3698 = vpop.f32.mrb[0].mxu0
        %v3699 = vadd.f32 0.0, %v3698
        %3700 = vmatprep.mubr.f32.mxu0 0.0
        %3701 = vmatmul.mubr.f32.gmra.mrb[0].mxu0 %v3615
        %v3702 = vpop.f32.mrb[0].mxu0
        %v3703 = vadd.f32 0.0, %v3702
        %v3704 = vpop.f32.mrb[0].mxu0
        %v3705 = vadd.f32 0.0, %v3704
        %3706 = vmatprep.mubr.f32.mxu0 0.0
        %3707 = vmatmul.mubr.f32.gmra.mrb[0].mxu0 %v3616
        %v3708 = vpop.f32.mrb[0].mxu0
        %v3709 = vadd.f32 0.0, %v3708
        %v3710 = vpop.f32.mrb[0].mxu0
        %v3711 = vadd.f32 0.0, %v3710
        %3712 = vmatprep.mubr.f32.mxu0 0.0
        %3713 = vmatmul.mubr.f32.gmra.mrb[0].mxu0 %v3617
        %v3714 = vpop.f32.mrb[0].mxu0
        %v3715 = vadd.f32 0.0, %v3714
        %v3716 = vpop.f32.mrb[0].mxu0
        %v3717 = vadd.f32 0.0, %v3716
        %3718 = vmatprep.mubr.f32.mxu0 0.0
        %3719 = vmatmul.mubr.f32.gmra.mrb[0].mxu0 %v3618
        %v3720 = vpop.f32.mrb[0].mxu0
        %v3721 = vadd.f32 0.0, %v3720
        %v3722 = vpop.f32.mrb[0].mxu0
        %v3723 = vadd.f32 0.0, %v3722
        %3724 = vmatprep.mubr.f32.mxu0 0.0
        %3725 = vmatmul.mubr.f32.gmra.mrb[0].mxu0 %v3619
        %v3726 = vpop.f32.mrb[0].mxu0
        %v3727 = vadd.f32 0.0, %v3726
        %v3728 = vpop.f32.mrb[0].mxu0
        %v3729 = vadd.f32 0.0, %v3728
        %3730 = vmatprep.mubr.f32.mxu0 0.0
        %3731 = vmatmul.mubr.f32.gmra.mrb[0].mxu0 %v3620
        %v3732 = vpop.f32.mrb[0].mxu0
        %v3733 = vadd.f32 0.0, %v3732
        %v3734 = vpop.f32.mrb[0].mxu0
        %v3735 = vadd.f32 0.0, %v3734
        %3736 = vmatprep.mubr.f32.mxu0 0.0
        %3737 = vmatmul.mubr.f32.gmra.mrb[0].mxu0 %v3621
        %v3738 = vpop.f32.mrb[0].mxu0
        %v3739 = vadd.f32 0.0, %v3738
        %v3740 = vpop.f32.mrb[0].mxu0
        %v3741 = vadd.f32 0.0, %v3740
        %3742 = vmatprep.mubr.f32.mxu0 0.0
        %3743 = vmatmul.mubr.f32.gmra.mrb[0].mxu0 %v3622
        %v3744 = vpop.f32.mrb[0].mxu0
        %v3745 = vadd.f32 0.0, %v3744
        %v3746 = vpop.f32.mrb[0].mxu0
        %v3747 = vadd.f32 0.0, %v3746
        %3748 = vmatprep.mubr.f32.mxu0 0.0
        %3749 = vmatmul.mubr.f32.gmra.mrb[0].mxu0 %v3623
        %v3750 = vpop.f32.mrb[0].mxu0
        %v3751 = vadd.f32 0.0, %v3750
        %v3752 = vpop.f32.mrb[0].mxu0
        %v3753 = vadd.f32 0.0, %v3752
        %3754 = vmatprep.mubr.f32.mxu0 0.0
        %3755 = vmatmul.mubr.f32.gmra.mrb[0].mxu0 %v3624
        %v3756 = vpop.f32.mrb[0].mxu0
        %v3757 = vadd.f32 0.0, %v3756
        %v3758 = vpop.f32.mrb[0].mxu0
        %v3759 = vadd.f32 0.0, %v3758
        %3760 = vmatprep.mubr.f32.mxu0 0.0
        %3761 = vmatmul.mubr.f32.gmra.mrb[0].mxu0 %v3625
        %v3762 = vpop.f32.mrb[0].mxu0
        %v3763 = vadd.f32 0.0, %v3762
        %v3764 = vpop.f32.mrb[0].mxu0
        %v3765 = vadd.f32 0.0, %v3764
        %3766 = vmatprep.mubr.f32.mxu0 0.0
        %3767 = vmatmul.mubr.f32.gmra.mrb[0].mxu0 %v3626
        %v3768 = vpop.f32.mrb[0].mxu0
        %v3769 = vadd.f32 0.0, %v3768
        %v3770 = vpop.f32.mrb[0].mxu0
        %v3771 = vadd.f32 0.0, %v3770
        %3772 = vmatprep.mubr.f32.mxu0 0.0
        %3773 = vmatmul.mubr.f32.gmra.mrb[0].mxu0 %v3627
        %v3774 = vpop.f32.mrb[0].mxu0
        %v3775 = vadd.f32 0.0, %v3774
        %v3776 = vpop.f32.mrb[0].mxu0
        %v3777 = vadd.f32 0.0, %v3776
        %3778 = vmatprep.mubr.f32.mxu0 0.0
        %3779 = vmatmul.mubr.f32.gmra.mrb[0].mxu0 %v3628
        %v3780 = vpop.f32.mrb[0].mxu0
        %v3781 = vadd.f32 0.0, %v3780
        %v3782 = vpop.f32.mrb[0].mxu0
        %v3783 = vadd.f32 0.0, %v3782
        %3784 = vmatprep.mubr.f32.mxu0 0.0
        %3785 = vmatmul.mubr.f32.gmra.mrb[0].mxu0 %v3629
        %v3786 = vpop.f32.mrb[0].mxu0
        %v3787 = vadd.f32 0.0, %v3786
        %v3788 = vpop.f32.mrb[0].mxu0
        %v3789 = vadd.f32 0.0, %v3788
        %3790 = vdwg.mxu0
        %v3791 = vadd.f32 %v1019, %v3697
        %v3792 = vadd.f32 %v1025, %v3703
        %v3793 = vadd.f32 %v1031, %v3709
        %v3794 = vadd.f32 %v1037, %v3715
        %v3795 = vadd.f32 %v1043, %v3721
        %v3796 = vadd.f32 %v1049, %v3727
        %v3797 = vadd.f32 %v1055, %v3733
        %v3798 = vadd.f32 %v1061, %v3739
        %v3799 = vadd.f32 %v1067, %v3745
        %v3800 = vadd.f32 %v1073, %v3751
        %v3801 = vadd.f32 %v1079, %v3757
        %v3802 = vadd.f32 %v1085, %v3763
        %v3803 = vadd.f32 %v1091, %v3769
        %v3804 = vadd.f32 %v1097, %v3775
        %v3805 = vadd.f32 %v1103, %v3781
        %v3806 = vadd.f32 %v1109, %v3787
        %v3807 = vxor.u32 %v3791, 2147483648
        %v3808 = vxor.u32 %v3792, 2147483648
        %v3809 = vxor.u32 %v3793, 2147483648
        %v3810 = vxor.u32 %v3794, 2147483648
        %v3811 = vxor.u32 %v3795, 2147483648
        %v3812 = vxor.u32 %v3796, 2147483648
        %v3813 = vxor.u32 %v3797, 2147483648
        %v3814 = vxor.u32 %v3798, 2147483648
        %v3815 = vxor.u32 %v3799, 2147483648
        %v3816 = vxor.u32 %v3800, 2147483648
        %v3817 = vxor.u32 %v3801, 2147483648
        %v3818 = vxor.u32 %v3802, 2147483648
        %v3819 = vxor.u32 %v3803, 2147483648
        %v3820 = vxor.u32 %v3804, 2147483648
        %v3821 = vxor.u32 %v3805, 2147483648
        %v3822 = vxor.u32 %v3806, 2147483648
        %v3823 = vmul.f32 %v3807, 1.442695
        %v3824 = vpow.pop %v3823
        %v3825 = vmul.f32 %v3808, 1.442695
        %v3826 = vpow.pop %v3825
        %v3827 = vmul.f32 %v3809, 1.442695
        %v3828 = vpow.pop %v3827
        %v3829 = vmul.f32 %v3810, 1.442695
        %v3830 = vpow.pop %v3829
        %v3831 = vmul.f32 %v3811, 1.442695
        %v3832 = vpow.pop %v3831
        %v3833 = vmul.f32 %v3812, 1.442695
        %v3834 = vpow.pop %v3833
        %v3835 = vmul.f32 %v3813, 1.442695
        %v3836 = vpow.pop %v3835
        %v3837 = vmul.f32 %v3814, 1.442695
        %v3838 = vpow.pop %v3837
        %v3839 = vmul.f32 %v3815, 1.442695
        %v3840 = vpow.pop %v3839
        %v3841 = vmul.f32 %v3816, 1.442695
        %v3842 = vpow.pop %v3841
        %v3843 = vmul.f32 %v3817, 1.442695
        %v3844 = vpow.pop %v3843
        %v3845 = vmul.f32 %v3818, 1.442695
        %v3846 = vpow.pop %v3845
        %v3847 = vmul.f32 %v3819, 1.442695
        %v3848 = vpow.pop %v3847
        %v3849 = vmul.f32 %v3820, 1.442695
        %v3850 = vpow.pop %v3849
        %v3851 = vmul.f32 %v3821, 1.442695
        %v3852 = vpow.pop %v3851
        %v3853 = vmul.f32 %v3822, 1.442695
        %v3854 = vpow.pop %v3853
        %v3855 = vadd.f32 %v3824, 1.0
        %v3856 = vadd.f32 %v3826, 1.0
        %v3857 = vadd.f32 %v3828, 1.0
        %v3858 = vadd.f32 %v3830, 1.0
        %v3859 = vadd.f32 %v3832, 1.0
        %v3860 = vadd.f32 %v3834, 1.0
        %v3861 = vadd.f32 %v3836, 1.0
        %v3862 = vadd.f32 %v3838, 1.0
        %v3863 = vadd.f32 %v3840, 1.0
        %v3864 = vadd.f32 %v3842, 1.0
        %v3865 = vadd.f32 %v3844, 1.0
        %v3866 = vadd.f32 %v3846, 1.0
        %v3867 = vadd.f32 %v3848, 1.0
        %v3868 = vadd.f32 %v3850, 1.0
        %v3869 = vadd.f32 %v3852, 1.0
        %v3870 = vadd.f32 %v3854, 1.0
        %v3871 = vrcp.pop %v3855
        %v3872 = vmul.f32 1.0, %v3871
        %v3873 = vrcp.pop %v3856
        %v3874 = vmul.f32 1.0, %v3873
        %v3875 = vrcp.pop %v3857
        %v3876 = vmul.f32 1.0, %v3875
        %v3877 = vrcp.pop %v3858
        %v3878 = vmul.f32 1.0, %v3877
        %v3879 = vrcp.pop %v3859
        %v3880 = vmul.f32 1.0, %v3879
        %v3881 = vrcp.pop %v3860
        %v3882 = vmul.f32 1.0, %v3881
        %v3883 = vrcp.pop %v3861
        %v3884 = vmul.f32 1.0, %v3883
        %v3885 = vrcp.pop %v3862
        %v3886 = vmul.f32 1.0, %v3885
        %v3887 = vrcp.pop %v3863
        %v3888 = vmul.f32 1.0, %v3887
        %v3889 = vrcp.pop %v3864
        %v3890 = vmul.f32 1.0, %v3889
        %v3891 = vrcp.pop %v3865
        %v3892 = vmul.f32 1.0, %v3891
        %v3893 = vrcp.pop %v3866
        %v3894 = vmul.f32 1.0, %v3893
        %v3895 = vrcp.pop %v3867
        %v3896 = vmul.f32 1.0, %v3895
        %v3897 = vrcp.pop %v3868
        %v3898 = vmul.f32 1.0, %v3897
        %v3899 = vrcp.pop %v3869
        %v3900 = vmul.f32 1.0, %v3899
        %v3901 = vrcp.pop %v3870
        %v3902 = vmul.f32 1.0, %v3901
        %v3903 = vadd.f32 %v1021, %v3699
        %v3904 = vadd.f32 %v1027, %v3705
        %v3905 = vadd.f32 %v1033, %v3711
        %v3906 = vadd.f32 %v1039, %v3717
        %v3907 = vadd.f32 %v1045, %v3723
        %v3908 = vadd.f32 %v1051, %v3729
        %v3909 = vadd.f32 %v1057, %v3735
        %v3910 = vadd.f32 %v1063, %v3741
        %v3911 = vadd.f32 %v1069, %v3747
        %v3912 = vadd.f32 %v1075, %v3753
        %v3913 = vadd.f32 %v1081, %v3759
        %v3914 = vadd.f32 %v1087, %v3765
        %v3915 = vadd.f32 %v1093, %v3771
        %v3916 = vadd.f32 %v1099, %v3777
        %v3917 = vadd.f32 %v1105, %v3783
        %v3918 = vadd.f32 %v1111, %v3789
        %v3919 = vxor.u32 %v3903, 2147483648
        %v3920 = vxor.u32 %v3904, 2147483648
        %v3921 = vxor.u32 %v3905, 2147483648
        %v3922 = vxor.u32 %v3906, 2147483648
        %v3923 = vxor.u32 %v3907, 2147483648
        %v3924 = vxor.u32 %v3908, 2147483648
        %v3925 = vxor.u32 %v3909, 2147483648
        %v3926 = vxor.u32 %v3910, 2147483648
        %v3927 = vxor.u32 %v3911, 2147483648
        %v3928 = vxor.u32 %v3912, 2147483648
        %v3929 = vxor.u32 %v3913, 2147483648
        %v3930 = vxor.u32 %v3914, 2147483648
        %v3931 = vxor.u32 %v3915, 2147483648
        %v3932 = vxor.u32 %v3916, 2147483648
        %v3933 = vxor.u32 %v3917, 2147483648
        %v3934 = vxor.u32 %v3918, 2147483648
        %v3935 = vmul.f32 %v3919, 1.442695
        %v3936 = vpow.pop %v3935
        %v3937 = vmul.f32 %v3920, 1.442695
        %v3938 = vpow.pop %v3937
        %v3939 = vmul.f32 %v3921, 1.442695
        %v3940 = vpow.pop %v3939
        %v3941 = vmul.f32 %v3922, 1.442695
        %v3942 = vpow.pop %v3941
        %v3943 = vmul.f32 %v3923, 1.442695
        %v3944 = vpow.pop %v3943
        %v3945 = vmul.f32 %v3924, 1.442695
        %v3946 = vpow.pop %v3945
        %v3947 = vmul.f32 %v3925, 1.442695
        %v3948 = vpow.pop %v3947
        %v3949 = vmul.f32 %v3926, 1.442695
        %v3950 = vpow.pop %v3949
        %v3951 = vmul.f32 %v3927, 1.442695
        %v3952 = vpow.pop %v3951
        %v3953 = vmul.f32 %v3928, 1.442695
        %v3954 = vpow.pop %v3953
        %v3955 = vmul.f32 %v3929, 1.442695
        %v3956 = vpow.pop %v3955
        %v3957 = vmul.f32 %v3930, 1.442695
        %v3958 = vpow.pop %v3957
        %v3959 = vmul.f32 %v3931, 1.442695
        %v3960 = vpow.pop %v3959
        %v3961 = vmul.f32 %v3932, 1.442695
        %v3962 = vpow.pop %v3961
        %v3963 = vmul.f32 %v3933, 1.442695
        %v3964 = vpow.pop %v3963
        %v3965 = vmul.f32 %v3934, 1.442695
        %v3966 = vpow.pop %v3965
        %v3967 = vadd.f32 %v3936, 1.0
        %v3968 = vadd.f32 %v3938, 1.0
        %v3969 = vadd.f32 %v3940, 1.0
        %v3970 = vadd.f32 %v3942, 1.0
        %v3971 = vadd.f32 %v3944, 1.0
        %v3972 = vadd.f32 %v3946, 1.0
        %v3973 = vadd.f32 %v3948, 1.0
        %v3974 = vadd.f32 %v3950, 1.0
        %v3975 = vadd.f32 %v3952, 1.0
        %v3976 = vadd.f32 %v3954, 1.0
        %v3977 = vadd.f32 %v3956, 1.0
        %v3978 = vadd.f32 %v3958, 1.0
        %v3979 = vadd.f32 %v3960, 1.0
        %v3980 = vadd.f32 %v3962, 1.0
        %v3981 = vadd.f32 %v3964, 1.0
        %v3982 = vadd.f32 %v3966, 1.0
        %v3983 = vrcp.pop %v3967
        %v3984 = vmul.f32 1.0, %v3983
        %v3985 = vrcp.pop %v3968
        %v3986 = vmul.f32 1.0, %v3985
        %v3987 = vrcp.pop %v3969
        %v3988 = vmul.f32 1.0, %v3987
        %v3989 = vrcp.pop %v3970
        %v3990 = vmul.f32 1.0, %v3989
        %v3991 = vrcp.pop %v3971
        %v3992 = vmul.f32 1.0, %v3991
        %v3993 = vrcp.pop %v3972
        %v3994 = vmul.f32 1.0, %v3993
        %v3995 = vrcp.pop %v3973
        %v3996 = vmul.f32 1.0, %v3995
        %v3997 = vrcp.pop %v3974
        %v3998 = vmul.f32 1.0, %v3997
        %v3999 = vrcp.pop %v3975
        %v4000 = vmul.f32 1.0, %v3999
        %v4001 = vrcp.pop %v3976
        %v4002 = vmul.f32 1.0, %v4001
        %v4003 = vrcp.pop %v3977
        %v4004 = vmul.f32 1.0, %v4003
        %v4005 = vrcp.pop %v3978
        %v4006 = vmul.f32 1.0, %v4005
        %v4007 = vrcp.pop %v3979
        %v4008 = vmul.f32 1.0, %v4007
        %v4009 = vrcp.pop %v3980
        %v4010 = vmul.f32 1.0, %v4009
        %v4011 = vrcp.pop %v3981
        %v4012 = vmul.f32 1.0, %v4011
        %v4013 = vrcp.pop %v3982
        %v4014 = vmul.f32 1.0, %v4013
        %v4015 = vmul.f32 %v3984, %v3614
        %v4016 = vmul.f32 %v3986, %v3615
        %v4017 = vmul.f32 %v3988, %v3616
        %v4018 = vmul.f32 %v3990, %v3617
        %v4019 = vmul.f32 %v3992, %v3618
        %v4020 = vmul.f32 %v3994, %v3619
        %v4021 = vmul.f32 %v3996, %v3620
        %v4022 = vmul.f32 %v3998, %v3621
        %v4023 = vmul.f32 %v4000, %v3622
        %v4024 = vmul.f32 %v4002, %v3623
        %v4025 = vmul.f32 %v4004, %v3624
        %v4026 = vmul.f32 %v4006, %v3625
        %v4027 = vmul.f32 %v4008, %v3626
        %v4028 = vmul.f32 %v4010, %v3627
        %v4029 = vmul.f32 %v4012, %v3628
        %v4030 = vmul.f32 %v4014, %v3629
        %4031 = vmatprep.subr.mxu0 0.0
        %4032 = vmatpush1.msra.mxu0 %v2731
        %4033 = vmatprep.subr.mxu0 0.0
        %4034 = vmatpush1.msra.mxu0 %v2732
        %4035 = vmatprep.subr.mxu0 0.0
        %4036 = vmatpush1.msra.mxu0 %v2733
        %4037 = vmatprep.subr.mxu0 0.0
        %4038 = vmatpush1.msra.mxu0 %v2734
        %4039 = vmatprep.subr.mxu0 0.0
        %4040 = vmatpush1.msra.mxu0 %v2735
        %4041 = vmatprep.subr.mxu0 0.0
        %4042 = vmatpush1.msra.mxu0 %v2736
        %4043 = vmatprep.subr.mxu0 0.0
        %4044 = vmatpush1.msra.mxu0 %v2737
        %4045 = vmatprep.subr.mxu0 0.0
        %4046 = vmatpush1.msra.mxu0 %v2738
        %4047 = vmatprep.subr.mxu0 0.0
        %4048 = vmatpush1.msra.mxu0 %v2739
        %4049 = vmatprep.subr.mxu0 0.0
        %4050 = vmatpush1.msra.mxu0 %v2740
        %4051 = vmatprep.subr.mxu0 0.0
        %4052 = vmatpush1.msra.mxu0 %v2741
        %4053 = vmatprep.subr.mxu0 0.0
        %4054 = vmatpush1.msra.mxu0 %v2742
        %4055 = vmatprep.subr.mxu0 0.0
        %4056 = vmatpush1.msra.mxu0 %v2743
        %4057 = vmatprep.subr.mxu0 0.0
        %4058 = vmatpush1.msra.mxu0 %v2744
        %4059 = vmatprep.subr.mxu0 0.0
        %4060 = vmatpush1.msra.mxu0 %v2745
        %4061 = vmatprep.subr.mxu0 0.0
        %4062 = vmatpush1.msra.mxu0 %v2746
        %4063 = vmatprep.subr.mxu0 0.0
        %4064 = vmatpush1.msra.mxu0 0.0
        %4065 = vmatprep.subr.mxu0 0.0
        %4066 = vmatpush1.msra.mxu0 0.0
        %4067 = vmatprep.subr.mxu0 0.0
        %4068 = vmatpush1.msra.mxu0 0.0
        %4069 = vmatprep.subr.mxu0 0.0
        %4070 = vmatpush1.msra.mxu0 0.0
        %4071 = vmatprep.subr.mxu0 0.0
        %4072 = vmatpush1.msra.mxu0 0.0
        %4073 = vmatprep.subr.mxu0 0.0
        %4074 = vmatpush1.msra.mxu0 0.0
        %4075 = vmatprep.subr.mxu0 0.0
        %4076 = vmatpush1.msra.mxu0 0.0
        %4077 = vmatprep.subr.mxu0 0.0
        %4078 = vmatpush1.msra.mxu0 0.0
        %4079 = vmatprep.subr.mxu0 0.0
        %4080 = vmatpush1.msra.mxu0 0.0
        %4081 = vmatprep.subr.mxu0 0.0
        %4082 = vmatpush1.msra.mxu0 0.0
        %4083 = vmatprep.subr.mxu0 0.0
        %4084 = vmatpush1.msra.mxu0 0.0
        %4085 = vmatprep.subr.mxu0 0.0
        %4086 = vmatpush1.msra.mxu0 0.0
        %4087 = vmatprep.subr.mxu0 0.0
        %4088 = vmatpush1.msra.mxu0 0.0
        %4089 = vmatprep.subr.mxu0 0.0
        %4090 = vmatpush1.msra.mxu0 0.0
        %4091 = vmatprep.subr.mxu0 0.0
        %4092 = vmatpush1.msra.mxu0 0.0
        %4093 = vmatprep.subr.mxu0 0.0
        %4094 = vmatpush1.msra.mxu0 0.0
        %4095 = vmatprep.mubr.f32.mxu0 0.0
        %4096 = vmatmul.mubr.f32.gmra.mrb[0].mxu0 %v4015
        %v4097 = vpop.f32.mrb[0].mxu0
        %v4098 = vadd.f32 0.0, %v4097
        %v4099 = vpop.f32.mrb[0].mxu0
        %4100 = vmatprep.mubr.f32.mxu0 0.0
        %4101 = vmatmul.mubr.f32.gmra.mrb[0].mxu0 %v4016
        %v4102 = vpop.f32.mrb[0].mxu0
        %v4103 = vadd.f32 0.0, %v4102
        %v4104 = vpop.f32.mrb[0].mxu0
        %4105 = vmatprep.mubr.f32.mxu0 0.0
        %4106 = vmatmul.mubr.f32.gmra.mrb[0].mxu0 %v4017
        %v4107 = vpop.f32.mrb[0].mxu0
        %v4108 = vadd.f32 0.0, %v4107
        %v4109 = vpop.f32.mrb[0].mxu0
        %4110 = vmatprep.mubr.f32.mxu0 0.0
        %4111 = vmatmul.mubr.f32.gmra.mrb[0].mxu0 %v4018
        %v4112 = vpop.f32.mrb[0].mxu0
        %v4113 = vadd.f32 0.0, %v4112
        %v4114 = vpop.f32.mrb[0].mxu0
        %4115 = vmatprep.mubr.f32.mxu0 0.0
        %4116 = vmatmul.mubr.f32.gmra.mrb[0].mxu0 %v4019
        %v4117 = vpop.f32.mrb[0].mxu0
        %v4118 = vadd.f32 0.0, %v4117
        %v4119 = vpop.f32.mrb[0].mxu0
        %4120 = vmatprep.mubr.f32.mxu0 0.0
        %4121 = vmatmul.mubr.f32.gmra.mrb[0].mxu0 %v4020
        %v4122 = vpop.f32.mrb[0].mxu0
        %v4123 = vadd.f32 0.0, %v4122
        %v4124 = vpop.f32.mrb[0].mxu0
        %4125 = vmatprep.mubr.f32.mxu0 0.0
        %4126 = vmatmul.mubr.f32.gmra.mrb[0].mxu0 %v4021
        %v4127 = vpop.f32.mrb[0].mxu0
        %v4128 = vadd.f32 0.0, %v4127
        %v4129 = vpop.f32.mrb[0].mxu0
        %4130 = vmatprep.mubr.f32.mxu0 0.0
        %4131 = vmatmul.mubr.f32.gmra.mrb[0].mxu0 %v4022
        %v4132 = vpop.f32.mrb[0].mxu0
        %v4133 = vadd.f32 0.0, %v4132
        %v4134 = vpop.f32.mrb[0].mxu0
        %4135 = vmatprep.mubr.f32.mxu0 0.0
        %4136 = vmatmul.mubr.f32.gmra.mrb[0].mxu0 %v4023
        %v4137 = vpop.f32.mrb[0].mxu0
        %v4138 = vadd.f32 0.0, %v4137
        %v4139 = vpop.f32.mrb[0].mxu0
        %4140 = vmatprep.mubr.f32.mxu0 0.0
        %4141 = vmatmul.mubr.f32.gmra.mrb[0].mxu0 %v4024
        %v4142 = vpop.f32.mrb[0].mxu0
        %v4143 = vadd.f32 0.0, %v4142
        %v4144 = vpop.f32.mrb[0].mxu0
        %4145 = vmatprep.mubr.f32.mxu0 0.0
        %4146 = vmatmul.mubr.f32.gmra.mrb[0].mxu0 %v4025
        %v4147 = vpop.f32.mrb[0].mxu0
        %v4148 = vadd.f32 0.0, %v4147
        %v4149 = vpop.f32.mrb[0].mxu0
        %4150 = vmatprep.mubr.f32.mxu0 0.0
        %4151 = vmatmul.mubr.f32.gmra.mrb[0].mxu0 %v4026
        %v4152 = vpop.f32.mrb[0].mxu0
        %v4153 = vadd.f32 0.0, %v4152
        %v4154 = vpop.f32.mrb[0].mxu0
        %4155 = vmatprep.mubr.f32.mxu0 0.0
        %4156 = vmatmul.mubr.f32.gmra.mrb[0].mxu0 %v4027
        %v4157 = vpop.f32.mrb[0].mxu0
        %v4158 = vadd.f32 0.0, %v4157
        %v4159 = vpop.f32.mrb[0].mxu0
        %4160 = vmatprep.mubr.f32.mxu0 0.0
        %4161 = vmatmul.mubr.f32.gmra.mrb[0].mxu0 %v4028
        %v4162 = vpop.f32.mrb[0].mxu0
        %v4163 = vadd.f32 0.0, %v4162
        %v4164 = vpop.f32.mrb[0].mxu0
        %4165 = vmatprep.mubr.f32.mxu0 0.0
        %4166 = vmatmul.mubr.f32.gmra.mrb[0].mxu0 %v4029
        %v4167 = vpop.f32.mrb[0].mxu0
        %v4168 = vadd.f32 0.0, %v4167
        %v4169 = vpop.f32.mrb[0].mxu0
        %4170 = vmatprep.mubr.f32.mxu0 0.0
        %4171 = vmatmul.mubr.f32.gmra.mrb[0].mxu0 %v4030
        %v4172 = vpop.f32.mrb[0].mxu0
        %v4173 = vadd.f32 0.0, %v4172
        %v4174 = vpop.f32.mrb[0].mxu0
        %4175 = vdwg.mxu0
        %v4176 = vadd.f32 %v1820, %v4098
        %v4177 = vadd.f32 %v1825, %v4103
        %v4178 = vadd.f32 %v1830, %v4108
        %v4179 = vadd.f32 %v1835, %v4113
        %v4180 = vadd.f32 %v1840, %v4118
        %v4181 = vadd.f32 %v1845, %v4123
        %v4182 = vadd.f32 %v1850, %v4128
        %v4183 = vadd.f32 %v1855, %v4133
        %v4184 = vadd.f32 %v1860, %v4138
        %v4185 = vadd.f32 %v1865, %v4143
        %v4186 = vadd.f32 %v1870, %v4148
        %v4187 = vadd.f32 %v1875, %v4153
        %v4188 = vadd.f32 %v1880, %v4158
        %v4189 = vadd.f32 %v1885, %v4163
        %v4190 = vadd.f32 %v1890, %v4168
        %v4191 = vadd.f32 %v1895, %v4173
        %v4192 = vtanh.pop %v4176
        %v4193 = vtanh.pop %v4177
        %v4194 = vtanh.pop %v4178
        %v4195 = vtanh.pop %v4179
        %v4196 = vtanh.pop %v4180
        %v4197 = vtanh.pop %v4181
        %v4198 = vtanh.pop %v4182
        %v4199 = vtanh.pop %v4183
        %v4200 = vtanh.pop %v4184
        %v4201 = vtanh.pop %v4185
        %v4202 = vtanh.pop %v4186
        %v4203 = vtanh.pop %v4187
        %v4204 = vtanh.pop %v4188
        %v4205 = vtanh.pop %v4189
        %v4206 = vtanh.pop %v4190
        %v4207 = vtanh.pop %v4191
        %v4208 = vsub.f32 1.0, %v3872
        %v4209 = vsub.f32 1.0, %v3874
        %v4210 = vsub.f32 1.0, %v3876
        %v4211 = vsub.f32 1.0, %v3878
        %v4212 = vsub.f32 1.0, %v3880
        %v4213 = vsub.f32 1.0, %v3882
        %v4214 = vsub.f32 1.0, %v3884
        %v4215 = vsub.f32 1.0, %v3886
        %v4216 = vsub.f32 1.0, %v3888
        %v4217 = vsub.f32 1.0, %v3890
        %v4218 = vsub.f32 1.0, %v3892
        %v4219 = vsub.f32 1.0, %v3894
        %v4220 = vsub.f32 1.0, %v3896
        %v4221 = vsub.f32 1.0, %v3898
        %v4222 = vsub.f32 1.0, %v3900
        %v4223 = vsub.f32 1.0, %v3902
        %v4224 = vmul.f32 %v4208, %v3614
        %v4225 = vmul.f32 %v4209, %v3615
        %v4226 = vmul.f32 %v4210, %v3616
        %v4227 = vmul.f32 %v4211, %v3617
        %v4228 = vmul.f32 %v4212, %v3618
        %v4229 = vmul.f32 %v4213, %v3619
        %v4230 = vmul.f32 %v4214, %v3620
        %v4231 = vmul.f32 %v4215, %v3621
        %v4232 = vmul.f32 %v4216, %v3622
        %v4233 = vmul.f32 %v4217, %v3623
        %v4234 = vmul.f32 %v4218, %v3624
        %v4235 = vmul.f32 %v4219, %v3625
        %v4236 = vmul.f32 %v4220, %v3626
        %v4237 = vmul.f32 %v4221, %v3627
        %v4238 = vmul.f32 %v4222, %v3628
        %v4239 = vmul.f32 %v4223, %v3629
        %v4240 = vmul.f32 %v3872, %v4192
        %v4241 = vmul.f32 %v3874, %v4193
        %v4242 = vmul.f32 %v3876, %v4194
        %v4243 = vmul.f32 %v3878, %v4195
        %v4244 = vmul.f32 %v3880, %v4196
        %v4245 = vmul.f32 %v3882, %v4197
        %v4246 = vmul.f32 %v3884, %v4198
        %v4247 = vmul.f32 %v3886, %v4199
        %v4248 = vmul.f32 %v3888, %v4200
        %v4249 = vmul.f32 %v3890, %v4201
        %v4250 = vmul.f32 %v3892, %v4202
        %v4251 = vmul.f32 %v3894, %v4203
        %v4252 = vmul.f32 %v3896, %v4204
        %v4253 = vmul.f32 %v3898, %v4205
        %v4254 = vmul.f32 %v3900, %v4206
        %v4255 = vmul.f32 %v3902, %v4207
        %v4256 = vadd.f32 %v4224, %v4240
        %v4257 = vadd.f32 %v4225, %v4241
        %v4258 = vadd.f32 %v4226, %v4242
        %v4259 = vadd.f32 %v4227, %v4243
        %v4260 = vadd.f32 %v4228, %v4244
        %v4261 = vadd.f32 %v4229, %v4245
        %v4262 = vadd.f32 %v4230, %v4246
        %v4263 = vadd.f32 %v4231, %v4247
        %v4264 = vadd.f32 %v4232, %v4248
        %v4265 = vadd.f32 %v4233, %v4249
        %v4266 = vadd.f32 %v4234, %v4250
        %v4267 = vadd.f32 %v4235, %v4251
        %v4268 = vadd.f32 %v4236, %v4252
        %v4269 = vadd.f32 %v4237, %v4253
        %v4270 = vadd.f32 %v4238, %v4254
        %v4271 = vadd.f32 %v4239, %v4255
        %4272 = vmatprep.subr.mxu0 %v2299
        %4273 = vmatpush1.msra.mxu0 %v2298
        %4274 = vmatprep.subr.mxu0 %v2301
        %4275 = vmatpush1.msra.mxu0 %v2300
        %4276 = vmatprep.subr.mxu0 %v2303
        %4277 = vmatpush1.msra.mxu0 %v2302
        %4278 = vmatprep.subr.mxu0 %v2305
        %4279 = vmatpush1.msra.mxu0 %v2304
        %4280 = vmatprep.subr.mxu0 %v2307
        %4281 = vmatpush1.msra.mxu0 %v2306
        %4282 = vmatprep.subr.mxu0 %v2309
        %4283 = vmatpush1.msra.mxu0 %v2308
        %4284 = vmatprep.subr.mxu0 %v2311
        %4285 = vmatpush1.msra.mxu0 %v2310
        %4286 = vmatprep.subr.mxu0 %v2313
        %4287 = vmatpush1.msra.mxu0 %v2312
        %4288 = vmatprep.subr.mxu0 %v2315
        %4289 = vmatpush1.msra.mxu0 %v2314
        %4290 = vmatprep.subr.mxu0 %v2317
        %4291 = vmatpush1.msra.mxu0 %v2316
        %4292 = vmatprep.subr.mxu0 %v2319
        %4293 = vmatpush1.msra.mxu0 %v2318
        %4294 = vmatprep.subr.mxu0 %v2321
        %4295 = vmatpush1.msra.mxu0 %v2320
        %4296 = vmatprep.subr.mxu0 %v2323
        %4297 = vmatpush1.msra.mxu0 %v2322
        %4298 = vmatprep.subr.mxu0 %v2325
        %4299 = vmatpush1.msra.mxu0 %v2324
        %4300 = vmatprep.subr.mxu0 %v2327
        %4301 = vmatpush1.msra.mxu0 %v2326
        %4302 = vmatprep.subr.mxu0 %v2329
        %4303 = vmatpush1.msra.mxu0 %v2328
        %4304 = vmatprep.subr.mxu0 0.0
        %4305 = vmatpush1.msra.mxu0 0.0
        %4306 = vmatprep.subr.mxu0 0.0
        %4307 = vmatpush1.msra.mxu0 0.0
        %4308 = vmatprep.subr.mxu0 0.0
        %4309 = vmatpush1.msra.mxu0 0.0
        %4310 = vmatprep.subr.mxu0 0.0
        %4311 = vmatpush1.msra.mxu0 0.0
        %4312 = vmatprep.subr.mxu0 0.0
        %4313 = vmatpush1.msra.mxu0 0.0
        %4314 = vmatprep.subr.mxu0 0.0
        %4315 = vmatpush1.msra.mxu0 0.0
        %4316 = vmatprep.subr.mxu0 0.0
        %4317 = vmatpush1.msra.mxu0 0.0
        %4318 = vmatprep.subr.mxu0 0.0
        %4319 = vmatpush1.msra.mxu0 0.0
        %4320 = vmatprep.subr.mxu0 0.0
        %4321 = vmatpush1.msra.mxu0 0.0
        %4322 = vmatprep.subr.mxu0 0.0
        %4323 = vmatpush1.msra.mxu0 0.0
        %4324 = vmatprep.subr.mxu0 0.0
        %4325 = vmatpush1.msra.mxu0 0.0
        %4326 = vmatprep.subr.mxu0 0.0
        %4327 = vmatpush1.msra.mxu0 0.0
        %4328 = vmatprep.subr.mxu0 0.0
        %4329 = vmatpush1.msra.mxu0 0.0
        %4330 = vmatprep.subr.mxu0 0.0
        %4331 = vmatpush1.msra.mxu0 0.0
        %4332 = vmatprep.subr.mxu0 0.0
        %4333 = vmatpush1.msra.mxu0 0.0
        %4334 = vmatprep.subr.mxu0 0.0
        %4335 = vmatpush1.msra.mxu0 0.0
        %4336 = vmatprep.mubr.f32.mxu0 0.0
        %4337 = vmatmul.mubr.f32.gmra.mrb[0].mxu0 %v4256
        %v4338 = vpop.f32.mrb[0].mxu0
        %v4339 = vadd.f32 0.0, %v4338
        %v4340 = vpop.f32.mrb[0].mxu0
        %v4341 = vadd.f32 0.0, %v4340
        %4342 = vmatprep.mubr.f32.mxu0 0.0
        %4343 = vmatmul.mubr.f32.gmra.mrb[0].mxu0 %v4257
        %v4344 = vpop.f32.mrb[0].mxu0
        %v4345 = vadd.f32 0.0, %v4344
        %v4346 = vpop.f32.mrb[0].mxu0
        %v4347 = vadd.f32 0.0, %v4346
        %4348 = vmatprep.mubr.f32.mxu0 0.0
        %4349 = vmatmul.mubr.f32.gmra.mrb[0].mxu0 %v4258
        %v4350 = vpop.f32.mrb[0].mxu0
        %v4351 = vadd.f32 0.0, %v4350
        %v4352 = vpop.f32.mrb[0].mxu0
        %v4353 = vadd.f32 0.0, %v4352
        %4354 = vmatprep.mubr.f32.mxu0 0.0
        %4355 = vmatmul.mubr.f32.gmra.mrb[0].mxu0 %v4259
        %v4356 = vpop.f32.mrb[0].mxu0
        %v4357 = vadd.f32 0.0, %v4356
        %v4358 = vpop.f32.mrb[0].mxu0
        %v4359 = vadd.f32 0.0, %v4358
        %4360 = vmatprep.mubr.f32.mxu0 0.0
        %4361 = vmatmul.mubr.f32.gmra.mrb[0].mxu0 %v4260
        %v4362 = vpop.f32.mrb[0].mxu0
        %v4363 = vadd.f32 0.0, %v4362
        %v4364 = vpop.f32.mrb[0].mxu0
        %v4365 = vadd.f32 0.0, %v4364
        %4366 = vmatprep.mubr.f32.mxu0 0.0
        %4367 = vmatmul.mubr.f32.gmra.mrb[0].mxu0 %v4261
        %v4368 = vpop.f32.mrb[0].mxu0
        %v4369 = vadd.f32 0.0, %v4368
        %v4370 = vpop.f32.mrb[0].mxu0
        %v4371 = vadd.f32 0.0, %v4370
        %4372 = vmatprep.mubr.f32.mxu0 0.0
        %4373 = vmatmul.mubr.f32.gmra.mrb[0].mxu0 %v4262
        %v4374 = vpop.f32.mrb[0].mxu0
        %v4375 = vadd.f32 0.0, %v4374
        %v4376 = vpop.f32.mrb[0].mxu0
        %v4377 = vadd.f32 0.0, %v4376
        %4378 = vmatprep.mubr.f32.mxu0 0.0
        %4379 = vmatmul.mubr.f32.gmra.mrb[0].mxu0 %v4263
        %v4380 = vpop.f32.mrb[0].mxu0
        %v4381 = vadd.f32 0.0, %v4380
        %v4382 = vpop.f32.mrb[0].mxu0
        %v4383 = vadd.f32 0.0, %v4382
        %4384 = vmatprep.mubr.f32.mxu0 0.0
        %4385 = vmatmul.mubr.f32.gmra.mrb[0].mxu0 %v4264
        %v4386 = vpop.f32.mrb[0].mxu0
        %v4387 = vadd.f32 0.0, %v4386
        %v4388 = vpop.f32.mrb[0].mxu0
        %v4389 = vadd.f32 0.0, %v4388
        %4390 = vmatprep.mubr.f32.mxu0 0.0
        %4391 = vmatmul.mubr.f32.gmra.mrb[0].mxu0 %v4265
        %v4392 = vpop.f32.mrb[0].mxu0
        %v4393 = vadd.f32 0.0, %v4392
        %v4394 = vpop.f32.mrb[0].mxu0
        %v4395 = vadd.f32 0.0, %v4394
        %4396 = vmatprep.mubr.f32.mxu0 0.0
        %4397 = vmatmul.mubr.f32.gmra.mrb[0].mxu0 %v4266
        %v4398 = vpop.f32.mrb[0].mxu0
        %v4399 = vadd.f32 0.0, %v4398
        %v4400 = vpop.f32.mrb[0].mxu0
        %v4401 = vadd.f32 0.0, %v4400
        %4402 = vmatprep.mubr.f32.mxu0 0.0
        %4403 = vmatmul.mubr.f32.gmra.mrb[0].mxu0 %v4267
        %v4404 = vpop.f32.mrb[0].mxu0
        %v4405 = vadd.f32 0.0, %v4404
        %v4406 = vpop.f32.mrb[0].mxu0
        %v4407 = vadd.f32 0.0, %v4406
        %4408 = vmatprep.mubr.f32.mxu0 0.0
        %4409 = vmatmul.mubr.f32.gmra.mrb[0].mxu0 %v4268
        %v4410 = vpop.f32.mrb[0].mxu0
        %v4411 = vadd.f32 0.0, %v4410
        %v4412 = vpop.f32.mrb[0].mxu0
        %v4413 = vadd.f32 0.0, %v4412
        %4414 = vmatprep.mubr.f32.mxu0 0.0
        %4415 = vmatmul.mubr.f32.gmra.mrb[0].mxu0 %v4269
        %v4416 = vpop.f32.mrb[0].mxu0
        %v4417 = vadd.f32 0.0, %v4416
        %v4418 = vpop.f32.mrb[0].mxu0
        %v4419 = vadd.f32 0.0, %v4418
        %4420 = vmatprep.mubr.f32.mxu0 0.0
        %4421 = vmatmul.mubr.f32.gmra.mrb[0].mxu0 %v4270
        %v4422 = vpop.f32.mrb[0].mxu0
        %v4423 = vadd.f32 0.0, %v4422
        %v4424 = vpop.f32.mrb[0].mxu0
        %v4425 = vadd.f32 0.0, %v4424
        %4426 = vmatprep.mubr.f32.mxu0 0.0
        %4427 = vmatmul.mubr.f32.gmra.mrb[0].mxu0 %v4271
        %v4428 = vpop.f32.mrb[0].mxu0
        %v4429 = vadd.f32 0.0, %v4428
        %v4430 = vpop.f32.mrb[0].mxu0
        %v4431 = vadd.f32 0.0, %v4430
        %4432 = vdwg.mxu0
        %v4433 = vadd.f32 %v1115, %v4339
        %v4434 = vadd.f32 %v1121, %v4345
        %v4435 = vadd.f32 %v1127, %v4351
        %v4436 = vadd.f32 %v1133, %v4357
        %v4437 = vadd.f32 %v1139, %v4363
        %v4438 = vadd.f32 %v1145, %v4369
        %v4439 = vadd.f32 %v1151, %v4375
        %v4440 = vadd.f32 %v1157, %v4381
        %v4441 = vadd.f32 %v1163, %v4387
        %v4442 = vadd.f32 %v1169, %v4393
        %v4443 = vadd.f32 %v1175, %v4399
        %v4444 = vadd.f32 %v1181, %v4405
        %v4445 = vadd.f32 %v1187, %v4411
        %v4446 = vadd.f32 %v1193, %v4417
        %v4447 = vadd.f32 %v1199, %v4423
        %v4448 = vadd.f32 %v1205, %v4429
        %v4449 = vxor.u32 %v4433, 2147483648
        %v4450 = vxor.u32 %v4434, 2147483648
        %v4451 = vxor.u32 %v4435, 2147483648
        %v4452 = vxor.u32 %v4436, 2147483648
        %v4453 = vxor.u32 %v4437, 2147483648
        %v4454 = vxor.u32 %v4438, 2147483648
        %v4455 = vxor.u32 %v4439, 2147483648
        %v4456 = vxor.u32 %v4440, 2147483648
        %v4457 = vxor.u32 %v4441, 2147483648
        %v4458 = vxor.u32 %v4442, 2147483648
        %v4459 = vxor.u32 %v4443, 2147483648
        %v4460 = vxor.u32 %v4444, 2147483648
        %v4461 = vxor.u32 %v4445, 2147483648
        %v4462 = vxor.u32 %v4446, 2147483648
        %v4463 = vxor.u32 %v4447, 2147483648
        %v4464 = vxor.u32 %v4448, 2147483648
        %v4465 = vmul.f32 %v4449, 1.442695
        %v4466 = vpow.pop %v4465
        %v4467 = vmul.f32 %v4450, 1.442695
        %v4468 = vpow.pop %v4467
        %v4469 = vmul.f32 %v4451, 1.442695
        %v4470 = vpow.pop %v4469
        %v4471 = vmul.f32 %v4452, 1.442695
        %v4472 = vpow.pop %v4471
        %v4473 = vmul.f32 %v4453, 1.442695
        %v4474 = vpow.pop %v4473
        %v4475 = vmul.f32 %v4454, 1.442695
        %v4476 = vpow.pop %v4475
        %v4477 = vmul.f32 %v4455, 1.442695
        %v4478 = vpow.pop %v4477
        %v4479 = vmul.f32 %v4456, 1.442695
        %v4480 = vpow.pop %v4479
        %v4481 = vmul.f32 %v4457, 1.442695
        %v4482 = vpow.pop %v4481
        %v4483 = vmul.f32 %v4458, 1.442695
        %v4484 = vpow.pop %v4483
        %v4485 = vmul.f32 %v4459, 1.442695
        %v4486 = vpow.pop %v4485
        %v4487 = vmul.f32 %v4460, 1.442695
        %v4488 = vpow.pop %v4487
        %v4489 = vmul.f32 %v4461, 1.442695
        %v4490 = vpow.pop %v4489
        %v4491 = vmul.f32 %v4462, 1.442695
        %v4492 = vpow.pop %v4491
        %v4493 = vmul.f32 %v4463, 1.442695
        %v4494 = vpow.pop %v4493
        %v4495 = vmul.f32 %v4464, 1.442695
        %v4496 = vpow.pop %v4495
        %v4497 = vadd.f32 %v4466, 1.0
        %v4498 = vadd.f32 %v4468, 1.0
        %v4499 = vadd.f32 %v4470, 1.0
        %v4500 = vadd.f32 %v4472, 1.0
        %v4501 = vadd.f32 %v4474, 1.0
        %v4502 = vadd.f32 %v4476, 1.0
        %v4503 = vadd.f32 %v4478, 1.0
        %v4504 = vadd.f32 %v4480, 1.0
        %v4505 = vadd.f32 %v4482, 1.0
        %v4506 = vadd.f32 %v4484, 1.0
        %v4507 = vadd.f32 %v4486, 1.0
        %v4508 = vadd.f32 %v4488, 1.0
        %v4509 = vadd.f32 %v4490, 1.0
        %v4510 = vadd.f32 %v4492, 1.0
        %v4511 = vadd.f32 %v4494, 1.0
        %v4512 = vadd.f32 %v4496, 1.0
        %v4513 = vrcp.pop %v4497
        %v4514 = vmul.f32 1.0, %v4513
        %v4515 = vrcp.pop %v4498
        %v4516 = vmul.f32 1.0, %v4515
        %v4517 = vrcp.pop %v4499
        %v4518 = vmul.f32 1.0, %v4517
        %v4519 = vrcp.pop %v4500
        %v4520 = vmul.f32 1.0, %v4519
        %v4521 = vrcp.pop %v4501
        %v4522 = vmul.f32 1.0, %v4521
        %v4523 = vrcp.pop %v4502
        %v4524 = vmul.f32 1.0, %v4523
        %v4525 = vrcp.pop %v4503
        %v4526 = vmul.f32 1.0, %v4525
        %v4527 = vrcp.pop %v4504
        %v4528 = vmul.f32 1.0, %v4527
        %v4529 = vrcp.pop %v4505
        %v4530 = vmul.f32 1.0, %v4529
        %v4531 = vrcp.pop %v4506
        %v4532 = vmul.f32 1.0, %v4531
        %v4533 = vrcp.pop %v4507
        %v4534 = vmul.f32 1.0, %v4533
        %v4535 = vrcp.pop %v4508
        %v4536 = vmul.f32 1.0, %v4535
        %v4537 = vrcp.pop %v4509
        %v4538 = vmul.f32 1.0, %v4537
        %v4539 = vrcp.pop %v4510
        %v4540 = vmul.f32 1.0, %v4539
        %v4541 = vrcp.pop %v4511
        %v4542 = vmul.f32 1.0, %v4541
        %v4543 = vrcp.pop %v4512
        %v4544 = vmul.f32 1.0, %v4543
        %v4545 = vadd.f32 %v1117, %v4341
        %v4546 = vadd.f32 %v1123, %v4347
        %v4547 = vadd.f32 %v1129, %v4353
        %v4548 = vadd.f32 %v1135, %v4359
        %v4549 = vadd.f32 %v1141, %v4365
        %v4550 = vadd.f32 %v1147, %v4371
        %v4551 = vadd.f32 %v1153, %v4377
        %v4552 = vadd.f32 %v1159, %v4383
        %v4553 = vadd.f32 %v1165, %v4389
        %v4554 = vadd.f32 %v1171, %v4395
        %v4555 = vadd.f32 %v1177, %v4401
        %v4556 = vadd.f32 %v1183, %v4407
        %v4557 = vadd.f32 %v1189, %v4413
        %v4558 = vadd.f32 %v1195, %v4419
        %v4559 = vadd.f32 %v1201, %v4425
        %v4560 = vadd.f32 %v1207, %v4431
        %v4561 = vxor.u32 %v4545, 2147483648
        %v4562 = vxor.u32 %v4546, 2147483648
        %v4563 = vxor.u32 %v4547, 2147483648
        %v4564 = vxor.u32 %v4548, 2147483648
        %v4565 = vxor.u32 %v4549, 2147483648
        %v4566 = vxor.u32 %v4550, 2147483648
        %v4567 = vxor.u32 %v4551, 2147483648
        %v4568 = vxor.u32 %v4552, 2147483648
        %v4569 = vxor.u32 %v4553, 2147483648
        %v4570 = vxor.u32 %v4554, 2147483648
        %v4571 = vxor.u32 %v4555, 2147483648
        %v4572 = vxor.u32 %v4556, 2147483648
        %v4573 = vxor.u32 %v4557, 2147483648
        %v4574 = vxor.u32 %v4558, 2147483648
        %v4575 = vxor.u32 %v4559, 2147483648
        %v4576 = vxor.u32 %v4560, 2147483648
        %v4577 = vmul.f32 %v4561, 1.442695
        %v4578 = vpow.pop %v4577
        %v4579 = vmul.f32 %v4562, 1.442695
        %v4580 = vpow.pop %v4579
        %v4581 = vmul.f32 %v4563, 1.442695
        %v4582 = vpow.pop %v4581
        %v4583 = vmul.f32 %v4564, 1.442695
        %v4584 = vpow.pop %v4583
        %v4585 = vmul.f32 %v4565, 1.442695
        %v4586 = vpow.pop %v4585
        %v4587 = vmul.f32 %v4566, 1.442695
        %v4588 = vpow.pop %v4587
        %v4589 = vmul.f32 %v4567, 1.442695
        %v4590 = vpow.pop %v4589
        %v4591 = vmul.f32 %v4568, 1.442695
        %v4592 = vpow.pop %v4591
        %v4593 = vmul.f32 %v4569, 1.442695
        %v4594 = vpow.pop %v4593
        %v4595 = vmul.f32 %v4570, 1.442695
        %v4596 = vpow.pop %v4595
        %v4597 = vmul.f32 %v4571, 1.442695
        %v4598 = vpow.pop %v4597
        %v4599 = vmul.f32 %v4572, 1.442695
        %v4600 = vpow.pop %v4599
        %v4601 = vmul.f32 %v4573, 1.442695
        %v4602 = vpow.pop %v4601
        %v4603 = vmul.f32 %v4574, 1.442695
        %v4604 = vpow.pop %v4603
        %v4605 = vmul.f32 %v4575, 1.442695
        %v4606 = vpow.pop %v4605
        %v4607 = vmul.f32 %v4576, 1.442695
        %v4608 = vpow.pop %v4607
        %v4609 = vadd.f32 %v4578, 1.0
        %v4610 = vadd.f32 %v4580, 1.0
        %v4611 = vadd.f32 %v4582, 1.0
        %v4612 = vadd.f32 %v4584, 1.0
        %v4613 = vadd.f32 %v4586, 1.0
        %v4614 = vadd.f32 %v4588, 1.0
        %v4615 = vadd.f32 %v4590, 1.0
        %v4616 = vadd.f32 %v4592, 1.0
        %v4617 = vadd.f32 %v4594, 1.0
        %v4618 = vadd.f32 %v4596, 1.0
        %v4619 = vadd.f32 %v4598, 1.0
        %v4620 = vadd.f32 %v4600, 1.0
        %v4621 = vadd.f32 %v4602, 1.0
        %v4622 = vadd.f32 %v4604, 1.0
        %v4623 = vadd.f32 %v4606, 1.0
        %v4624 = vadd.f32 %v4608, 1.0
        %v4625 = vrcp.pop %v4609
        %v4626 = vmul.f32 1.0, %v4625
        %v4627 = vrcp.pop %v4610
        %v4628 = vmul.f32 1.0, %v4627
        %v4629 = vrcp.pop %v4611
        %v4630 = vmul.f32 1.0, %v4629
        %v4631 = vrcp.pop %v4612
        %v4632 = vmul.f32 1.0, %v4631
        %v4633 = vrcp.pop %v4613
        %v4634 = vmul.f32 1.0, %v4633
        %v4635 = vrcp.pop %v4614
        %v4636 = vmul.f32 1.0, %v4635
        %v4637 = vrcp.pop %v4615
        %v4638 = vmul.f32 1.0, %v4637
        %v4639 = vrcp.pop %v4616
        %v4640 = vmul.f32 1.0, %v4639
        %v4641 = vrcp.pop %v4617
        %v4642 = vmul.f32 1.0, %v4641
        %v4643 = vrcp.pop %v4618
        %v4644 = vmul.f32 1.0, %v4643
        %v4645 = vrcp.pop %v4619
        %v4646 = vmul.f32 1.0, %v4645
        %v4647 = vrcp.pop %v4620
        %v4648 = vmul.f32 1.0, %v4647
        %v4649 = vrcp.pop %v4621
        %v4650 = vmul.f32 1.0, %v4649
        %v4651 = vrcp.pop %v4622
        %v4652 = vmul.f32 1.0, %v4651
        %v4653 = vrcp.pop %v4623
        %v4654 = vmul.f32 1.0, %v4653
        %v4655 = vrcp.pop %v4624
        %v4656 = vmul.f32 1.0, %v4655
        %v4657 = vmul.f32 %v4626, %v4256
        %v4658 = vmul.f32 %v4628, %v4257
        %v4659 = vmul.f32 %v4630, %v4258
        %v4660 = vmul.f32 %v4632, %v4259
        %v4661 = vmul.f32 %v4634, %v4260
        %v4662 = vmul.f32 %v4636, %v4261
        %v4663 = vmul.f32 %v4638, %v4262
        %v4664 = vmul.f32 %v4640, %v4263
        %v4665 = vmul.f32 %v4642, %v4264
        %v4666 = vmul.f32 %v4644, %v4265
        %v4667 = vmul.f32 %v4646, %v4266
        %v4668 = vmul.f32 %v4648, %v4267
        %v4669 = vmul.f32 %v4650, %v4268
        %v4670 = vmul.f32 %v4652, %v4269
        %v4671 = vmul.f32 %v4654, %v4270
        %v4672 = vmul.f32 %v4656, %v4271
        %4673 = vmatprep.subr.mxu0 0.0
        %4674 = vmatpush1.msra.mxu0 %v2731
        %4675 = vmatprep.subr.mxu0 0.0
        %4676 = vmatpush1.msra.mxu0 %v2732
        %4677 = vmatprep.subr.mxu0 0.0
        %4678 = vmatpush1.msra.mxu0 %v2733
        %4679 = vmatprep.subr.mxu0 0.0
        %4680 = vmatpush1.msra.mxu0 %v2734
        %4681 = vmatprep.subr.mxu0 0.0
        %4682 = vmatpush1.msra.mxu0 %v2735
        %4683 = vmatprep.subr.mxu0 0.0
        %4684 = vmatpush1.msra.mxu0 %v2736
        %4685 = vmatprep.subr.mxu0 0.0
        %4686 = vmatpush1.msra.mxu0 %v2737
        %4687 = vmatprep.subr.mxu0 0.0
        %4688 = vmatpush1.msra.mxu0 %v2738
        %4689 = vmatprep.subr.mxu0 0.0
        %4690 = vmatpush1.msra.mxu0 %v2739
        %4691 = vmatprep.subr.mxu0 0.0
        %4692 = vmatpush1.msra.mxu0 %v2740
        %4693 = vmatprep.subr.mxu0 0.0
        %4694 = vmatpush1.msra.mxu0 %v2741
        %4695 = vmatprep.subr.mxu0 0.0
        %4696 = vmatpush1.msra.mxu0 %v2742
        %4697 = vmatprep.subr.mxu0 0.0
        %4698 = vmatpush1.msra.mxu0 %v2743
        %4699 = vmatprep.subr.mxu0 0.0
        %4700 = vmatpush1.msra.mxu0 %v2744
        %4701 = vmatprep.subr.mxu0 0.0
        %4702 = vmatpush1.msra.mxu0 %v2745
        %4703 = vmatprep.subr.mxu0 0.0
        %4704 = vmatpush1.msra.mxu0 %v2746
        %4705 = vmatprep.subr.mxu0 0.0
        %4706 = vmatpush1.msra.mxu0 0.0
        %4707 = vmatprep.subr.mxu0 0.0
        %4708 = vmatpush1.msra.mxu0 0.0
        %4709 = vmatprep.subr.mxu0 0.0
        %4710 = vmatpush1.msra.mxu0 0.0
        %4711 = vmatprep.subr.mxu0 0.0
        %4712 = vmatpush1.msra.mxu0 0.0
        %4713 = vmatprep.subr.mxu0 0.0
        %4714 = vmatpush1.msra.mxu0 0.0
        %4715 = vmatprep.subr.mxu0 0.0
        %4716 = vmatpush1.msra.mxu0 0.0
        %4717 = vmatprep.subr.mxu0 0.0
        %4718 = vmatpush1.msra.mxu0 0.0
        %4719 = vmatprep.subr.mxu0 0.0
        %4720 = vmatpush1.msra.mxu0 0.0
        %4721 = vmatprep.subr.mxu0 0.0
        %4722 = vmatpush1.msra.mxu0 0.0
        %4723 = vmatprep.subr.mxu0 0.0
        %4724 = vmatpush1.msra.mxu0 0.0
        %4725 = vmatprep.subr.mxu0 0.0
        %4726 = vmatpush1.msra.mxu0 0.0
        %4727 = vmatprep.subr.mxu0 0.0
        %4728 = vmatpush1.msra.mxu0 0.0
        %4729 = vmatprep.subr.mxu0 0.0
        %4730 = vmatpush1.msra.mxu0 0.0
        %4731 = vmatprep.subr.mxu0 0.0
        %4732 = vmatpush1.msra.mxu0 0.0
        %4733 = vmatprep.subr.mxu0 0.0
        %4734 = vmatpush1.msra.mxu0 0.0
        %4735 = vmatprep.subr.mxu0 0.0
        %4736 = vmatpush1.msra.mxu0 0.0
        %4737 = vmatprep.mubr.f32.mxu0 0.0
        %4738 = vmatmul.mubr.f32.gmra.mrb[0].mxu0 %v4657
        %v4739 = vpop.f32.mrb[0].mxu0
        %v4740 = vadd.f32 0.0, %v4739
        %v4741 = vpop.f32.mrb[0].mxu0
        %4742 = vmatprep.mubr.f32.mxu0 0.0
        %4743 = vmatmul.mubr.f32.gmra.mrb[0].mxu0 %v4658
        %v4744 = vpop.f32.mrb[0].mxu0
        %v4745 = vadd.f32 0.0, %v4744
        %v4746 = vpop.f32.mrb[0].mxu0
        %4747 = vmatprep.mubr.f32.mxu0 0.0
        %4748 = vmatmul.mubr.f32.gmra.mrb[0].mxu0 %v4659
        %v4749 = vpop.f32.mrb[0].mxu0
        %v4750 = vadd.f32 0.0, %v4749
        %v4751 = vpop.f32.mrb[0].mxu0
        %4752 = vmatprep.mubr.f32.mxu0 0.0
        %4753 = vmatmul.mubr.f32.gmra.mrb[0].mxu0 %v4660
        %v4754 = vpop.f32.mrb[0].mxu0
        %v4755 = vadd.f32 0.0, %v4754
        %v4756 = vpop.f32.mrb[0].mxu0
        %4757 = vmatprep.mubr.f32.mxu0 0.0
        %4758 = vmatmul.mubr.f32.gmra.mrb[0].mxu0 %v4661
        %v4759 = vpop.f32.mrb[0].mxu0
        %v4760 = vadd.f32 0.0, %v4759
        %v4761 = vpop.f32.mrb[0].mxu0
        %4762 = vmatprep.mubr.f32.mxu0 0.0
        %4763 = vmatmul.mubr.f32.gmra.mrb[0].mxu0 %v4662
        %v4764 = vpop.f32.mrb[0].mxu0
        %v4765 = vadd.f32 0.0, %v4764
        %v4766 = vpop.f32.mrb[0].mxu0
        %4767 = vmatprep.mubr.f32.mxu0 0.0
        %4768 = vmatmul.mubr.f32.gmra.mrb[0].mxu0 %v4663
        %v4769 = vpop.f32.mrb[0].mxu0
        %v4770 = vadd.f32 0.0, %v4769
        %v4771 = vpop.f32.mrb[0].mxu0
        %4772 = vmatprep.mubr.f32.mxu0 0.0
        %4773 = vmatmul.mubr.f32.gmra.mrb[0].mxu0 %v4664
        %v4774 = vpop.f32.mrb[0].mxu0
        %v4775 = vadd.f32 0.0, %v4774
        %v4776 = vpop.f32.mrb[0].mxu0
        %4777 = vmatprep.mubr.f32.mxu0 0.0
        %4778 = vmatmul.mubr.f32.gmra.mrb[0].mxu0 %v4665
        %v4779 = vpop.f32.mrb[0].mxu0
        %v4780 = vadd.f32 0.0, %v4779
        %v4781 = vpop.f32.mrb[0].mxu0
        %4782 = vmatprep.mubr.f32.mxu0 0.0
        %4783 = vmatmul.mubr.f32.gmra.mrb[0].mxu0 %v4666
        %v4784 = vpop.f32.mrb[0].mxu0
        %v4785 = vadd.f32 0.0, %v4784
        %v4786 = vpop.f32.mrb[0].mxu0
        %4787 = vmatprep.mubr.f32.mxu0 0.0
        %4788 = vmatmul.mubr.f32.gmra.mrb[0].mxu0 %v4667
        %v4789 = vpop.f32.mrb[0].mxu0
        %v4790 = vadd.f32 0.0, %v4789
        %v4791 = vpop.f32.mrb[0].mxu0
        %4792 = vmatprep.mubr.f32.mxu0 0.0
        %4793 = vmatmul.mubr.f32.gmra.mrb[0].mxu0 %v4668
        %v4794 = vpop.f32.mrb[0].mxu0
        %v4795 = vadd.f32 0.0, %v4794
        %v4796 = vpop.f32.mrb[0].mxu0
        %4797 = vmatprep.mubr.f32.mxu0 0.0
        %4798 = vmatmul.mubr.f32.gmra.mrb[0].mxu0 %v4669
        %v4799 = vpop.f32.mrb[0].mxu0
        %v4800 = vadd.f32 0.0, %v4799
        %v4801 = vpop.f32.mrb[0].mxu0
        %4802 = vmatprep.mubr.f32.mxu0 0.0
        %4803 = vmatmul.mubr.f32.gmra.mrb[0].mxu0 %v4670
        %v4804 = vpop.f32.mrb[0].mxu0
        %v4805 = vadd.f32 0.0, %v4804
        %v4806 = vpop.f32.mrb[0].mxu0
        %4807 = vmatprep.mubr.f32.mxu0 0.0
        %4808 = vmatmul.mubr.f32.gmra.mrb[0].mxu0 %v4671
        %v4809 = vpop.f32.mrb[0].mxu0
        %v4810 = vadd.f32 0.0, %v4809
        %v4811 = vpop.f32.mrb[0].mxu0
        %4812 = vmatprep.mubr.f32.mxu0 0.0
        %4813 = vmatmul.mubr.f32.gmra.mrb[0].mxu0 %v4672
        %v4814 = vpop.f32.mrb[0].mxu0
        %v4815 = vadd.f32 0.0, %v4814
        %v4816 = vpop.f32.mrb[0].mxu0
        %4817 = vdwg.mxu0
        %v4818 = vadd.f32 %v1900, %v4740
        %v4819 = vadd.f32 %v1905, %v4745
        %v4820 = vadd.f32 %v1910, %v4750
        %v4821 = vadd.f32 %v1915, %v4755
        %v4822 = vadd.f32 %v1920, %v4760
        %v4823 = vadd.f32 %v1925, %v4765
        %v4824 = vadd.f32 %v1930, %v4770
        %v4825 = vadd.f32 %v1935, %v4775
        %v4826 = vadd.f32 %v1940, %v4780
        %v4827 = vadd.f32 %v1945, %v4785
        %v4828 = vadd.f32 %v1950, %v4790
        %v4829 = vadd.f32 %v1955, %v4795
        %v4830 = vadd.f32 %v1960, %v4800
        %v4831 = vadd.f32 %v1965, %v4805
        %v4832 = vadd.f32 %v1970, %v4810
        %v4833 = vadd.f32 %v1975, %v4815
        %v4834 = vtanh.pop %v4818
        %v4835 = vtanh.pop %v4819
        %v4836 = vtanh.pop %v4820
        %v4837 = vtanh.pop %v4821
        %v4838 = vtanh.pop %v4822
        %v4839 = vtanh.pop %v4823
        %v4840 = vtanh.pop %v4824
        %v4841 = vtanh.pop %v4825
        %v4842 = vtanh.pop %v4826
        %v4843 = vtanh.pop %v4827
        %v4844 = vtanh.pop %v4828
        %v4845 = vtanh.pop %v4829
        %v4846 = vtanh.pop %v4830
        %v4847 = vtanh.pop %v4831
        %v4848 = vtanh.pop %v4832
        %v4849 = vtanh.pop %v4833
        %v4850 = vsub.f32 1.0, %v4514
        %v4851 = vsub.f32 1.0, %v4516
        %v4852 = vsub.f32 1.0, %v4518
        %v4853 = vsub.f32 1.0, %v4520
        %v4854 = vsub.f32 1.0, %v4522
        %v4855 = vsub.f32 1.0, %v4524
        %v4856 = vsub.f32 1.0, %v4526
        %v4857 = vsub.f32 1.0, %v4528
        %v4858 = vsub.f32 1.0, %v4530
        %v4859 = vsub.f32 1.0, %v4532
        %v4860 = vsub.f32 1.0, %v4534
        %v4861 = vsub.f32 1.0, %v4536
        %v4862 = vsub.f32 1.0, %v4538
        %v4863 = vsub.f32 1.0, %v4540
        %v4864 = vsub.f32 1.0, %v4542
        %v4865 = vsub.f32 1.0, %v4544
        %v4866 = vmul.f32 %v4850, %v4256
        %v4867 = vmul.f32 %v4851, %v4257
        %v4868 = vmul.f32 %v4852, %v4258
        %v4869 = vmul.f32 %v4853, %v4259
        %v4870 = vmul.f32 %v4854, %v4260
        %v4871 = vmul.f32 %v4855, %v4261
        %v4872 = vmul.f32 %v4856, %v4262
        %v4873 = vmul.f32 %v4857, %v4263
        %v4874 = vmul.f32 %v4858, %v4264
        %v4875 = vmul.f32 %v4859, %v4265
        %v4876 = vmul.f32 %v4860, %v4266
        %v4877 = vmul.f32 %v4861, %v4267
        %v4878 = vmul.f32 %v4862, %v4268
        %v4879 = vmul.f32 %v4863, %v4269
        %v4880 = vmul.f32 %v4864, %v4270
        %v4881 = vmul.f32 %v4865, %v4271
        %v4882 = vmul.f32 %v4514, %v4834
        %v4883 = vmul.f32 %v4516, %v4835
        %v4884 = vmul.f32 %v4518, %v4836
        %v4885 = vmul.f32 %v4520, %v4837
        %v4886 = vmul.f32 %v4522, %v4838
        %v4887 = vmul.f32 %v4524, %v4839
        %v4888 = vmul.f32 %v4526, %v4840
        %v4889 = vmul.f32 %v4528, %v4841
        %v4890 = vmul.f32 %v4530, %v4842
        %v4891 = vmul.f32 %v4532, %v4843
        %v4892 = vmul.f32 %v4534, %v4844
        %v4893 = vmul.f32 %v4536, %v4845
        %v4894 = vmul.f32 %v4538, %v4846
        %v4895 = vmul.f32 %v4540, %v4847
        %v4896 = vmul.f32 %v4542, %v4848
        %v4897 = vmul.f32 %v4544, %v4849
        %v4898 = vadd.f32 %v4866, %v4882
        %v4899 = vadd.f32 %v4867, %v4883
        %v4900 = vadd.f32 %v4868, %v4884
        %v4901 = vadd.f32 %v4869, %v4885
        %v4902 = vadd.f32 %v4870, %v4886
        %v4903 = vadd.f32 %v4871, %v4887
        %v4904 = vadd.f32 %v4872, %v4888
        %v4905 = vadd.f32 %v4873, %v4889
        %v4906 = vadd.f32 %v4874, %v4890
        %v4907 = vadd.f32 %v4875, %v4891
        %v4908 = vadd.f32 %v4876, %v4892
        %v4909 = vadd.f32 %v4877, %v4893
        %v4910 = vadd.f32 %v4878, %v4894
        %v4911 = vadd.f32 %v4879, %v4895
        %v4912 = vadd.f32 %v4880, %v4896
        %v4913 = vadd.f32 %v4881, %v4897
        %4914 = vmatprep.subr.mxu0 %v2299
        %4915 = vmatpush1.msra.mxu0 %v2298
        %4916 = vmatprep.subr.mxu0 %v2301
        %4917 = vmatpush1.msra.mxu0 %v2300
        %4918 = vmatprep.subr.mxu0 %v2303
        %4919 = vmatpush1.msra.mxu0 %v2302
        %4920 = vmatprep.subr.mxu0 %v2305
        %4921 = vmatpush1.msra.mxu0 %v2304
        %4922 = vmatprep.subr.mxu0 %v2307
        %4923 = vmatpush1.msra.mxu0 %v2306
        %4924 = vmatprep.subr.mxu0 %v2309
        %4925 = vmatpush1.msra.mxu0 %v2308
        %4926 = vmatprep.subr.mxu0 %v2311
        %4927 = vmatpush1.msra.mxu0 %v2310
        %4928 = vmatprep.subr.mxu0 %v2313
        %4929 = vmatpush1.msra.mxu0 %v2312
        %4930 = vmatprep.subr.mxu0 %v2315
        %4931 = vmatpush1.msra.mxu0 %v2314
        %4932 = vmatprep.subr.mxu0 %v2317
        %4933 = vmatpush1.msra.mxu0 %v2316
        %4934 = vmatprep.subr.mxu0 %v2319
        %4935 = vmatpush1.msra.mxu0 %v2318
        %4936 = vmatprep.subr.mxu0 %v2321
        %4937 = vmatpush1.msra.mxu0 %v2320
        %4938 = vmatprep.subr.mxu0 %v2323
        %4939 = vmatpush1.msra.mxu0 %v2322
        %4940 = vmatprep.subr.mxu0 %v2325
        %4941 = vmatpush1.msra.mxu0 %v2324
        %4942 = vmatprep.subr.mxu0 %v2327
        %4943 = vmatpush1.msra.mxu0 %v2326
        %4944 = vmatprep.subr.mxu0 %v2329
        %4945 = vmatpush1.msra.mxu0 %v2328
        %4946 = vmatprep.subr.mxu0 0.0
        %4947 = vmatpush1.msra.mxu0 0.0
        %4948 = vmatprep.subr.mxu0 0.0
        %4949 = vmatpush1.msra.mxu0 0.0
        %4950 = vmatprep.subr.mxu0 0.0
        %4951 = vmatpush1.msra.mxu0 0.0
        %4952 = vmatprep.subr.mxu0 0.0
        %4953 = vmatpush1.msra.mxu0 0.0
        %4954 = vmatprep.subr.mxu0 0.0
        %4955 = vmatpush1.msra.mxu0 0.0
        %4956 = vmatprep.subr.mxu0 0.0
        %4957 = vmatpush1.msra.mxu0 0.0
        %4958 = vmatprep.subr.mxu0 0.0
        %4959 = vmatpush1.msra.mxu0 0.0
        %4960 = vmatprep.subr.mxu0 0.0
        %4961 = vmatpush1.msra.mxu0 0.0
        %4962 = vmatprep.subr.mxu0 0.0
        %4963 = vmatpush1.msra.mxu0 0.0
        %4964 = vmatprep.subr.mxu0 0.0
        %4965 = vmatpush1.msra.mxu0 0.0
        %4966 = vmatprep.subr.mxu0 0.0
        %4967 = vmatpush1.msra.mxu0 0.0
        %4968 = vmatprep.subr.mxu0 0.0
        %4969 = vmatpush1.msra.mxu0 0.0
        %4970 = vmatprep.subr.mxu0 0.0
        %4971 = vmatpush1.msra.mxu0 0.0
        %4972 = vmatprep.subr.mxu0 0.0
        %4973 = vmatpush1.msra.mxu0 0.0
        %4974 = vmatprep.subr.mxu0 0.0
        %4975 = vmatpush1.msra.mxu0 0.0
        %4976 = vmatprep.subr.mxu0 0.0
        %4977 = vmatpush1.msra.mxu0 0.0
        %4978 = vmatprep.mubr.f32.mxu0 0.0
        %4979 = vmatmul.mubr.f32.gmra.mrb[0].mxu0 %v4898
        %v4980 = vpop.f32.mrb[0].mxu0
        %v4981 = vadd.f32 0.0, %v4980
        %v4982 = vpop.f32.mrb[0].mxu0
        %v4983 = vadd.f32 0.0, %v4982
        %4984 = vmatprep.mubr.f32.mxu0 0.0
        %4985 = vmatmul.mubr.f32.gmra.mrb[0].mxu0 %v4899
        %v4986 = vpop.f32.mrb[0].mxu0
        %v4987 = vadd.f32 0.0, %v4986
        %v4988 = vpop.f32.mrb[0].mxu0
        %v4989 = vadd.f32 0.0, %v4988
        %4990 = vmatprep.mubr.f32.mxu0 0.0
        %4991 = vmatmul.mubr.f32.gmra.mrb[0].mxu0 %v4900
        %v4992 = vpop.f32.mrb[0].mxu0
        %v4993 = vadd.f32 0.0, %v4992
        %v4994 = vpop.f32.mrb[0].mxu0
        %v4995 = vadd.f32 0.0, %v4994
        %4996 = vmatprep.mubr.f32.mxu0 0.0
        %4997 = vmatmul.mubr.f32.gmra.mrb[0].mxu0 %v4901
        %v4998 = vpop.f32.mrb[0].mxu0
        %v4999 = vadd.f32 0.0, %v4998
        %v5000 = vpop.f32.mrb[0].mxu0
        %v5001 = vadd.f32 0.0, %v5000
        %5002 = vmatprep.mubr.f32.mxu0 0.0
        %5003 = vmatmul.mubr.f32.gmra.mrb[0].mxu0 %v4902
        %v5004 = vpop.f32.mrb[0].mxu0
        %v5005 = vadd.f32 0.0, %v5004
        %v5006 = vpop.f32.mrb[0].mxu0
        %v5007 = vadd.f32 0.0, %v5006
        %5008 = vmatprep.mubr.f32.mxu0 0.0
        %5009 = vmatmul.mubr.f32.gmra.mrb[0].mxu0 %v4903
        %v5010 = vpop.f32.mrb[0].mxu0
        %v5011 = vadd.f32 0.0, %v5010
        %v5012 = vpop.f32.mrb[0].mxu0
        %v5013 = vadd.f32 0.0, %v5012
        %5014 = vmatprep.mubr.f32.mxu0 0.0
        %5015 = vmatmul.mubr.f32.gmra.mrb[0].mxu0 %v4904
        %v5016 = vpop.f32.mrb[0].mxu0
        %v5017 = vadd.f32 0.0, %v5016
        %v5018 = vpop.f32.mrb[0].mxu0
        %v5019 = vadd.f32 0.0, %v5018
        %5020 = vmatprep.mubr.f32.mxu0 0.0
        %5021 = vmatmul.mubr.f32.gmra.mrb[0].mxu0 %v4905
        %v5022 = vpop.f32.mrb[0].mxu0
        %v5023 = vadd.f32 0.0, %v5022
        %v5024 = vpop.f32.mrb[0].mxu0
        %v5025 = vadd.f32 0.0, %v5024
        %5026 = vmatprep.mubr.f32.mxu0 0.0
        %5027 = vmatmul.mubr.f32.gmra.mrb[0].mxu0 %v4906
        %v5028 = vpop.f32.mrb[0].mxu0
        %v5029 = vadd.f32 0.0, %v5028
        %v5030 = vpop.f32.mrb[0].mxu0
        %v5031 = vadd.f32 0.0, %v5030
        %5032 = vmatprep.mubr.f32.mxu0 0.0
        %5033 = vmatmul.mubr.f32.gmra.mrb[0].mxu0 %v4907
        %v5034 = vpop.f32.mrb[0].mxu0
        %v5035 = vadd.f32 0.0, %v5034
        %v5036 = vpop.f32.mrb[0].mxu0
        %v5037 = vadd.f32 0.0, %v5036
        %5038 = vmatprep.mubr.f32.mxu0 0.0
        %5039 = vmatmul.mubr.f32.gmra.mrb[0].mxu0 %v4908
        %v5040 = vpop.f32.mrb[0].mxu0
        %v5041 = vadd.f32 0.0, %v5040
        %v5042 = vpop.f32.mrb[0].mxu0
        %v5043 = vadd.f32 0.0, %v5042
        %5044 = vmatprep.mubr.f32.mxu0 0.0
        %5045 = vmatmul.mubr.f32.gmra.mrb[0].mxu0 %v4909
        %v5046 = vpop.f32.mrb[0].mxu0
        %v5047 = vadd.f32 0.0, %v5046
        %v5048 = vpop.f32.mrb[0].mxu0
        %v5049 = vadd.f32 0.0, %v5048
        %5050 = vmatprep.mubr.f32.mxu0 0.0
        %5051 = vmatmul.mubr.f32.gmra.mrb[0].mxu0 %v4910
        %v5052 = vpop.f32.mrb[0].mxu0
        %v5053 = vadd.f32 0.0, %v5052
        %v5054 = vpop.f32.mrb[0].mxu0
        %v5055 = vadd.f32 0.0, %v5054
        %5056 = vmatprep.mubr.f32.mxu0 0.0
        %5057 = vmatmul.mubr.f32.gmra.mrb[0].mxu0 %v4911
        %v5058 = vpop.f32.mrb[0].mxu0
        %v5059 = vadd.f32 0.0, %v5058
        %v5060 = vpop.f32.mrb[0].mxu0
        %v5061 = vadd.f32 0.0, %v5060
        %5062 = vmatprep.mubr.f32.mxu0 0.0
        %5063 = vmatmul.mubr.f32.gmra.mrb[0].mxu0 %v4912
        %v5064 = vpop.f32.mrb[0].mxu0
        %v5065 = vadd.f32 0.0, %v5064
        %v5066 = vpop.f32.mrb[0].mxu0
        %v5067 = vadd.f32 0.0, %v5066
        %5068 = vmatprep.mubr.f32.mxu0 0.0
        %5069 = vmatmul.mubr.f32.gmra.mrb[0].mxu0 %v4913
        %v5070 = vpop.f32.mrb[0].mxu0
        %v5071 = vadd.f32 0.0, %v5070
        %v5072 = vpop.f32.mrb[0].mxu0
        %v5073 = vadd.f32 0.0, %v5072
        %5074 = vdwg.mxu0
        %v5075 = vadd.f32 %v1211, %v4981
        %v5076 = vadd.f32 %v1217, %v4987
        %v5077 = vadd.f32 %v1223, %v4993
        %v5078 = vadd.f32 %v1229, %v4999
        %v5079 = vadd.f32 %v1235, %v5005
        %v5080 = vadd.f32 %v1241, %v5011
        %v5081 = vadd.f32 %v1247, %v5017
        %v5082 = vadd.f32 %v1253, %v5023
        %v5083 = vadd.f32 %v1259, %v5029
        %v5084 = vadd.f32 %v1265, %v5035
        %v5085 = vadd.f32 %v1271, %v5041
        %v5086 = vadd.f32 %v1277, %v5047
        %v5087 = vadd.f32 %v1283, %v5053
        %v5088 = vadd.f32 %v1289, %v5059
        %v5089 = vadd.f32 %v1295, %v5065
        %v5090 = vadd.f32 %v1301, %v5071
        %v5091 = vxor.u32 %v5075, 2147483648
        %v5092 = vxor.u32 %v5076, 2147483648
        %v5093 = vxor.u32 %v5077, 2147483648
        %v5094 = vxor.u32 %v5078, 2147483648
        %v5095 = vxor.u32 %v5079, 2147483648
        %v5096 = vxor.u32 %v5080, 2147483648
        %v5097 = vxor.u32 %v5081, 2147483648
        %v5098 = vxor.u32 %v5082, 2147483648
        %v5099 = vxor.u32 %v5083, 2147483648
        %v5100 = vxor.u32 %v5084, 2147483648
        %v5101 = vxor.u32 %v5085, 2147483648
        %v5102 = vxor.u32 %v5086, 2147483648
        %v5103 = vxor.u32 %v5087, 2147483648
        %v5104 = vxor.u32 %v5088, 2147483648
        %v5105 = vxor.u32 %v5089, 2147483648
        %v5106 = vxor.u32 %v5090, 2147483648
        %v5107 = vmul.f32 %v5091, 1.442695
        %v5108 = vpow.pop %v5107
        %v5109 = vmul.f32 %v5092, 1.442695
        %v5110 = vpow.pop %v5109
        %v5111 = vmul.f32 %v5093, 1.442695
        %v5112 = vpow.pop %v5111
        %v5113 = vmul.f32 %v5094, 1.442695
        %v5114 = vpow.pop %v5113
        %v5115 = vmul.f32 %v5095, 1.442695
        %v5116 = vpow.pop %v5115
        %v5117 = vmul.f32 %v5096, 1.442695
        %v5118 = vpow.pop %v5117
        %v5119 = vmul.f32 %v5097, 1.442695
        %v5120 = vpow.pop %v5119
        %v5121 = vmul.f32 %v5098, 1.442695
        %v5122 = vpow.pop %v5121
        %v5123 = vmul.f32 %v5099, 1.442695
        %v5124 = vpow.pop %v5123
        %v5125 = vmul.f32 %v5100, 1.442695
        %v5126 = vpow.pop %v5125
        %v5127 = vmul.f32 %v5101, 1.442695
        %v5128 = vpow.pop %v5127
        %v5129 = vmul.f32 %v5102, 1.442695
        %v5130 = vpow.pop %v5129
        %v5131 = vmul.f32 %v5103, 1.442695
        %v5132 = vpow.pop %v5131
        %v5133 = vmul.f32 %v5104, 1.442695
        %v5134 = vpow.pop %v5133
        %v5135 = vmul.f32 %v5105, 1.442695
        %v5136 = vpow.pop %v5135
        %v5137 = vmul.f32 %v5106, 1.442695
        %v5138 = vpow.pop %v5137
        %v5139 = vadd.f32 %v5108, 1.0
        %v5140 = vadd.f32 %v5110, 1.0
        %v5141 = vadd.f32 %v5112, 1.0
        %v5142 = vadd.f32 %v5114, 1.0
        %v5143 = vadd.f32 %v5116, 1.0
        %v5144 = vadd.f32 %v5118, 1.0
        %v5145 = vadd.f32 %v5120, 1.0
        %v5146 = vadd.f32 %v5122, 1.0
        %v5147 = vadd.f32 %v5124, 1.0
        %v5148 = vadd.f32 %v5126, 1.0
        %v5149 = vadd.f32 %v5128, 1.0
        %v5150 = vadd.f32 %v5130, 1.0
        %v5151 = vadd.f32 %v5132, 1.0
        %v5152 = vadd.f32 %v5134, 1.0
        %v5153 = vadd.f32 %v5136, 1.0
        %v5154 = vadd.f32 %v5138, 1.0
        %v5155 = vrcp.pop %v5139
        %v5156 = vmul.f32 1.0, %v5155
        %v5157 = vrcp.pop %v5140
        %v5158 = vmul.f32 1.0, %v5157
        %v5159 = vrcp.pop %v5141
        %v5160 = vmul.f32 1.0, %v5159
        %v5161 = vrcp.pop %v5142
        %v5162 = vmul.f32 1.0, %v5161
        %v5163 = vrcp.pop %v5143
        %v5164 = vmul.f32 1.0, %v5163
        %v5165 = vrcp.pop %v5144
        %v5166 = vmul.f32 1.0, %v5165
        %v5167 = vrcp.pop %v5145
        %v5168 = vmul.f32 1.0, %v5167
        %v5169 = vrcp.pop %v5146
        %v5170 = vmul.f32 1.0, %v5169
        %v5171 = vrcp.pop %v5147
        %v5172 = vmul.f32 1.0, %v5171
        %v5173 = vrcp.pop %v5148
        %v5174 = vmul.f32 1.0, %v5173
        %v5175 = vrcp.pop %v5149
        %v5176 = vmul.f32 1.0, %v5175
        %v5177 = vrcp.pop %v5150
        %v5178 = vmul.f32 1.0, %v5177
        %v5179 = vrcp.pop %v5151
        %v5180 = vmul.f32 1.0, %v5179
        %v5181 = vrcp.pop %v5152
        %v5182 = vmul.f32 1.0, %v5181
        %v5183 = vrcp.pop %v5153
        %v5184 = vmul.f32 1.0, %v5183
        %v5185 = vrcp.pop %v5154
        %v5186 = vmul.f32 1.0, %v5185
        %v5187 = vadd.f32 %v1213, %v4983
        %v5188 = vadd.f32 %v1219, %v4989
        %v5189 = vadd.f32 %v1225, %v4995
        %v5190 = vadd.f32 %v1231, %v5001
        %v5191 = vadd.f32 %v1237, %v5007
        %v5192 = vadd.f32 %v1243, %v5013
        %v5193 = vadd.f32 %v1249, %v5019
        %v5194 = vadd.f32 %v1255, %v5025
        %v5195 = vadd.f32 %v1261, %v5031
        %v5196 = vadd.f32 %v1267, %v5037
        %v5197 = vadd.f32 %v1273, %v5043
        %v5198 = vadd.f32 %v1279, %v5049
        %v5199 = vadd.f32 %v1285, %v5055
        %v5200 = vadd.f32 %v1291, %v5061
        %v5201 = vadd.f32 %v1297, %v5067
        %v5202 = vadd.f32 %v1303, %v5073
        %v5203 = vxor.u32 %v5187, 2147483648
        %v5204 = vxor.u32 %v5188, 2147483648
        %v5205 = vxor.u32 %v5189, 2147483648
        %v5206 = vxor.u32 %v5190, 2147483648
        %v5207 = vxor.u32 %v5191, 2147483648
        %v5208 = vxor.u32 %v5192, 2147483648
        %v5209 = vxor.u32 %v5193, 2147483648
        %v5210 = vxor.u32 %v5194, 2147483648
        %v5211 = vxor.u32 %v5195, 2147483648
        %v5212 = vxor.u32 %v5196, 2147483648
        %v5213 = vxor.u32 %v5197, 2147483648
        %v5214 = vxor.u32 %v5198, 2147483648
        %v5215 = vxor.u32 %v5199, 2147483648
        %v5216 = vxor.u32 %v5200, 2147483648
        %v5217 = vxor.u32 %v5201, 2147483648
        %v5218 = vxor.u32 %v5202, 2147483648
        %v5219 = vmul.f32 %v5203, 1.442695
        %v5220 = vpow.pop %v5219
        %v5221 = vmul.f32 %v5204, 1.442695
        %v5222 = vpow.pop %v5221
        %v5223 = vmul.f32 %v5205, 1.442695
        %v5224 = vpow.pop %v5223
        %v5225 = vmul.f32 %v5206, 1.442695
        %v5226 = vpow.pop %v5225
        %v5227 = vmul.f32 %v5207, 1.442695
        %v5228 = vpow.pop %v5227
        %v5229 = vmul.f32 %v5208, 1.442695
        %v5230 = vpow.pop %v5229
        %v5231 = vmul.f32 %v5209, 1.442695
        %v5232 = vpow.pop %v5231
        %v5233 = vmul.f32 %v5210, 1.442695
        %v5234 = vpow.pop %v5233
        %v5235 = vmul.f32 %v5211, 1.442695
        %v5236 = vpow.pop %v5235
        %v5237 = vmul.f32 %v5212, 1.442695
        %v5238 = vpow.pop %v5237
        %v5239 = vmul.f32 %v5213, 1.442695
        %v5240 = vpow.pop %v5239
        %v5241 = vmul.f32 %v5214, 1.442695
        %v5242 = vpow.pop %v5241
        %v5243 = vmul.f32 %v5215, 1.442695
        %v5244 = vpow.pop %v5243
        %v5245 = vmul.f32 %v5216, 1.442695
        %v5246 = vpow.pop %v5245
        %v5247 = vmul.f32 %v5217, 1.442695
        %v5248 = vpow.pop %v5247
        %v5249 = vmul.f32 %v5218, 1.442695
        %v5250 = vpow.pop %v5249
        %v5251 = vadd.f32 %v5220, 1.0
        %v5252 = vadd.f32 %v5222, 1.0
        %v5253 = vadd.f32 %v5224, 1.0
        %v5254 = vadd.f32 %v5226, 1.0
        %v5255 = vadd.f32 %v5228, 1.0
        %v5256 = vadd.f32 %v5230, 1.0
        %v5257 = vadd.f32 %v5232, 1.0
        %v5258 = vadd.f32 %v5234, 1.0
        %v5259 = vadd.f32 %v5236, 1.0
        %v5260 = vadd.f32 %v5238, 1.0
        %v5261 = vadd.f32 %v5240, 1.0
        %v5262 = vadd.f32 %v5242, 1.0
        %v5263 = vadd.f32 %v5244, 1.0
        %v5264 = vadd.f32 %v5246, 1.0
        %v5265 = vadd.f32 %v5248, 1.0
        %v5266 = vadd.f32 %v5250, 1.0
        %v5267 = vrcp.pop %v5251
        %v5268 = vmul.f32 1.0, %v5267
        %v5269 = vrcp.pop %v5252
        %v5270 = vmul.f32 1.0, %v5269
        %v5271 = vrcp.pop %v5253
        %v5272 = vmul.f32 1.0, %v5271
        %v5273 = vrcp.pop %v5254
        %v5274 = vmul.f32 1.0, %v5273
        %v5275 = vrcp.pop %v5255
        %v5276 = vmul.f32 1.0, %v5275
        %v5277 = vrcp.pop %v5256
        %v5278 = vmul.f32 1.0, %v5277
        %v5279 = vrcp.pop %v5257
        %v5280 = vmul.f32 1.0, %v5279
        %v5281 = vrcp.pop %v5258
        %v5282 = vmul.f32 1.0, %v5281
        %v5283 = vrcp.pop %v5259
        %v5284 = vmul.f32 1.0, %v5283
        %v5285 = vrcp.pop %v5260
        %v5286 = vmul.f32 1.0, %v5285
        %v5287 = vrcp.pop %v5261
        %v5288 = vmul.f32 1.0, %v5287
        %v5289 = vrcp.pop %v5262
        %v5290 = vmul.f32 1.0, %v5289
        %v5291 = vrcp.pop %v5263
        %v5292 = vmul.f32 1.0, %v5291
        %v5293 = vrcp.pop %v5264
        %v5294 = vmul.f32 1.0, %v5293
        %v5295 = vrcp.pop %v5265
        %v5296 = vmul.f32 1.0, %v5295
        %v5297 = vrcp.pop %v5266
        %v5298 = vmul.f32 1.0, %v5297
        %v5299 = vmul.f32 %v5268, %v4898
        %v5300 = vmul.f32 %v5270, %v4899
        %v5301 = vmul.f32 %v5272, %v4900
        %v5302 = vmul.f32 %v5274, %v4901
        %v5303 = vmul.f32 %v5276, %v4902
        %v5304 = vmul.f32 %v5278, %v4903
        %v5305 = vmul.f32 %v5280, %v4904
        %v5306 = vmul.f32 %v5282, %v4905
        %v5307 = vmul.f32 %v5284, %v4906
        %v5308 = vmul.f32 %v5286, %v4907
        %v5309 = vmul.f32 %v5288, %v4908
        %v5310 = vmul.f32 %v5290, %v4909
        %v5311 = vmul.f32 %v5292, %v4910
        %v5312 = vmul.f32 %v5294, %v4911
        %v5313 = vmul.f32 %v5296, %v4912
        %v5314 = vmul.f32 %v5298, %v4913
        %5315 = vmatprep.subr.mxu0 0.0
        %5316 = vmatpush1.msra.mxu0 %v2731
        %5317 = vmatprep.subr.mxu0 0.0
        %5318 = vmatpush1.msra.mxu0 %v2732
        %5319 = vmatprep.subr.mxu0 0.0
        %5320 = vmatpush1.msra.mxu0 %v2733
        %5321 = vmatprep.subr.mxu0 0.0
        %5322 = vmatpush1.msra.mxu0 %v2734
        %5323 = vmatprep.subr.mxu0 0.0
        %5324 = vmatpush1.msra.mxu0 %v2735
        %5325 = vmatprep.subr.mxu0 0.0
        %5326 = vmatpush1.msra.mxu0 %v2736
        %5327 = vmatprep.subr.mxu0 0.0
        %5328 = vmatpush1.msra.mxu0 %v2737
        %5329 = vmatprep.subr.mxu0 0.0
        %5330 = vmatpush1.msra.mxu0 %v2738
        %5331 = vmatprep.subr.mxu0 0.0
        %5332 = vmatpush1.msra.mxu0 %v2739
        %5333 = vmatprep.subr.mxu0 0.0
        %5334 = vmatpush1.msra.mxu0 %v2740
        %5335 = vmatprep.subr.mxu0 0.0
        %5336 = vmatpush1.msra.mxu0 %v2741
        %5337 = vmatprep.subr.mxu0 0.0
        %5338 = vmatpush1.msra.mxu0 %v2742
        %5339 = vmatprep.subr.mxu0 0.0
        %5340 = vmatpush1.msra.mxu0 %v2743
        %5341 = vmatprep.subr.mxu0 0.0
        %5342 = vmatpush1.msra.mxu0 %v2744
        %5343 = vmatprep.subr.mxu0 0.0
        %5344 = vmatpush1.msra.mxu0 %v2745
        %5345 = vmatprep.subr.mxu0 0.0
        %5346 = vmatpush1.msra.mxu0 %v2746
        %5347 = vmatprep.subr.mxu0 0.0
        %5348 = vmatpush1.msra.mxu0 0.0
        %5349 = vmatprep.subr.mxu0 0.0
        %5350 = vmatpush1.msra.mxu0 0.0
        %5351 = vmatprep.subr.mxu0 0.0
        %5352 = vmatpush1.msra.mxu0 0.0
        %5353 = vmatprep.subr.mxu0 0.0
        %5354 = vmatpush1.msra.mxu0 0.0
        %5355 = vmatprep.subr.mxu0 0.0
        %5356 = vmatpush1.msra.mxu0 0.0
        %5357 = vmatprep.subr.mxu0 0.0
        %5358 = vmatpush1.msra.mxu0 0.0
        %5359 = vmatprep.subr.mxu0 0.0
        %5360 = vmatpush1.msra.mxu0 0.0
        %5361 = vmatprep.subr.mxu0 0.0
        %5362 = vmatpush1.msra.mxu0 0.0
        %5363 = vmatprep.subr.mxu0 0.0
        %5364 = vmatpush1.msra.mxu0 0.0
        %5365 = vmatprep.subr.mxu0 0.0
        %5366 = vmatpush1.msra.mxu0 0.0
        %5367 = vmatprep.subr.mxu0 0.0
        %5368 = vmatpush1.msra.mxu0 0.0
        %5369 = vmatprep.subr.mxu0 0.0
        %5370 = vmatpush1.msra.mxu0 0.0
        %5371 = vmatprep.subr.mxu0 0.0
        %5372 = vmatpush1.msra.mxu0 0.0
        %5373 = vmatprep.subr.mxu0 0.0
        %5374 = vmatpush1.msra.mxu0 0.0
        %5375 = vmatprep.subr.mxu0 0.0
        %5376 = vmatpush1.msra.mxu0 0.0
        %5377 = vmatprep.subr.mxu0 0.0
        %5378 = vmatpush1.msra.mxu0 0.0
        %5379 = vmatprep.mubr.f32.mxu0 0.0
        %5380 = vmatmul.mubr.f32.gmra.mrb[0].mxu0 %v5299
        %v5381 = vpop.f32.mrb[0].mxu0
        %v5382 = vadd.f32 0.0, %v5381
        %v5383 = vpop.f32.mrb[0].mxu0
        %5384 = vmatprep.mubr.f32.mxu0 0.0
        %5385 = vmatmul.mubr.f32.gmra.mrb[0].mxu0 %v5300
        %v5386 = vpop.f32.mrb[0].mxu0
        %v5387 = vadd.f32 0.0, %v5386
        %v5388 = vpop.f32.mrb[0].mxu0
        %5389 = vmatprep.mubr.f32.mxu0 0.0
        %5390 = vmatmul.mubr.f32.gmra.mrb[0].mxu0 %v5301
        %v5391 = vpop.f32.mrb[0].mxu0
        %v5392 = vadd.f32 0.0, %v5391
        %v5393 = vpop.f32.mrb[0].mxu0
        %5394 = vmatprep.mubr.f32.mxu0 0.0
        %5395 = vmatmul.mubr.f32.gmra.mrb[0].mxu0 %v5302
        %v5396 = vpop.f32.mrb[0].mxu0
        %v5397 = vadd.f32 0.0, %v5396
        %v5398 = vpop.f32.mrb[0].mxu0
        %5399 = vmatprep.mubr.f32.mxu0 0.0
        %5400 = vmatmul.mubr.f32.gmra.mrb[0].mxu0 %v5303
        %v5401 = vpop.f32.mrb[0].mxu0
        %v5402 = vadd.f32 0.0, %v5401
        %v5403 = vpop.f32.mrb[0].mxu0
        %5404 = vmatprep.mubr.f32.mxu0 0.0
        %5405 = vmatmul.mubr.f32.gmra.mrb[0].mxu0 %v5304
        %v5406 = vpop.f32.mrb[0].mxu0
        %v5407 = vadd.f32 0.0, %v5406
        %v5408 = vpop.f32.mrb[0].mxu0
        %5409 = vmatprep.mubr.f32.mxu0 0.0
        %5410 = vmatmul.mubr.f32.gmra.mrb[0].mxu0 %v5305
        %v5411 = vpop.f32.mrb[0].mxu0
        %v5412 = vadd.f32 0.0, %v5411
        %v5413 = vpop.f32.mrb[0].mxu0
        %5414 = vmatprep.mubr.f32.mxu0 0.0
        %5415 = vmatmul.mubr.f32.gmra.mrb[0].mxu0 %v5306
        %v5416 = vpop.f32.mrb[0].mxu0
        %v5417 = vadd.f32 0.0, %v5416
        %v5418 = vpop.f32.mrb[0].mxu0
        %5419 = vmatprep.mubr.f32.mxu0 0.0
        %5420 = vmatmul.mubr.f32.gmra.mrb[0].mxu0 %v5307
        %v5421 = vpop.f32.mrb[0].mxu0
        %v5422 = vadd.f32 0.0, %v5421
        %v5423 = vpop.f32.mrb[0].mxu0
        %5424 = vmatprep.mubr.f32.mxu0 0.0
        %5425 = vmatmul.mubr.f32.gmra.mrb[0].mxu0 %v5308
        %v5426 = vpop.f32.mrb[0].mxu0
        %v5427 = vadd.f32 0.0, %v5426
        %v5428 = vpop.f32.mrb[0].mxu0
        %5429 = vmatprep.mubr.f32.mxu0 0.0
        %5430 = vmatmul.mubr.f32.gmra.mrb[0].mxu0 %v5309
        %v5431 = vpop.f32.mrb[0].mxu0
        %v5432 = vadd.f32 0.0, %v5431
        %v5433 = vpop.f32.mrb[0].mxu0
        %5434 = vmatprep.mubr.f32.mxu0 0.0
        %5435 = vmatmul.mubr.f32.gmra.mrb[0].mxu0 %v5310
        %v5436 = vpop.f32.mrb[0].mxu0
        %v5437 = vadd.f32 0.0, %v5436
        %v5438 = vpop.f32.mrb[0].mxu0
        %5439 = vmatprep.mubr.f32.mxu0 0.0
        %5440 = vmatmul.mubr.f32.gmra.mrb[0].mxu0 %v5311
        %v5441 = vpop.f32.mrb[0].mxu0
        %v5442 = vadd.f32 0.0, %v5441
        %v5443 = vpop.f32.mrb[0].mxu0
        %5444 = vmatprep.mubr.f32.mxu0 0.0
        %5445 = vmatmul.mubr.f32.gmra.mrb[0].mxu0 %v5312
        %v5446 = vpop.f32.mrb[0].mxu0
        %v5447 = vadd.f32 0.0, %v5446
        %v5448 = vpop.f32.mrb[0].mxu0
        %5449 = vmatprep.mubr.f32.mxu0 0.0
        %5450 = vmatmul.mubr.f32.gmra.mrb[0].mxu0 %v5313
        %v5451 = vpop.f32.mrb[0].mxu0
        %v5452 = vadd.f32 0.0, %v5451
        %v5453 = vpop.f32.mrb[0].mxu0
        %5454 = vmatprep.mubr.f32.mxu0 0.0
        %5455 = vmatmul.mubr.f32.gmra.mrb[0].mxu0 %v5314
        %v5456 = vpop.f32.mrb[0].mxu0
        %v5457 = vadd.f32 0.0, %v5456
        %v5458 = vpop.f32.mrb[0].mxu0
        %5459 = vdwg.mxu0
        %v5460 = vadd.f32 %v1980, %v5382
        %v5461 = vadd.f32 %v1985, %v5387
        %v5462 = vadd.f32 %v1990, %v5392
        %v5463 = vadd.f32 %v1995, %v5397
        %v5464 = vadd.f32 %v2000, %v5402
        %v5465 = vadd.f32 %v2005, %v5407
        %v5466 = vadd.f32 %v2010, %v5412
        %v5467 = vadd.f32 %v2015, %v5417
        %v5468 = vadd.f32 %v2020, %v5422
        %v5469 = vadd.f32 %v2025, %v5427
        %v5470 = vadd.f32 %v2030, %v5432
        %v5471 = vadd.f32 %v2035, %v5437
        %v5472 = vadd.f32 %v2040, %v5442
        %v5473 = vadd.f32 %v2045, %v5447
        %v5474 = vadd.f32 %v2050, %v5452
        %v5475 = vadd.f32 %v2055, %v5457
        %v5476 = vtanh.pop %v5460
        %v5477 = vtanh.pop %v5461
        %v5478 = vtanh.pop %v5462
        %v5479 = vtanh.pop %v5463
        %v5480 = vtanh.pop %v5464
        %v5481 = vtanh.pop %v5465
        %v5482 = vtanh.pop %v5466
        %v5483 = vtanh.pop %v5467
        %v5484 = vtanh.pop %v5468
        %v5485 = vtanh.pop %v5469
        %v5486 = vtanh.pop %v5470
        %v5487 = vtanh.pop %v5471
        %v5488 = vtanh.pop %v5472
        %v5489 = vtanh.pop %v5473
        %v5490 = vtanh.pop %v5474
        %v5491 = vtanh.pop %v5475
        %v5492 = vsub.f32 1.0, %v5156
        %v5493 = vsub.f32 1.0, %v5158
        %v5494 = vsub.f32 1.0, %v5160
        %v5495 = vsub.f32 1.0, %v5162
        %v5496 = vsub.f32 1.0, %v5164
        %v5497 = vsub.f32 1.0, %v5166
        %v5498 = vsub.f32 1.0, %v5168
        %v5499 = vsub.f32 1.0, %v5170
        %v5500 = vsub.f32 1.0, %v5172
        %v5501 = vsub.f32 1.0, %v5174
        %v5502 = vsub.f32 1.0, %v5176
        %v5503 = vsub.f32 1.0, %v5178
        %v5504 = vsub.f32 1.0, %v5180
        %v5505 = vsub.f32 1.0, %v5182
        %v5506 = vsub.f32 1.0, %v5184
        %v5507 = vsub.f32 1.0, %v5186
        %v5508 = vmul.f32 %v5492, %v4898
        %v5509 = vmul.f32 %v5493, %v4899
        %v5510 = vmul.f32 %v5494, %v4900
        %v5511 = vmul.f32 %v5495, %v4901
        %v5512 = vmul.f32 %v5496, %v4902
        %v5513 = vmul.f32 %v5497, %v4903
        %v5514 = vmul.f32 %v5498, %v4904
        %v5515 = vmul.f32 %v5499, %v4905
        %v5516 = vmul.f32 %v5500, %v4906
        %v5517 = vmul.f32 %v5501, %v4907
        %v5518 = vmul.f32 %v5502, %v4908
        %v5519 = vmul.f32 %v5503, %v4909
        %v5520 = vmul.f32 %v5504, %v4910
        %v5521 = vmul.f32 %v5505, %v4911
        %v5522 = vmul.f32 %v5506, %v4912
        %v5523 = vmul.f32 %v5507, %v4913
        %v5524 = vmul.f32 %v5156, %v5476
        %v5525 = vmul.f32 %v5158, %v5477
        %v5526 = vmul.f32 %v5160, %v5478
        %v5527 = vmul.f32 %v5162, %v5479
        %v5528 = vmul.f32 %v5164, %v5480
        %v5529 = vmul.f32 %v5166, %v5481
        %v5530 = vmul.f32 %v5168, %v5482
        %v5531 = vmul.f32 %v5170, %v5483
        %v5532 = vmul.f32 %v5172, %v5484
        %v5533 = vmul.f32 %v5174, %v5485
        %v5534 = vmul.f32 %v5176, %v5486
        %v5535 = vmul.f32 %v5178, %v5487
        %v5536 = vmul.f32 %v5180, %v5488
        %v5537 = vmul.f32 %v5182, %v5489
        %v5538 = vmul.f32 %v5184, %v5490
        %v5539 = vmul.f32 %v5186, %v5491
        %v5540 = vadd.f32 %v5508, %v5524
        %v5541 = vadd.f32 %v5509, %v5525
        %v5542 = vadd.f32 %v5510, %v5526
        %v5543 = vadd.f32 %v5511, %v5527
        %v5544 = vadd.f32 %v5512, %v5528
        %v5545 = vadd.f32 %v5513, %v5529
        %v5546 = vadd.f32 %v5514, %v5530
        %v5547 = vadd.f32 %v5515, %v5531
        %v5548 = vadd.f32 %v5516, %v5532
        %v5549 = vadd.f32 %v5517, %v5533
        %v5550 = vadd.f32 %v5518, %v5534
        %v5551 = vadd.f32 %v5519, %v5535
        %v5552 = vadd.f32 %v5520, %v5536
        %v5553 = vadd.f32 %v5521, %v5537
        %v5554 = vadd.f32 %v5522, %v5538
        %v5555 = vadd.f32 %v5523, %v5539
        %5556 = vmatprep.subr.mxu0 %v2299
        %5557 = vmatpush1.msra.mxu0 %v2298
        %5558 = vmatprep.subr.mxu0 %v2301
        %5559 = vmatpush1.msra.mxu0 %v2300
        %5560 = vmatprep.subr.mxu0 %v2303
        %5561 = vmatpush1.msra.mxu0 %v2302
        %5562 = vmatprep.subr.mxu0 %v2305
        %5563 = vmatpush1.msra.mxu0 %v2304
        %5564 = vmatprep.subr.mxu0 %v2307
        %5565 = vmatpush1.msra.mxu0 %v2306
        %5566 = vmatprep.subr.mxu0 %v2309
        %5567 = vmatpush1.msra.mxu0 %v2308
        %5568 = vmatprep.subr.mxu0 %v2311
        %5569 = vmatpush1.msra.mxu0 %v2310
        %5570 = vmatprep.subr.mxu0 %v2313
        %5571 = vmatpush1.msra.mxu0 %v2312
        %5572 = vmatprep.subr.mxu0 %v2315
        %5573 = vmatpush1.msra.mxu0 %v2314
        %5574 = vmatprep.subr.mxu0 %v2317
        %5575 = vmatpush1.msra.mxu0 %v2316
        %5576 = vmatprep.subr.mxu0 %v2319
        %5577 = vmatpush1.msra.mxu0 %v2318
        %5578 = vmatprep.subr.mxu0 %v2321
        %5579 = vmatpush1.msra.mxu0 %v2320
        %5580 = vmatprep.subr.mxu0 %v2323
        %5581 = vmatpush1.msra.mxu0 %v2322
        %5582 = vmatprep.subr.mxu0 %v2325
        %5583 = vmatpush1.msra.mxu0 %v2324
        %5584 = vmatprep.subr.mxu0 %v2327
        %5585 = vmatpush1.msra.mxu0 %v2326
        %5586 = vmatprep.subr.mxu0 %v2329
        %5587 = vmatpush1.msra.mxu0 %v2328
        %5588 = vmatprep.subr.mxu0 0.0
        %5589 = vmatpush1.msra.mxu0 0.0
        %5590 = vmatprep.subr.mxu0 0.0
        %5591 = vmatpush1.msra.mxu0 0.0
        %5592 = vmatprep.subr.mxu0 0.0
        %5593 = vmatpush1.msra.mxu0 0.0
        %5594 = vmatprep.subr.mxu0 0.0
        %5595 = vmatpush1.msra.mxu0 0.0
        %5596 = vmatprep.subr.mxu0 0.0
        %5597 = vmatpush1.msra.mxu0 0.0
        %5598 = vmatprep.subr.mxu0 0.0
        %5599 = vmatpush1.msra.mxu0 0.0
        %5600 = vmatprep.subr.mxu0 0.0
        %5601 = vmatpush1.msra.mxu0 0.0
        %5602 = vmatprep.subr.mxu0 0.0
        %5603 = vmatpush1.msra.mxu0 0.0
        %5604 = vmatprep.subr.mxu0 0.0
        %5605 = vmatpush1.msra.mxu0 0.0
        %5606 = vmatprep.subr.mxu0 0.0
        %5607 = vmatpush1.msra.mxu0 0.0
        %5608 = vmatprep.subr.mxu0 0.0
        %5609 = vmatpush1.msra.mxu0 0.0
        %5610 = vmatprep.subr.mxu0 0.0
        %5611 = vmatpush1.msra.mxu0 0.0
        %5612 = vmatprep.subr.mxu0 0.0
        %5613 = vmatpush1.msra.mxu0 0.0
        %5614 = vmatprep.subr.mxu0 0.0
        %5615 = vmatpush1.msra.mxu0 0.0
        %5616 = vmatprep.subr.mxu0 0.0
        %5617 = vmatpush1.msra.mxu0 0.0
        %5618 = vmatprep.subr.mxu0 0.0
        %5619 = vmatpush1.msra.mxu0 0.0
        %5620 = vmatprep.mubr.f32.mxu0 0.0
        %5621 = vmatmul.mubr.f32.gmra.mrb[0].mxu0 %v5540
        %v5622 = vpop.f32.mrb[0].mxu0
        %v5623 = vadd.f32 0.0, %v5622
        %v5624 = vpop.f32.mrb[0].mxu0
        %v5625 = vadd.f32 0.0, %v5624
        %5626 = vmatprep.mubr.f32.mxu0 0.0
        %5627 = vmatmul.mubr.f32.gmra.mrb[0].mxu0 %v5541
        %v5628 = vpop.f32.mrb[0].mxu0
        %v5629 = vadd.f32 0.0, %v5628
        %v5630 = vpop.f32.mrb[0].mxu0
        %v5631 = vadd.f32 0.0, %v5630
        %5632 = vmatprep.mubr.f32.mxu0 0.0
        %5633 = vmatmul.mubr.f32.gmra.mrb[0].mxu0 %v5542
        %v5634 = vpop.f32.mrb[0].mxu0
        %v5635 = vadd.f32 0.0, %v5634
        %v5636 = vpop.f32.mrb[0].mxu0
        %v5637 = vadd.f32 0.0, %v5636
        %5638 = vmatprep.mubr.f32.mxu0 0.0
        %5639 = vmatmul.mubr.f32.gmra.mrb[0].mxu0 %v5543
        %v5640 = vpop.f32.mrb[0].mxu0
        %v5641 = vadd.f32 0.0, %v5640
        %v5642 = vpop.f32.mrb[0].mxu0
        %v5643 = vadd.f32 0.0, %v5642
        %5644 = vmatprep.mubr.f32.mxu0 0.0
        %5645 = vmatmul.mubr.f32.gmra.mrb[0].mxu0 %v5544
        %v5646 = vpop.f32.mrb[0].mxu0
        %v5647 = vadd.f32 0.0, %v5646
        %v5648 = vpop.f32.mrb[0].mxu0
        %v5649 = vadd.f32 0.0, %v5648
        %5650 = vmatprep.mubr.f32.mxu0 0.0
        %5651 = vmatmul.mubr.f32.gmra.mrb[0].mxu0 %v5545
        %v5652 = vpop.f32.mrb[0].mxu0
        %v5653 = vadd.f32 0.0, %v5652
        %v5654 = vpop.f32.mrb[0].mxu0
        %v5655 = vadd.f32 0.0, %v5654
        %5656 = vmatprep.mubr.f32.mxu0 0.0
        %5657 = vmatmul.mubr.f32.gmra.mrb[0].mxu0 %v5546
        %v5658 = vpop.f32.mrb[0].mxu0
        %v5659 = vadd.f32 0.0, %v5658
        %v5660 = vpop.f32.mrb[0].mxu0
        %v5661 = vadd.f32 0.0, %v5660
        %5662 = vmatprep.mubr.f32.mxu0 0.0
        %5663 = vmatmul.mubr.f32.gmra.mrb[0].mxu0 %v5547
        %v5664 = vpop.f32.mrb[0].mxu0
        %v5665 = vadd.f32 0.0, %v5664
        %v5666 = vpop.f32.mrb[0].mxu0
        %v5667 = vadd.f32 0.0, %v5666
        %5668 = vmatprep.mubr.f32.mxu0 0.0
        %5669 = vmatmul.mubr.f32.gmra.mrb[0].mxu0 %v5548
        %v5670 = vpop.f32.mrb[0].mxu0
        %v5671 = vadd.f32 0.0, %v5670
        %v5672 = vpop.f32.mrb[0].mxu0
        %v5673 = vadd.f32 0.0, %v5672
        %5674 = vmatprep.mubr.f32.mxu0 0.0
        %5675 = vmatmul.mubr.f32.gmra.mrb[0].mxu0 %v5549
        %v5676 = vpop.f32.mrb[0].mxu0
        %v5677 = vadd.f32 0.0, %v5676
        %v5678 = vpop.f32.mrb[0].mxu0
        %v5679 = vadd.f32 0.0, %v5678
        %5680 = vmatprep.mubr.f32.mxu0 0.0
        %5681 = vmatmul.mubr.f32.gmra.mrb[0].mxu0 %v5550
        %v5682 = vpop.f32.mrb[0].mxu0
        %v5683 = vadd.f32 0.0, %v5682
        %v5684 = vpop.f32.mrb[0].mxu0
        %v5685 = vadd.f32 0.0, %v5684
        %5686 = vmatprep.mubr.f32.mxu0 0.0
        %5687 = vmatmul.mubr.f32.gmra.mrb[0].mxu0 %v5551
        %v5688 = vpop.f32.mrb[0].mxu0
        %v5689 = vadd.f32 0.0, %v5688
        %v5690 = vpop.f32.mrb[0].mxu0
        %v5691 = vadd.f32 0.0, %v5690
        %5692 = vmatprep.mubr.f32.mxu0 0.0
        %5693 = vmatmul.mubr.f32.gmra.mrb[0].mxu0 %v5552
        %v5694 = vpop.f32.mrb[0].mxu0
        %v5695 = vadd.f32 0.0, %v5694
        %v5696 = vpop.f32.mrb[0].mxu0
        %v5697 = vadd.f32 0.0, %v5696
        %5698 = vmatprep.mubr.f32.mxu0 0.0
        %5699 = vmatmul.mubr.f32.gmra.mrb[0].mxu0 %v5553
        %v5700 = vpop.f32.mrb[0].mxu0
        %v5701 = vadd.f32 0.0, %v5700
        %v5702 = vpop.f32.mrb[0].mxu0
        %v5703 = vadd.f32 0.0, %v5702
        %5704 = vmatprep.mubr.f32.mxu0 0.0
        %5705 = vmatmul.mubr.f32.gmra.mrb[0].mxu0 %v5554
        %v5706 = vpop.f32.mrb[0].mxu0
        %v5707 = vadd.f32 0.0, %v5706
        %v5708 = vpop.f32.mrb[0].mxu0
        %v5709 = vadd.f32 0.0, %v5708
        %5710 = vmatprep.mubr.f32.mxu0 0.0
        %5711 = vmatmul.mubr.f32.gmra.mrb[0].mxu0 %v5555
        %v5712 = vpop.f32.mrb[0].mxu0
        %v5713 = vadd.f32 0.0, %v5712
        %v5714 = vpop.f32.mrb[0].mxu0
        %v5715 = vadd.f32 0.0, %v5714
        %5716 = vdwg.mxu0
        %v5717 = vadd.f32 %v1307, %v5623
        %v5718 = vadd.f32 %v1313, %v5629
        %v5719 = vadd.f32 %v1319, %v5635
        %v5720 = vadd.f32 %v1325, %v5641
        %v5721 = vadd.f32 %v1331, %v5647
        %v5722 = vadd.f32 %v1337, %v5653
        %v5723 = vadd.f32 %v1343, %v5659
        %v5724 = vadd.f32 %v1349, %v5665
        %v5725 = vadd.f32 %v1355, %v5671
        %v5726 = vadd.f32 %v1361, %v5677
        %v5727 = vadd.f32 %v1367, %v5683
        %v5728 = vadd.f32 %v1373, %v5689
        %v5729 = vadd.f32 %v1379, %v5695
        %v5730 = vadd.f32 %v1385, %v5701
        %v5731 = vadd.f32 %v1391, %v5707
        %v5732 = vadd.f32 %v1397, %v5713
        %v5733 = vxor.u32 %v5717, 2147483648
        %v5734 = vxor.u32 %v5718, 2147483648
        %v5735 = vxor.u32 %v5719, 2147483648
        %v5736 = vxor.u32 %v5720, 2147483648
        %v5737 = vxor.u32 %v5721, 2147483648
        %v5738 = vxor.u32 %v5722, 2147483648
        %v5739 = vxor.u32 %v5723, 2147483648
        %v5740 = vxor.u32 %v5724, 2147483648
        %v5741 = vxor.u32 %v5725, 2147483648
        %v5742 = vxor.u32 %v5726, 2147483648
        %v5743 = vxor.u32 %v5727, 2147483648
        %v5744 = vxor.u32 %v5728, 2147483648
        %v5745 = vxor.u32 %v5729, 2147483648
        %v5746 = vxor.u32 %v5730, 2147483648
        %v5747 = vxor.u32 %v5731, 2147483648
        %v5748 = vxor.u32 %v5732, 2147483648
        %v5749 = vmul.f32 %v5733, 1.442695
        %v5750 = vpow.pop %v5749
        %v5751 = vmul.f32 %v5734, 1.442695
        %v5752 = vpow.pop %v5751
        %v5753 = vmul.f32 %v5735, 1.442695
        %v5754 = vpow.pop %v5753
        %v5755 = vmul.f32 %v5736, 1.442695
        %v5756 = vpow.pop %v5755
        %v5757 = vmul.f32 %v5737, 1.442695
        %v5758 = vpow.pop %v5757
        %v5759 = vmul.f32 %v5738, 1.442695
        %v5760 = vpow.pop %v5759
        %v5761 = vmul.f32 %v5739, 1.442695
        %v5762 = vpow.pop %v5761
        %v5763 = vmul.f32 %v5740, 1.442695
        %v5764 = vpow.pop %v5763
        %v5765 = vmul.f32 %v5741, 1.442695
        %v5766 = vpow.pop %v5765
        %v5767 = vmul.f32 %v5742, 1.442695
        %v5768 = vpow.pop %v5767
        %v5769 = vmul.f32 %v5743, 1.442695
        %v5770 = vpow.pop %v5769
        %v5771 = vmul.f32 %v5744, 1.442695
        %v5772 = vpow.pop %v5771
        %v5773 = vmul.f32 %v5745, 1.442695
        %v5774 = vpow.pop %v5773
        %v5775 = vmul.f32 %v5746, 1.442695
        %v5776 = vpow.pop %v5775
        %v5777 = vmul.f32 %v5747, 1.442695
        %v5778 = vpow.pop %v5777
        %v5779 = vmul.f32 %v5748, 1.442695
        %v5780 = vpow.pop %v5779
        %v5781 = vadd.f32 %v5750, 1.0
        %v5782 = vadd.f32 %v5752, 1.0
        %v5783 = vadd.f32 %v5754, 1.0
        %v5784 = vadd.f32 %v5756, 1.0
        %v5785 = vadd.f32 %v5758, 1.0
        %v5786 = vadd.f32 %v5760, 1.0
        %v5787 = vadd.f32 %v5762, 1.0
        %v5788 = vadd.f32 %v5764, 1.0
        %v5789 = vadd.f32 %v5766, 1.0
        %v5790 = vadd.f32 %v5768, 1.0
        %v5791 = vadd.f32 %v5770, 1.0
        %v5792 = vadd.f32 %v5772, 1.0
        %v5793 = vadd.f32 %v5774, 1.0
        %v5794 = vadd.f32 %v5776, 1.0
        %v5795 = vadd.f32 %v5778, 1.0
        %v5796 = vadd.f32 %v5780, 1.0
        %v5797 = vrcp.pop %v5781
        %v5798 = vmul.f32 1.0, %v5797
        %v5799 = vrcp.pop %v5782
        %v5800 = vmul.f32 1.0, %v5799
        %v5801 = vrcp.pop %v5783
        %v5802 = vmul.f32 1.0, %v5801
        %v5803 = vrcp.pop %v5784
        %v5804 = vmul.f32 1.0, %v5803
        %v5805 = vrcp.pop %v5785
        %v5806 = vmul.f32 1.0, %v5805
        %v5807 = vrcp.pop %v5786
        %v5808 = vmul.f32 1.0, %v5807
        %v5809 = vrcp.pop %v5787
        %v5810 = vmul.f32 1.0, %v5809
        %v5811 = vrcp.pop %v5788
        %v5812 = vmul.f32 1.0, %v5811
        %v5813 = vrcp.pop %v5789
        %v5814 = vmul.f32 1.0, %v5813
        %v5815 = vrcp.pop %v5790
        %v5816 = vmul.f32 1.0, %v5815
        %v5817 = vrcp.pop %v5791
        %v5818 = vmul.f32 1.0, %v5817
        %v5819 = vrcp.pop %v5792
        %v5820 = vmul.f32 1.0, %v5819
        %v5821 = vrcp.pop %v5793
        %v5822 = vmul.f32 1.0, %v5821
        %v5823 = vrcp.pop %v5794
        %v5824 = vmul.f32 1.0, %v5823
        %v5825 = vrcp.pop %v5795
        %v5826 = vmul.f32 1.0, %v5825
        %v5827 = vrcp.pop %v5796
        %v5828 = vmul.f32 1.0, %v5827
        %v5829 = vadd.f32 %v1309, %v5625
        %v5830 = vadd.f32 %v1315, %v5631
        %v5831 = vadd.f32 %v1321, %v5637
        %v5832 = vadd.f32 %v1327, %v5643
        %v5833 = vadd.f32 %v1333, %v5649
        %v5834 = vadd.f32 %v1339, %v5655
        %v5835 = vadd.f32 %v1345, %v5661
        %v5836 = vadd.f32 %v1351, %v5667
        %v5837 = vadd.f32 %v1357, %v5673
        %v5838 = vadd.f32 %v1363, %v5679
        %v5839 = vadd.f32 %v1369, %v5685
        %v5840 = vadd.f32 %v1375, %v5691
        %v5841 = vadd.f32 %v1381, %v5697
        %v5842 = vadd.f32 %v1387, %v5703
        %v5843 = vadd.f32 %v1393, %v5709
        %v5844 = vadd.f32 %v1399, %v5715
        %v5845 = vxor.u32 %v5829, 2147483648
        %v5846 = vxor.u32 %v5830, 2147483648
        %v5847 = vxor.u32 %v5831, 2147483648
        %v5848 = vxor.u32 %v5832, 2147483648
        %v5849 = vxor.u32 %v5833, 2147483648
        %v5850 = vxor.u32 %v5834, 2147483648
        %v5851 = vxor.u32 %v5835, 2147483648
        %v5852 = vxor.u32 %v5836, 2147483648
        %v5853 = vxor.u32 %v5837, 2147483648
        %v5854 = vxor.u32 %v5838, 2147483648
        %v5855 = vxor.u32 %v5839, 2147483648
        %v5856 = vxor.u32 %v5840, 2147483648
        %v5857 = vxor.u32 %v5841, 2147483648
        %v5858 = vxor.u32 %v5842, 2147483648
        %v5859 = vxor.u32 %v5843, 2147483648
        %v5860 = vxor.u32 %v5844, 2147483648
        %v5861 = vmul.f32 %v5845, 1.442695
        %v5862 = vpow.pop %v5861
        %v5863 = vmul.f32 %v5846, 1.442695
        %v5864 = vpow.pop %v5863
        %v5865 = vmul.f32 %v5847, 1.442695
        %v5866 = vpow.pop %v5865
        %v5867 = vmul.f32 %v5848, 1.442695
        %v5868 = vpow.pop %v5867
        %v5869 = vmul.f32 %v5849, 1.442695
        %v5870 = vpow.pop %v5869
        %v5871 = vmul.f32 %v5850, 1.442695
        %v5872 = vpow.pop %v5871
        %v5873 = vmul.f32 %v5851, 1.442695
        %v5874 = vpow.pop %v5873
        %v5875 = vmul.f32 %v5852, 1.442695
        %v5876 = vpow.pop %v5875
        %v5877 = vmul.f32 %v5853, 1.442695
        %v5878 = vpow.pop %v5877
        %v5879 = vmul.f32 %v5854, 1.442695
        %v5880 = vpow.pop %v5879
        %v5881 = vmul.f32 %v5855, 1.442695
        %v5882 = vpow.pop %v5881
        %v5883 = vmul.f32 %v5856, 1.442695
        %v5884 = vpow.pop %v5883
        %v5885 = vmul.f32 %v5857, 1.442695
        %v5886 = vpow.pop %v5885
        %v5887 = vmul.f32 %v5858, 1.442695
        %v5888 = vpow.pop %v5887
        %v5889 = vmul.f32 %v5859, 1.442695
        %v5890 = vpow.pop %v5889
        %v5891 = vmul.f32 %v5860, 1.442695
        %v5892 = vpow.pop %v5891
        %v5893 = vadd.f32 %v5862, 1.0
        %v5894 = vadd.f32 %v5864, 1.0
        %v5895 = vadd.f32 %v5866, 1.0
        %v5896 = vadd.f32 %v5868, 1.0
        %v5897 = vadd.f32 %v5870, 1.0
        %v5898 = vadd.f32 %v5872, 1.0
        %v5899 = vadd.f32 %v5874, 1.0
        %v5900 = vadd.f32 %v5876, 1.0
        %v5901 = vadd.f32 %v5878, 1.0
        %v5902 = vadd.f32 %v5880, 1.0
        %v5903 = vadd.f32 %v5882, 1.0
        %v5904 = vadd.f32 %v5884, 1.0
        %v5905 = vadd.f32 %v5886, 1.0
        %v5906 = vadd.f32 %v5888, 1.0
        %v5907 = vadd.f32 %v5890, 1.0
        %v5908 = vadd.f32 %v5892, 1.0
        %v5909 = vrcp.pop %v5893
        %v5910 = vmul.f32 1.0, %v5909
        %v5911 = vrcp.pop %v5894
        %v5912 = vmul.f32 1.0, %v5911
        %v5913 = vrcp.pop %v5895
        %v5914 = vmul.f32 1.0, %v5913
        %v5915 = vrcp.pop %v5896
        %v5916 = vmul.f32 1.0, %v5915
        %v5917 = vrcp.pop %v5897
        %v5918 = vmul.f32 1.0, %v5917
        %v5919 = vrcp.pop %v5898
        %v5920 = vmul.f32 1.0, %v5919
        %v5921 = vrcp.pop %v5899
        %v5922 = vmul.f32 1.0, %v5921
        %v5923 = vrcp.pop %v5900
        %v5924 = vmul.f32 1.0, %v5923
        %v5925 = vrcp.pop %v5901
        %v5926 = vmul.f32 1.0, %v5925
        %v5927 = vrcp.pop %v5902
        %v5928 = vmul.f32 1.0, %v5927
        %v5929 = vrcp.pop %v5903
        %v5930 = vmul.f32 1.0, %v5929
        %v5931 = vrcp.pop %v5904
        %v5932 = vmul.f32 1.0, %v5931
        %v5933 = vrcp.pop %v5905
        %v5934 = vmul.f32 1.0, %v5933
        %v5935 = vrcp.pop %v5906
        %v5936 = vmul.f32 1.0, %v5935
        %v5937 = vrcp.pop %v5907
        %v5938 = vmul.f32 1.0, %v5937
        %v5939 = vrcp.pop %v5908
        %v5940 = vmul.f32 1.0, %v5939
        %v5941 = vmul.f32 %v5910, %v5540
        %v5942 = vmul.f32 %v5912, %v5541
        %v5943 = vmul.f32 %v5914, %v5542
        %v5944 = vmul.f32 %v5916, %v5543
        %v5945 = vmul.f32 %v5918, %v5544
        %v5946 = vmul.f32 %v5920, %v5545
        %v5947 = vmul.f32 %v5922, %v5546
        %v5948 = vmul.f32 %v5924, %v5547
        %v5949 = vmul.f32 %v5926, %v5548
        %v5950 = vmul.f32 %v5928, %v5549
        %v5951 = vmul.f32 %v5930, %v5550
        %v5952 = vmul.f32 %v5932, %v5551
        %v5953 = vmul.f32 %v5934, %v5552
        %v5954 = vmul.f32 %v5936, %v5553
        %v5955 = vmul.f32 %v5938, %v5554
        %v5956 = vmul.f32 %v5940, %v5555
        %5957 = vmatprep.subr.mxu0 0.0
        %5958 = vmatpush1.msra.mxu0 %v2731
        %5959 = vmatprep.subr.mxu0 0.0
        %5960 = vmatpush1.msra.mxu0 %v2732
        %5961 = vmatprep.subr.mxu0 0.0
        %5962 = vmatpush1.msra.mxu0 %v2733
        %5963 = vmatprep.subr.mxu0 0.0
        %5964 = vmatpush1.msra.mxu0 %v2734
        %5965 = vmatprep.subr.mxu0 0.0
        %5966 = vmatpush1.msra.mxu0 %v2735
        %5967 = vmatprep.subr.mxu0 0.0
        %5968 = vmatpush1.msra.mxu0 %v2736
        %5969 = vmatprep.subr.mxu0 0.0
        %5970 = vmatpush1.msra.mxu0 %v2737
        %5971 = vmatprep.subr.mxu0 0.0
        %5972 = vmatpush1.msra.mxu0 %v2738
        %5973 = vmatprep.subr.mxu0 0.0
        %5974 = vmatpush1.msra.mxu0 %v2739
        %5975 = vmatprep.subr.mxu0 0.0
        %5976 = vmatpush1.msra.mxu0 %v2740
        %5977 = vmatprep.subr.mxu0 0.0
        %5978 = vmatpush1.msra.mxu0 %v2741
        %5979 = vmatprep.subr.mxu0 0.0
        %5980 = vmatpush1.msra.mxu0 %v2742
        %5981 = vmatprep.subr.mxu0 0.0
        %5982 = vmatpush1.msra.mxu0 %v2743
        %5983 = vmatprep.subr.mxu0 0.0
        %5984 = vmatpush1.msra.mxu0 %v2744
        %5985 = vmatprep.subr.mxu0 0.0
        %5986 = vmatpush1.msra.mxu0 %v2745
        %5987 = vmatprep.subr.mxu0 0.0
        %5988 = vmatpush1.msra.mxu0 %v2746
        %5989 = vmatprep.subr.mxu0 0.0
        %5990 = vmatpush1.msra.mxu0 0.0
        %5991 = vmatprep.subr.mxu0 0.0
        %5992 = vmatpush1.msra.mxu0 0.0
        %5993 = vmatprep.subr.mxu0 0.0
        %5994 = vmatpush1.msra.mxu0 0.0
        %5995 = vmatprep.subr.mxu0 0.0
        %5996 = vmatpush1.msra.mxu0 0.0
        %5997 = vmatprep.subr.mxu0 0.0
        %5998 = vmatpush1.msra.mxu0 0.0
        %5999 = vmatprep.subr.mxu0 0.0
        %6000 = vmatpush1.msra.mxu0 0.0
        %6001 = vmatprep.subr.mxu0 0.0
        %6002 = vmatpush1.msra.mxu0 0.0
        %6003 = vmatprep.subr.mxu0 0.0
        %6004 = vmatpush1.msra.mxu0 0.0
        %6005 = vmatprep.subr.mxu0 0.0
        %6006 = vmatpush1.msra.mxu0 0.0
        %6007 = vmatprep.subr.mxu0 0.0
        %6008 = vmatpush1.msra.mxu0 0.0
        %6009 = vmatprep.subr.mxu0 0.0
        %6010 = vmatpush1.msra.mxu0 0.0
        %6011 = vmatprep.subr.mxu0 0.0
        %6012 = vmatpush1.msra.mxu0 0.0
        %6013 = vmatprep.subr.mxu0 0.0
        %6014 = vmatpush1.msra.mxu0 0.0
        %6015 = vmatprep.subr.mxu0 0.0
        %6016 = vmatpush1.msra.mxu0 0.0
        %6017 = vmatprep.subr.mxu0 0.0
        %6018 = vmatpush1.msra.mxu0 0.0
        %6019 = vmatprep.subr.mxu0 0.0
        %6020 = vmatpush1.msra.mxu0 0.0
        %6021 = vmatprep.mubr.f32.mxu0 0.0
        %6022 = vmatmul.mubr.f32.gmra.mrb[0].mxu0 %v5941
        %v6023 = vpop.f32.mrb[0].mxu0
        %v6024 = vadd.f32 0.0, %v6023
        %v6025 = vpop.f32.mrb[0].mxu0
        %6026 = vmatprep.mubr.f32.mxu0 0.0
        %6027 = vmatmul.mubr.f32.gmra.mrb[0].mxu0 %v5942
        %v6028 = vpop.f32.mrb[0].mxu0
        %v6029 = vadd.f32 0.0, %v6028
        %v6030 = vpop.f32.mrb[0].mxu0
        %6031 = vmatprep.mubr.f32.mxu0 0.0
        %6032 = vmatmul.mubr.f32.gmra.mrb[0].mxu0 %v5943
        %v6033 = vpop.f32.mrb[0].mxu0
        %v6034 = vadd.f32 0.0, %v6033
        %v6035 = vpop.f32.mrb[0].mxu0
        %6036 = vmatprep.mubr.f32.mxu0 0.0
        %6037 = vmatmul.mubr.f32.gmra.mrb[0].mxu0 %v5944
        %v6038 = vpop.f32.mrb[0].mxu0
        %v6039 = vadd.f32 0.0, %v6038
        %v6040 = vpop.f32.mrb[0].mxu0
        %6041 = vmatprep.mubr.f32.mxu0 0.0
        %6042 = vmatmul.mubr.f32.gmra.mrb[0].mxu0 %v5945
        %v6043 = vpop.f32.mrb[0].mxu0
        %v6044 = vadd.f32 0.0, %v6043
        %v6045 = vpop.f32.mrb[0].mxu0
        %6046 = vmatprep.mubr.f32.mxu0 0.0
        %6047 = vmatmul.mubr.f32.gmra.mrb[0].mxu0 %v5946
        %v6048 = vpop.f32.mrb[0].mxu0
        %v6049 = vadd.f32 0.0, %v6048
        %v6050 = vpop.f32.mrb[0].mxu0
        %6051 = vmatprep.mubr.f32.mxu0 0.0
        %6052 = vmatmul.mubr.f32.gmra.mrb[0].mxu0 %v5947
        %v6053 = vpop.f32.mrb[0].mxu0
        %v6054 = vadd.f32 0.0, %v6053
        %v6055 = vpop.f32.mrb[0].mxu0
        %6056 = vmatprep.mubr.f32.mxu0 0.0
        %6057 = vmatmul.mubr.f32.gmra.mrb[0].mxu0 %v5948
        %v6058 = vpop.f32.mrb[0].mxu0
        %v6059 = vadd.f32 0.0, %v6058
        %v6060 = vpop.f32.mrb[0].mxu0
        %6061 = vmatprep.mubr.f32.mxu0 0.0
        %6062 = vmatmul.mubr.f32.gmra.mrb[0].mxu0 %v5949
        %v6063 = vpop.f32.mrb[0].mxu0
        %v6064 = vadd.f32 0.0, %v6063
        %v6065 = vpop.f32.mrb[0].mxu0
        %6066 = vmatprep.mubr.f32.mxu0 0.0
        %6067 = vmatmul.mubr.f32.gmra.mrb[0].mxu0 %v5950
        %v6068 = vpop.f32.mrb[0].mxu0
        %v6069 = vadd.f32 0.0, %v6068
        %v6070 = vpop.f32.mrb[0].mxu0
        %6071 = vmatprep.mubr.f32.mxu0 0.0
        %6072 = vmatmul.mubr.f32.gmra.mrb[0].mxu0 %v5951
        %v6073 = vpop.f32.mrb[0].mxu0
        %v6074 = vadd.f32 0.0, %v6073
        %v6075 = vpop.f32.mrb[0].mxu0
        %6076 = vmatprep.mubr.f32.mxu0 0.0
        %6077 = vmatmul.mubr.f32.gmra.mrb[0].mxu0 %v5952
        %v6078 = vpop.f32.mrb[0].mxu0
        %v6079 = vadd.f32 0.0, %v6078
        %v6080 = vpop.f32.mrb[0].mxu0
        %6081 = vmatprep.mubr.f32.mxu0 0.0
        %6082 = vmatmul.mubr.f32.gmra.mrb[0].mxu0 %v5953
        %v6083 = vpop.f32.mrb[0].mxu0
        %v6084 = vadd.f32 0.0, %v6083
        %v6085 = vpop.f32.mrb[0].mxu0
        %6086 = vmatprep.mubr.f32.mxu0 0.0
        %6087 = vmatmul.mubr.f32.gmra.mrb[0].mxu0 %v5954
        %v6088 = vpop.f32.mrb[0].mxu0
        %v6089 = vadd.f32 0.0, %v6088
        %v6090 = vpop.f32.mrb[0].mxu0
        %6091 = vmatprep.mubr.f32.mxu0 0.0
        %6092 = vmatmul.mubr.f32.gmra.mrb[0].mxu0 %v5955
        %v6093 = vpop.f32.mrb[0].mxu0
        %v6094 = vadd.f32 0.0, %v6093
        %v6095 = vpop.f32.mrb[0].mxu0
        %6096 = vmatprep.mubr.f32.mxu0 0.0
        %6097 = vmatmul.mubr.f32.gmra.mrb[0].mxu0 %v5956
        %v6098 = vpop.f32.mrb[0].mxu0
        %v6099 = vadd.f32 0.0, %v6098
        %v6100 = vpop.f32.mrb[0].mxu0
        %6101 = vdwg.mxu0
        %v6102 = vadd.f32 %v2060, %v6024
        %v6103 = vadd.f32 %v2065, %v6029
        %v6104 = vadd.f32 %v2070, %v6034
        %v6105 = vadd.f32 %v2075, %v6039
        %v6106 = vadd.f32 %v2080, %v6044
        %v6107 = vadd.f32 %v2085, %v6049
        %v6108 = vadd.f32 %v2090, %v6054
        %v6109 = vadd.f32 %v2095, %v6059
        %v6110 = vadd.f32 %v2100, %v6064
        %v6111 = vadd.f32 %v2105, %v6069
        %v6112 = vadd.f32 %v2110, %v6074
        %v6113 = vadd.f32 %v2115, %v6079
        %v6114 = vadd.f32 %v2120, %v6084
        %v6115 = vadd.f32 %v2125, %v6089
        %v6116 = vadd.f32 %v2130, %v6094
        %v6117 = vadd.f32 %v2135, %v6099
        %v6118 = vtanh.pop %v6102
        %v6119 = vtanh.pop %v6103
        %v6120 = vtanh.pop %v6104
        %v6121 = vtanh.pop %v6105
        %v6122 = vtanh.pop %v6106
        %v6123 = vtanh.pop %v6107
        %v6124 = vtanh.pop %v6108
        %v6125 = vtanh.pop %v6109
        %v6126 = vtanh.pop %v6110
        %v6127 = vtanh.pop %v6111
        %v6128 = vtanh.pop %v6112
        %v6129 = vtanh.pop %v6113
        %v6130 = vtanh.pop %v6114
        %v6131 = vtanh.pop %v6115
        %v6132 = vtanh.pop %v6116
        %v6133 = vtanh.pop %v6117
        %v6134 = vsub.f32 1.0, %v5798
        %v6135 = vsub.f32 1.0, %v5800
        %v6136 = vsub.f32 1.0, %v5802
        %v6137 = vsub.f32 1.0, %v5804
        %v6138 = vsub.f32 1.0, %v5806
        %v6139 = vsub.f32 1.0, %v5808
        %v6140 = vsub.f32 1.0, %v5810
        %v6141 = vsub.f32 1.0, %v5812
        %v6142 = vsub.f32 1.0, %v5814
        %v6143 = vsub.f32 1.0, %v5816
        %v6144 = vsub.f32 1.0, %v5818
        %v6145 = vsub.f32 1.0, %v5820
        %v6146 = vsub.f32 1.0, %v5822
        %v6147 = vsub.f32 1.0, %v5824
        %v6148 = vsub.f32 1.0, %v5826
        %v6149 = vsub.f32 1.0, %v5828
        %v6150 = vmul.f32 %v6134, %v5540
        %v6151 = vmul.f32 %v6135, %v5541
        %v6152 = vmul.f32 %v6136, %v5542
        %v6153 = vmul.f32 %v6137, %v5543
        %v6154 = vmul.f32 %v6138, %v5544
        %v6155 = vmul.f32 %v6139, %v5545
        %v6156 = vmul.f32 %v6140, %v5546
        %v6157 = vmul.f32 %v6141, %v5547
        %v6158 = vmul.f32 %v6142, %v5548
        %v6159 = vmul.f32 %v6143, %v5549
        %v6160 = vmul.f32 %v6144, %v5550
        %v6161 = vmul.f32 %v6145, %v5551
        %v6162 = vmul.f32 %v6146, %v5552
        %v6163 = vmul.f32 %v6147, %v5553
        %v6164 = vmul.f32 %v6148, %v5554
        %v6165 = vmul.f32 %v6149, %v5555
        %v6166 = vmul.f32 %v5798, %v6118
        %v6167 = vmul.f32 %v5800, %v6119
        %v6168 = vmul.f32 %v5802, %v6120
        %v6169 = vmul.f32 %v5804, %v6121
        %v6170 = vmul.f32 %v5806, %v6122
        %v6171 = vmul.f32 %v5808, %v6123
        %v6172 = vmul.f32 %v5810, %v6124
        %v6173 = vmul.f32 %v5812, %v6125
        %v6174 = vmul.f32 %v5814, %v6126
        %v6175 = vmul.f32 %v5816, %v6127
        %v6176 = vmul.f32 %v5818, %v6128
        %v6177 = vmul.f32 %v5820, %v6129
        %v6178 = vmul.f32 %v5822, %v6130
        %v6179 = vmul.f32 %v5824, %v6131
        %v6180 = vmul.f32 %v5826, %v6132
        %v6181 = vmul.f32 %v5828, %v6133
        %v6182 = vadd.f32 %v6150, %v6166
        %v6183 = vadd.f32 %v6151, %v6167
        %v6184 = vadd.f32 %v6152, %v6168
        %v6185 = vadd.f32 %v6153, %v6169
        %v6186 = vadd.f32 %v6154, %v6170
        %v6187 = vadd.f32 %v6155, %v6171
        %v6188 = vadd.f32 %v6156, %v6172
        %v6189 = vadd.f32 %v6157, %v6173
        %v6190 = vadd.f32 %v6158, %v6174
        %v6191 = vadd.f32 %v6159, %v6175
        %v6192 = vadd.f32 %v6160, %v6176
        %v6193 = vadd.f32 %v6161, %v6177
        %v6194 = vadd.f32 %v6162, %v6178
        %v6195 = vadd.f32 %v6163, %v6179
        %v6196 = vadd.f32 %v6164, %v6180
        %v6197 = vadd.f32 %v6165, %v6181
        %6198 = vmatprep.subr.mxu0 %v2299
        %6199 = vmatpush1.msra.mxu0 %v2298
        %6200 = vmatprep.subr.mxu0 %v2301
        %6201 = vmatpush1.msra.mxu0 %v2300
        %6202 = vmatprep.subr.mxu0 %v2303
        %6203 = vmatpush1.msra.mxu0 %v2302
        %6204 = vmatprep.subr.mxu0 %v2305
        %6205 = vmatpush1.msra.mxu0 %v2304
        %6206 = vmatprep.subr.mxu0 %v2307
        %6207 = vmatpush1.msra.mxu0 %v2306
        %6208 = vmatprep.subr.mxu0 %v2309
        %6209 = vmatpush1.msra.mxu0 %v2308
        %6210 = vmatprep.subr.mxu0 %v2311
        %6211 = vmatpush1.msra.mxu0 %v2310
        %6212 = vmatprep.subr.mxu0 %v2313
        %6213 = vmatpush1.msra.mxu0 %v2312
        %6214 = vmatprep.subr.mxu0 %v2315
        %6215 = vmatpush1.msra.mxu0 %v2314
        %6216 = vmatprep.subr.mxu0 %v2317
        %6217 = vmatpush1.msra.mxu0 %v2316
        %6218 = vmatprep.subr.mxu0 %v2319
        %6219 = vmatpush1.msra.mxu0 %v2318
        %6220 = vmatprep.subr.mxu0 %v2321
        %6221 = vmatpush1.msra.mxu0 %v2320
        %6222 = vmatprep.subr.mxu0 %v2323
        %6223 = vmatpush1.msra.mxu0 %v2322
        %6224 = vmatprep.subr.mxu0 %v2325
        %6225 = vmatpush1.msra.mxu0 %v2324
        %6226 = vmatprep.subr.mxu0 %v2327
        %6227 = vmatpush1.msra.mxu0 %v2326
        %6228 = vmatprep.subr.mxu0 %v2329
        %6229 = vmatpush1.msra.mxu0 %v2328
        %6230 = vmatprep.subr.mxu0 0.0
        %6231 = vmatpush1.msra.mxu0 0.0
        %6232 = vmatprep.subr.mxu0 0.0
        %6233 = vmatpush1.msra.mxu0 0.0
        %6234 = vmatprep.subr.mxu0 0.0
        %6235 = vmatpush1.msra.mxu0 0.0
        %6236 = vmatprep.subr.mxu0 0.0
        %6237 = vmatpush1.msra.mxu0 0.0
        %6238 = vmatprep.subr.mxu0 0.0
        %6239 = vmatpush1.msra.mxu0 0.0
        %6240 = vmatprep.subr.mxu0 0.0
        %6241 = vmatpush1.msra.mxu0 0.0
        %6242 = vmatprep.subr.mxu0 0.0
        %6243 = vmatpush1.msra.mxu0 0.0
        %6244 = vmatprep.subr.mxu0 0.0
        %6245 = vmatpush1.msra.mxu0 0.0
        %6246 = vmatprep.subr.mxu0 0.0
        %6247 = vmatpush1.msra.mxu0 0.0
        %6248 = vmatprep.subr.mxu0 0.0
        %6249 = vmatpush1.msra.mxu0 0.0
        %6250 = vmatprep.subr.mxu0 0.0
        %6251 = vmatpush1.msra.mxu0 0.0
        %6252 = vmatprep.subr.mxu0 0.0
        %6253 = vmatpush1.msra.mxu0 0.0
        %6254 = vmatprep.subr.mxu0 0.0
        %6255 = vmatpush1.msra.mxu0 0.0
        %6256 = vmatprep.subr.mxu0 0.0
        %6257 = vmatpush1.msra.mxu0 0.0
        %6258 = vmatprep.subr.mxu0 0.0
        %6259 = vmatpush1.msra.mxu0 0.0
        %6260 = vmatprep.subr.mxu0 0.0
        %6261 = vmatpush1.msra.mxu0 0.0
        %6262 = vmatprep.mubr.f32.mxu0 0.0
        %6263 = vmatmul.mubr.f32.gmra.mrb[0].mxu0 %v6182
        %v6264 = vpop.f32.mrb[0].mxu0
        %v6265 = vadd.f32 0.0, %v6264
        %v6266 = vpop.f32.mrb[0].mxu0
        %v6267 = vadd.f32 0.0, %v6266
        %6268 = vmatprep.mubr.f32.mxu0 0.0
        %6269 = vmatmul.mubr.f32.gmra.mrb[0].mxu0 %v6183
        %v6270 = vpop.f32.mrb[0].mxu0
        %v6271 = vadd.f32 0.0, %v6270
        %v6272 = vpop.f32.mrb[0].mxu0
        %v6273 = vadd.f32 0.0, %v6272
        %6274 = vmatprep.mubr.f32.mxu0 0.0
        %6275 = vmatmul.mubr.f32.gmra.mrb[0].mxu0 %v6184
        %v6276 = vpop.f32.mrb[0].mxu0
        %v6277 = vadd.f32 0.0, %v6276
        %v6278 = vpop.f32.mrb[0].mxu0
        %v6279 = vadd.f32 0.0, %v6278
        %6280 = vmatprep.mubr.f32.mxu0 0.0
        %6281 = vmatmul.mubr.f32.gmra.mrb[0].mxu0 %v6185
        %v6282 = vpop.f32.mrb[0].mxu0
        %v6283 = vadd.f32 0.0, %v6282
        %v6284 = vpop.f32.mrb[0].mxu0
        %v6285 = vadd.f32 0.0, %v6284
        %6286 = vmatprep.mubr.f32.mxu0 0.0
        %6287 = vmatmul.mubr.f32.gmra.mrb[0].mxu0 %v6186
        %v6288 = vpop.f32.mrb[0].mxu0
        %v6289 = vadd.f32 0.0, %v6288
        %v6290 = vpop.f32.mrb[0].mxu0
        %v6291 = vadd.f32 0.0, %v6290
        %6292 = vmatprep.mubr.f32.mxu0 0.0
        %6293 = vmatmul.mubr.f32.gmra.mrb[0].mxu0 %v6187
        %v6294 = vpop.f32.mrb[0].mxu0
        %v6295 = vadd.f32 0.0, %v6294
        %v6296 = vpop.f32.mrb[0].mxu0
        %v6297 = vadd.f32 0.0, %v6296
        %6298 = vmatprep.mubr.f32.mxu0 0.0
        %6299 = vmatmul.mubr.f32.gmra.mrb[0].mxu0 %v6188
        %v6300 = vpop.f32.mrb[0].mxu0
        %v6301 = vadd.f32 0.0, %v6300
        %v6302 = vpop.f32.mrb[0].mxu0
        %v6303 = vadd.f32 0.0, %v6302
        %6304 = vmatprep.mubr.f32.mxu0 0.0
        %6305 = vmatmul.mubr.f32.gmra.mrb[0].mxu0 %v6189
        %v6306 = vpop.f32.mrb[0].mxu0
        %v6307 = vadd.f32 0.0, %v6306
        %v6308 = vpop.f32.mrb[0].mxu0
        %v6309 = vadd.f32 0.0, %v6308
        %6310 = vmatprep.mubr.f32.mxu0 0.0
        %6311 = vmatmul.mubr.f32.gmra.mrb[0].mxu0 %v6190
        %v6312 = vpop.f32.mrb[0].mxu0
        %v6313 = vadd.f32 0.0, %v6312
        %v6314 = vpop.f32.mrb[0].mxu0
        %v6315 = vadd.f32 0.0, %v6314
        %6316 = vmatprep.mubr.f32.mxu0 0.0
        %6317 = vmatmul.mubr.f32.gmra.mrb[0].mxu0 %v6191
        %v6318 = vpop.f32.mrb[0].mxu0
        %v6319 = vadd.f32 0.0, %v6318
        %v6320 = vpop.f32.mrb[0].mxu0
        %v6321 = vadd.f32 0.0, %v6320
        %6322 = vmatprep.mubr.f32.mxu0 0.0
        %6323 = vmatmul.mubr.f32.gmra.mrb[0].mxu0 %v6192
        %v6324 = vpop.f32.mrb[0].mxu0
        %v6325 = vadd.f32 0.0, %v6324
        %v6326 = vpop.f32.mrb[0].mxu0
        %v6327 = vadd.f32 0.0, %v6326
        %6328 = vmatprep.mubr.f32.mxu0 0.0
        %6329 = vmatmul.mubr.f32.gmra.mrb[0].mxu0 %v6193
        %v6330 = vpop.f32.mrb[0].mxu0
        %v6331 = vadd.f32 0.0, %v6330
        %v6332 = vpop.f32.mrb[0].mxu0
        %v6333 = vadd.f32 0.0, %v6332
        %6334 = vmatprep.mubr.f32.mxu0 0.0
        %6335 = vmatmul.mubr.f32.gmra.mrb[0].mxu0 %v6194
        %v6336 = vpop.f32.mrb[0].mxu0
        %v6337 = vadd.f32 0.0, %v6336
        %v6338 = vpop.f32.mrb[0].mxu0
        %v6339 = vadd.f32 0.0, %v6338
        %6340 = vmatprep.mubr.f32.mxu0 0.0
        %6341 = vmatmul.mubr.f32.gmra.mrb[0].mxu0 %v6195
        %v6342 = vpop.f32.mrb[0].mxu0
        %v6343 = vadd.f32 0.0, %v6342
        %v6344 = vpop.f32.mrb[0].mxu0
        %v6345 = vadd.f32 0.0, %v6344
        %6346 = vmatprep.mubr.f32.mxu0 0.0
        %6347 = vmatmul.mubr.f32.gmra.mrb[0].mxu0 %v6196
        %v6348 = vpop.f32.mrb[0].mxu0
        %v6349 = vadd.f32 0.0, %v6348
        %v6350 = vpop.f32.mrb[0].mxu0
        %v6351 = vadd.f32 0.0, %v6350
        %6352 = vmatprep.mubr.f32.mxu0 0.0
        %6353 = vmatmul.mubr.f32.gmra.mrb[0].mxu0 %v6197
        %v6354 = vpop.f32.mrb[0].mxu0
        %v6355 = vadd.f32 0.0, %v6354
        %v6356 = vpop.f32.mrb[0].mxu0
        %v6357 = vadd.f32 0.0, %v6356
        %6358 = vdwg.mxu0
        %v6359 = vadd.f32 %v1403, %v6265
        %v6360 = vadd.f32 %v1409, %v6271
        %v6361 = vadd.f32 %v1415, %v6277
        %v6362 = vadd.f32 %v1421, %v6283
        %v6363 = vadd.f32 %v1427, %v6289
        %v6364 = vadd.f32 %v1433, %v6295
        %v6365 = vadd.f32 %v1439, %v6301
        %v6366 = vadd.f32 %v1445, %v6307
        %v6367 = vadd.f32 %v1451, %v6313
        %v6368 = vadd.f32 %v1457, %v6319
        %v6369 = vadd.f32 %v1463, %v6325
        %v6370 = vadd.f32 %v1469, %v6331
        %v6371 = vadd.f32 %v1475, %v6337
        %v6372 = vadd.f32 %v1481, %v6343
        %v6373 = vadd.f32 %v1487, %v6349
        %v6374 = vadd.f32 %v1493, %v6355
        %v6375 = vxor.u32 %v6359, 2147483648
        %v6376 = vxor.u32 %v6360, 2147483648
        %v6377 = vxor.u32 %v6361, 2147483648
        %v6378 = vxor.u32 %v6362, 2147483648
        %v6379 = vxor.u32 %v6363, 2147483648
        %v6380 = vxor.u32 %v6364, 2147483648
        %v6381 = vxor.u32 %v6365, 2147483648
        %v6382 = vxor.u32 %v6366, 2147483648
        %v6383 = vxor.u32 %v6367, 2147483648
        %v6384 = vxor.u32 %v6368, 2147483648
        %v6385 = vxor.u32 %v6369, 2147483648
        %v6386 = vxor.u32 %v6370, 2147483648
        %v6387 = vxor.u32 %v6371, 2147483648
        %v6388 = vxor.u32 %v6372, 2147483648
        %v6389 = vxor.u32 %v6373, 2147483648
        %v6390 = vxor.u32 %v6374, 2147483648
        %v6391 = vmul.f32 %v6375, 1.442695
        %v6392 = vpow.pop %v6391
        %v6393 = vmul.f32 %v6376, 1.442695
        %v6394 = vpow.pop %v6393
        %v6395 = vmul.f32 %v6377, 1.442695
        %v6396 = vpow.pop %v6395
        %v6397 = vmul.f32 %v6378, 1.442695
        %v6398 = vpow.pop %v6397
        %v6399 = vmul.f32 %v6379, 1.442695
        %v6400 = vpow.pop %v6399
        %v6401 = vmul.f32 %v6380, 1.442695
        %v6402 = vpow.pop %v6401
        %v6403 = vmul.f32 %v6381, 1.442695
        %v6404 = vpow.pop %v6403
        %v6405 = vmul.f32 %v6382, 1.442695
        %v6406 = vpow.pop %v6405
        %v6407 = vmul.f32 %v6383, 1.442695
        %v6408 = vpow.pop %v6407
        %v6409 = vmul.f32 %v6384, 1.442695
        %v6410 = vpow.pop %v6409
        %v6411 = vmul.f32 %v6385, 1.442695
        %v6412 = vpow.pop %v6411
        %v6413 = vmul.f32 %v6386, 1.442695
        %v6414 = vpow.pop %v6413
        %v6415 = vmul.f32 %v6387, 1.442695
        %v6416 = vpow.pop %v6415
        %v6417 = vmul.f32 %v6388, 1.442695
        %v6418 = vpow.pop %v6417
        %v6419 = vmul.f32 %v6389, 1.442695
        %v6420 = vpow.pop %v6419
        %v6421 = vmul.f32 %v6390, 1.442695
        %v6422 = vpow.pop %v6421
        %v6423 = vadd.f32 %v6392, 1.0
        %v6424 = vadd.f32 %v6394, 1.0
        %v6425 = vadd.f32 %v6396, 1.0
        %v6426 = vadd.f32 %v6398, 1.0
        %v6427 = vadd.f32 %v6400, 1.0
        %v6428 = vadd.f32 %v6402, 1.0
        %v6429 = vadd.f32 %v6404, 1.0
        %v6430 = vadd.f32 %v6406, 1.0
        %v6431 = vadd.f32 %v6408, 1.0
        %v6432 = vadd.f32 %v6410, 1.0
        %v6433 = vadd.f32 %v6412, 1.0
        %v6434 = vadd.f32 %v6414, 1.0
        %v6435 = vadd.f32 %v6416, 1.0
        %v6436 = vadd.f32 %v6418, 1.0
        %v6437 = vadd.f32 %v6420, 1.0
        %v6438 = vadd.f32 %v6422, 1.0
        %v6439 = vrcp.pop %v6423
        %v6440 = vmul.f32 1.0, %v6439
        %v6441 = vrcp.pop %v6424
        %v6442 = vmul.f32 1.0, %v6441
        %v6443 = vrcp.pop %v6425
        %v6444 = vmul.f32 1.0, %v6443
        %v6445 = vrcp.pop %v6426
        %v6446 = vmul.f32 1.0, %v6445
        %v6447 = vrcp.pop %v6427
        %v6448 = vmul.f32 1.0, %v6447
        %v6449 = vrcp.pop %v6428
        %v6450 = vmul.f32 1.0, %v6449
        %v6451 = vrcp.pop %v6429
        %v6452 = vmul.f32 1.0, %v6451
        %v6453 = vrcp.pop %v6430
        %v6454 = vmul.f32 1.0, %v6453
        %v6455 = vrcp.pop %v6431
        %v6456 = vmul.f32 1.0, %v6455
        %v6457 = vrcp.pop %v6432
        %v6458 = vmul.f32 1.0, %v6457
        %v6459 = vrcp.pop %v6433
        %v6460 = vmul.f32 1.0, %v6459
        %v6461 = vrcp.pop %v6434
        %v6462 = vmul.f32 1.0, %v6461
        %v6463 = vrcp.pop %v6435
        %v6464 = vmul.f32 1.0, %v6463
        %v6465 = vrcp.pop %v6436
        %v6466 = vmul.f32 1.0, %v6465
        %v6467 = vrcp.pop %v6437
        %v6468 = vmul.f32 1.0, %v6467
        %v6469 = vrcp.pop %v6438
        %v6470 = vmul.f32 1.0, %v6469
        %v6471 = vadd.f32 %v1405, %v6267
        %v6472 = vadd.f32 %v1411, %v6273
        %v6473 = vadd.f32 %v1417, %v6279
        %v6474 = vadd.f32 %v1423, %v6285
        %v6475 = vadd.f32 %v1429, %v6291
        %v6476 = vadd.f32 %v1435, %v6297
        %v6477 = vadd.f32 %v1441, %v6303
        %v6478 = vadd.f32 %v1447, %v6309
        %v6479 = vadd.f32 %v1453, %v6315
        %v6480 = vadd.f32 %v1459, %v6321
        %v6481 = vadd.f32 %v1465, %v6327
        %v6482 = vadd.f32 %v1471, %v6333
        %v6483 = vadd.f32 %v1477, %v6339
        %v6484 = vadd.f32 %v1483, %v6345
        %v6485 = vadd.f32 %v1489, %v6351
        %v6486 = vadd.f32 %v1495, %v6357
        %v6487 = vxor.u32 %v6471, 2147483648
        %v6488 = vxor.u32 %v6472, 2147483648
        %v6489 = vxor.u32 %v6473, 2147483648
        %v6490 = vxor.u32 %v6474, 2147483648
        %v6491 = vxor.u32 %v6475, 2147483648
        %v6492 = vxor.u32 %v6476, 2147483648
        %v6493 = vxor.u32 %v6477, 2147483648
        %v6494 = vxor.u32 %v6478, 2147483648
        %v6495 = vxor.u32 %v6479, 2147483648
        %v6496 = vxor.u32 %v6480, 2147483648
        %v6497 = vxor.u32 %v6481, 2147483648
        %v6498 = vxor.u32 %v6482, 2147483648
        %v6499 = vxor.u32 %v6483, 2147483648
        %v6500 = vxor.u32 %v6484, 2147483648
        %v6501 = vxor.u32 %v6485, 2147483648
        %v6502 = vxor.u32 %v6486, 2147483648
        %v6503 = vmul.f32 %v6487, 1.442695
        %v6504 = vpow.pop %v6503
        %v6505 = vmul.f32 %v6488, 1.442695
        %v6506 = vpow.pop %v6505
        %v6507 = vmul.f32 %v6489, 1.442695
        %v6508 = vpow.pop %v6507
        %v6509 = vmul.f32 %v6490, 1.442695
        %v6510 = vpow.pop %v6509
        %v6511 = vmul.f32 %v6491, 1.442695
        %v6512 = vpow.pop %v6511
        %v6513 = vmul.f32 %v6492, 1.442695
        %v6514 = vpow.pop %v6513
        %v6515 = vmul.f32 %v6493, 1.442695
        %v6516 = vpow.pop %v6515
        %v6517 = vmul.f32 %v6494, 1.442695
        %v6518 = vpow.pop %v6517
        %v6519 = vmul.f32 %v6495, 1.442695
        %v6520 = vpow.pop %v6519
        %v6521 = vmul.f32 %v6496, 1.442695
        %v6522 = vpow.pop %v6521
        %v6523 = vmul.f32 %v6497, 1.442695
        %v6524 = vpow.pop %v6523
        %v6525 = vmul.f32 %v6498, 1.442695
        %v6526 = vpow.pop %v6525
        %v6527 = vmul.f32 %v6499, 1.442695
        %v6528 = vpow.pop %v6527
        %v6529 = vmul.f32 %v6500, 1.442695
        %v6530 = vpow.pop %v6529
        %v6531 = vmul.f32 %v6501, 1.442695
        %v6532 = vpow.pop %v6531
        %v6533 = vmul.f32 %v6502, 1.442695
        %v6534 = vpow.pop %v6533
        %v6535 = vadd.f32 %v6504, 1.0
        %v6536 = vadd.f32 %v6506, 1.0
        %v6537 = vadd.f32 %v6508, 1.0
        %v6538 = vadd.f32 %v6510, 1.0
        %v6539 = vadd.f32 %v6512, 1.0
        %v6540 = vadd.f32 %v6514, 1.0
        %v6541 = vadd.f32 %v6516, 1.0
        %v6542 = vadd.f32 %v6518, 1.0
        %v6543 = vadd.f32 %v6520, 1.0
        %v6544 = vadd.f32 %v6522, 1.0
        %v6545 = vadd.f32 %v6524, 1.0
        %v6546 = vadd.f32 %v6526, 1.0
        %v6547 = vadd.f32 %v6528, 1.0
        %v6548 = vadd.f32 %v6530, 1.0
        %v6549 = vadd.f32 %v6532, 1.0
        %v6550 = vadd.f32 %v6534, 1.0
        %v6551 = vrcp.pop %v6535
        %v6552 = vmul.f32 1.0, %v6551
        %v6553 = vrcp.pop %v6536
        %v6554 = vmul.f32 1.0, %v6553
        %v6555 = vrcp.pop %v6537
        %v6556 = vmul.f32 1.0, %v6555
        %v6557 = vrcp.pop %v6538
        %v6558 = vmul.f32 1.0, %v6557
        %v6559 = vrcp.pop %v6539
        %v6560 = vmul.f32 1.0, %v6559
        %v6561 = vrcp.pop %v6540
        %v6562 = vmul.f32 1.0, %v6561
        %v6563 = vrcp.pop %v6541
        %v6564 = vmul.f32 1.0, %v6563
        %v6565 = vrcp.pop %v6542
        %v6566 = vmul.f32 1.0, %v6565
        %v6567 = vrcp.pop %v6543
        %v6568 = vmul.f32 1.0, %v6567
        %v6569 = vrcp.pop %v6544
        %v6570 = vmul.f32 1.0, %v6569
        %v6571 = vrcp.pop %v6545
        %v6572 = vmul.f32 1.0, %v6571
        %v6573 = vrcp.pop %v6546
        %v6574 = vmul.f32 1.0, %v6573
        %v6575 = vrcp.pop %v6547
        %v6576 = vmul.f32 1.0, %v6575
        %v6577 = vrcp.pop %v6548
        %v6578 = vmul.f32 1.0, %v6577
        %v6579 = vrcp.pop %v6549
        %v6580 = vmul.f32 1.0, %v6579
        %v6581 = vrcp.pop %v6550
        %v6582 = vmul.f32 1.0, %v6581
        %v6583 = vmul.f32 %v6552, %v6182
        %v6584 = vmul.f32 %v6554, %v6183
        %v6585 = vmul.f32 %v6556, %v6184
        %v6586 = vmul.f32 %v6558, %v6185
        %v6587 = vmul.f32 %v6560, %v6186
        %v6588 = vmul.f32 %v6562, %v6187
        %v6589 = vmul.f32 %v6564, %v6188
        %v6590 = vmul.f32 %v6566, %v6189
        %v6591 = vmul.f32 %v6568, %v6190
        %v6592 = vmul.f32 %v6570, %v6191
        %v6593 = vmul.f32 %v6572, %v6192
        %v6594 = vmul.f32 %v6574, %v6193
        %v6595 = vmul.f32 %v6576, %v6194
        %v6596 = vmul.f32 %v6578, %v6195
        %v6597 = vmul.f32 %v6580, %v6196
        %v6598 = vmul.f32 %v6582, %v6197
        %6599 = vmatprep.subr.mxu0 0.0
        %6600 = vmatpush1.msra.mxu0 %v2731
        %6601 = vmatprep.subr.mxu0 0.0
        %6602 = vmatpush1.msra.mxu0 %v2732
        %6603 = vmatprep.subr.mxu0 0.0
        %6604 = vmatpush1.msra.mxu0 %v2733
        %6605 = vmatprep.subr.mxu0 0.0
        %6606 = vmatpush1.msra.mxu0 %v2734
        %6607 = vmatprep.subr.mxu0 0.0
        %6608 = vmatpush1.msra.mxu0 %v2735
        %6609 = vmatprep.subr.mxu0 0.0
        %6610 = vmatpush1.msra.mxu0 %v2736
        %6611 = vmatprep.subr.mxu0 0.0
        %6612 = vmatpush1.msra.mxu0 %v2737
        %6613 = vmatprep.subr.mxu0 0.0
        %6614 = vmatpush1.msra.mxu0 %v2738
        %6615 = vmatprep.subr.mxu0 0.0
        %6616 = vmatpush1.msra.mxu0 %v2739
        %6617 = vmatprep.subr.mxu0 0.0
        %6618 = vmatpush1.msra.mxu0 %v2740
        %6619 = vmatprep.subr.mxu0 0.0
        %6620 = vmatpush1.msra.mxu0 %v2741
        %6621 = vmatprep.subr.mxu0 0.0
        %6622 = vmatpush1.msra.mxu0 %v2742
        %6623 = vmatprep.subr.mxu0 0.0
        %6624 = vmatpush1.msra.mxu0 %v2743
        %6625 = vmatprep.subr.mxu0 0.0
        %6626 = vmatpush1.msra.mxu0 %v2744
        %6627 = vmatprep.subr.mxu0 0.0
        %6628 = vmatpush1.msra.mxu0 %v2745
        %6629 = vmatprep.subr.mxu0 0.0
        %6630 = vmatpush1.msra.mxu0 %v2746
        %6631 = vmatprep.subr.mxu0 0.0
        %6632 = vmatpush1.msra.mxu0 0.0
        %6633 = vmatprep.subr.mxu0 0.0
        %6634 = vmatpush1.msra.mxu0 0.0
        %6635 = vmatprep.subr.mxu0 0.0
        %6636 = vmatpush1.msra.mxu0 0.0
        %6637 = vmatprep.subr.mxu0 0.0
        %6638 = vmatpush1.msra.mxu0 0.0
        %6639 = vmatprep.subr.mxu0 0.0
        %6640 = vmatpush1.msra.mxu0 0.0
        %6641 = vmatprep.subr.mxu0 0.0
        %6642 = vmatpush1.msra.mxu0 0.0
        %6643 = vmatprep.subr.mxu0 0.0
        %6644 = vmatpush1.msra.mxu0 0.0
        %6645 = vmatprep.subr.mxu0 0.0
        %6646 = vmatpush1.msra.mxu0 0.0
        %6647 = vmatprep.subr.mxu0 0.0
        %6648 = vmatpush1.msra.mxu0 0.0
        %6649 = vmatprep.subr.mxu0 0.0
        %6650 = vmatpush1.msra.mxu0 0.0
        %6651 = vmatprep.subr.mxu0 0.0
        %6652 = vmatpush1.msra.mxu0 0.0
        %6653 = vmatprep.subr.mxu0 0.0
        %6654 = vmatpush1.msra.mxu0 0.0
        %6655 = vmatprep.subr.mxu0 0.0
        %6656 = vmatpush1.msra.mxu0 0.0
        %6657 = vmatprep.subr.mxu0 0.0
        %6658 = vmatpush1.msra.mxu0 0.0
        %6659 = vmatprep.subr.mxu0 0.0
        %6660 = vmatpush1.msra.mxu0 0.0
        %6661 = vmatprep.subr.mxu0 0.0
        %6662 = vmatpush1.msra.mxu0 0.0
        %6663 = vmatprep.mubr.f32.mxu0 0.0
        %6664 = vmatmul.mubr.f32.gmra.mrb[0].mxu0 %v6583
        %v6665 = vpop.f32.mrb[0].mxu0
        %v6666 = vadd.f32 0.0, %v6665
        %v6667 = vpop.f32.mrb[0].mxu0
        %6668 = vmatprep.mubr.f32.mxu0 0.0
        %6669 = vmatmul.mubr.f32.gmra.mrb[0].mxu0 %v6584
        %v6670 = vpop.f32.mrb[0].mxu0
        %v6671 = vadd.f32 0.0, %v6670
        %v6672 = vpop.f32.mrb[0].mxu0
        %6673 = vmatprep.mubr.f32.mxu0 0.0
        %6674 = vmatmul.mubr.f32.gmra.mrb[0].mxu0 %v6585
        %v6675 = vpop.f32.mrb[0].mxu0
        %v6676 = vadd.f32 0.0, %v6675
        %v6677 = vpop.f32.mrb[0].mxu0
        %6678 = vmatprep.mubr.f32.mxu0 0.0
        %6679 = vmatmul.mubr.f32.gmra.mrb[0].mxu0 %v6586
        %v6680 = vpop.f32.mrb[0].mxu0
        %v6681 = vadd.f32 0.0, %v6680
        %v6682 = vpop.f32.mrb[0].mxu0
        %6683 = vmatprep.mubr.f32.mxu0 0.0
        %6684 = vmatmul.mubr.f32.gmra.mrb[0].mxu0 %v6587
        %v6685 = vpop.f32.mrb[0].mxu0
        %v6686 = vadd.f32 0.0, %v6685
        %v6687 = vpop.f32.mrb[0].mxu0
        %6688 = vmatprep.mubr.f32.mxu0 0.0
        %6689 = vmatmul.mubr.f32.gmra.mrb[0].mxu0 %v6588
        %v6690 = vpop.f32.mrb[0].mxu0
        %v6691 = vadd.f32 0.0, %v6690
        %v6692 = vpop.f32.mrb[0].mxu0
        %6693 = vmatprep.mubr.f32.mxu0 0.0
        %6694 = vmatmul.mubr.f32.gmra.mrb[0].mxu0 %v6589
        %v6695 = vpop.f32.mrb[0].mxu0
        %v6696 = vadd.f32 0.0, %v6695
        %v6697 = vpop.f32.mrb[0].mxu0
        %6698 = vmatprep.mubr.f32.mxu0 0.0
        %6699 = vmatmul.mubr.f32.gmra.mrb[0].mxu0 %v6590
        %v6700 = vpop.f32.mrb[0].mxu0
        %v6701 = vadd.f32 0.0, %v6700
        %v6702 = vpop.f32.mrb[0].mxu0
        %6703 = vmatprep.mubr.f32.mxu0 0.0
        %6704 = vmatmul.mubr.f32.gmra.mrb[0].mxu0 %v6591
        %v6705 = vpop.f32.mrb[0].mxu0
        %v6706 = vadd.f32 0.0, %v6705
        %v6707 = vpop.f32.mrb[0].mxu0
        %6708 = vmatprep.mubr.f32.mxu0 0.0
        %6709 = vmatmul.mubr.f32.gmra.mrb[0].mxu0 %v6592
        %v6710 = vpop.f32.mrb[0].mxu0
        %v6711 = vadd.f32 0.0, %v6710
        %v6712 = vpop.f32.mrb[0].mxu0
        %6713 = vmatprep.mubr.f32.mxu0 0.0
        %6714 = vmatmul.mubr.f32.gmra.mrb[0].mxu0 %v6593
        %v6715 = vpop.f32.mrb[0].mxu0
        %v6716 = vadd.f32 0.0, %v6715
        %v6717 = vpop.f32.mrb[0].mxu0
        %6718 = vmatprep.mubr.f32.mxu0 0.0
        %6719 = vmatmul.mubr.f32.gmra.mrb[0].mxu0 %v6594
        %v6720 = vpop.f32.mrb[0].mxu0
        %v6721 = vadd.f32 0.0, %v6720
        %v6722 = vpop.f32.mrb[0].mxu0
        %6723 = vmatprep.mubr.f32.mxu0 0.0
        %6724 = vmatmul.mubr.f32.gmra.mrb[0].mxu0 %v6595
        %v6725 = vpop.f32.mrb[0].mxu0
        %v6726 = vadd.f32 0.0, %v6725
        %v6727 = vpop.f32.mrb[0].mxu0
        %6728 = vmatprep.mubr.f32.mxu0 0.0
        %6729 = vmatmul.mubr.f32.gmra.mrb[0].mxu0 %v6596
        %v6730 = vpop.f32.mrb[0].mxu0
        %v6731 = vadd.f32 0.0, %v6730
        %v6732 = vpop.f32.mrb[0].mxu0
        %6733 = vmatprep.mubr.f32.mxu0 0.0
        %6734 = vmatmul.mubr.f32.gmra.mrb[0].mxu0 %v6597
        %v6735 = vpop.f32.mrb[0].mxu0
        %v6736 = vadd.f32 0.0, %v6735
        %v6737 = vpop.f32.mrb[0].mxu0
        %6738 = vmatprep.mubr.f32.mxu0 0.0
        %6739 = vmatmul.mubr.f32.gmra.mrb[0].mxu0 %v6598
        %v6740 = vpop.f32.mrb[0].mxu0
        %v6741 = vadd.f32 0.0, %v6740
        %v6742 = vpop.f32.mrb[0].mxu0
        %6743 = vdwg.mxu0
        %v6744 = vadd.f32 %v2140, %v6666
        %v6745 = vadd.f32 %v2145, %v6671
        %v6746 = vadd.f32 %v2150, %v6676
        %v6747 = vadd.f32 %v2155, %v6681
        %v6748 = vadd.f32 %v2160, %v6686
        %v6749 = vadd.f32 %v2165, %v6691
        %v6750 = vadd.f32 %v2170, %v6696
        %v6751 = vadd.f32 %v2175, %v6701
        %v6752 = vadd.f32 %v2180, %v6706
        %v6753 = vadd.f32 %v2185, %v6711
        %v6754 = vadd.f32 %v2190, %v6716
        %v6755 = vadd.f32 %v2195, %v6721
        %v6756 = vadd.f32 %v2200, %v6726
        %v6757 = vadd.f32 %v2205, %v6731
        %v6758 = vadd.f32 %v2210, %v6736
        %v6759 = vadd.f32 %v2215, %v6741
        %v6760 = vtanh.pop %v6744
        %v6761 = vtanh.pop %v6745
        %v6762 = vtanh.pop %v6746
        %v6763 = vtanh.pop %v6747
        %v6764 = vtanh.pop %v6748
        %v6765 = vtanh.pop %v6749
        %v6766 = vtanh.pop %v6750
        %v6767 = vtanh.pop %v6751
        %v6768 = vtanh.pop %v6752
        %v6769 = vtanh.pop %v6753
        %v6770 = vtanh.pop %v6754
        %v6771 = vtanh.pop %v6755
        %v6772 = vtanh.pop %v6756
        %v6773 = vtanh.pop %v6757
        %v6774 = vtanh.pop %v6758
        %v6775 = vtanh.pop %v6759
        %v6776 = vsub.f32 1.0, %v6440
        %v6777 = vsub.f32 1.0, %v6442
        %v6778 = vsub.f32 1.0, %v6444
        %v6779 = vsub.f32 1.0, %v6446
        %v6780 = vsub.f32 1.0, %v6448
        %v6781 = vsub.f32 1.0, %v6450
        %v6782 = vsub.f32 1.0, %v6452
        %v6783 = vsub.f32 1.0, %v6454
        %v6784 = vsub.f32 1.0, %v6456
        %v6785 = vsub.f32 1.0, %v6458
        %v6786 = vsub.f32 1.0, %v6460
        %v6787 = vsub.f32 1.0, %v6462
        %v6788 = vsub.f32 1.0, %v6464
        %v6789 = vsub.f32 1.0, %v6466
        %v6790 = vsub.f32 1.0, %v6468
        %v6791 = vsub.f32 1.0, %v6470
        %v6792 = vmul.f32 %v6776, %v6182
        %v6793 = vmul.f32 %v6777, %v6183
        %v6794 = vmul.f32 %v6778, %v6184
        %v6795 = vmul.f32 %v6779, %v6185
        %v6796 = vmul.f32 %v6780, %v6186
        %v6797 = vmul.f32 %v6781, %v6187
        %v6798 = vmul.f32 %v6782, %v6188
        %v6799 = vmul.f32 %v6783, %v6189
        %v6800 = vmul.f32 %v6784, %v6190
        %v6801 = vmul.f32 %v6785, %v6191
        %v6802 = vmul.f32 %v6786, %v6192
        %v6803 = vmul.f32 %v6787, %v6193
        %v6804 = vmul.f32 %v6788, %v6194
        %v6805 = vmul.f32 %v6789, %v6195
        %v6806 = vmul.f32 %v6790, %v6196
        %v6807 = vmul.f32 %v6791, %v6197
        %v6808 = vmul.f32 %v6440, %v6760
        %v6809 = vmul.f32 %v6442, %v6761
        %v6810 = vmul.f32 %v6444, %v6762
        %v6811 = vmul.f32 %v6446, %v6763
        %v6812 = vmul.f32 %v6448, %v6764
        %v6813 = vmul.f32 %v6450, %v6765
        %v6814 = vmul.f32 %v6452, %v6766
        %v6815 = vmul.f32 %v6454, %v6767
        %v6816 = vmul.f32 %v6456, %v6768
        %v6817 = vmul.f32 %v6458, %v6769
        %v6818 = vmul.f32 %v6460, %v6770
        %v6819 = vmul.f32 %v6462, %v6771
        %v6820 = vmul.f32 %v6464, %v6772
        %v6821 = vmul.f32 %v6466, %v6773
        %v6822 = vmul.f32 %v6468, %v6774
        %v6823 = vmul.f32 %v6470, %v6775
        %v6824 = vadd.f32 %v6792, %v6808
        %v6825 = vadd.f32 %v6793, %v6809
        %v6826 = vadd.f32 %v6794, %v6810
        %v6827 = vadd.f32 %v6795, %v6811
        %v6828 = vadd.f32 %v6796, %v6812
        %v6829 = vadd.f32 %v6797, %v6813
        %v6830 = vadd.f32 %v6798, %v6814
        %v6831 = vadd.f32 %v6799, %v6815
        %v6832 = vadd.f32 %v6800, %v6816
        %v6833 = vadd.f32 %v6801, %v6817
        %v6834 = vadd.f32 %v6802, %v6818
        %v6835 = vadd.f32 %v6803, %v6819
        %v6836 = vadd.f32 %v6804, %v6820
        %v6837 = vadd.f32 %v6805, %v6821
        %v6838 = vadd.f32 %v6806, %v6822
        %v6839 = vadd.f32 %v6807, %v6823
        %6840 = vmatprep.subr.mxu0 %v2299
        %6841 = vmatpush1.msra.mxu0 %v2298
        %6842 = vmatprep.subr.mxu0 %v2301
        %6843 = vmatpush1.msra.mxu0 %v2300
        %6844 = vmatprep.subr.mxu0 %v2303
        %6845 = vmatpush1.msra.mxu0 %v2302
        %6846 = vmatprep.subr.mxu0 %v2305
        %6847 = vmatpush1.msra.mxu0 %v2304
        %6848 = vmatprep.subr.mxu0 %v2307
        %6849 = vmatpush1.msra.mxu0 %v2306
        %6850 = vmatprep.subr.mxu0 %v2309
        %6851 = vmatpush1.msra.mxu0 %v2308
        %6852 = vmatprep.subr.mxu0 %v2311
        %6853 = vmatpush1.msra.mxu0 %v2310
        %6854 = vmatprep.subr.mxu0 %v2313
        %6855 = vmatpush1.msra.mxu0 %v2312
        %6856 = vmatprep.subr.mxu0 %v2315
        %6857 = vmatpush1.msra.mxu0 %v2314
        %6858 = vmatprep.subr.mxu0 %v2317
        %6859 = vmatpush1.msra.mxu0 %v2316
        %6860 = vmatprep.subr.mxu0 %v2319
        %6861 = vmatpush1.msra.mxu0 %v2318
        %6862 = vmatprep.subr.mxu0 %v2321
        %6863 = vmatpush1.msra.mxu0 %v2320
        %6864 = vmatprep.subr.mxu0 %v2323
        %6865 = vmatpush1.msra.mxu0 %v2322
        %6866 = vmatprep.subr.mxu0 %v2325
        %6867 = vmatpush1.msra.mxu0 %v2324
        %6868 = vmatprep.subr.mxu0 %v2327
        %6869 = vmatpush1.msra.mxu0 %v2326
        %6870 = vmatprep.subr.mxu0 %v2329
        %6871 = vmatpush1.msra.mxu0 %v2328
        %6872 = vmatprep.subr.mxu0 0.0
        %6873 = vmatpush1.msra.mxu0 0.0
        %6874 = vmatprep.subr.mxu0 0.0
        %6875 = vmatpush1.msra.mxu0 0.0
        %6876 = vmatprep.subr.mxu0 0.0
        %6877 = vmatpush1.msra.mxu0 0.0
        %6878 = vmatprep.subr.mxu0 0.0
        %6879 = vmatpush1.msra.mxu0 0.0
        %6880 = vmatprep.subr.mxu0 0.0
        %6881 = vmatpush1.msra.mxu0 0.0
        %6882 = vmatprep.subr.mxu0 0.0
        %6883 = vmatpush1.msra.mxu0 0.0
        %6884 = vmatprep.subr.mxu0 0.0
        %6885 = vmatpush1.msra.mxu0 0.0
        %6886 = vmatprep.subr.mxu0 0.0
        %6887 = vmatpush1.msra.mxu0 0.0
        %6888 = vmatprep.subr.mxu0 0.0
        %6889 = vmatpush1.msra.mxu0 0.0
        %6890 = vmatprep.subr.mxu0 0.0
        %6891 = vmatpush1.msra.mxu0 0.0
        %6892 = vmatprep.subr.mxu0 0.0
        %6893 = vmatpush1.msra.mxu0 0.0
        %6894 = vmatprep.subr.mxu0 0.0
        %6895 = vmatpush1.msra.mxu0 0.0
        %6896 = vmatprep.subr.mxu0 0.0
        %6897 = vmatpush1.msra.mxu0 0.0
        %6898 = vmatprep.subr.mxu0 0.0
        %6899 = vmatpush1.msra.mxu0 0.0
        %6900 = vmatprep.subr.mxu0 0.0
        %6901 = vmatpush1.msra.mxu0 0.0
        %6902 = vmatprep.subr.mxu0 0.0
        %6903 = vmatpush1.msra.mxu0 0.0
        %6904 = vmatprep.mubr.f32.mxu0 0.0
        %6905 = vmatmul.mubr.f32.gmra.mrb[0].mxu0 %v6824
        %v6906 = vpop.f32.mrb[0].mxu0
        %v6907 = vadd.f32 0.0, %v6906
        %v6908 = vpop.f32.mrb[0].mxu0
        %v6909 = vadd.f32 0.0, %v6908
        %6910 = vmatprep.mubr.f32.mxu0 0.0
        %6911 = vmatmul.mubr.f32.gmra.mrb[0].mxu0 %v6825
        %v6912 = vpop.f32.mrb[0].mxu0
        %v6913 = vadd.f32 0.0, %v6912
        %v6914 = vpop.f32.mrb[0].mxu0
        %v6915 = vadd.f32 0.0, %v6914
        %6916 = vmatprep.mubr.f32.mxu0 0.0
        %6917 = vmatmul.mubr.f32.gmra.mrb[0].mxu0 %v6826
        %v6918 = vpop.f32.mrb[0].mxu0
        %v6919 = vadd.f32 0.0, %v6918
        %v6920 = vpop.f32.mrb[0].mxu0
        %v6921 = vadd.f32 0.0, %v6920
        %6922 = vmatprep.mubr.f32.mxu0 0.0
        %6923 = vmatmul.mubr.f32.gmra.mrb[0].mxu0 %v6827
        %v6924 = vpop.f32.mrb[0].mxu0
        %v6925 = vadd.f32 0.0, %v6924
        %v6926 = vpop.f32.mrb[0].mxu0
        %v6927 = vadd.f32 0.0, %v6926
        %6928 = vmatprep.mubr.f32.mxu0 0.0
        %6929 = vmatmul.mubr.f32.gmra.mrb[0].mxu0 %v6828
        %v6930 = vpop.f32.mrb[0].mxu0
        %v6931 = vadd.f32 0.0, %v6930
        %v6932 = vpop.f32.mrb[0].mxu0
        %v6933 = vadd.f32 0.0, %v6932
        %6934 = vmatprep.mubr.f32.mxu0 0.0
        %6935 = vmatmul.mubr.f32.gmra.mrb[0].mxu0 %v6829
        %v6936 = vpop.f32.mrb[0].mxu0
        %v6937 = vadd.f32 0.0, %v6936
        %v6938 = vpop.f32.mrb[0].mxu0
        %v6939 = vadd.f32 0.0, %v6938
        %6940 = vmatprep.mubr.f32.mxu0 0.0
        %6941 = vmatmul.mubr.f32.gmra.mrb[0].mxu0 %v6830
        %v6942 = vpop.f32.mrb[0].mxu0
        %v6943 = vadd.f32 0.0, %v6942
        %v6944 = vpop.f32.mrb[0].mxu0
        %v6945 = vadd.f32 0.0, %v6944
        %6946 = vmatprep.mubr.f32.mxu0 0.0
        %6947 = vmatmul.mubr.f32.gmra.mrb[0].mxu0 %v6831
        %v6948 = vpop.f32.mrb[0].mxu0
        %v6949 = vadd.f32 0.0, %v6948
        %v6950 = vpop.f32.mrb[0].mxu0
        %v6951 = vadd.f32 0.0, %v6950
        %6952 = vmatprep.mubr.f32.mxu0 0.0
        %6953 = vmatmul.mubr.f32.gmra.mrb[0].mxu0 %v6832
        %v6954 = vpop.f32.mrb[0].mxu0
        %v6955 = vadd.f32 0.0, %v6954
        %v6956 = vpop.f32.mrb[0].mxu0
        %v6957 = vadd.f32 0.0, %v6956
        %6958 = vmatprep.mubr.f32.mxu0 0.0
        %6959 = vmatmul.mubr.f32.gmra.mrb[0].mxu0 %v6833
        %v6960 = vpop.f32.mrb[0].mxu0
        %v6961 = vadd.f32 0.0, %v6960
        %v6962 = vpop.f32.mrb[0].mxu0
        %v6963 = vadd.f32 0.0, %v6962
        %6964 = vmatprep.mubr.f32.mxu0 0.0
        %6965 = vmatmul.mubr.f32.gmra.mrb[0].mxu0 %v6834
        %v6966 = vpop.f32.mrb[0].mxu0
        %v6967 = vadd.f32 0.0, %v6966
        %v6968 = vpop.f32.mrb[0].mxu0
        %v6969 = vadd.f32 0.0, %v6968
        %6970 = vmatprep.mubr.f32.mxu0 0.0
        %6971 = vmatmul.mubr.f32.gmra.mrb[0].mxu0 %v6835
        %v6972 = vpop.f32.mrb[0].mxu0
        %v6973 = vadd.f32 0.0, %v6972
        %v6974 = vpop.f32.mrb[0].mxu0
        %v6975 = vadd.f32 0.0, %v6974
        %6976 = vmatprep.mubr.f32.mxu0 0.0
        %6977 = vmatmul.mubr.f32.gmra.mrb[0].mxu0 %v6836
        %v6978 = vpop.f32.mrb[0].mxu0
        %v6979 = vadd.f32 0.0, %v6978
        %v6980 = vpop.f32.mrb[0].mxu0
        %v6981 = vadd.f32 0.0, %v6980
        %6982 = vmatprep.mubr.f32.mxu0 0.0
        %6983 = vmatmul.mubr.f32.gmra.mrb[0].mxu0 %v6837
        %v6984 = vpop.f32.mrb[0].mxu0
        %v6985 = vadd.f32 0.0, %v6984
        %v6986 = vpop.f32.mrb[0].mxu0
        %v6987 = vadd.f32 0.0, %v6986
        %6988 = vmatprep.mubr.f32.mxu0 0.0
        %6989 = vmatmul.mubr.f32.gmra.mrb[0].mxu0 %v6838
        %v6990 = vpop.f32.mrb[0].mxu0
        %v6991 = vadd.f32 0.0, %v6990
        %v6992 = vpop.f32.mrb[0].mxu0
        %v6993 = vadd.f32 0.0, %v6992
        %6994 = vmatprep.mubr.f32.mxu0 0.0
        %6995 = vmatmul.mubr.f32.gmra.mrb[0].mxu0 %v6839
        %v6996 = vpop.f32.mrb[0].mxu0
        %v6997 = vadd.f32 0.0, %v6996
        %v6998 = vpop.f32.mrb[0].mxu0
        %v6999 = vadd.f32 0.0, %v6998
        %7000 = vdwg.mxu0
        %v7001 = vadd.f32 %v1499, %v6907
        %v7002 = vadd.f32 %v1505, %v6913
        %v7003 = vadd.f32 %v1511, %v6919
        %v7004 = vadd.f32 %v1517, %v6925
        %v7005 = vadd.f32 %v1523, %v6931
        %v7006 = vadd.f32 %v1529, %v6937
        %v7007 = vadd.f32 %v1535, %v6943
        %v7008 = vadd.f32 %v1541, %v6949
        %v7009 = vadd.f32 %v1547, %v6955
        %v7010 = vadd.f32 %v1553, %v6961
        %v7011 = vadd.f32 %v1559, %v6967
        %v7012 = vadd.f32 %v1565, %v6973
        %v7013 = vadd.f32 %v1571, %v6979
        %v7014 = vadd.f32 %v1577, %v6985
        %v7015 = vadd.f32 %v1583, %v6991
        %v7016 = vadd.f32 %v1589, %v6997
        %v7017 = vxor.u32 %v7001, 2147483648
        %v7018 = vxor.u32 %v7002, 2147483648
        %v7019 = vxor.u32 %v7003, 2147483648
        %v7020 = vxor.u32 %v7004, 2147483648
        %v7021 = vxor.u32 %v7005, 2147483648
        %v7022 = vxor.u32 %v7006, 2147483648
        %v7023 = vxor.u32 %v7007, 2147483648
        %v7024 = vxor.u32 %v7008, 2147483648
        %v7025 = vxor.u32 %v7009, 2147483648
        %v7026 = vxor.u32 %v7010, 2147483648
        %v7027 = vxor.u32 %v7011, 2147483648
        %v7028 = vxor.u32 %v7012, 2147483648
        %v7029 = vxor.u32 %v7013, 2147483648
        %v7030 = vxor.u32 %v7014, 2147483648
        %v7031 = vxor.u32 %v7015, 2147483648
        %v7032 = vxor.u32 %v7016, 2147483648
        %v7033 = vmul.f32 %v7017, 1.442695
        %v7034 = vpow.pop %v7033
        %v7035 = vmul.f32 %v7018, 1.442695
        %v7036 = vpow.pop %v7035
        %v7037 = vmul.f32 %v7019, 1.442695
        %v7038 = vpow.pop %v7037
        %v7039 = vmul.f32 %v7020, 1.442695
        %v7040 = vpow.pop %v7039
        %v7041 = vmul.f32 %v7021, 1.442695
        %v7042 = vpow.pop %v7041
        %v7043 = vmul.f32 %v7022, 1.442695
        %v7044 = vpow.pop %v7043
        %v7045 = vmul.f32 %v7023, 1.442695
        %v7046 = vpow.pop %v7045
        %v7047 = vmul.f32 %v7024, 1.442695
        %v7048 = vpow.pop %v7047
        %v7049 = vmul.f32 %v7025, 1.442695
        %v7050 = vpow.pop %v7049
        %v7051 = vmul.f32 %v7026, 1.442695
        %v7052 = vpow.pop %v7051
        %v7053 = vmul.f32 %v7027, 1.442695
        %v7054 = vpow.pop %v7053
        %v7055 = vmul.f32 %v7028, 1.442695
        %v7056 = vpow.pop %v7055
        %v7057 = vmul.f32 %v7029, 1.442695
        %v7058 = vpow.pop %v7057
        %v7059 = vmul.f32 %v7030, 1.442695
        %v7060 = vpow.pop %v7059
        %v7061 = vmul.f32 %v7031, 1.442695
        %v7062 = vpow.pop %v7061
        %v7063 = vmul.f32 %v7032, 1.442695
        %v7064 = vpow.pop %v7063
        %v7065 = vadd.f32 %v7034, 1.0
        %v7066 = vadd.f32 %v7036, 1.0
        %v7067 = vadd.f32 %v7038, 1.0
        %v7068 = vadd.f32 %v7040, 1.0
        %v7069 = vadd.f32 %v7042, 1.0
        %v7070 = vadd.f32 %v7044, 1.0
        %v7071 = vadd.f32 %v7046, 1.0
        %v7072 = vadd.f32 %v7048, 1.0
        %v7073 = vadd.f32 %v7050, 1.0
        %v7074 = vadd.f32 %v7052, 1.0
        %v7075 = vadd.f32 %v7054, 1.0
        %v7076 = vadd.f32 %v7056, 1.0
        %v7077 = vadd.f32 %v7058, 1.0
        %v7078 = vadd.f32 %v7060, 1.0
        %v7079 = vadd.f32 %v7062, 1.0
        %v7080 = vadd.f32 %v7064, 1.0
        %v7081 = vrcp.pop %v7065
        %v7082 = vmul.f32 1.0, %v7081
        %v7083 = vrcp.pop %v7066
        %v7084 = vmul.f32 1.0, %v7083
        %v7085 = vrcp.pop %v7067
        %v7086 = vmul.f32 1.0, %v7085
        %v7087 = vrcp.pop %v7068
        %v7088 = vmul.f32 1.0, %v7087
        %v7089 = vrcp.pop %v7069
        %v7090 = vmul.f32 1.0, %v7089
        %v7091 = vrcp.pop %v7070
        %v7092 = vmul.f32 1.0, %v7091
        %v7093 = vrcp.pop %v7071
        %v7094 = vmul.f32 1.0, %v7093
        %v7095 = vrcp.pop %v7072
        %v7096 = vmul.f32 1.0, %v7095
        %v7097 = vrcp.pop %v7073
        %v7098 = vmul.f32 1.0, %v7097
        %v7099 = vrcp.pop %v7074
        %v7100 = vmul.f32 1.0, %v7099
        %v7101 = vrcp.pop %v7075
        %v7102 = vmul.f32 1.0, %v7101
        %v7103 = vrcp.pop %v7076
        %v7104 = vmul.f32 1.0, %v7103
        %v7105 = vrcp.pop %v7077
        %v7106 = vmul.f32 1.0, %v7105
        %v7107 = vrcp.pop %v7078
        %v7108 = vmul.f32 1.0, %v7107
        %v7109 = vrcp.pop %v7079
        %v7110 = vmul.f32 1.0, %v7109
        %v7111 = vrcp.pop %v7080
        %v7112 = vmul.f32 1.0, %v7111
        %v7113 = vadd.f32 %v1501, %v6909
        %v7114 = vadd.f32 %v1507, %v6915
        %v7115 = vadd.f32 %v1513, %v6921
        %v7116 = vadd.f32 %v1519, %v6927
        %v7117 = vadd.f32 %v1525, %v6933
        %v7118 = vadd.f32 %v1531, %v6939
        %v7119 = vadd.f32 %v1537, %v6945
        %v7120 = vadd.f32 %v1543, %v6951
        %v7121 = vadd.f32 %v1549, %v6957
        %v7122 = vadd.f32 %v1555, %v6963
        %v7123 = vadd.f32 %v1561, %v6969
        %v7124 = vadd.f32 %v1567, %v6975
        %v7125 = vadd.f32 %v1573, %v6981
        %v7126 = vadd.f32 %v1579, %v6987
        %v7127 = vadd.f32 %v1585, %v6993
        %v7128 = vadd.f32 %v1591, %v6999
        %v7129 = vxor.u32 %v7113, 2147483648
        %v7130 = vxor.u32 %v7114, 2147483648
        %v7131 = vxor.u32 %v7115, 2147483648
        %v7132 = vxor.u32 %v7116, 2147483648
        %v7133 = vxor.u32 %v7117, 2147483648
        %v7134 = vxor.u32 %v7118, 2147483648
        %v7135 = vxor.u32 %v7119, 2147483648
        %v7136 = vxor.u32 %v7120, 2147483648
        %v7137 = vxor.u32 %v7121, 2147483648
        %v7138 = vxor.u32 %v7122, 2147483648
        %v7139 = vxor.u32 %v7123, 2147483648
        %v7140 = vxor.u32 %v7124, 2147483648
        %v7141 = vxor.u32 %v7125, 2147483648
        %v7142 = vxor.u32 %v7126, 2147483648
        %v7143 = vxor.u32 %v7127, 2147483648
        %v7144 = vxor.u32 %v7128, 2147483648
        %v7145 = vmul.f32 %v7129, 1.442695
        %v7146 = vpow.pop %v7145
        %v7147 = vmul.f32 %v7130, 1.442695
        %v7148 = vpow.pop %v7147
        %v7149 = vmul.f32 %v7131, 1.442695
        %v7150 = vpow.pop %v7149
        %v7151 = vmul.f32 %v7132, 1.442695
        %v7152 = vpow.pop %v7151
        %v7153 = vmul.f32 %v7133, 1.442695
        %v7154 = vpow.pop %v7153
        %v7155 = vmul.f32 %v7134, 1.442695
        %v7156 = vpow.pop %v7155
        %v7157 = vmul.f32 %v7135, 1.442695
        %v7158 = vpow.pop %v7157
        %v7159 = vmul.f32 %v7136, 1.442695
        %v7160 = vpow.pop %v7159
        %v7161 = vmul.f32 %v7137, 1.442695
        %v7162 = vpow.pop %v7161
        %v7163 = vmul.f32 %v7138, 1.442695
        %v7164 = vpow.pop %v7163
        %v7165 = vmul.f32 %v7139, 1.442695
        %v7166 = vpow.pop %v7165
        %v7167 = vmul.f32 %v7140, 1.442695
        %v7168 = vpow.pop %v7167
        %v7169 = vmul.f32 %v7141, 1.442695
        %v7170 = vpow.pop %v7169
        %v7171 = vmul.f32 %v7142, 1.442695
        %v7172 = vpow.pop %v7171
        %v7173 = vmul.f32 %v7143, 1.442695
        %v7174 = vpow.pop %v7173
        %v7175 = vmul.f32 %v7144, 1.442695
        %v7176 = vpow.pop %v7175
        %v7177 = vadd.f32 %v7146, 1.0
        %v7178 = vadd.f32 %v7148, 1.0
        %v7179 = vadd.f32 %v7150, 1.0
        %v7180 = vadd.f32 %v7152, 1.0
        %v7181 = vadd.f32 %v7154, 1.0
        %v7182 = vadd.f32 %v7156, 1.0
        %v7183 = vadd.f32 %v7158, 1.0
        %v7184 = vadd.f32 %v7160, 1.0
        %v7185 = vadd.f32 %v7162, 1.0
        %v7186 = vadd.f32 %v7164, 1.0
        %v7187 = vadd.f32 %v7166, 1.0
        %v7188 = vadd.f32 %v7168, 1.0
        %v7189 = vadd.f32 %v7170, 1.0
        %v7190 = vadd.f32 %v7172, 1.0
        %v7191 = vadd.f32 %v7174, 1.0
        %v7192 = vadd.f32 %v7176, 1.0
        %v7193 = vrcp.pop %v7177
        %v7194 = vmul.f32 1.0, %v7193
        %v7195 = vrcp.pop %v7178
        %v7196 = vmul.f32 1.0, %v7195
        %v7197 = vrcp.pop %v7179
        %v7198 = vmul.f32 1.0, %v7197
        %v7199 = vrcp.pop %v7180
        %v7200 = vmul.f32 1.0, %v7199
        %v7201 = vrcp.pop %v7181
        %v7202 = vmul.f32 1.0, %v7201
        %v7203 = vrcp.pop %v7182
        %v7204 = vmul.f32 1.0, %v7203
        %v7205 = vrcp.pop %v7183
        %v7206 = vmul.f32 1.0, %v7205
        %v7207 = vrcp.pop %v7184
        %v7208 = vmul.f32 1.0, %v7207
        %v7209 = vrcp.pop %v7185
        %v7210 = vmul.f32 1.0, %v7209
        %v7211 = vrcp.pop %v7186
        %v7212 = vmul.f32 1.0, %v7211
        %v7213 = vrcp.pop %v7187
        %v7214 = vmul.f32 1.0, %v7213
        %v7215 = vrcp.pop %v7188
        %v7216 = vmul.f32 1.0, %v7215
        %v7217 = vrcp.pop %v7189
        %v7218 = vmul.f32 1.0, %v7217
        %v7219 = vrcp.pop %v7190
        %v7220 = vmul.f32 1.0, %v7219
        %v7221 = vrcp.pop %v7191
        %v7222 = vmul.f32 1.0, %v7221
        %v7223 = vrcp.pop %v7192
        %v7224 = vmul.f32 1.0, %v7223
        %v7225 = vmul.f32 %v7194, %v6824
        %v7226 = vmul.f32 %v7196, %v6825
        %v7227 = vmul.f32 %v7198, %v6826
        %v7228 = vmul.f32 %v7200, %v6827
        %v7229 = vmul.f32 %v7202, %v6828
        %v7230 = vmul.f32 %v7204, %v6829
        %v7231 = vmul.f32 %v7206, %v6830
        %v7232 = vmul.f32 %v7208, %v6831
        %v7233 = vmul.f32 %v7210, %v6832
        %v7234 = vmul.f32 %v7212, %v6833
        %v7235 = vmul.f32 %v7214, %v6834
        %v7236 = vmul.f32 %v7216, %v6835
        %v7237 = vmul.f32 %v7218, %v6836
        %v7238 = vmul.f32 %v7220, %v6837
        %v7239 = vmul.f32 %v7222, %v6838
        %v7240 = vmul.f32 %v7224, %v6839
        %7241 = vmatprep.subr.mxu0 0.0
        %7242 = vmatpush1.msra.mxu0 %v2731
        %7243 = vmatprep.subr.mxu0 0.0
        %7244 = vmatpush1.msra.mxu0 %v2732
        %7245 = vmatprep.subr.mxu0 0.0
        %7246 = vmatpush1.msra.mxu0 %v2733
        %7247 = vmatprep.subr.mxu0 0.0
        %7248 = vmatpush1.msra.mxu0 %v2734
        %7249 = vmatprep.subr.mxu0 0.0
        %7250 = vmatpush1.msra.mxu0 %v2735
        %7251 = vmatprep.subr.mxu0 0.0
        %7252 = vmatpush1.msra.mxu0 %v2736
        %7253 = vmatprep.subr.mxu0 0.0
        %7254 = vmatpush1.msra.mxu0 %v2737
        %7255 = vmatprep.subr.mxu0 0.0
        %7256 = vmatpush1.msra.mxu0 %v2738
        %7257 = vmatprep.subr.mxu0 0.0
        %7258 = vmatpush1.msra.mxu0 %v2739
        %7259 = vmatprep.subr.mxu0 0.0
        %7260 = vmatpush1.msra.mxu0 %v2740
        %7261 = vmatprep.subr.mxu0 0.0
        %7262 = vmatpush1.msra.mxu0 %v2741
        %7263 = vmatprep.subr.mxu0 0.0
        %7264 = vmatpush1.msra.mxu0 %v2742
        %7265 = vmatprep.subr.mxu0 0.0
        %7266 = vmatpush1.msra.mxu0 %v2743
        %7267 = vmatprep.subr.mxu0 0.0
        %7268 = vmatpush1.msra.mxu0 %v2744
        %7269 = vmatprep.subr.mxu0 0.0
        %7270 = vmatpush1.msra.mxu0 %v2745
        %7271 = vmatprep.subr.mxu0 0.0
        %7272 = vmatpush1.msra.mxu0 %v2746
        %7273 = vmatprep.subr.mxu0 0.0
        %7274 = vmatpush1.msra.mxu0 0.0
        %7275 = vmatprep.subr.mxu0 0.0
        %7276 = vmatpush1.msra.mxu0 0.0
        %7277 = vmatprep.subr.mxu0 0.0
        %7278 = vmatpush1.msra.mxu0 0.0
        %7279 = vmatprep.subr.mxu0 0.0
        %7280 = vmatpush1.msra.mxu0 0.0
        %7281 = vmatprep.subr.mxu0 0.0
        %7282 = vmatpush1.msra.mxu0 0.0
        %7283 = vmatprep.subr.mxu0 0.0
        %7284 = vmatpush1.msra.mxu0 0.0
        %7285 = vmatprep.subr.mxu0 0.0
        %7286 = vmatpush1.msra.mxu0 0.0
        %7287 = vmatprep.subr.mxu0 0.0
        %7288 = vmatpush1.msra.mxu0 0.0
        %7289 = vmatprep.subr.mxu0 0.0
        %7290 = vmatpush1.msra.mxu0 0.0
        %7291 = vmatprep.subr.mxu0 0.0
        %7292 = vmatpush1.msra.mxu0 0.0
        %7293 = vmatprep.subr.mxu0 0.0
        %7294 = vmatpush1.msra.mxu0 0.0
        %7295 = vmatprep.subr.mxu0 0.0
        %7296 = vmatpush1.msra.mxu0 0.0
        %7297 = vmatprep.subr.mxu0 0.0
        %7298 = vmatpush1.msra.mxu0 0.0
        %7299 = vmatprep.subr.mxu0 0.0
        %7300 = vmatpush1.msra.mxu0 0.0
        %7301 = vmatprep.subr.mxu0 0.0
        %7302 = vmatpush1.msra.mxu0 0.0
        %7303 = vmatprep.subr.mxu0 0.0
        %7304 = vmatpush1.msra.mxu0 0.0
        %7305 = vmatprep.mubr.f32.mxu0 0.0
        %7306 = vmatmul.mubr.f32.gmra.mrb[0].mxu0 %v7225
        %v7307 = vpop.f32.mrb[0].mxu0
        %v7308 = vadd.f32 0.0, %v7307
        %v7309 = vpop.f32.mrb[0].mxu0
        %7310 = vmatprep.mubr.f32.mxu0 0.0
        %7311 = vmatmul.mubr.f32.gmra.mrb[0].mxu0 %v7226
        %v7312 = vpop.f32.mrb[0].mxu0
        %v7313 = vadd.f32 0.0, %v7312
        %v7314 = vpop.f32.mrb[0].mxu0
        %7315 = vmatprep.mubr.f32.mxu0 0.0
        %7316 = vmatmul.mubr.f32.gmra.mrb[0].mxu0 %v7227
        %v7317 = vpop.f32.mrb[0].mxu0
        %v7318 = vadd.f32 0.0, %v7317
        %v7319 = vpop.f32.mrb[0].mxu0
        %7320 = vmatprep.mubr.f32.mxu0 0.0
        %7321 = vmatmul.mubr.f32.gmra.mrb[0].mxu0 %v7228
        %v7322 = vpop.f32.mrb[0].mxu0
        %v7323 = vadd.f32 0.0, %v7322
        %v7324 = vpop.f32.mrb[0].mxu0
        %7325 = vmatprep.mubr.f32.mxu0 0.0
        %7326 = vmatmul.mubr.f32.gmra.mrb[0].mxu0 %v7229
        %v7327 = vpop.f32.mrb[0].mxu0
        %v7328 = vadd.f32 0.0, %v7327
        %v7329 = vpop.f32.mrb[0].mxu0
        %7330 = vmatprep.mubr.f32.mxu0 0.0
        %7331 = vmatmul.mubr.f32.gmra.mrb[0].mxu0 %v7230
        %v7332 = vpop.f32.mrb[0].mxu0
        %v7333 = vadd.f32 0.0, %v7332
        %v7334 = vpop.f32.mrb[0].mxu0
        %7335 = vmatprep.mubr.f32.mxu0 0.0
        %7336 = vmatmul.mubr.f32.gmra.mrb[0].mxu0 %v7231
        %v7337 = vpop.f32.mrb[0].mxu0
        %v7338 = vadd.f32 0.0, %v7337
        %v7339 = vpop.f32.mrb[0].mxu0
        %7340 = vmatprep.mubr.f32.mxu0 0.0
        %7341 = vmatmul.mubr.f32.gmra.mrb[0].mxu0 %v7232
        %v7342 = vpop.f32.mrb[0].mxu0
        %v7343 = vadd.f32 0.0, %v7342
        %v7344 = vpop.f32.mrb[0].mxu0
        %7345 = vmatprep.mubr.f32.mxu0 0.0
        %7346 = vmatmul.mubr.f32.gmra.mrb[0].mxu0 %v7233
        %v7347 = vpop.f32.mrb[0].mxu0
        %v7348 = vadd.f32 0.0, %v7347
        %v7349 = vpop.f32.mrb[0].mxu0
        %7350 = vmatprep.mubr.f32.mxu0 0.0
        %7351 = vmatmul.mubr.f32.gmra.mrb[0].mxu0 %v7234
        %v7352 = vpop.f32.mrb[0].mxu0
        %v7353 = vadd.f32 0.0, %v7352
        %v7354 = vpop.f32.mrb[0].mxu0
        %7355 = vmatprep.mubr.f32.mxu0 0.0
        %7356 = vmatmul.mubr.f32.gmra.mrb[0].mxu0 %v7235
        %v7357 = vpop.f32.mrb[0].mxu0
        %v7358 = vadd.f32 0.0, %v7357
        %v7359 = vpop.f32.mrb[0].mxu0
        %7360 = vmatprep.mubr.f32.mxu0 0.0
        %7361 = vmatmul.mubr.f32.gmra.mrb[0].mxu0 %v7236
        %v7362 = vpop.f32.mrb[0].mxu0
        %v7363 = vadd.f32 0.0, %v7362
        %v7364 = vpop.f32.mrb[0].mxu0
        %7365 = vmatprep.mubr.f32.mxu0 0.0
        %7366 = vmatmul.mubr.f32.gmra.mrb[0].mxu0 %v7237
        %v7367 = vpop.f32.mrb[0].mxu0
        %v7368 = vadd.f32 0.0, %v7367
        %v7369 = vpop.f32.mrb[0].mxu0
        %7370 = vmatprep.mubr.f32.mxu0 0.0
        %7371 = vmatmul.mubr.f32.gmra.mrb[0].mxu0 %v7238
        %v7372 = vpop.f32.mrb[0].mxu0
        %v7373 = vadd.f32 0.0, %v7372
        %v7374 = vpop.f32.mrb[0].mxu0
        %7375 = vmatprep.mubr.f32.mxu0 0.0
        %7376 = vmatmul.mubr.f32.gmra.mrb[0].mxu0 %v7239
        %v7377 = vpop.f32.mrb[0].mxu0
        %v7378 = vadd.f32 0.0, %v7377
        %v7379 = vpop.f32.mrb[0].mxu0
        %7380 = vmatprep.mubr.f32.mxu0 0.0
        %7381 = vmatmul.mubr.f32.gmra.mrb[0].mxu0 %v7240
        %v7382 = vpop.f32.mrb[0].mxu0
        %v7383 = vadd.f32 0.0, %v7382
        %v7384 = vpop.f32.mrb[0].mxu0
        %7385 = vdwg.mxu0
        %v7386 = vadd.f32 %v2220, %v7308
        %v7387 = vadd.f32 %v2225, %v7313
        %v7388 = vadd.f32 %v2230, %v7318
        %v7389 = vadd.f32 %v2235, %v7323
        %v7390 = vadd.f32 %v2240, %v7328
        %v7391 = vadd.f32 %v2245, %v7333
        %v7392 = vadd.f32 %v2250, %v7338
        %v7393 = vadd.f32 %v2255, %v7343
        %v7394 = vadd.f32 %v2260, %v7348
        %v7395 = vadd.f32 %v2265, %v7353
        %v7396 = vadd.f32 %v2270, %v7358
        %v7397 = vadd.f32 %v2275, %v7363
        %v7398 = vadd.f32 %v2280, %v7368
        %v7399 = vadd.f32 %v2285, %v7373
        %v7400 = vadd.f32 %v2290, %v7378
        %v7401 = vadd.f32 %v2295, %v7383
        %v7402 = vtanh.pop %v7386
        %v7403 = vtanh.pop %v7387
        %v7404 = vtanh.pop %v7388
        %v7405 = vtanh.pop %v7389
        %v7406 = vtanh.pop %v7390
        %v7407 = vtanh.pop %v7391
        %v7408 = vtanh.pop %v7392
        %v7409 = vtanh.pop %v7393
        %v7410 = vtanh.pop %v7394
        %v7411 = vtanh.pop %v7395
        %v7412 = vtanh.pop %v7396
        %v7413 = vtanh.pop %v7397
        %v7414 = vtanh.pop %v7398
        %v7415 = vtanh.pop %v7399
        %v7416 = vtanh.pop %v7400
        %v7417 = vtanh.pop %v7401
        %v7418 = vsub.f32 1.0, %v7082
        %v7419 = vsub.f32 1.0, %v7084
        %v7420 = vsub.f32 1.0, %v7086
        %v7421 = vsub.f32 1.0, %v7088
        %v7422 = vsub.f32 1.0, %v7090
        %v7423 = vsub.f32 1.0, %v7092
        %v7424 = vsub.f32 1.0, %v7094
        %v7425 = vsub.f32 1.0, %v7096
        %v7426 = vsub.f32 1.0, %v7098
        %v7427 = vsub.f32 1.0, %v7100
        %v7428 = vsub.f32 1.0, %v7102
        %v7429 = vsub.f32 1.0, %v7104
        %v7430 = vsub.f32 1.0, %v7106
        %v7431 = vsub.f32 1.0, %v7108
        %v7432 = vsub.f32 1.0, %v7110
        %v7433 = vsub.f32 1.0, %v7112
        %v7434 = vmul.f32 %v7418, %v6824
        %v7435 = vmul.f32 %v7419, %v6825
        %v7436 = vmul.f32 %v7420, %v6826
        %v7437 = vmul.f32 %v7421, %v6827
        %v7438 = vmul.f32 %v7422, %v6828
        %v7439 = vmul.f32 %v7423, %v6829
        %v7440 = vmul.f32 %v7424, %v6830
        %v7441 = vmul.f32 %v7425, %v6831
        %v7442 = vmul.f32 %v7426, %v6832
        %v7443 = vmul.f32 %v7427, %v6833
        %v7444 = vmul.f32 %v7428, %v6834
        %v7445 = vmul.f32 %v7429, %v6835
        %v7446 = vmul.f32 %v7430, %v6836
        %v7447 = vmul.f32 %v7431, %v6837
        %v7448 = vmul.f32 %v7432, %v6838
        %v7449 = vmul.f32 %v7433, %v6839
        %v7450 = vmul.f32 %v7082, %v7402
        %v7451 = vmul.f32 %v7084, %v7403
        %v7452 = vmul.f32 %v7086, %v7404
        %v7453 = vmul.f32 %v7088, %v7405
        %v7454 = vmul.f32 %v7090, %v7406
        %v7455 = vmul.f32 %v7092, %v7407
        %v7456 = vmul.f32 %v7094, %v7408
        %v7457 = vmul.f32 %v7096, %v7409
        %v7458 = vmul.f32 %v7098, %v7410
        %v7459 = vmul.f32 %v7100, %v7411
        %v7460 = vmul.f32 %v7102, %v7412
        %v7461 = vmul.f32 %v7104, %v7413
        %v7462 = vmul.f32 %v7106, %v7414
        %v7463 = vmul.f32 %v7108, %v7415
        %v7464 = vmul.f32 %v7110, %v7416
        %v7465 = vmul.f32 %v7112, %v7417
        %v7466 = vadd.f32 %v7434, %v7450
        %v7467 = vadd.f32 %v7435, %v7451
        %v7468 = vadd.f32 %v7436, %v7452
        %v7469 = vadd.f32 %v7437, %v7453
        %v7470 = vadd.f32 %v7438, %v7454
        %v7471 = vadd.f32 %v7439, %v7455
        %v7472 = vadd.f32 %v7440, %v7456
        %v7473 = vadd.f32 %v7441, %v7457
        %v7474 = vadd.f32 %v7442, %v7458
        %v7475 = vadd.f32 %v7443, %v7459
        %v7476 = vadd.f32 %v7444, %v7460
        %v7477 = vadd.f32 %v7445, %v7461
        %v7478 = vadd.f32 %v7446, %v7462
        %v7479 = vadd.f32 %v7447, %v7463
        %v7480 = vadd.f32 %v7448, %v7464
        %v7481 = vadd.f32 %v7449, %v7465
        %7482 = vst [vmem:[%s217] sm:$0xff] %v7466
        %7483 = vst [vmem:[%s217 + $0x8] sm:$0xff] %v7467
        %7484 = vst [vmem:[%s217 + $0x10] sm:$0xff] %v7468
        %7485 = vst [vmem:[%s217 + $0x18] sm:$0xff] %v7469
        %7486 = vst [vmem:[%s217 + $0x20] sm:$0xff] %v7470
        %7487 = vst [vmem:[%s217 + $0x28] sm:$0xff] %v7471
        %7488 = vst [vmem:[%s217 + $0x30] sm:$0xff] %v7472
        %7489 = vst [vmem:[%s217 + $0x38] sm:$0xff] %v7473
        %7490 = vst [vmem:[%s217 + $0x40] sm:$0xff] %v7474
        %7491 = vst [vmem:[%s217 + $0x48] sm:$0xff] %v7475
        %7492 = vst [vmem:[%s217 + $0x50] sm:$0xff] %v7476
        %7493 = vst [vmem:[%s217 + $0x58] sm:$0xff] %v7477
        %7494 = vst [vmem:[%s217 + $0x60] sm:$0xff] %v7478
        %7495 = vst [vmem:[%s217 + $0x68] sm:$0xff] %v7479
        %7496 = vst [vmem:[%s217 + $0x70] sm:$0xff] %v7480
        %7497 = vst [vmem:[%s217 + $0x78] sm:$0xff] %v7481
        %s7498 = sand.u32 %s137, 1
        %s7499 = scalar_lea.sflag [#allocation3], %s7498
        %s7500 = sand.u32 %s137, 1
        %s7501 = smul.addr %s7500, 128
        %s7502 = scalar_lea.vmem [#allocation2], %s7501
        // Predicated region
        $region41: #{tpu_custom_call.1} parent=39 // pred_check
          %p7503 = pneg %p147
        $region42: #{tpu_custom_call.1} parent=39 // pred_check_branch
          %7505 = sbr.rel (%p7503) target = $region44
        $region43: #{tpu_custom_call.1} parent=39 // pred_region
          %s7506 = smul.u32 16, %s19
          %s7508 = ssub.s32 2048, 2048
          %7509 = vsyncadd %s7499, %s7508
          %s7510 = smul.addr %s7506, 128
          %s7511 = scalar_lea.hbm %s5, %s7510
          %s7512 = sshll.u32 %s7502, 4
          %s7513 = int_to_ptr.vmem [resolvable:$true] %s7512
          %7518 = dma.vmem_to_hbm [thread:$0]  %s7513, 2048, %s7511, %s7499, 128, 128, 8
        $region44: #{tpu_custom_call.1} parent=39 // pred_fallthru
          _
      $region40: #{tpu_custom_call.1} parent=5 // pred_fallthru
        _
      %p7519 = scmp.le.s32.totalorder 2, %s14
      // Predicated region
      $region45: #{tpu_custom_call.1} parent=5 // pred_check
        %p7520 = pneg %p7519
      $region46: #{tpu_custom_call.1} parent=5 // pred_check_branch
        %7522 = sbr.rel (%p7520) target = $region48
      $region47: #{tpu_custom_call.1} parent=5 // pred_region
        %s7523 = ssub.s32 %s14, 2
        // Predicated region
        $region49: #{tpu_custom_call.1} parent=47 // pred_check
          %p7524 = pneg %p153
        $region50: #{tpu_custom_call.1} parent=47 // pred_check_branch
          %7526 = sbr.rel (%p7524) target = $region52
        $region51: #{tpu_custom_call.1} parent=47 // pred_region
          %s7527 = sand.u32 %s138, 1
          %s7528 = scalar_lea.sflag [#allocation3], %s7527
          %s7529 = sand.u32 %s138, 1
          %s7530 = smul.addr %s7529, 128
          %s7531 = scalar_lea.vmem [#allocation2], %s7530
          %7532 = dma.done %s7528, 2048
        $region52: #{tpu_custom_call.1} parent=47 // pred_fallthru
          _
      $region48: #{tpu_custom_call.1} parent=5 // pred_fallthru
        _
    $region6: #{tpu_custom_call.1} parent=1 // loop_footer
      %s18 = sadd.s32 1, %s14
    $region7: #{tpu_custom_call.1} parent=1 // loop_footer_branch
      %13 = sbr.rel target = $region3
    $region8: #{tpu_custom_call.1} parent=1 // loop_exit
      _
    %7533 = vsyncpa [#allocation3], 1
    %s7534 = scalar_lea.sflag [#allocation3], 1
    %7535 = vsyncpa %s7534, 1

</llo_original>
